<compile_context>
chip_gen: v7x
topology: tpu7x:2x2x1
jax: 0.10.0
libtpu: 0.0.40
codegen_flags: <defaults>
</compile_context>

<pallas_src>
import functools

import jax
import jax.numpy as jnp
import numpy as np
from jax.experimental import pallas as pl
from jax.experimental.pallas import tpu as pltpu


# ----------------------------------------------------------------------------
# Pallas kernel: 3-layer GRU recurrence over a time block + classifier head
# ----------------------------------------------------------------------------
def _disc_kernel(gi0_ref,                 # [t_blk, b_blk, 3*Hp] hoisted layer-0 input proj
                 whh0_ref, bhh0_ref,      # [Hp, 3Hp], [1, 3Hp]
                 wf1_ref, bf1_ref,        # [2Hp, 6Hp], [1, 6Hp]  (fused layer 1)
                 wf2_ref, bf2_ref,        # [2Hp, 6Hp], [1, 6Hp]  (fused layer 2)
                 wc1_ref, bc1_ref, wc2_ref, bc2_ref, wc3_ref, bc3_ref,
                 out_ref,                 # [b_blk, 1]
                 h0_ref, h1_ref, h2_ref,  # VMEM scratch [b_blk, Hp]
                 *, t_blk, hp):
    t = pl.program_id(1)

    @pl.when(t == 0)
    def _():
        h0_ref[...] = jnp.zeros_like(h0_ref)
        h1_ref[...] = jnp.zeros_like(h1_ref)
        h2_ref[...] = jnp.zeros_like(h2_ref)

    def gru_update(gi, gh, h):
        # PyTorch gate order (r, z, n); each gate is a 128-lane-aligned slab.
        r = jax.nn.sigmoid(gi[:, 0:hp] + gh[:, 0:hp])
        z = jax.nn.sigmoid(gi[:, hp:2 * hp] + gh[:, hp:2 * hp])
        n = jnp.tanh(gi[:, 2 * hp:3 * hp] + r * gh[:, 2 * hp:3 * hp])
        return (1.0 - z) * n + z * h

    h0 = h0_ref[...]
    h1 = h1_ref[...]
    h2 = h2_ref[...]

    # Statically unrolled time block (scheduler visibility across iterations).
    for i in range(t_blk):
        # layer 0: input projection was hoisted to the wrapper (streamed gi0)
        gi0 = gi0_ref[i]
        gh0 = jnp.dot(h0, whh0_ref[...],
                      preferred_element_type=jnp.float32) + bhh0_ref[...]
        h0 = gru_update(gi0, gh0, h0)

        # layer 1: one fused matmul produces [gi | gh]
        g1 = jnp.dot(jnp.concatenate([h0, h1], axis=1), wf1_ref[...],
                     preferred_element_type=jnp.float32) + bf1_ref[...]
        h1 = gru_update(g1[:, :3 * hp], g1[:, 3 * hp:], h1)

        # layer 2
        g2 = jnp.dot(jnp.concatenate([h1, h2], axis=1), wf2_ref[...],
                     preferred_element_type=jnp.float32) + bf2_ref[...]
        h2 = gru_update(g2[:, :3 * hp], g2[:, 3 * hp:], h2)

    h0_ref[...] = h0
    h1_ref[...] = h1
    h2_ref[...] = h2

    # classifier: Linear -> ReLU -> (Dropout=id) -> Linear -> ReLU -> Linear -> Sigmoid
    @pl.when(t == pl.num_programs(1) - 1)
    def _():
        y = jnp.dot(h2, wc1_ref[...], preferred_element_type=jnp.float32) + bc1_ref[...]
        y = jnp.maximum(y, 0.0)
        y = jnp.dot(y, wc2_ref[...], preferred_element_type=jnp.float32) + bc2_ref[...]
        y = jnp.maximum(y, 0.0)
        y = jnp.dot(y, wc3_ref[...], preferred_element_type=jnp.float32) + bc3_ref[...]
        out_ref[...] = jax.nn.sigmoid(y)


# ----------------------------------------------------------------------------
# Parameter construction (deterministic, PyTorch-style uniform init)
# ----------------------------------------------------------------------------
def init_params(key, input_dim, condition_dim, hidden_dim):
    emb_dim = hidden_dim // 4
    k = 1.0 / np.sqrt(hidden_dim)

    def u(key, shape, bound):
        return jax.random.uniform(key, shape, jnp.float32, -bound, bound)

    keys = iter(jax.random.split(key, 32))
    p = {}
    p["emb"] = jax.random.normal(next(keys), (condition_dim, emb_dim), jnp.float32)

    in_dims = [input_dim + emb_dim, hidden_dim, hidden_dim]
    for l in range(3):
        # stored pre-transposed: [in, 3H] / [H, 3H]; biases as [1, 3H]
        p[f"wih{l}"] = u(next(keys), (in_dims[l], 3 * hidden_dim), k)
        p[f"whh{l}"] = u(next(keys), (hidden_dim, 3 * hidden_dim), k)
        p[f"bih{l}"] = u(next(keys), (1, 3 * hidden_dim), k)
        p[f"bhh{l}"] = u(next(keys), (1, 3 * hidden_dim), k)

    h2 = hidden_dim // 2
    p["wc1"] = u(next(keys), (hidden_dim, hidden_dim), 1.0 / np.sqrt(hidden_dim))
    p["bc1"] = u(next(keys), (1, hidden_dim), 1.0 / np.sqrt(hidden_dim))
    p["wc2"] = u(next(keys), (hidden_dim, h2), 1.0 / np.sqrt(hidden_dim))
    p["bc2"] = u(next(keys), (1, h2), 1.0 / np.sqrt(hidden_dim))
    p["wc3"] = u(next(keys), (h2, 1), 1.0 / np.sqrt(h2))
    p["bc3"] = u(next(keys), (1, 1), 1.0 / np.sqrt(h2))
    return p


# ----------------------------------------------------------------------------
# Pack logical params into kernel layout (128-lane gate padding + fused layers)
# ----------------------------------------------------------------------------
def pack_params(p, input_dim, hidden_dim):
    H = hidden_dim
    Hp = ((H + 127) // 128) * 128          # per-gate lane-aligned width

    def pad_cols(w):                        # (in, 3H) -> (in, 3Hp), pad cols zero
        out = jnp.zeros((w.shape[0], 3 * Hp), jnp.float32)
        for g in range(3):
            out = out.at[:, g * Hp:g * Hp + H].set(w[:, g * H:(g + 1) * H])
        return out

    def pad_rows(w):                        # (H, N) -> (Hp, N), pad rows zero
        return jnp.zeros((Hp, w.shape[1]), jnp.float32).at[:H, :].set(w)

    packed = {"emb": p["emb"]}

    # layer 0: input projection is hoisted to the wrapper; recurrent part in kernel
    wih0 = pad_cols(p["wih0"])                          # (input_dim + E, 3Hp)
    packed["wih0_seq"] = wih0[:input_dim]               # (input_dim, 3Hp)
    packed["wih0_cond"] = wih0[input_dim:]              # (E, 3Hp)
    packed["bih0"] = pad_cols(p["bih0"])                # (1, 3Hp)
    packed["whh0"] = pad_rows(pad_cols(p["whh0"]))      # (Hp, 3Hp)
    packed["bhh0"] = pad_cols(p["bhh0"])                # (1, 3Hp)

    # layers 1, 2: block-diagonal fused weights -> one matmul gives [gi | gh]
    for l in (1, 2):
        wih = pad_rows(pad_cols(p[f"wih{l}"]))          # (Hp, 3Hp)
        whh = pad_rows(pad_cols(p[f"whh{l}"]))          # (Hp, 3Hp)
        wf = jnp.zeros((2 * Hp, 6 * Hp), jnp.float32)
        wf = wf.at[:Hp, :3 * Hp].set(wih)
        wf = wf.at[Hp:, 3 * Hp:].set(whh)
        packed[f"wf{l}"] = wf
        packed[f"bf{l}"] = jnp.concatenate(
            [pad_cols(p[f"bih{l}"]), pad_cols(p[f"bhh{l}"])], axis=1)

    packed["wc1"] = pad_rows(p["wc1"])                  # (Hp, H) pad rows zero
    packed["bc1"] = p["bc1"]
    packed["wc2"] = p["wc2"]
    packed["bc2"] = p["bc2"]
    packed["wc3"] = p["wc3"]
    packed["bc3"] = p["bc3"]
    return packed


def _pick_tblk(T, cap=8):
    for d in range(min(T, cap), 0, -1):
        if T % d == 0:
            return d
    return 1


# ----------------------------------------------------------------------------
# Wrapper: embedding lookup + hoisted layer-0 projection + pallas_call
# ----------------------------------------------------------------------------
@jax.jit
def discriminator_forward(packed, sequences, condition):
    B, T, _ = sequences.shape
    Hp = packed["whh0"].shape[0]
    seq = sequences.astype(jnp.float32)

    # Hoisted layer-0 input projection + time-invariant condition contribution
    # (one big batched matmul outside the recurrence), time-major for streaming.
    cond_emb = packed["emb"][condition]                                   # (B, E)
    cond_bias = cond_emb @ packed["wih0_cond"] + packed["bih0"]           # (B, 3Hp)
    gi0 = jnp.einsum("btd,dg->tbg", seq, packed["wih0_seq"]) + cond_bias[None, :, :]

    t_blk = _pick_tblk(T)
    b_blk = B if (B <= 8 or B % 8 != 0) else 8
    grid = (B // b_blk, T // t_blk)

    weights = [packed["whh0"], packed["bhh0"],
               packed["wf1"], packed["bf1"],
               packed["wf2"], packed["bf2"],
               packed["wc1"], packed["bc1"],
               packed["wc2"], packed["bc2"],
               packed["wc3"], packed["bc3"]]
    args = [gi0] + weights

    def _resident_spec(arr):
        zeros = (0,) * arr.ndim
        return pl.BlockSpec(arr.shape, lambda b, t, _z=zeros: _z)

    in_specs = [pl.BlockSpec((t_blk, b_blk, 3 * Hp), lambda b, t: (t, b, 0))]
    in_specs += [_resident_spec(w) for w in weights]
    out_spec = pl.BlockSpec((b_blk, 1), lambda b, t: (b, 0))

    # VMEM budget with headroom (weights resident + double-buffered gi0 block).
    arg_bytes = sum(int(np.prod(a.shape)) * 4 for a in args)
    scratch_bytes = 3 * b_blk * Hp * 4
    vmem_limit = int(min(48 * 2**20,
                         max(4 * 2**20, 2 * arg_bytes + scratch_bytes + (1 << 20))))

    kernel = functools.partial(_disc_kernel, t_blk=t_blk, hp=Hp)
    return pl.pallas_call(
        kernel,
        out_shape=jax.ShapeDtypeStruct((B, 1), jnp.float32),
        grid_spec=pltpu.PrefetchScalarGridSpec(
            num_scalar_prefetch=0,
            grid=grid,
            in_specs=in_specs,
            out_specs=out_spec,
            scratch_shapes=[pltpu.VMEM((b_blk, Hp), jnp.float32)] * 3),
        compiler_params=pltpu.CompilerParams(
            dimension_semantics=("parallel", "arbitrary"),
            vmem_limit_bytes=vmem_limit),
    )(*args)


# ----------------------------------------------------------------------------
# Pure-JAX reference for validation (uses the unpadded logical parameters)
# ----------------------------------------------------------------------------
def discriminator_reference(params, sequences, condition):
    B, T, _ = sequences.shape
    H = params["whh0"].shape[0]
    cond_emb = params["emb"][condition]
    cond_seq = jnp.broadcast_to(cond_emb[:, None, :], (B, T, cond_emb.shape[-1]))
    x = jnp.concatenate([sequences, cond_seq], axis=2).astype(jnp.float32)

    def gru_cell(xt, h, l):
        gi = xt @ params[f"wih{l}"] + params[f"bih{l}"]
        gh = h @ params[f"whh{l}"] + params[f"bhh{l}"]
        r = jax.nn.sigmoid(gi[:, :H] + gh[:, :H])
        z = jax.nn.sigmoid(gi[:, H:2 * H] + gh[:, H:2 * H])
        n = jnp.tanh(gi[:, 2 * H:] + r * gh[:, 2 * H:])
        return (1.0 - z) * n + z * h

    h0 = h1 = h2 = jnp.zeros((B, H), jnp.float32)
    for t in range(T):
        h0 = gru_cell(x[:, t, :], h0, 0)
        h1 = gru_cell(h0, h1, 1)
        h2 = gru_cell(h1, h2, 2)

    y = jnp.maximum(h2 @ params["wc1"] + params["bc1"], 0.0)
    y = jnp.maximum(y @ params["wc2"] + params["bc2"], 0.0)
    y = y @ params["wc3"] + params["bc3"]
    return jax.nn.sigmoid(y)


if __name__ == "__main__":
    input_dim, condition_dim, hidden_dim = 6, 4, 32
    batch, seq_len = 2, 8

    root = jax.random.PRNGKey(0)
    k_param, k_seq, k_cond = jax.random.split(root, 3)

    params = init_params(k_param, input_dim, condition_dim, hidden_dim)
    packed = pack_params(params, input_dim, hidden_dim)
    sequences = jax.random.normal(k_seq, (batch, seq_len, input_dim), jnp.float32)
    condition = jax.random.randint(k_cond, (batch,), 0, condition_dim)

    out = discriminator_forward(packed, sequences, condition)
    out = jax.block_until_ready(out)

    ref = discriminator_reference(params, sequences, condition)
    np.testing.assert_allclose(np.asarray(out), np.asarray(ref), rtol=1e-4, atol=1e-4)
    assert out.shape == (batch, 1)

    print("KERNEL_OK")
</pallas_src>

<mosaic_0001>
module attributes {stable_mosaic.version = 11 : i64} {
  func.func @_disc_kernel(%arg0: i32, %arg1: i32, %arg2: memref<8x2x384xf32, #tpu.memory_space<vmem>>, %arg3: memref<128x384xf32, #tpu.memory_space<vmem>>, %arg4: memref<1x384xf32, #tpu.memory_space<vmem>>, %arg5: memref<256x768xf32, #tpu.memory_space<vmem>>, %arg6: memref<1x768xf32, #tpu.memory_space<vmem>>, %arg7: memref<256x768xf32, #tpu.memory_space<vmem>>, %arg8: memref<1x768xf32, #tpu.memory_space<vmem>>, %arg9: memref<128x32xf32, #tpu.memory_space<vmem>>, %arg10: memref<1x32xf32, #tpu.memory_space<vmem>>, %arg11: memref<32x16xf32, #tpu.memory_space<vmem>>, %arg12: memref<1x16xf32, #tpu.memory_space<vmem>>, %arg13: memref<16x1xf32, #tpu.memory_space<vmem>>, %arg14: memref<1x1xf32, #tpu.memory_space<vmem>>, %arg15: memref<2x1xf32, #tpu.memory_space<vmem>>, %arg16: memref<2x128xf32, #tpu.memory_space<vmem>>, %arg17: memref<2x128xf32, #tpu.memory_space<vmem>>, %arg18: memref<2x128xf32, #tpu.memory_space<vmem>>) attributes {dimension_semantics = [#tpu.dimension_semantics<parallel>, #tpu.dimension_semantics<arbitrary>], iteration_bounds = array<i64: 1, 1>, scalar_prefetch = 0 : i64, scratch_operands = 3 : i64, tpu.core_type = #tpu.core_type<tc>, window_params = [{transform_indices = @transform_0, window_bounds = array<i64: 8, 2, 384>}, {pipeline_mode = #tpu.pipeline_mode<synchronous>, transform_indices = @transform_1, window_bounds = array<i64: 128, 384>}, {pipeline_mode = #tpu.pipeline_mode<synchronous>, transform_indices = @transform_2, window_bounds = array<i64: 1, 384>}, {pipeline_mode = #tpu.pipeline_mode<synchronous>, transform_indices = @transform_3, window_bounds = array<i64: 256, 768>}, {pipeline_mode = #tpu.pipeline_mode<synchronous>, transform_indices = @transform_4, window_bounds = array<i64: 1, 768>}, {pipeline_mode = #tpu.pipeline_mode<synchronous>, transform_indices = @transform_5, window_bounds = array<i64: 256, 768>}, {pipeline_mode = #tpu.pipeline_mode<synchronous>, transform_indices = @transform_6, window_bounds = array<i64: 1, 768>}, {pipeline_mode = #tpu.pipeline_mode<synchronous>, transform_indices = @transform_7, window_bounds = array<i64: 128, 32>}, {pipeline_mode = #tpu.pipeline_mode<synchronous>, transform_indices = @transform_8, window_bounds = array<i64: 1, 32>}, {pipeline_mode = #tpu.pipeline_mode<synchronous>, transform_indices = @transform_9, window_bounds = array<i64: 32, 16>}, {pipeline_mode = #tpu.pipeline_mode<synchronous>, transform_indices = @transform_10, window_bounds = array<i64: 1, 16>}, {pipeline_mode = #tpu.pipeline_mode<synchronous>, transform_indices = @transform_11, window_bounds = array<i64: 16, 1>}, {pipeline_mode = #tpu.pipeline_mode<synchronous>, transform_indices = @transform_12, window_bounds = array<i64: 1, 1>}, {transform_indices = @transform_13, window_bounds = array<i64: 2, 1>}]} {
    %c0_i32 = arith.constant 0 : i32
    %0 = arith.cmpi eq, %arg1, %c0_i32 : i32
    %1 = arith.extui %0 : i1 to i32
    %c0_i32_0 = arith.constant 0 : i32
    %2 = arith.cmpi ne, %1, %c0_i32_0 : i32
    scf.if %2 {
      %cst_222 = arith.constant 0.000000e+00 : f32
      %820 = vector.broadcast %cst_222 : f32 to vector<2x128xf32>
      %c0_223 = arith.constant 0 : index
      %c0_224 = arith.constant 0 : index
      %821 = vector.load %arg16[%c0_223, %c0_224] : memref<2x128xf32, #tpu.memory_space<vmem>>, vector<2x128xf32>
      tpu.vector_store %arg16[%c0_223, %c0_224], %820 {strides = array<i32>} : memref<2x128xf32, #tpu.memory_space<vmem>>, vector<2x128xf32>,
      %cst_225 = arith.constant 0.000000e+00 : f32
      %822 = vector.broadcast %cst_225 : f32 to vector<2x128xf32>
      %c0_226 = arith.constant 0 : index
      %c0_227 = arith.constant 0 : index
      %823 = vector.load %arg17[%c0_226, %c0_227] : memref<2x128xf32, #tpu.memory_space<vmem>>, vector<2x128xf32>
      tpu.vector_store %arg17[%c0_226, %c0_227], %822 {strides = array<i32>} : memref<2x128xf32, #tpu.memory_space<vmem>>, vector<2x128xf32>,
      %cst_228 = arith.constant 0.000000e+00 : f32
      %824 = vector.broadcast %cst_228 : f32 to vector<2x128xf32>
      %c0_229 = arith.constant 0 : index
      %c0_230 = arith.constant 0 : index
      %825 = vector.load %arg18[%c0_229, %c0_230] : memref<2x128xf32, #tpu.memory_space<vmem>>, vector<2x128xf32>
      tpu.vector_store %arg18[%c0_229, %c0_230], %824 {strides = array<i32>} : memref<2x128xf32, #tpu.memory_space<vmem>>, vector<2x128xf32>,
    } else {
    }
    %c0 = arith.constant 0 : index
    %c0_1 = arith.constant 0 : index
    %3 = vector.load %arg16[%c0, %c0_1] : memref<2x128xf32, #tpu.memory_space<vmem>>, vector<2x128xf32>
    %c0_2 = arith.constant 0 : index
    %c0_3 = arith.constant 0 : index
    %4 = vector.load %arg17[%c0_2, %c0_3] : memref<2x128xf32, #tpu.memory_space<vmem>>, vector<2x128xf32>
    %c0_4 = arith.constant 0 : index
    %c0_5 = arith.constant 0 : index
    %5 = vector.load %arg18[%c0_4, %c0_5] : memref<2x128xf32, #tpu.memory_space<vmem>>, vector<2x128xf32>
    %c0_6 = arith.constant 0 : index
    %c0_7 = arith.constant 0 : index
    %c0_8 = arith.constant 0 : index
    %6 = vector.load %arg2[%c0_6, %c0_7, %c0_8] : memref<8x2x384xf32, #tpu.memory_space<vmem>>, vector<1x2x384xf32>
    %7 = vector.shape_cast %6 : vector<1x2x384xf32> to vector<2x384xf32>
    %c0_9 = arith.constant 0 : index
    %c0_10 = arith.constant 0 : index
    %8 = vector.load %arg3[%c0_9, %c0_10] : memref<128x384xf32, #tpu.memory_space<vmem>>, vector<128x384xf32>
    %cst = arith.constant dense<0.000000e+00> : vector<2x384xf32>
    %9 = tpu.matmul %3, %8, %cst {dimension_numbers = #tpu.dot_dimension_numbers<[1], [0], [0], [1], [0, 0, 1, 1], [], []>} : vector<2x128xf32>, vector<128x384xf32>, vector<2x384xf32> -> vector<2x384xf32>
    %c0_11 = arith.constant 0 : index
    %c0_12 = arith.constant 0 : index
    %10 = vector.load %arg4[%c0_11, %c0_12] : memref<1x384xf32, #tpu.memory_space<vmem>>, vector<1x384xf32>
    %11 = vector.broadcast %10 : vector<1x384xf32> to vector<2x384xf32>
    %12 = arith.addf %9, %11 : vector<2x384xf32>
    %13 = vector.extract_strided_slice %7 {offsets = [0, 0], sizes = [2, 128], strides = [1, 1]} : vector<2x384xf32> to vector<2x128xf32>
    %14 = vector.extract_strided_slice %12 {offsets = [0, 0], sizes = [2, 128], strides = [1, 1]} : vector<2x384xf32> to vector<2x128xf32>
    %15 = arith.addf %13, %14 : vector<2x128xf32>
    %16 = arith.negf %15 : vector<2x128xf32>
    %17 = math.exp %16 : vector<2x128xf32>
    %cst_13 = arith.constant 1.000000e+00 : f32
    %18 = vector.broadcast %cst_13 : f32 to vector<2x128xf32>
    %19 = arith.addf %18, %17 : vector<2x128xf32>
    %20 = arith.divf %18, %19 : vector<2x128xf32>
    %21 = vector.extract_strided_slice %7 {offsets = [0, 128], sizes = [2, 128], strides = [1, 1]} : vector<2x384xf32> to vector<2x128xf32>
    %22 = vector.extract_strided_slice %12 {offsets = [0, 128], sizes = [2, 128], strides = [1, 1]} : vector<2x384xf32> to vector<2x128xf32>
    %23 = arith.addf %21, %22 : vector<2x128xf32>
    %24 = arith.negf %23 : vector<2x128xf32>
    %25 = math.exp %24 : vector<2x128xf32>
    %cst_14 = arith.constant 1.000000e+00 : f32
    %26 = vector.broadcast %cst_14 : f32 to vector<2x128xf32>
    %27 = arith.addf %26, %25 : vector<2x128xf32>
    %28 = arith.divf %26, %27 : vector<2x128xf32>
    %29 = vector.extract_strided_slice %7 {offsets = [0, 256], sizes = [2, 128], strides = [1, 1]} : vector<2x384xf32> to vector<2x128xf32>
    %30 = vector.extract_strided_slice %12 {offsets = [0, 256], sizes = [2, 128], strides = [1, 1]} : vector<2x384xf32> to vector<2x128xf32>
    %31 = arith.mulf %20, %30 : vector<2x128xf32>
    %32 = arith.addf %29, %31 : vector<2x128xf32>
    %33 = math.tanh %32 : vector<2x128xf32>
    %cst_15 = arith.constant 1.000000e+00 : f32
    %34 = vector.broadcast %cst_15 : f32 to vector<2x128xf32>
    %35 = arith.subf %34, %28 : vector<2x128xf32>
    %36 = arith.mulf %35, %33 : vector<2x128xf32>
    %37 = arith.mulf %28, %3 : vector<2x128xf32>
    %38 = arith.addf %36, %37 : vector<2x128xf32>
    %39 = tpu.concatenate %38, %4 in 1 : vector<2x128xf32>, vector<2x128xf32> -> vector<2x256xf32>
    %c0_16 = arith.constant 0 : index
    %c0_17 = arith.constant 0 : index
    %40 = vector.load %arg5[%c0_16, %c0_17] : memref<256x768xf32, #tpu.memory_space<vmem>>, vector<256x768xf32>
    %cst_18 = arith.constant dense<0.000000e+00> : vector<2x768xf32>
    %41 = tpu.matmul %39, %40, %cst_18 {dimension_numbers = #tpu.dot_dimension_numbers<[1], [0], [0], [1], [0, 0, 1, 1], [], []>} : vector<2x256xf32>, vector<256x768xf32>, vector<2x768xf32> -> vector<2x768xf32>
    %c0_19 = arith.constant 0 : index
    %c0_20 = arith.constant 0 : index
    %42 = vector.load %arg6[%c0_19, %c0_20] : memref<1x768xf32, #tpu.memory_space<vmem>>, vector<1x768xf32>
    %43 = vector.broadcast %42 : vector<1x768xf32> to vector<2x768xf32>
    %44 = arith.addf %41, %43 : vector<2x768xf32>
    %45 = vector.extract_strided_slice %44 {offsets = [0, 0], sizes = [2, 384], strides = [1, 1]} : vector<2x768xf32> to vector<2x384xf32>
    %46 = vector.extract_strided_slice %44 {offsets = [0, 384], sizes = [2, 384], strides = [1, 1]} : vector<2x768xf32> to vector<2x384xf32>
    %47 = vector.extract_strided_slice %45 {offsets = [0, 0], sizes = [2, 128], strides = [1, 1]} : vector<2x384xf32> to vector<2x128xf32>
    %48 = vector.extract_strided_slice %46 {offsets = [0, 0], sizes = [2, 128], strides = [1, 1]} : vector<2x384xf32> to vector<2x128xf32>
    %49 = arith.addf %47, %48 : vector<2x128xf32>
    %50 = arith.negf %49 : vector<2x128xf32>
    %51 = math.exp %50 : vector<2x128xf32>
    %cst_21 = arith.constant 1.000000e+00 : f32
    %52 = vector.broadcast %cst_21 : f32 to vector<2x128xf32>
    %53 = arith.addf %52, %51 : vector<2x128xf32>
    %54 = arith.divf %52, %53 : vector<2x128xf32>
    %55 = vector.extract_strided_slice %45 {offsets = [0, 128], sizes = [2, 128], strides = [1, 1]} : vector<2x384xf32> to vector<2x128xf32>
    %56 = vector.extract_strided_slice %46 {offsets = [0, 128], sizes = [2, 128], strides = [1, 1]} : vector<2x384xf32> to vector<2x128xf32>
    %57 = arith.addf %55, %56 : vector<2x128xf32>
    %58 = arith.negf %57 : vector<2x128xf32>
    %59 = math.exp %58 : vector<2x128xf32>
    %cst_22 = arith.constant 1.000000e+00 : f32
    %60 = vector.broadcast %cst_22 : f32 to vector<2x128xf32>
    %61 = arith.addf %60, %59 : vector<2x128xf32>
    %62 = arith.divf %60, %61 : vector<2x128xf32>
    %63 = vector.extract_strided_slice %45 {offsets = [0, 256], sizes = [2, 128], strides = [1, 1]} : vector<2x384xf32> to vector<2x128xf32>
    %64 = vector.extract_strided_slice %46 {offsets = [0, 256], sizes = [2, 128], strides = [1, 1]} : vector<2x384xf32> to vector<2x128xf32>
    %65 = arith.mulf %54, %64 : vector<2x128xf32>
    %66 = arith.addf %63, %65 : vector<2x128xf32>
    %67 = math.tanh %66 : vector<2x128xf32>
    %cst_23 = arith.constant 1.000000e+00 : f32
    %68 = vector.broadcast %cst_23 : f32 to vector<2x128xf32>
    %69 = arith.subf %68, %62 : vector<2x128xf32>
    %70 = arith.mulf %69, %67 : vector<2x128xf32>
    %71 = arith.mulf %62, %4 : vector<2x128xf32>
    %72 = arith.addf %70, %71 : vector<2x128xf32>
    %73 = tpu.concatenate %72, %5 in 1 : vector<2x128xf32>, vector<2x128xf32> -> vector<2x256xf32>
    %c0_24 = arith.constant 0 : index
    %c0_25 = arith.constant 0 : index
    %74 = vector.load %arg7[%c0_24, %c0_25] : memref<256x768xf32, #tpu.memory_space<vmem>>, vector<256x768xf32>
    %cst_26 = arith.constant dense<0.000000e+00> : vector<2x768xf32>
    %75 = tpu.matmul %73, %74, %cst_26 {dimension_numbers = #tpu.dot_dimension_numbers<[1], [0], [0], [1], [0, 0, 1, 1], [], []>} : vector<2x256xf32>, vector<256x768xf32>, vector<2x768xf32> -> vector<2x768xf32>
    %c0_27 = arith.constant 0 : index
    %c0_28 = arith.constant 0 : index
    %76 = vector.load %arg8[%c0_27, %c0_28] : memref<1x768xf32, #tpu.memory_space<vmem>>, vector<1x768xf32>
    %77 = vector.broadcast %76 : vector<1x768xf32> to vector<2x768xf32>
    %78 = arith.addf %75, %77 : vector<2x768xf32>
    %79 = vector.extract_strided_slice %78 {offsets = [0, 0], sizes = [2, 384], strides = [1, 1]} : vector<2x768xf32> to vector<2x384xf32>
    %80 = vector.extract_strided_slice %78 {offsets = [0, 384], sizes = [2, 384], strides = [1, 1]} : vector<2x768xf32> to vector<2x384xf32>
    %81 = vector.extract_strided_slice %79 {offsets = [0, 0], sizes = [2, 128], strides = [1, 1]} : vector<2x384xf32> to vector<2x128xf32>
    %82 = vector.extract_strided_slice %80 {offsets = [0, 0], sizes = [2, 128], strides = [1, 1]} : vector<2x384xf32> to vector<2x128xf32>
    %83 = arith.addf %81, %82 : vector<2x128xf32>
    %84 = arith.negf %83 : vector<2x128xf32>
    %85 = math.exp %84 : vector<2x128xf32>
    %cst_29 = arith.constant 1.000000e+00 : f32
    %86 = vector.broadcast %cst_29 : f32 to vector<2x128xf32>
    %87 = arith.addf %86, %85 : vector<2x128xf32>
    %88 = arith.divf %86, %87 : vector<2x128xf32>
    %89 = vector.extract_strided_slice %79 {offsets = [0, 128], sizes = [2, 128], strides = [1, 1]} : vector<2x384xf32> to vector<2x128xf32>
    %90 = vector.extract_strided_slice %80 {offsets = [0, 128], sizes = [2, 128], strides = [1, 1]} : vector<2x384xf32> to vector<2x128xf32>
    %91 = arith.addf %89, %90 : vector<2x128xf32>
    %92 = arith.negf %91 : vector<2x128xf32>
    %93 = math.exp %92 : vector<2x128xf32>
    %cst_30 = arith.constant 1.000000e+00 : f32
    %94 = vector.broadcast %cst_30 : f32 to vector<2x128xf32>
    %95 = arith.addf %94, %93 : vector<2x128xf32>
    %96 = arith.divf %94, %95 : vector<2x128xf32>
    %97 = vector.extract_strided_slice %79 {offsets = [0, 256], sizes = [2, 128], strides = [1, 1]} : vector<2x384xf32> to vector<2x128xf32>
    %98 = vector.extract_strided_slice %80 {offsets = [0, 256], sizes = [2, 128], strides = [1, 1]} : vector<2x384xf32> to vector<2x128xf32>
    %99 = arith.mulf %88, %98 : vector<2x128xf32>
    %100 = arith.addf %97, %99 : vector<2x128xf32>
    %101 = math.tanh %100 : vector<2x128xf32>
    %cst_31 = arith.constant 1.000000e+00 : f32
    %102 = vector.broadcast %cst_31 : f32 to vector<2x128xf32>
    %103 = arith.subf %102, %96 : vector<2x128xf32>
    %104 = arith.mulf %103, %101 : vector<2x128xf32>
    %105 = arith.mulf %96, %5 : vector<2x128xf32>
    %106 = arith.addf %104, %105 : vector<2x128xf32>
    %c1 = arith.constant 1 : index
    %c0_32 = arith.constant 0 : index
    %c0_33 = arith.constant 0 : index
    %107 = vector.load %arg2[%c1, %c0_32, %c0_33] : memref<8x2x384xf32, #tpu.memory_space<vmem>>, vector<1x2x384xf32>
    %108 = vector.shape_cast %107 : vector<1x2x384xf32> to vector<2x384xf32>
    %c0_34 = arith.constant 0 : index
    %c0_35 = arith.constant 0 : index
    %109 = vector.load %arg3[%c0_34, %c0_35] : memref<128x384xf32, #tpu.memory_space<vmem>>, vector<128x384xf32>
    %cst_36 = arith.constant dense<0.000000e+00> : vector<2x384xf32>
    %110 = tpu.matmul %38, %109, %cst_36 {dimension_numbers = #tpu.dot_dimension_numbers<[1], [0], [0], [1], [0, 0, 1, 1], [], []>} : vector<2x128xf32>, vector<128x384xf32>, vector<2x384xf32> -> vector<2x384xf32>
    %c0_37 = arith.constant 0 : index
    %c0_38 = arith.constant 0 : index
    %111 = vector.load %arg4[%c0_37, %c0_38] : memref<1x384xf32, #tpu.memory_space<vmem>>, vector<1x384xf32>
    %112 = vector.broadcast %111 : vector<1x384xf32> to vector<2x384xf32>
    %113 = arith.addf %110, %112 : vector<2x384xf32>
    %114 = vector.extract_strided_slice %108 {offsets = [0, 0], sizes = [2, 128], strides = [1, 1]} : vector<2x384xf32> to vector<2x128xf32>
    %115 = vector.extract_strided_slice %113 {offsets = [0, 0], sizes = [2, 128], strides = [1, 1]} : vector<2x384xf32> to vector<2x128xf32>
    %116 = arith.addf %114, %115 : vector<2x128xf32>
    %117 = arith.negf %116 : vector<2x128xf32>
    %118 = math.exp %117 : vector<2x128xf32>
    %cst_39 = arith.constant 1.000000e+00 : f32
    %119 = vector.broadcast %cst_39 : f32 to vector<2x128xf32>
    %120 = arith.addf %119, %118 : vector<2x128xf32>
    %121 = arith.divf %119, %120 : vector<2x128xf32>
    %122 = vector.extract_strided_slice %108 {offsets = [0, 128], sizes = [2, 128], strides = [1, 1]} : vector<2x384xf32> to vector<2x128xf32>
    %123 = vector.extract_strided_slice %113 {offsets = [0, 128], sizes = [2, 128], strides = [1, 1]} : vector<2x384xf32> to vector<2x128xf32>
    %124 = arith.addf %122, %123 : vector<2x128xf32>
    %125 = arith.negf %124 : vector<2x128xf32>
    %126 = math.exp %125 : vector<2x128xf32>
    %cst_40 = arith.constant 1.000000e+00 : f32
    %127 = vector.broadcast %cst_40 : f32 to vector<2x128xf32>
    %128 = arith.addf %127, %126 : vector<2x128xf32>
    %129 = arith.divf %127, %128 : vector<2x128xf32>
    %130 = vector.extract_strided_slice %108 {offsets = [0, 256], sizes = [2, 128], strides = [1, 1]} : vector<2x384xf32> to vector<2x128xf32>
    %131 = vector.extract_strided_slice %113 {offsets = [0, 256], sizes = [2, 128], strides = [1, 1]} : vector<2x384xf32> to vector<2x128xf32>
    %132 = arith.mulf %121, %131 : vector<2x128xf32>
    %133 = arith.addf %130, %132 : vector<2x128xf32>
    %134 = math.tanh %133 : vector<2x128xf32>
    %cst_41 = arith.constant 1.000000e+00 : f32
    %135 = vector.broadcast %cst_41 : f32 to vector<2x128xf32>
    %136 = arith.subf %135, %129 : vector<2x128xf32>
    %137 = arith.mulf %136, %134 : vector<2x128xf32>
    %138 = arith.mulf %129, %38 : vector<2x128xf32>
    %139 = arith.addf %137, %138 : vector<2x128xf32>
    %140 = tpu.concatenate %139, %72 in 1 : vector<2x128xf32>, vector<2x128xf32> -> vector<2x256xf32>
    %c0_42 = arith.constant 0 : index
    %c0_43 = arith.constant 0 : index
    %141 = vector.load %arg5[%c0_42, %c0_43] : memref<256x768xf32, #tpu.memory_space<vmem>>, vector<256x768xf32>
    %cst_44 = arith.constant dense<0.000000e+00> : vector<2x768xf32>
    %142 = tpu.matmul %140, %141, %cst_44 {dimension_numbers = #tpu.dot_dimension_numbers<[1], [0], [0], [1], [0, 0, 1, 1], [], []>} : vector<2x256xf32>, vector<256x768xf32>, vector<2x768xf32> -> vector<2x768xf32>
    %c0_45 = arith.constant 0 : index
    %c0_46 = arith.constant 0 : index
    %143 = vector.load %arg6[%c0_45, %c0_46] : memref<1x768xf32, #tpu.memory_space<vmem>>, vector<1x768xf32>
    %144 = vector.broadcast %143 : vector<1x768xf32> to vector<2x768xf32>
    %145 = arith.addf %142, %144 : vector<2x768xf32>
    %146 = vector.extract_strided_slice %145 {offsets = [0, 0], sizes = [2, 384], strides = [1, 1]} : vector<2x768xf32> to vector<2x384xf32>
    %147 = vector.extract_strided_slice %145 {offsets = [0, 384], sizes = [2, 384], strides = [1, 1]} : vector<2x768xf32> to vector<2x384xf32>
    %148 = vector.extract_strided_slice %146 {offsets = [0, 0], sizes = [2, 128], strides = [1, 1]} : vector<2x384xf32> to vector<2x128xf32>
    %149 = vector.extract_strided_slice %147 {offsets = [0, 0], sizes = [2, 128], strides = [1, 1]} : vector<2x384xf32> to vector<2x128xf32>
    %150 = arith.addf %148, %149 : vector<2x128xf32>
    %151 = arith.negf %150 : vector<2x128xf32>
    %152 = math.exp %151 : vector<2x128xf32>
    %cst_47 = arith.constant 1.000000e+00 : f32
    %153 = vector.broadcast %cst_47 : f32 to vector<2x128xf32>
    %154 = arith.addf %153, %152 : vector<2x128xf32>
    %155 = arith.divf %153, %154 : vector<2x128xf32>
    %156 = vector.extract_strided_slice %146 {offsets = [0, 128], sizes = [2, 128], strides = [1, 1]} : vector<2x384xf32> to vector<2x128xf32>
    %157 = vector.extract_strided_slice %147 {offsets = [0, 128], sizes = [2, 128], strides = [1, 1]} : vector<2x384xf32> to vector<2x128xf32>
    %158 = arith.addf %156, %157 : vector<2x128xf32>
    %159 = arith.negf %158 : vector<2x128xf32>
    %160 = math.exp %159 : vector<2x128xf32>
    %cst_48 = arith.constant 1.000000e+00 : f32
    %161 = vector.broadcast %cst_48 : f32 to vector<2x128xf32>
    %162 = arith.addf %161, %160 : vector<2x128xf32>
    %163 = arith.divf %161, %162 : vector<2x128xf32>
    %164 = vector.extract_strided_slice %146 {offsets = [0, 256], sizes = [2, 128], strides = [1, 1]} : vector<2x384xf32> to vector<2x128xf32>
    %165 = vector.extract_strided_slice %147 {offsets = [0, 256], sizes = [2, 128], strides = [1, 1]} : vector<2x384xf32> to vector<2x128xf32>
    %166 = arith.mulf %155, %165 : vector<2x128xf32>
    %167 = arith.addf %164, %166 : vector<2x128xf32>
    %168 = math.tanh %167 : vector<2x128xf32>
    %cst_49 = arith.constant 1.000000e+00 : f32
    %169 = vector.broadcast %cst_49 : f32 to vector<2x128xf32>
    %170 = arith.subf %169, %163 : vector<2x128xf32>
    %171 = arith.mulf %170, %168 : vector<2x128xf32>
    %172 = arith.mulf %163, %72 : vector<2x128xf32>
    %173 = arith.addf %171, %172 : vector<2x128xf32>
    %174 = tpu.concatenate %173, %106 in 1 : vector<2x128xf32>, vector<2x128xf32> -> vector<2x256xf32>
    %c0_50 = arith.constant 0 : index
    %c0_51 = arith.constant 0 : index
    %175 = vector.load %arg7[%c0_50, %c0_51] : memref<256x768xf32, #tpu.memory_space<vmem>>, vector<256x768xf32>
    %cst_52 = arith.constant dense<0.000000e+00> : vector<2x768xf32>
    %176 = tpu.matmul %174, %175, %cst_52 {dimension_numbers = #tpu.dot_dimension_numbers<[1], [0], [0], [1], [0, 0, 1, 1], [], []>} : vector<2x256xf32>, vector<256x768xf32>, vector<2x768xf32> -> vector<2x768xf32>
    %c0_53 = arith.constant 0 : index
    %c0_54 = arith.constant 0 : index
    %177 = vector.load %arg8[%c0_53, %c0_54] : memref<1x768xf32, #tpu.memory_space<vmem>>, vector<1x768xf32>
    %178 = vector.broadcast %177 : vector<1x768xf32> to vector<2x768xf32>
    %179 = arith.addf %176, %178 : vector<2x768xf32>
    %180 = vector.extract_strided_slice %179 {offsets = [0, 0], sizes = [2, 384], strides = [1, 1]} : vector<2x768xf32> to vector<2x384xf32>
    %181 = vector.extract_strided_slice %179 {offsets = [0, 384], sizes = [2, 384], strides = [1, 1]} : vector<2x768xf32> to vector<2x384xf32>
    %182 = vector.extract_strided_slice %180 {offsets = [0, 0], sizes = [2, 128], strides = [1, 1]} : vector<2x384xf32> to vector<2x128xf32>
    %183 = vector.extract_strided_slice %181 {offsets = [0, 0], sizes = [2, 128], strides = [1, 1]} : vector<2x384xf32> to vector<2x128xf32>
    %184 = arith.addf %182, %183 : vector<2x128xf32>
    %185 = arith.negf %184 : vector<2x128xf32>
    %186 = math.exp %185 : vector<2x128xf32>
    %cst_55 = arith.constant 1.000000e+00 : f32
    %187 = vector.broadcast %cst_55 : f32 to vector<2x128xf32>
    %188 = arith.addf %187, %186 : vector<2x128xf32>
    %189 = arith.divf %187, %188 : vector<2x128xf32>
    %190 = vector.extract_strided_slice %180 {offsets = [0, 128], sizes = [2, 128], strides = [1, 1]} : vector<2x384xf32> to vector<2x128xf32>
    %191 = vector.extract_strided_slice %181 {offsets = [0, 128], sizes = [2, 128], strides = [1, 1]} : vector<2x384xf32> to vector<2x128xf32>
    %192 = arith.addf %190, %191 : vector<2x128xf32>
    %193 = arith.negf %192 : vector<2x128xf32>
    %194 = math.exp %193 : vector<2x128xf32>
    %cst_56 = arith.constant 1.000000e+00 : f32
    %195 = vector.broadcast %cst_56 : f32 to vector<2x128xf32>
    %196 = arith.addf %195, %194 : vector<2x128xf32>
    %197 = arith.divf %195, %196 : vector<2x128xf32>
    %198 = vector.extract_strided_slice %180 {offsets = [0, 256], sizes = [2, 128], strides = [1, 1]} : vector<2x384xf32> to vector<2x128xf32>
    %199 = vector.extract_strided_slice %181 {offsets = [0, 256], sizes = [2, 128], strides = [1, 1]} : vector<2x384xf32> to vector<2x128xf32>
    %200 = arith.mulf %189, %199 : vector<2x128xf32>
    %201 = arith.addf %198, %200 : vector<2x128xf32>
    %202 = math.tanh %201 : vector<2x128xf32>
    %cst_57 = arith.constant 1.000000e+00 : f32
    %203 = vector.broadcast %cst_57 : f32 to vector<2x128xf32>
    %204 = arith.subf %203, %197 : vector<2x128xf32>
    %205 = arith.mulf %204, %202 : vector<2x128xf32>
    %206 = arith.mulf %197, %106 : vector<2x128xf32>
    %207 = arith.addf %205, %206 : vector<2x128xf32>
    %c2 = arith.constant 2 : index
    %c0_58 = arith.constant 0 : index
    %c0_59 = arith.constant 0 : index
    %208 = vector.load %arg2[%c2, %c0_58, %c0_59] : memref<8x2x384xf32, #tpu.memory_space<vmem>>, vector<1x2x384xf32>
    %209 = vector.shape_cast %208 : vector<1x2x384xf32> to vector<2x384xf32>
    %c0_60 = arith.constant 0 : index
    %c0_61 = arith.constant 0 : index
    %210 = vector.load %arg3[%c0_60, %c0_61] : memref<128x384xf32, #tpu.memory_space<vmem>>, vector<128x384xf32>
    %cst_62 = arith.constant dense<0.000000e+00> : vector<2x384xf32>
    %211 = tpu.matmul %139, %210, %cst_62 {dimension_numbers = #tpu.dot_dimension_numbers<[1], [0], [0], [1], [0, 0, 1, 1], [], []>} : vector<2x128xf32>, vector<128x384xf32>, vector<2x384xf32> -> vector<2x384xf32>
    %c0_63 = arith.constant 0 : index
    %c0_64 = arith.constant 0 : index
    %212 = vector.load %arg4[%c0_63, %c0_64] : memref<1x384xf32, #tpu.memory_space<vmem>>, vector<1x384xf32>
    %213 = vector.broadcast %212 : vector<1x384xf32> to vector<2x384xf32>
    %214 = arith.addf %211, %213 : vector<2x384xf32>
    %215 = vector.extract_strided_slice %209 {offsets = [0, 0], sizes = [2, 128], strides = [1, 1]} : vector<2x384xf32> to vector<2x128xf32>
    %216 = vector.extract_strided_slice %214 {offsets = [0, 0], sizes = [2, 128], strides = [1, 1]} : vector<2x384xf32> to vector<2x128xf32>
    %217 = arith.addf %215, %216 : vector<2x128xf32>
    %218 = arith.negf %217 : vector<2x128xf32>
    %219 = math.exp %218 : vector<2x128xf32>
    %cst_65 = arith.constant 1.000000e+00 : f32
    %220 = vector.broadcast %cst_65 : f32 to vector<2x128xf32>
    %221 = arith.addf %220, %219 : vector<2x128xf32>
    %222 = arith.divf %220, %221 : vector<2x128xf32>
    %223 = vector.extract_strided_slice %209 {offsets = [0, 128], sizes = [2, 128], strides = [1, 1]} : vector<2x384xf32> to vector<2x128xf32>
    %224 = vector.extract_strided_slice %214 {offsets = [0, 128], sizes = [2, 128], strides = [1, 1]} : vector<2x384xf32> to vector<2x128xf32>
    %225 = arith.addf %223, %224 : vector<2x128xf32>
    %226 = arith.negf %225 : vector<2x128xf32>
    %227 = math.exp %226 : vector<2x128xf32>
    %cst_66 = arith.constant 1.000000e+00 : f32
    %228 = vector.broadcast %cst_66 : f32 to vector<2x128xf32>
    %229 = arith.addf %228, %227 : vector<2x128xf32>
    %230 = arith.divf %228, %229 : vector<2x128xf32>
    %231 = vector.extract_strided_slice %209 {offsets = [0, 256], sizes = [2, 128], strides = [1, 1]} : vector<2x384xf32> to vector<2x128xf32>
    %232 = vector.extract_strided_slice %214 {offsets = [0, 256], sizes = [2, 128], strides = [1, 1]} : vector<2x384xf32> to vector<2x128xf32>
    %233 = arith.mulf %222, %232 : vector<2x128xf32>
    %234 = arith.addf %231, %233 : vector<2x128xf32>
    %235 = math.tanh %234 : vector<2x128xf32>
    %cst_67 = arith.constant 1.000000e+00 : f32
    %236 = vector.broadcast %cst_67 : f32 to vector<2x128xf32>
    %237 = arith.subf %236, %230 : vector<2x128xf32>
    %238 = arith.mulf %237, %235 : vector<2x128xf32>
    %239 = arith.mulf %230, %139 : vector<2x128xf32>
    %240 = arith.addf %238, %239 : vector<2x128xf32>
    %241 = tpu.concatenate %240, %173 in 1 : vector<2x128xf32>, vector<2x128xf32> -> vector<2x256xf32>
    %c0_68 = arith.constant 0 : index
    %c0_69 = arith.constant 0 : index
    %242 = vector.load %arg5[%c0_68, %c0_69] : memref<256x768xf32, #tpu.memory_space<vmem>>, vector<256x768xf32>
    %cst_70 = arith.constant dense<0.000000e+00> : vector<2x768xf32>
    %243 = tpu.matmul %241, %242, %cst_70 {dimension_numbers = #tpu.dot_dimension_numbers<[1], [0], [0], [1], [0, 0, 1, 1], [], []>} : vector<2x256xf32>, vector<256x768xf32>, vector<2x768xf32> -> vector<2x768xf32>
    %c0_71 = arith.constant 0 : index
    %c0_72 = arith.constant 0 : index
    %244 = vector.load %arg6[%c0_71, %c0_72] : memref<1x768xf32, #tpu.memory_space<vmem>>, vector<1x768xf32>
    %245 = vector.broadcast %244 : vector<1x768xf32> to vector<2x768xf32>
    %246 = arith.addf %243, %245 : vector<2x768xf32>
    %247 = vector.extract_strided_slice %246 {offsets = [0, 0], sizes = [2, 384], strides = [1, 1]} : vector<2x768xf32> to vector<2x384xf32>
    %248 = vector.extract_strided_slice %246 {offsets = [0, 384], sizes = [2, 384], strides = [1, 1]} : vector<2x768xf32> to vector<2x384xf32>
    %249 = vector.extract_strided_slice %247 {offsets = [0, 0], sizes = [2, 128], strides = [1, 1]} : vector<2x384xf32> to vector<2x128xf32>
    %250 = vector.extract_strided_slice %248 {offsets = [0, 0], sizes = [2, 128], strides = [1, 1]} : vector<2x384xf32> to vector<2x128xf32>
    %251 = arith.addf %249, %250 : vector<2x128xf32>
    %252 = arith.negf %251 : vector<2x128xf32>
    %253 = math.exp %252 : vector<2x128xf32>
    %cst_73 = arith.constant 1.000000e+00 : f32
    %254 = vector.broadcast %cst_73 : f32 to vector<2x128xf32>
    %255 = arith.addf %254, %253 : vector<2x128xf32>
    %256 = arith.divf %254, %255 : vector<2x128xf32>
    %257 = vector.extract_strided_slice %247 {offsets = [0, 128], sizes = [2, 128], strides = [1, 1]} : vector<2x384xf32> to vector<2x128xf32>
    %258 = vector.extract_strided_slice %248 {offsets = [0, 128], sizes = [2, 128], strides = [1, 1]} : vector<2x384xf32> to vector<2x128xf32>
    %259 = arith.addf %257, %258 : vector<2x128xf32>
    %260 = arith.negf %259 : vector<2x128xf32>
    %261 = math.exp %260 : vector<2x128xf32>
    %cst_74 = arith.constant 1.000000e+00 : f32
    %262 = vector.broadcast %cst_74 : f32 to vector<2x128xf32>
    %263 = arith.addf %262, %261 : vector<2x128xf32>
    %264 = arith.divf %262, %263 : vector<2x128xf32>
    %265 = vector.extract_strided_slice %247 {offsets = [0, 256], sizes = [2, 128], strides = [1, 1]} : vector<2x384xf32> to vector<2x128xf32>
    %266 = vector.extract_strided_slice %248 {offsets = [0, 256], sizes = [2, 128], strides = [1, 1]} : vector<2x384xf32> to vector<2x128xf32>
    %267 = arith.mulf %256, %266 : vector<2x128xf32>
    %268 = arith.addf %265, %267 : vector<2x128xf32>
    %269 = math.tanh %268 : vector<2x128xf32>
    %cst_75 = arith.constant 1.000000e+00 : f32
    %270 = vector.broadcast %cst_75 : f32 to vector<2x128xf32>
    %271 = arith.subf %270, %264 : vector<2x128xf32>
    %272 = arith.mulf %271, %269 : vector<2x128xf32>
    %273 = arith.mulf %264, %173 : vector<2x128xf32>
    %274 = arith.addf %272, %273 : vector<2x128xf32>
    %275 = tpu.concatenate %274, %207 in 1 : vector<2x128xf32>, vector<2x128xf32> -> vector<2x256xf32>
    %c0_76 = arith.constant 0 : index
    %c0_77 = arith.constant 0 : index
    %276 = vector.load %arg7[%c0_76, %c0_77] : memref<256x768xf32, #tpu.memory_space<vmem>>, vector<256x768xf32>
    %cst_78 = arith.constant dense<0.000000e+00> : vector<2x768xf32>
    %277 = tpu.matmul %275, %276, %cst_78 {dimension_numbers = #tpu.dot_dimension_numbers<[1], [0], [0], [1], [0, 0, 1, 1], [], []>} : vector<2x256xf32>, vector<256x768xf32>, vector<2x768xf32> -> vector<2x768xf32>
    %c0_79 = arith.constant 0 : index
    %c0_80 = arith.constant 0 : index
    %278 = vector.load %arg8[%c0_79, %c0_80] : memref<1x768xf32, #tpu.memory_space<vmem>>, vector<1x768xf32>
    %279 = vector.broadcast %278 : vector<1x768xf32> to vector<2x768xf32>
    %280 = arith.addf %277, %279 : vector<2x768xf32>
    %281 = vector.extract_strided_slice %280 {offsets = [0, 0], sizes = [2, 384], strides = [1, 1]} : vector<2x768xf32> to vector<2x384xf32>
    %282 = vector.extract_strided_slice %280 {offsets = [0, 384], sizes = [2, 384], strides = [1, 1]} : vector<2x768xf32> to vector<2x384xf32>
    %283 = vector.extract_strided_slice %281 {offsets = [0, 0], sizes = [2, 128], strides = [1, 1]} : vector<2x384xf32> to vector<2x128xf32>
    %284 = vector.extract_strided_slice %282 {offsets = [0, 0], sizes = [2, 128], strides = [1, 1]} : vector<2x384xf32> to vector<2x128xf32>
    %285 = arith.addf %283, %284 : vector<2x128xf32>
    %286 = arith.negf %285 : vector<2x128xf32>
    %287 = math.exp %286 : vector<2x128xf32>
    %cst_81 = arith.constant 1.000000e+00 : f32
    %288 = vector.broadcast %cst_81 : f32 to vector<2x128xf32>
    %289 = arith.addf %288, %287 : vector<2x128xf32>
    %290 = arith.divf %288, %289 : vector<2x128xf32>
    %291 = vector.extract_strided_slice %281 {offsets = [0, 128], sizes = [2, 128], strides = [1, 1]} : vector<2x384xf32> to vector<2x128xf32>
    %292 = vector.extract_strided_slice %282 {offsets = [0, 128], sizes = [2, 128], strides = [1, 1]} : vector<2x384xf32> to vector<2x128xf32>
    %293 = arith.addf %291, %292 : vector<2x128xf32>
    %294 = arith.negf %293 : vector<2x128xf32>
    %295 = math.exp %294 : vector<2x128xf32>
    %cst_82 = arith.constant 1.000000e+00 : f32
    %296 = vector.broadcast %cst_82 : f32 to vector<2x128xf32>
    %297 = arith.addf %296, %295 : vector<2x128xf32>
    %298 = arith.divf %296, %297 : vector<2x128xf32>
    %299 = vector.extract_strided_slice %281 {offsets = [0, 256], sizes = [2, 128], strides = [1, 1]} : vector<2x384xf32> to vector<2x128xf32>
    %300 = vector.extract_strided_slice %282 {offsets = [0, 256], sizes = [2, 128], strides = [1, 1]} : vector<2x384xf32> to vector<2x128xf32>
    %301 = arith.mulf %290, %300 : vector<2x128xf32>
    %302 = arith.addf %299, %301 : vector<2x128xf32>
    %303 = math.tanh %302 : vector<2x128xf32>
    %cst_83 = arith.constant 1.000000e+00 : f32
    %304 = vector.broadcast %cst_83 : f32 to vector<2x128xf32>
    %305 = arith.subf %304, %298 : vector<2x128xf32>
    %306 = arith.mulf %305, %303 : vector<2x128xf32>
    %307 = arith.mulf %298, %207 : vector<2x128xf32>
    %308 = arith.addf %306, %307 : vector<2x128xf32>
    %c3 = arith.constant 3 : index
    %c0_84 = arith.constant 0 : index
    %c0_85 = arith.constant 0 : index
    %309 = vector.load %arg2[%c3, %c0_84, %c0_85] : memref<8x2x384xf32, #tpu.memory_space<vmem>>, vector<1x2x384xf32>
    %310 = vector.shape_cast %309 : vector<1x2x384xf32> to vector<2x384xf32>
    %c0_86 = arith.constant 0 : index
    %c0_87 = arith.constant 0 : index
    %311 = vector.load %arg3[%c0_86, %c0_87] : memref<128x384xf32, #tpu.memory_space<vmem>>, vector<128x384xf32>
    %cst_88 = arith.constant dense<0.000000e+00> : vector<2x384xf32>
    %312 = tpu.matmul %240, %311, %cst_88 {dimension_numbers = #tpu.dot_dimension_numbers<[1], [0], [0], [1], [0, 0, 1, 1], [], []>} : vector<2x128xf32>, vector<128x384xf32>, vector<2x384xf32> -> vector<2x384xf32>
    %c0_89 = arith.constant 0 : index
    %c0_90 = arith.constant 0 : index
    %313 = vector.load %arg4[%c0_89, %c0_90] : memref<1x384xf32, #tpu.memory_space<vmem>>, vector<1x384xf32>
    %314 = vector.broadcast %313 : vector<1x384xf32> to vector<2x384xf32>
    %315 = arith.addf %312, %314 : vector<2x384xf32>
    %316 = vector.extract_strided_slice %310 {offsets = [0, 0], sizes = [2, 128], strides = [1, 1]} : vector<2x384xf32> to vector<2x128xf32>
    %317 = vector.extract_strided_slice %315 {offsets = [0, 0], sizes = [2, 128], strides = [1, 1]} : vector<2x384xf32> to vector<2x128xf32>
    %318 = arith.addf %316, %317 : vector<2x128xf32>
    %319 = arith.negf %318 : vector<2x128xf32>
    %320 = math.exp %319 : vector<2x128xf32>
    %cst_91 = arith.constant 1.000000e+00 : f32
    %321 = vector.broadcast %cst_91 : f32 to vector<2x128xf32>
    %322 = arith.addf %321, %320 : vector<2x128xf32>
    %323 = arith.divf %321, %322 : vector<2x128xf32>
    %324 = vector.extract_strided_slice %310 {offsets = [0, 128], sizes = [2, 128], strides = [1, 1]} : vector<2x384xf32> to vector<2x128xf32>
    %325 = vector.extract_strided_slice %315 {offsets = [0, 128], sizes = [2, 128], strides = [1, 1]} : vector<2x384xf32> to vector<2x128xf32>
    %326 = arith.addf %324, %325 : vector<2x128xf32>
    %327 = arith.negf %326 : vector<2x128xf32>
    %328 = math.exp %327 : vector<2x128xf32>
    %cst_92 = arith.constant 1.000000e+00 : f32
    %329 = vector.broadcast %cst_92 : f32 to vector<2x128xf32>
    %330 = arith.addf %329, %328 : vector<2x128xf32>
    %331 = arith.divf %329, %330 : vector<2x128xf32>
    %332 = vector.extract_strided_slice %310 {offsets = [0, 256], sizes = [2, 128], strides = [1, 1]} : vector<2x384xf32> to vector<2x128xf32>
    %333 = vector.extract_strided_slice %315 {offsets = [0, 256], sizes = [2, 128], strides = [1, 1]} : vector<2x384xf32> to vector<2x128xf32>
    %334 = arith.mulf %323, %333 : vector<2x128xf32>
    %335 = arith.addf %332, %334 : vector<2x128xf32>
    %336 = math.tanh %335 : vector<2x128xf32>
    %cst_93 = arith.constant 1.000000e+00 : f32
    %337 = vector.broadcast %cst_93 : f32 to vector<2x128xf32>
    %338 = arith.subf %337, %331 : vector<2x128xf32>
    %339 = arith.mulf %338, %336 : vector<2x128xf32>
    %340 = arith.mulf %331, %240 : vector<2x128xf32>
    %341 = arith.addf %339, %340 : vector<2x128xf32>
    %342 = tpu.concatenate %341, %274 in 1 : vector<2x128xf32>, vector<2x128xf32> -> vector<2x256xf32>
    %c0_94 = arith.constant 0 : index
    %c0_95 = arith.constant 0 : index
    %343 = vector.load %arg5[%c0_94, %c0_95] : memref<256x768xf32, #tpu.memory_space<vmem>>, vector<256x768xf32>
    %cst_96 = arith.constant dense<0.000000e+00> : vector<2x768xf32>
    %344 = tpu.matmul %342, %343, %cst_96 {dimension_numbers = #tpu.dot_dimension_numbers<[1], [0], [0], [1], [0, 0, 1, 1], [], []>} : vector<2x256xf32>, vector<256x768xf32>, vector<2x768xf32> -> vector<2x768xf32>
    %c0_97 = arith.constant 0 : index
    %c0_98 = arith.constant 0 : index
    %345 = vector.load %arg6[%c0_97, %c0_98] : memref<1x768xf32, #tpu.memory_space<vmem>>, vector<1x768xf32>
    %346 = vector.broadcast %345 : vector<1x768xf32> to vector<2x768xf32>
    %347 = arith.addf %344, %346 : vector<2x768xf32>
    %348 = vector.extract_strided_slice %347 {offsets = [0, 0], sizes = [2, 384], strides = [1, 1]} : vector<2x768xf32> to vector<2x384xf32>
    %349 = vector.extract_strided_slice %347 {offsets = [0, 384], sizes = [2, 384], strides = [1, 1]} : vector<2x768xf32> to vector<2x384xf32>
    %350 = vector.extract_strided_slice %348 {offsets = [0, 0], sizes = [2, 128], strides = [1, 1]} : vector<2x384xf32> to vector<2x128xf32>
    %351 = vector.extract_strided_slice %349 {offsets = [0, 0], sizes = [2, 128], strides = [1, 1]} : vector<2x384xf32> to vector<2x128xf32>
    %352 = arith.addf %350, %351 : vector<2x128xf32>
    %353 = arith.negf %352 : vector<2x128xf32>
    %354 = math.exp %353 : vector<2x128xf32>
    %cst_99 = arith.constant 1.000000e+00 : f32
    %355 = vector.broadcast %cst_99 : f32 to vector<2x128xf32>
    %356 = arith.addf %355, %354 : vector<2x128xf32>
    %357 = arith.divf %355, %356 : vector<2x128xf32>
    %358 = vector.extract_strided_slice %348 {offsets = [0, 128], sizes = [2, 128], strides = [1, 1]} : vector<2x384xf32> to vector<2x128xf32>
    %359 = vector.extract_strided_slice %349 {offsets = [0, 128], sizes = [2, 128], strides = [1, 1]} : vector<2x384xf32> to vector<2x128xf32>
    %360 = arith.addf %358, %359 : vector<2x128xf32>
    %361 = arith.negf %360 : vector<2x128xf32>
    %362 = math.exp %361 : vector<2x128xf32>
    %cst_100 = arith.constant 1.000000e+00 : f32
    %363 = vector.broadcast %cst_100 : f32 to vector<2x128xf32>
    %364 = arith.addf %363, %362 : vector<2x128xf32>
    %365 = arith.divf %363, %364 : vector<2x128xf32>
    %366 = vector.extract_strided_slice %348 {offsets = [0, 256], sizes = [2, 128], strides = [1, 1]} : vector<2x384xf32> to vector<2x128xf32>
    %367 = vector.extract_strided_slice %349 {offsets = [0, 256], sizes = [2, 128], strides = [1, 1]} : vector<2x384xf32> to vector<2x128xf32>
    %368 = arith.mulf %357, %367 : vector<2x128xf32>
    %369 = arith.addf %366, %368 : vector<2x128xf32>
    %370 = math.tanh %369 : vector<2x128xf32>
    %cst_101 = arith.constant 1.000000e+00 : f32
    %371 = vector.broadcast %cst_101 : f32 to vector<2x128xf32>
    %372 = arith.subf %371, %365 : vector<2x128xf32>
    %373 = arith.mulf %372, %370 : vector<2x128xf32>
    %374 = arith.mulf %365, %274 : vector<2x128xf32>
    %375 = arith.addf %373, %374 : vector<2x128xf32>
    %376 = tpu.concatenate %375, %308 in 1 : vector<2x128xf32>, vector<2x128xf32> -> vector<2x256xf32>
    %c0_102 = arith.constant 0 : index
    %c0_103 = arith.constant 0 : index
    %377 = vector.load %arg7[%c0_102, %c0_103] : memref<256x768xf32, #tpu.memory_space<vmem>>, vector<256x768xf32>
    %cst_104 = arith.constant dense<0.000000e+00> : vector<2x768xf32>
    %378 = tpu.matmul %376, %377, %cst_104 {dimension_numbers = #tpu.dot_dimension_numbers<[1], [0], [0], [1], [0, 0, 1, 1], [], []>} : vector<2x256xf32>, vector<256x768xf32>, vector<2x768xf32> -> vector<2x768xf32>
    %c0_105 = arith.constant 0 : index
    %c0_106 = arith.constant 0 : index
    %379 = vector.load %arg8[%c0_105, %c0_106] : memref<1x768xf32, #tpu.memory_space<vmem>>, vector<1x768xf32>
    %380 = vector.broadcast %379 : vector<1x768xf32> to vector<2x768xf32>
    %381 = arith.addf %378, %380 : vector<2x768xf32>
    %382 = vector.extract_strided_slice %381 {offsets = [0, 0], sizes = [2, 384], strides = [1, 1]} : vector<2x768xf32> to vector<2x384xf32>
    %383 = vector.extract_strided_slice %381 {offsets = [0, 384], sizes = [2, 384], strides = [1, 1]} : vector<2x768xf32> to vector<2x384xf32>
    %384 = vector.extract_strided_slice %382 {offsets = [0, 0], sizes = [2, 128], strides = [1, 1]} : vector<2x384xf32> to vector<2x128xf32>
    %385 = vector.extract_strided_slice %383 {offsets = [0, 0], sizes = [2, 128], strides = [1, 1]} : vector<2x384xf32> to vector<2x128xf32>
    %386 = arith.addf %384, %385 : vector<2x128xf32>
    %387 = arith.negf %386 : vector<2x128xf32>
    %388 = math.exp %387 : vector<2x128xf32>
    %cst_107 = arith.constant 1.000000e+00 : f32
    %389 = vector.broadcast %cst_107 : f32 to vector<2x128xf32>
    %390 = arith.addf %389, %388 : vector<2x128xf32>
    %391 = arith.divf %389, %390 : vector<2x128xf32>
    %392 = vector.extract_strided_slice %382 {offsets = [0, 128], sizes = [2, 128], strides = [1, 1]} : vector<2x384xf32> to vector<2x128xf32>
    %393 = vector.extract_strided_slice %383 {offsets = [0, 128], sizes = [2, 128], strides = [1, 1]} : vector<2x384xf32> to vector<2x128xf32>
    %394 = arith.addf %392, %393 : vector<2x128xf32>
    %395 = arith.negf %394 : vector<2x128xf32>
    %396 = math.exp %395 : vector<2x128xf32>
    %cst_108 = arith.constant 1.000000e+00 : f32
    %397 = vector.broadcast %cst_108 : f32 to vector<2x128xf32>
    %398 = arith.addf %397, %396 : vector<2x128xf32>
    %399 = arith.divf %397, %398 : vector<2x128xf32>
    %400 = vector.extract_strided_slice %382 {offsets = [0, 256], sizes = [2, 128], strides = [1, 1]} : vector<2x384xf32> to vector<2x128xf32>
    %401 = vector.extract_strided_slice %383 {offsets = [0, 256], sizes = [2, 128], strides = [1, 1]} : vector<2x384xf32> to vector<2x128xf32>
    %402 = arith.mulf %391, %401 : vector<2x128xf32>
    %403 = arith.addf %400, %402 : vector<2x128xf32>
    %404 = math.tanh %403 : vector<2x128xf32>
    %cst_109 = arith.constant 1.000000e+00 : f32
    %405 = vector.broadcast %cst_109 : f32 to vector<2x128xf32>
    %406 = arith.subf %405, %399 : vector<2x128xf32>
    %407 = arith.mulf %406, %404 : vector<2x128xf32>
    %408 = arith.mulf %399, %308 : vector<2x128xf32>
    %409 = arith.addf %407, %408 : vector<2x128xf32>
    %c4 = arith.constant 4 : index
    %c0_110 = arith.constant 0 : index
    %c0_111 = arith.constant 0 : index
    %410 = vector.load %arg2[%c4, %c0_110, %c0_111] : memref<8x2x384xf32, #tpu.memory_space<vmem>>, vector<1x2x384xf32>
    %411 = vector.shape_cast %410 : vector<1x2x384xf32> to vector<2x384xf32>
    %c0_112 = arith.constant 0 : index
    %c0_113 = arith.constant 0 : index
    %412 = vector.load %arg3[%c0_112, %c0_113] : memref<128x384xf32, #tpu.memory_space<vmem>>, vector<128x384xf32>
    %cst_114 = arith.constant dense<0.000000e+00> : vector<2x384xf32>
    %413 = tpu.matmul %341, %412, %cst_114 {dimension_numbers = #tpu.dot_dimension_numbers<[1], [0], [0], [1], [0, 0, 1, 1], [], []>} : vector<2x128xf32>, vector<128x384xf32>, vector<2x384xf32> -> vector<2x384xf32>
    %c0_115 = arith.constant 0 : index
    %c0_116 = arith.constant 0 : index
    %414 = vector.load %arg4[%c0_115, %c0_116] : memref<1x384xf32, #tpu.memory_space<vmem>>, vector<1x384xf32>
    %415 = vector.broadcast %414 : vector<1x384xf32> to vector<2x384xf32>
    %416 = arith.addf %413, %415 : vector<2x384xf32>
    %417 = vector.extract_strided_slice %411 {offsets = [0, 0], sizes = [2, 128], strides = [1, 1]} : vector<2x384xf32> to vector<2x128xf32>
    %418 = vector.extract_strided_slice %416 {offsets = [0, 0], sizes = [2, 128], strides = [1, 1]} : vector<2x384xf32> to vector<2x128xf32>
    %419 = arith.addf %417, %418 : vector<2x128xf32>
    %420 = arith.negf %419 : vector<2x128xf32>
    %421 = math.exp %420 : vector<2x128xf32>
    %cst_117 = arith.constant 1.000000e+00 : f32
    %422 = vector.broadcast %cst_117 : f32 to vector<2x128xf32>
    %423 = arith.addf %422, %421 : vector<2x128xf32>
    %424 = arith.divf %422, %423 : vector<2x128xf32>
    %425 = vector.extract_strided_slice %411 {offsets = [0, 128], sizes = [2, 128], strides = [1, 1]} : vector<2x384xf32> to vector<2x128xf32>
    %426 = vector.extract_strided_slice %416 {offsets = [0, 128], sizes = [2, 128], strides = [1, 1]} : vector<2x384xf32> to vector<2x128xf32>
    %427 = arith.addf %425, %426 : vector<2x128xf32>
    %428 = arith.negf %427 : vector<2x128xf32>
    %429 = math.exp %428 : vector<2x128xf32>
    %cst_118 = arith.constant 1.000000e+00 : f32
    %430 = vector.broadcast %cst_118 : f32 to vector<2x128xf32>
    %431 = arith.addf %430, %429 : vector<2x128xf32>
    %432 = arith.divf %430, %431 : vector<2x128xf32>
    %433 = vector.extract_strided_slice %411 {offsets = [0, 256], sizes = [2, 128], strides = [1, 1]} : vector<2x384xf32> to vector<2x128xf32>
    %434 = vector.extract_strided_slice %416 {offsets = [0, 256], sizes = [2, 128], strides = [1, 1]} : vector<2x384xf32> to vector<2x128xf32>
    %435 = arith.mulf %424, %434 : vector<2x128xf32>
    %436 = arith.addf %433, %435 : vector<2x128xf32>
    %437 = math.tanh %436 : vector<2x128xf32>
    %cst_119 = arith.constant 1.000000e+00 : f32
    %438 = vector.broadcast %cst_119 : f32 to vector<2x128xf32>
    %439 = arith.subf %438, %432 : vector<2x128xf32>
    %440 = arith.mulf %439, %437 : vector<2x128xf32>
    %441 = arith.mulf %432, %341 : vector<2x128xf32>
    %442 = arith.addf %440, %441 : vector<2x128xf32>
    %443 = tpu.concatenate %442, %375 in 1 : vector<2x128xf32>, vector<2x128xf32> -> vector<2x256xf32>
    %c0_120 = arith.constant 0 : index
    %c0_121 = arith.constant 0 : index
    %444 = vector.load %arg5[%c0_120, %c0_121] : memref<256x768xf32, #tpu.memory_space<vmem>>, vector<256x768xf32>
    %cst_122 = arith.constant dense<0.000000e+00> : vector<2x768xf32>
    %445 = tpu.matmul %443, %444, %cst_122 {dimension_numbers = #tpu.dot_dimension_numbers<[1], [0], [0], [1], [0, 0, 1, 1], [], []>} : vector<2x256xf32>, vector<256x768xf32>, vector<2x768xf32> -> vector<2x768xf32>
    %c0_123 = arith.constant 0 : index
    %c0_124 = arith.constant 0 : index
    %446 = vector.load %arg6[%c0_123, %c0_124] : memref<1x768xf32, #tpu.memory_space<vmem>>, vector<1x768xf32>
    %447 = vector.broadcast %446 : vector<1x768xf32> to vector<2x768xf32>
    %448 = arith.addf %445, %447 : vector<2x768xf32>
    %449 = vector.extract_strided_slice %448 {offsets = [0, 0], sizes = [2, 384], strides = [1, 1]} : vector<2x768xf32> to vector<2x384xf32>
    %450 = vector.extract_strided_slice %448 {offsets = [0, 384], sizes = [2, 384], strides = [1, 1]} : vector<2x768xf32> to vector<2x384xf32>
    %451 = vector.extract_strided_slice %449 {offsets = [0, 0], sizes = [2, 128], strides = [1, 1]} : vector<2x384xf32> to vector<2x128xf32>
    %452 = vector.extract_strided_slice %450 {offsets = [0, 0], sizes = [2, 128], strides = [1, 1]} : vector<2x384xf32> to vector<2x128xf32>
    %453 = arith.addf %451, %452 : vector<2x128xf32>
    %454 = arith.negf %453 : vector<2x128xf32>
    %455 = math.exp %454 : vector<2x128xf32>
    %cst_125 = arith.constant 1.000000e+00 : f32
    %456 = vector.broadcast %cst_125 : f32 to vector<2x128xf32>
    %457 = arith.addf %456, %455 : vector<2x128xf32>
    %458 = arith.divf %456, %457 : vector<2x128xf32>
    %459 = vector.extract_strided_slice %449 {offsets = [0, 128], sizes = [2, 128], strides = [1, 1]} : vector<2x384xf32> to vector<2x128xf32>
    %460 = vector.extract_strided_slice %450 {offsets = [0, 128], sizes = [2, 128], strides = [1, 1]} : vector<2x384xf32> to vector<2x128xf32>
    %461 = arith.addf %459, %460 : vector<2x128xf32>
    %462 = arith.negf %461 : vector<2x128xf32>
    %463 = math.exp %462 : vector<2x128xf32>
    %cst_126 = arith.constant 1.000000e+00 : f32
    %464 = vector.broadcast %cst_126 : f32 to vector<2x128xf32>
    %465 = arith.addf %464, %463 : vector<2x128xf32>
    %466 = arith.divf %464, %465 : vector<2x128xf32>
    %467 = vector.extract_strided_slice %449 {offsets = [0, 256], sizes = [2, 128], strides = [1, 1]} : vector<2x384xf32> to vector<2x128xf32>
    %468 = vector.extract_strided_slice %450 {offsets = [0, 256], sizes = [2, 128], strides = [1, 1]} : vector<2x384xf32> to vector<2x128xf32>
    %469 = arith.mulf %458, %468 : vector<2x128xf32>
    %470 = arith.addf %467, %469 : vector<2x128xf32>
    %471 = math.tanh %470 : vector<2x128xf32>
    %cst_127 = arith.constant 1.000000e+00 : f32
    %472 = vector.broadcast %cst_127 : f32 to vector<2x128xf32>
    %473 = arith.subf %472, %466 : vector<2x128xf32>
    %474 = arith.mulf %473, %471 : vector<2x128xf32>
    %475 = arith.mulf %466, %375 : vector<2x128xf32>
    %476 = arith.addf %474, %475 : vector<2x128xf32>
    %477 = tpu.concatenate %476, %409 in 1 : vector<2x128xf32>, vector<2x128xf32> -> vector<2x256xf32>
    %c0_128 = arith.constant 0 : index
    %c0_129 = arith.constant 0 : index
    %478 = vector.load %arg7[%c0_128, %c0_129] : memref<256x768xf32, #tpu.memory_space<vmem>>, vector<256x768xf32>
    %cst_130 = arith.constant dense<0.000000e+00> : vector<2x768xf32>
    %479 = tpu.matmul %477, %478, %cst_130 {dimension_numbers = #tpu.dot_dimension_numbers<[1], [0], [0], [1], [0, 0, 1, 1], [], []>} : vector<2x256xf32>, vector<256x768xf32>, vector<2x768xf32> -> vector<2x768xf32>
    %c0_131 = arith.constant 0 : index
    %c0_132 = arith.constant 0 : index
    %480 = vector.load %arg8[%c0_131, %c0_132] : memref<1x768xf32, #tpu.memory_space<vmem>>, vector<1x768xf32>
    %481 = vector.broadcast %480 : vector<1x768xf32> to vector<2x768xf32>
    %482 = arith.addf %479, %481 : vector<2x768xf32>
    %483 = vector.extract_strided_slice %482 {offsets = [0, 0], sizes = [2, 384], strides = [1, 1]} : vector<2x768xf32> to vector<2x384xf32>
    %484 = vector.extract_strided_slice %482 {offsets = [0, 384], sizes = [2, 384], strides = [1, 1]} : vector<2x768xf32> to vector<2x384xf32>
    %485 = vector.extract_strided_slice %483 {offsets = [0, 0], sizes = [2, 128], strides = [1, 1]} : vector<2x384xf32> to vector<2x128xf32>
    %486 = vector.extract_strided_slice %484 {offsets = [0, 0], sizes = [2, 128], strides = [1, 1]} : vector<2x384xf32> to vector<2x128xf32>
    %487 = arith.addf %485, %486 : vector<2x128xf32>
    %488 = arith.negf %487 : vector<2x128xf32>
    %489 = math.exp %488 : vector<2x128xf32>
    %cst_133 = arith.constant 1.000000e+00 : f32
    %490 = vector.broadcast %cst_133 : f32 to vector<2x128xf32>
    %491 = arith.addf %490, %489 : vector<2x128xf32>
    %492 = arith.divf %490, %491 : vector<2x128xf32>
    %493 = vector.extract_strided_slice %483 {offsets = [0, 128], sizes = [2, 128], strides = [1, 1]} : vector<2x384xf32> to vector<2x128xf32>
    %494 = vector.extract_strided_slice %484 {offsets = [0, 128], sizes = [2, 128], strides = [1, 1]} : vector<2x384xf32> to vector<2x128xf32>
    %495 = arith.addf %493, %494 : vector<2x128xf32>
    %496 = arith.negf %495 : vector<2x128xf32>
    %497 = math.exp %496 : vector<2x128xf32>
    %cst_134 = arith.constant 1.000000e+00 : f32
    %498 = vector.broadcast %cst_134 : f32 to vector<2x128xf32>
    %499 = arith.addf %498, %497 : vector<2x128xf32>
    %500 = arith.divf %498, %499 : vector<2x128xf32>
    %501 = vector.extract_strided_slice %483 {offsets = [0, 256], sizes = [2, 128], strides = [1, 1]} : vector<2x384xf32> to vector<2x128xf32>
    %502 = vector.extract_strided_slice %484 {offsets = [0, 256], sizes = [2, 128], strides = [1, 1]} : vector<2x384xf32> to vector<2x128xf32>
    %503 = arith.mulf %492, %502 : vector<2x128xf32>
    %504 = arith.addf %501, %503 : vector<2x128xf32>
    %505 = math.tanh %504 : vector<2x128xf32>
    %cst_135 = arith.constant 1.000000e+00 : f32
    %506 = vector.broadcast %cst_135 : f32 to vector<2x128xf32>
    %507 = arith.subf %506, %500 : vector<2x128xf32>
    %508 = arith.mulf %507, %505 : vector<2x128xf32>
    %509 = arith.mulf %500, %409 : vector<2x128xf32>
    %510 = arith.addf %508, %509 : vector<2x128xf32>
    %c5 = arith.constant 5 : index
    %c0_136 = arith.constant 0 : index
    %c0_137 = arith.constant 0 : index
    %511 = vector.load %arg2[%c5, %c0_136, %c0_137] : memref<8x2x384xf32, #tpu.memory_space<vmem>>, vector<1x2x384xf32>
    %512 = vector.shape_cast %511 : vector<1x2x384xf32> to vector<2x384xf32>
    %c0_138 = arith.constant 0 : index
    %c0_139 = arith.constant 0 : index
    %513 = vector.load %arg3[%c0_138, %c0_139] : memref<128x384xf32, #tpu.memory_space<vmem>>, vector<128x384xf32>
    %cst_140 = arith.constant dense<0.000000e+00> : vector<2x384xf32>
    %514 = tpu.matmul %442, %513, %cst_140 {dimension_numbers = #tpu.dot_dimension_numbers<[1], [0], [0], [1], [0, 0, 1, 1], [], []>} : vector<2x128xf32>, vector<128x384xf32>, vector<2x384xf32> -> vector<2x384xf32>
    %c0_141 = arith.constant 0 : index
    %c0_142 = arith.constant 0 : index
    %515 = vector.load %arg4[%c0_141, %c0_142] : memref<1x384xf32, #tpu.memory_space<vmem>>, vector<1x384xf32>
    %516 = vector.broadcast %515 : vector<1x384xf32> to vector<2x384xf32>
    %517 = arith.addf %514, %516 : vector<2x384xf32>
    %518 = vector.extract_strided_slice %512 {offsets = [0, 0], sizes = [2, 128], strides = [1, 1]} : vector<2x384xf32> to vector<2x128xf32>
    %519 = vector.extract_strided_slice %517 {offsets = [0, 0], sizes = [2, 128], strides = [1, 1]} : vector<2x384xf32> to vector<2x128xf32>
    %520 = arith.addf %518, %519 : vector<2x128xf32>
    %521 = arith.negf %520 : vector<2x128xf32>
    %522 = math.exp %521 : vector<2x128xf32>
    %cst_143 = arith.constant 1.000000e+00 : f32
    %523 = vector.broadcast %cst_143 : f32 to vector<2x128xf32>
    %524 = arith.addf %523, %522 : vector<2x128xf32>
    %525 = arith.divf %523, %524 : vector<2x128xf32>
    %526 = vector.extract_strided_slice %512 {offsets = [0, 128], sizes = [2, 128], strides = [1, 1]} : vector<2x384xf32> to vector<2x128xf32>
    %527 = vector.extract_strided_slice %517 {offsets = [0, 128], sizes = [2, 128], strides = [1, 1]} : vector<2x384xf32> to vector<2x128xf32>
    %528 = arith.addf %526, %527 : vector<2x128xf32>
    %529 = arith.negf %528 : vector<2x128xf32>
    %530 = math.exp %529 : vector<2x128xf32>
    %cst_144 = arith.constant 1.000000e+00 : f32
    %531 = vector.broadcast %cst_144 : f32 to vector<2x128xf32>
    %532 = arith.addf %531, %530 : vector<2x128xf32>
    %533 = arith.divf %531, %532 : vector<2x128xf32>
    %534 = vector.extract_strided_slice %512 {offsets = [0, 256], sizes = [2, 128], strides = [1, 1]} : vector<2x384xf32> to vector<2x128xf32>
    %535 = vector.extract_strided_slice %517 {offsets = [0, 256], sizes = [2, 128], strides = [1, 1]} : vector<2x384xf32> to vector<2x128xf32>
    %536 = arith.mulf %525, %535 : vector<2x128xf32>
    %537 = arith.addf %534, %536 : vector<2x128xf32>
    %538 = math.tanh %537 : vector<2x128xf32>
    %cst_145 = arith.constant 1.000000e+00 : f32
    %539 = vector.broadcast %cst_145 : f32 to vector<2x128xf32>
    %540 = arith.subf %539, %533 : vector<2x128xf32>
    %541 = arith.mulf %540, %538 : vector<2x128xf32>
    %542 = arith.mulf %533, %442 : vector<2x128xf32>
    %543 = arith.addf %541, %542 : vector<2x128xf32>
    %544 = tpu.concatenate %543, %476 in 1 : vector<2x128xf32>, vector<2x128xf32> -> vector<2x256xf32>
    %c0_146 = arith.constant 0 : index
    %c0_147 = arith.constant 0 : index
    %545 = vector.load %arg5[%c0_146, %c0_147] : memref<256x768xf32, #tpu.memory_space<vmem>>, vector<256x768xf32>
    %cst_148 = arith.constant dense<0.000000e+00> : vector<2x768xf32>
    %546 = tpu.matmul %544, %545, %cst_148 {dimension_numbers = #tpu.dot_dimension_numbers<[1], [0], [0], [1], [0, 0, 1, 1], [], []>} : vector<2x256xf32>, vector<256x768xf32>, vector<2x768xf32> -> vector<2x768xf32>
    %c0_149 = arith.constant 0 : index
    %c0_150 = arith.constant 0 : index
    %547 = vector.load %arg6[%c0_149, %c0_150] : memref<1x768xf32, #tpu.memory_space<vmem>>, vector<1x768xf32>
    %548 = vector.broadcast %547 : vector<1x768xf32> to vector<2x768xf32>
    %549 = arith.addf %546, %548 : vector<2x768xf32>
    %550 = vector.extract_strided_slice %549 {offsets = [0, 0], sizes = [2, 384], strides = [1, 1]} : vector<2x768xf32> to vector<2x384xf32>
    %551 = vector.extract_strided_slice %549 {offsets = [0, 384], sizes = [2, 384], strides = [1, 1]} : vector<2x768xf32> to vector<2x384xf32>
    %552 = vector.extract_strided_slice %550 {offsets = [0, 0], sizes = [2, 128], strides = [1, 1]} : vector<2x384xf32> to vector<2x128xf32>
    %553 = vector.extract_strided_slice %551 {offsets = [0, 0], sizes = [2, 128], strides = [1, 1]} : vector<2x384xf32> to vector<2x128xf32>
    %554 = arith.addf %552, %553 : vector<2x128xf32>
    %555 = arith.negf %554 : vector<2x128xf32>
    %556 = math.exp %555 : vector<2x128xf32>
    %cst_151 = arith.constant 1.000000e+00 : f32
    %557 = vector.broadcast %cst_151 : f32 to vector<2x128xf32>
    %558 = arith.addf %557, %556 : vector<2x128xf32>
    %559 = arith.divf %557, %558 : vector<2x128xf32>
    %560 = vector.extract_strided_slice %550 {offsets = [0, 128], sizes = [2, 128], strides = [1, 1]} : vector<2x384xf32> to vector<2x128xf32>
    %561 = vector.extract_strided_slice %551 {offsets = [0, 128], sizes = [2, 128], strides = [1, 1]} : vector<2x384xf32> to vector<2x128xf32>
    %562 = arith.addf %560, %561 : vector<2x128xf32>
    %563 = arith.negf %562 : vector<2x128xf32>
    %564 = math.exp %563 : vector<2x128xf32>
    %cst_152 = arith.constant 1.000000e+00 : f32
    %565 = vector.broadcast %cst_152 : f32 to vector<2x128xf32>
    %566 = arith.addf %565, %564 : vector<2x128xf32>
    %567 = arith.divf %565, %566 : vector<2x128xf32>
    %568 = vector.extract_strided_slice %550 {offsets = [0, 256], sizes = [2, 128], strides = [1, 1]} : vector<2x384xf32> to vector<2x128xf32>
    %569 = vector.extract_strided_slice %551 {offsets = [0, 256], sizes = [2, 128], strides = [1, 1]} : vector<2x384xf32> to vector<2x128xf32>
    %570 = arith.mulf %559, %569 : vector<2x128xf32>
    %571 = arith.addf %568, %570 : vector<2x128xf32>
    %572 = math.tanh %571 : vector<2x128xf32>
    %cst_153 = arith.constant 1.000000e+00 : f32
    %573 = vector.broadcast %cst_153 : f32 to vector<2x128xf32>
    %574 = arith.subf %573, %567 : vector<2x128xf32>
    %575 = arith.mulf %574, %572 : vector<2x128xf32>
    %576 = arith.mulf %567, %476 : vector<2x128xf32>
    %577 = arith.addf %575, %576 : vector<2x128xf32>
    %578 = tpu.concatenate %577, %510 in 1 : vector<2x128xf32>, vector<2x128xf32> -> vector<2x256xf32>
    %c0_154 = arith.constant 0 : index
    %c0_155 = arith.constant 0 : index
    %579 = vector.load %arg7[%c0_154, %c0_155] : memref<256x768xf32, #tpu.memory_space<vmem>>, vector<256x768xf32>
    %cst_156 = arith.constant dense<0.000000e+00> : vector<2x768xf32>
    %580 = tpu.matmul %578, %579, %cst_156 {dimension_numbers = #tpu.dot_dimension_numbers<[1], [0], [0], [1], [0, 0, 1, 1], [], []>} : vector<2x256xf32>, vector<256x768xf32>, vector<2x768xf32> -> vector<2x768xf32>
    %c0_157 = arith.constant 0 : index
    %c0_158 = arith.constant 0 : index
    %581 = vector.load %arg8[%c0_157, %c0_158] : memref<1x768xf32, #tpu.memory_space<vmem>>, vector<1x768xf32>
    %582 = vector.broadcast %581 : vector<1x768xf32> to vector<2x768xf32>
    %583 = arith.addf %580, %582 : vector<2x768xf32>
    %584 = vector.extract_strided_slice %583 {offsets = [0, 0], sizes = [2, 384], strides = [1, 1]} : vector<2x768xf32> to vector<2x384xf32>
    %585 = vector.extract_strided_slice %583 {offsets = [0, 384], sizes = [2, 384], strides = [1, 1]} : vector<2x768xf32> to vector<2x384xf32>
    %586 = vector.extract_strided_slice %584 {offsets = [0, 0], sizes = [2, 128], strides = [1, 1]} : vector<2x384xf32> to vector<2x128xf32>
    %587 = vector.extract_strided_slice %585 {offsets = [0, 0], sizes = [2, 128], strides = [1, 1]} : vector<2x384xf32> to vector<2x128xf32>
    %588 = arith.addf %586, %587 : vector<2x128xf32>
    %589 = arith.negf %588 : vector<2x128xf32>
    %590 = math.exp %589 : vector<2x128xf32>
    %cst_159 = arith.constant 1.000000e+00 : f32
    %591 = vector.broadcast %cst_159 : f32 to vector<2x128xf32>
    %592 = arith.addf %591, %590 : vector<2x128xf32>
    %593 = arith.divf %591, %592 : vector<2x128xf32>
    %594 = vector.extract_strided_slice %584 {offsets = [0, 128], sizes = [2, 128], strides = [1, 1]} : vector<2x384xf32> to vector<2x128xf32>
    %595 = vector.extract_strided_slice %585 {offsets = [0, 128], sizes = [2, 128], strides = [1, 1]} : vector<2x384xf32> to vector<2x128xf32>
    %596 = arith.addf %594, %595 : vector<2x128xf32>
    %597 = arith.negf %596 : vector<2x128xf32>
    %598 = math.exp %597 : vector<2x128xf32>
    %cst_160 = arith.constant 1.000000e+00 : f32
    %599 = vector.broadcast %cst_160 : f32 to vector<2x128xf32>
    %600 = arith.addf %599, %598 : vector<2x128xf32>
    %601 = arith.divf %599, %600 : vector<2x128xf32>
    %602 = vector.extract_strided_slice %584 {offsets = [0, 256], sizes = [2, 128], strides = [1, 1]} : vector<2x384xf32> to vector<2x128xf32>
    %603 = vector.extract_strided_slice %585 {offsets = [0, 256], sizes = [2, 128], strides = [1, 1]} : vector<2x384xf32> to vector<2x128xf32>
    %604 = arith.mulf %593, %603 : vector<2x128xf32>
    %605 = arith.addf %602, %604 : vector<2x128xf32>
    %606 = math.tanh %605 : vector<2x128xf32>
    %cst_161 = arith.constant 1.000000e+00 : f32
    %607 = vector.broadcast %cst_161 : f32 to vector<2x128xf32>
    %608 = arith.subf %607, %601 : vector<2x128xf32>
    %609 = arith.mulf %608, %606 : vector<2x128xf32>
    %610 = arith.mulf %601, %510 : vector<2x128xf32>
    %611 = arith.addf %609, %610 : vector<2x128xf32>
    %c6 = arith.constant 6 : index
    %c0_162 = arith.constant 0 : index
    %c0_163 = arith.constant 0 : index
    %612 = vector.load %arg2[%c6, %c0_162, %c0_163] : memref<8x2x384xf32, #tpu.memory_space<vmem>>, vector<1x2x384xf32>
    %613 = vector.shape_cast %612 : vector<1x2x384xf32> to vector<2x384xf32>
    %c0_164 = arith.constant 0 : index
    %c0_165 = arith.constant 0 : index
    %614 = vector.load %arg3[%c0_164, %c0_165] : memref<128x384xf32, #tpu.memory_space<vmem>>, vector<128x384xf32>
    %cst_166 = arith.constant dense<0.000000e+00> : vector<2x384xf32>
    %615 = tpu.matmul %543, %614, %cst_166 {dimension_numbers = #tpu.dot_dimension_numbers<[1], [0], [0], [1], [0, 0, 1, 1], [], []>} : vector<2x128xf32>, vector<128x384xf32>, vector<2x384xf32> -> vector<2x384xf32>
    %c0_167 = arith.constant 0 : index
    %c0_168 = arith.constant 0 : index
    %616 = vector.load %arg4[%c0_167, %c0_168] : memref<1x384xf32, #tpu.memory_space<vmem>>, vector<1x384xf32>
    %617 = vector.broadcast %616 : vector<1x384xf32> to vector<2x384xf32>
    %618 = arith.addf %615, %617 : vector<2x384xf32>
    %619 = vector.extract_strided_slice %613 {offsets = [0, 0], sizes = [2, 128], strides = [1, 1]} : vector<2x384xf32> to vector<2x128xf32>
    %620 = vector.extract_strided_slice %618 {offsets = [0, 0], sizes = [2, 128], strides = [1, 1]} : vector<2x384xf32> to vector<2x128xf32>
    %621 = arith.addf %619, %620 : vector<2x128xf32>
    %622 = arith.negf %621 : vector<2x128xf32>
    %623 = math.exp %622 : vector<2x128xf32>
    %cst_169 = arith.constant 1.000000e+00 : f32
    %624 = vector.broadcast %cst_169 : f32 to vector<2x128xf32>
    %625 = arith.addf %624, %623 : vector<2x128xf32>
    %626 = arith.divf %624, %625 : vector<2x128xf32>
    %627 = vector.extract_strided_slice %613 {offsets = [0, 128], sizes = [2, 128], strides = [1, 1]} : vector<2x384xf32> to vector<2x128xf32>
    %628 = vector.extract_strided_slice %618 {offsets = [0, 128], sizes = [2, 128], strides = [1, 1]} : vector<2x384xf32> to vector<2x128xf32>
    %629 = arith.addf %627, %628 : vector<2x128xf32>
    %630 = arith.negf %629 : vector<2x128xf32>
    %631 = math.exp %630 : vector<2x128xf32>
    %cst_170 = arith.constant 1.000000e+00 : f32
    %632 = vector.broadcast %cst_170 : f32 to vector<2x128xf32>
    %633 = arith.addf %632, %631 : vector<2x128xf32>
    %634 = arith.divf %632, %633 : vector<2x128xf32>
    %635 = vector.extract_strided_slice %613 {offsets = [0, 256], sizes = [2, 128], strides = [1, 1]} : vector<2x384xf32> to vector<2x128xf32>
    %636 = vector.extract_strided_slice %618 {offsets = [0, 256], sizes = [2, 128], strides = [1, 1]} : vector<2x384xf32> to vector<2x128xf32>
    %637 = arith.mulf %626, %636 : vector<2x128xf32>
    %638 = arith.addf %635, %637 : vector<2x128xf32>
    %639 = math.tanh %638 : vector<2x128xf32>
    %cst_171 = arith.constant 1.000000e+00 : f32
    %640 = vector.broadcast %cst_171 : f32 to vector<2x128xf32>
    %641 = arith.subf %640, %634 : vector<2x128xf32>
    %642 = arith.mulf %641, %639 : vector<2x128xf32>
    %643 = arith.mulf %634, %543 : vector<2x128xf32>
    %644 = arith.addf %642, %643 : vector<2x128xf32>
    %645 = tpu.concatenate %644, %577 in 1 : vector<2x128xf32>, vector<2x128xf32> -> vector<2x256xf32>
    %c0_172 = arith.constant 0 : index
    %c0_173 = arith.constant 0 : index
    %646 = vector.load %arg5[%c0_172, %c0_173] : memref<256x768xf32, #tpu.memory_space<vmem>>, vector<256x768xf32>
    %cst_174 = arith.constant dense<0.000000e+00> : vector<2x768xf32>
    %647 = tpu.matmul %645, %646, %cst_174 {dimension_numbers = #tpu.dot_dimension_numbers<[1], [0], [0], [1], [0, 0, 1, 1], [], []>} : vector<2x256xf32>, vector<256x768xf32>, vector<2x768xf32> -> vector<2x768xf32>
    %c0_175 = arith.constant 0 : index
    %c0_176 = arith.constant 0 : index
    %648 = vector.load %arg6[%c0_175, %c0_176] : memref<1x768xf32, #tpu.memory_space<vmem>>, vector<1x768xf32>
    %649 = vector.broadcast %648 : vector<1x768xf32> to vector<2x768xf32>
    %650 = arith.addf %647, %649 : vector<2x768xf32>
    %651 = vector.extract_strided_slice %650 {offsets = [0, 0], sizes = [2, 384], strides = [1, 1]} : vector<2x768xf32> to vector<2x384xf32>
    %652 = vector.extract_strided_slice %650 {offsets = [0, 384], sizes = [2, 384], strides = [1, 1]} : vector<2x768xf32> to vector<2x384xf32>
    %653 = vector.extract_strided_slice %651 {offsets = [0, 0], sizes = [2, 128], strides = [1, 1]} : vector<2x384xf32> to vector<2x128xf32>
    %654 = vector.extract_strided_slice %652 {offsets = [0, 0], sizes = [2, 128], strides = [1, 1]} : vector<2x384xf32> to vector<2x128xf32>
    %655 = arith.addf %653, %654 : vector<2x128xf32>
    %656 = arith.negf %655 : vector<2x128xf32>
    %657 = math.exp %656 : vector<2x128xf32>
    %cst_177 = arith.constant 1.000000e+00 : f32
    %658 = vector.broadcast %cst_177 : f32 to vector<2x128xf32>
    %659 = arith.addf %658, %657 : vector<2x128xf32>
    %660 = arith.divf %658, %659 : vector<2x128xf32>
    %661 = vector.extract_strided_slice %651 {offsets = [0, 128], sizes = [2, 128], strides = [1, 1]} : vector<2x384xf32> to vector<2x128xf32>
    %662 = vector.extract_strided_slice %652 {offsets = [0, 128], sizes = [2, 128], strides = [1, 1]} : vector<2x384xf32> to vector<2x128xf32>
    %663 = arith.addf %661, %662 : vector<2x128xf32>
    %664 = arith.negf %663 : vector<2x128xf32>
    %665 = math.exp %664 : vector<2x128xf32>
    %cst_178 = arith.constant 1.000000e+00 : f32
    %666 = vector.broadcast %cst_178 : f32 to vector<2x128xf32>
    %667 = arith.addf %666, %665 : vector<2x128xf32>
    %668 = arith.divf %666, %667 : vector<2x128xf32>
    %669 = vector.extract_strided_slice %651 {offsets = [0, 256], sizes = [2, 128], strides = [1, 1]} : vector<2x384xf32> to vector<2x128xf32>
    %670 = vector.extract_strided_slice %652 {offsets = [0, 256], sizes = [2, 128], strides = [1, 1]} : vector<2x384xf32> to vector<2x128xf32>
    %671 = arith.mulf %660, %670 : vector<2x128xf32>
    %672 = arith.addf %669, %671 : vector<2x128xf32>
    %673 = math.tanh %672 : vector<2x128xf32>
    %cst_179 = arith.constant 1.000000e+00 : f32
    %674 = vector.broadcast %cst_179 : f32 to vector<2x128xf32>
    %675 = arith.subf %674, %668 : vector<2x128xf32>
    %676 = arith.mulf %675, %673 : vector<2x128xf32>
    %677 = arith.mulf %668, %577 : vector<2x128xf32>
    %678 = arith.addf %676, %677 : vector<2x128xf32>
    %679 = tpu.concatenate %678, %611 in 1 : vector<2x128xf32>, vector<2x128xf32> -> vector<2x256xf32>
    %c0_180 = arith.constant 0 : index
    %c0_181 = arith.constant 0 : index
    %680 = vector.load %arg7[%c0_180, %c0_181] : memref<256x768xf32, #tpu.memory_space<vmem>>, vector<256x768xf32>
    %cst_182 = arith.constant dense<0.000000e+00> : vector<2x768xf32>
    %681 = tpu.matmul %679, %680, %cst_182 {dimension_numbers = #tpu.dot_dimension_numbers<[1], [0], [0], [1], [0, 0, 1, 1], [], []>} : vector<2x256xf32>, vector<256x768xf32>, vector<2x768xf32> -> vector<2x768xf32>
    %c0_183 = arith.constant 0 : index
    %c0_184 = arith.constant 0 : index
    %682 = vector.load %arg8[%c0_183, %c0_184] : memref<1x768xf32, #tpu.memory_space<vmem>>, vector<1x768xf32>
    %683 = vector.broadcast %682 : vector<1x768xf32> to vector<2x768xf32>
    %684 = arith.addf %681, %683 : vector<2x768xf32>
    %685 = vector.extract_strided_slice %684 {offsets = [0, 0], sizes = [2, 384], strides = [1, 1]} : vector<2x768xf32> to vector<2x384xf32>
    %686 = vector.extract_strided_slice %684 {offsets = [0, 384], sizes = [2, 384], strides = [1, 1]} : vector<2x768xf32> to vector<2x384xf32>
    %687 = vector.extract_strided_slice %685 {offsets = [0, 0], sizes = [2, 128], strides = [1, 1]} : vector<2x384xf32> to vector<2x128xf32>
    %688 = vector.extract_strided_slice %686 {offsets = [0, 0], sizes = [2, 128], strides = [1, 1]} : vector<2x384xf32> to vector<2x128xf32>
    %689 = arith.addf %687, %688 : vector<2x128xf32>
    %690 = arith.negf %689 : vector<2x128xf32>
    %691 = math.exp %690 : vector<2x128xf32>
    %cst_185 = arith.constant 1.000000e+00 : f32
    %692 = vector.broadcast %cst_185 : f32 to vector<2x128xf32>
    %693 = arith.addf %692, %691 : vector<2x128xf32>
    %694 = arith.divf %692, %693 : vector<2x128xf32>
    %695 = vector.extract_strided_slice %685 {offsets = [0, 128], sizes = [2, 128], strides = [1, 1]} : vector<2x384xf32> to vector<2x128xf32>
    %696 = vector.extract_strided_slice %686 {offsets = [0, 128], sizes = [2, 128], strides = [1, 1]} : vector<2x384xf32> to vector<2x128xf32>
    %697 = arith.addf %695, %696 : vector<2x128xf32>
    %698 = arith.negf %697 : vector<2x128xf32>
    %699 = math.exp %698 : vector<2x128xf32>
    %cst_186 = arith.constant 1.000000e+00 : f32
    %700 = vector.broadcast %cst_186 : f32 to vector<2x128xf32>
    %701 = arith.addf %700, %699 : vector<2x128xf32>
    %702 = arith.divf %700, %701 : vector<2x128xf32>
    %703 = vector.extract_strided_slice %685 {offsets = [0, 256], sizes = [2, 128], strides = [1, 1]} : vector<2x384xf32> to vector<2x128xf32>
    %704 = vector.extract_strided_slice %686 {offsets = [0, 256], sizes = [2, 128], strides = [1, 1]} : vector<2x384xf32> to vector<2x128xf32>
    %705 = arith.mulf %694, %704 : vector<2x128xf32>
    %706 = arith.addf %703, %705 : vector<2x128xf32>
    %707 = math.tanh %706 : vector<2x128xf32>
    %cst_187 = arith.constant 1.000000e+00 : f32
    %708 = vector.broadcast %cst_187 : f32 to vector<2x128xf32>
    %709 = arith.subf %708, %702 : vector<2x128xf32>
    %710 = arith.mulf %709, %707 : vector<2x128xf32>
    %711 = arith.mulf %702, %611 : vector<2x128xf32>
    %712 = arith.addf %710, %711 : vector<2x128xf32>
    %c7 = arith.constant 7 : index
    %c0_188 = arith.constant 0 : index
    %c0_189 = arith.constant 0 : index
    %713 = vector.load %arg2[%c7, %c0_188, %c0_189] : memref<8x2x384xf32, #tpu.memory_space<vmem>>, vector<1x2x384xf32>
    %714 = vector.shape_cast %713 : vector<1x2x384xf32> to vector<2x384xf32>
    %c0_190 = arith.constant 0 : index
    %c0_191 = arith.constant 0 : index
    %715 = vector.load %arg3[%c0_190, %c0_191] : memref<128x384xf32, #tpu.memory_space<vmem>>, vector<128x384xf32>
    %cst_192 = arith.constant dense<0.000000e+00> : vector<2x384xf32>
    %716 = tpu.matmul %644, %715, %cst_192 {dimension_numbers = #tpu.dot_dimension_numbers<[1], [0], [0], [1], [0, 0, 1, 1], [], []>} : vector<2x128xf32>, vector<128x384xf32>, vector<2x384xf32> -> vector<2x384xf32>
    %c0_193 = arith.constant 0 : index
    %c0_194 = arith.constant 0 : index
    %717 = vector.load %arg4[%c0_193, %c0_194] : memref<1x384xf32, #tpu.memory_space<vmem>>, vector<1x384xf32>
    %718 = vector.broadcast %717 : vector<1x384xf32> to vector<2x384xf32>
    %719 = arith.addf %716, %718 : vector<2x384xf32>
    %720 = vector.extract_strided_slice %714 {offsets = [0, 0], sizes = [2, 128], strides = [1, 1]} : vector<2x384xf32> to vector<2x128xf32>
    %721 = vector.extract_strided_slice %719 {offsets = [0, 0], sizes = [2, 128], strides = [1, 1]} : vector<2x384xf32> to vector<2x128xf32>
    %722 = arith.addf %720, %721 : vector<2x128xf32>
    %723 = arith.negf %722 : vector<2x128xf32>
    %724 = math.exp %723 : vector<2x128xf32>
    %cst_195 = arith.constant 1.000000e+00 : f32
    %725 = vector.broadcast %cst_195 : f32 to vector<2x128xf32>
    %726 = arith.addf %725, %724 : vector<2x128xf32>
    %727 = arith.divf %725, %726 : vector<2x128xf32>
    %728 = vector.extract_strided_slice %714 {offsets = [0, 128], sizes = [2, 128], strides = [1, 1]} : vector<2x384xf32> to vector<2x128xf32>
    %729 = vector.extract_strided_slice %719 {offsets = [0, 128], sizes = [2, 128], strides = [1, 1]} : vector<2x384xf32> to vector<2x128xf32>
    %730 = arith.addf %728, %729 : vector<2x128xf32>
    %731 = arith.negf %730 : vector<2x128xf32>
    %732 = math.exp %731 : vector<2x128xf32>
    %cst_196 = arith.constant 1.000000e+00 : f32
    %733 = vector.broadcast %cst_196 : f32 to vector<2x128xf32>
    %734 = arith.addf %733, %732 : vector<2x128xf32>
    %735 = arith.divf %733, %734 : vector<2x128xf32>
    %736 = vector.extract_strided_slice %714 {offsets = [0, 256], sizes = [2, 128], strides = [1, 1]} : vector<2x384xf32> to vector<2x128xf32>
    %737 = vector.extract_strided_slice %719 {offsets = [0, 256], sizes = [2, 128], strides = [1, 1]} : vector<2x384xf32> to vector<2x128xf32>
    %738 = arith.mulf %727, %737 : vector<2x128xf32>
    %739 = arith.addf %736, %738 : vector<2x128xf32>
    %740 = math.tanh %739 : vector<2x128xf32>
    %cst_197 = arith.constant 1.000000e+00 : f32
    %741 = vector.broadcast %cst_197 : f32 to vector<2x128xf32>
    %742 = arith.subf %741, %735 : vector<2x128xf32>
    %743 = arith.mulf %742, %740 : vector<2x128xf32>
    %744 = arith.mulf %735, %644 : vector<2x128xf32>
    %745 = arith.addf %743, %744 : vector<2x128xf32>
    %746 = tpu.concatenate %745, %678 in 1 : vector<2x128xf32>, vector<2x128xf32> -> vector<2x256xf32>
    %c0_198 = arith.constant 0 : index
    %c0_199 = arith.constant 0 : index
    %747 = vector.load %arg5[%c0_198, %c0_199] : memref<256x768xf32, #tpu.memory_space<vmem>>, vector<256x768xf32>
    %cst_200 = arith.constant dense<0.000000e+00> : vector<2x768xf32>
    %748 = tpu.matmul %746, %747, %cst_200 {dimension_numbers = #tpu.dot_dimension_numbers<[1], [0], [0], [1], [0, 0, 1, 1], [], []>} : vector<2x256xf32>, vector<256x768xf32>, vector<2x768xf32> -> vector<2x768xf32>
    %c0_201 = arith.constant 0 : index
    %c0_202 = arith.constant 0 : index
    %749 = vector.load %arg6[%c0_201, %c0_202] : memref<1x768xf32, #tpu.memory_space<vmem>>, vector<1x768xf32>
    %750 = vector.broadcast %749 : vector<1x768xf32> to vector<2x768xf32>
    %751 = arith.addf %748, %750 : vector<2x768xf32>
    %752 = vector.extract_strided_slice %751 {offsets = [0, 0], sizes = [2, 384], strides = [1, 1]} : vector<2x768xf32> to vector<2x384xf32>
    %753 = vector.extract_strided_slice %751 {offsets = [0, 384], sizes = [2, 384], strides = [1, 1]} : vector<2x768xf32> to vector<2x384xf32>
    %754 = vector.extract_strided_slice %752 {offsets = [0, 0], sizes = [2, 128], strides = [1, 1]} : vector<2x384xf32> to vector<2x128xf32>
    %755 = vector.extract_strided_slice %753 {offsets = [0, 0], sizes = [2, 128], strides = [1, 1]} : vector<2x384xf32> to vector<2x128xf32>
    %756 = arith.addf %754, %755 : vector<2x128xf32>
    %757 = arith.negf %756 : vector<2x128xf32>
    %758 = math.exp %757 : vector<2x128xf32>
    %cst_203 = arith.constant 1.000000e+00 : f32
    %759 = vector.broadcast %cst_203 : f32 to vector<2x128xf32>
    %760 = arith.addf %759, %758 : vector<2x128xf32>
    %761 = arith.divf %759, %760 : vector<2x128xf32>
    %762 = vector.extract_strided_slice %752 {offsets = [0, 128], sizes = [2, 128], strides = [1, 1]} : vector<2x384xf32> to vector<2x128xf32>
    %763 = vector.extract_strided_slice %753 {offsets = [0, 128], sizes = [2, 128], strides = [1, 1]} : vector<2x384xf32> to vector<2x128xf32>
    %764 = arith.addf %762, %763 : vector<2x128xf32>
    %765 = arith.negf %764 : vector<2x128xf32>
    %766 = math.exp %765 : vector<2x128xf32>
    %cst_204 = arith.constant 1.000000e+00 : f32
    %767 = vector.broadcast %cst_204 : f32 to vector<2x128xf32>
    %768 = arith.addf %767, %766 : vector<2x128xf32>
    %769 = arith.divf %767, %768 : vector<2x128xf32>
    %770 = vector.extract_strided_slice %752 {offsets = [0, 256], sizes = [2, 128], strides = [1, 1]} : vector<2x384xf32> to vector<2x128xf32>
    %771 = vector.extract_strided_slice %753 {offsets = [0, 256], sizes = [2, 128], strides = [1, 1]} : vector<2x384xf32> to vector<2x128xf32>
    %772 = arith.mulf %761, %771 : vector<2x128xf32>
    %773 = arith.addf %770, %772 : vector<2x128xf32>
    %774 = math.tanh %773 : vector<2x128xf32>
    %cst_205 = arith.constant 1.000000e+00 : f32
    %775 = vector.broadcast %cst_205 : f32 to vector<2x128xf32>
    %776 = arith.subf %775, %769 : vector<2x128xf32>
    %777 = arith.mulf %776, %774 : vector<2x128xf32>
    %778 = arith.mulf %769, %678 : vector<2x128xf32>
    %779 = arith.addf %777, %778 : vector<2x128xf32>
    %780 = tpu.concatenate %779, %712 in 1 : vector<2x128xf32>, vector<2x128xf32> -> vector<2x256xf32>
    %c0_206 = arith.constant 0 : index
    %c0_207 = arith.constant 0 : index
    %781 = vector.load %arg7[%c0_206, %c0_207] : memref<256x768xf32, #tpu.memory_space<vmem>>, vector<256x768xf32>
    %cst_208 = arith.constant dense<0.000000e+00> : vector<2x768xf32>
    %782 = tpu.matmul %780, %781, %cst_208 {dimension_numbers = #tpu.dot_dimension_numbers<[1], [0], [0], [1], [0, 0, 1, 1], [], []>} : vector<2x256xf32>, vector<256x768xf32>, vector<2x768xf32> -> vector<2x768xf32>
    %c0_209 = arith.constant 0 : index
    %c0_210 = arith.constant 0 : index
    %783 = vector.load %arg8[%c0_209, %c0_210] : memref<1x768xf32, #tpu.memory_space<vmem>>, vector<1x768xf32>
    %784 = vector.broadcast %783 : vector<1x768xf32> to vector<2x768xf32>
    %785 = arith.addf %782, %784 : vector<2x768xf32>
    %786 = vector.extract_strided_slice %785 {offsets = [0, 0], sizes = [2, 384], strides = [1, 1]} : vector<2x768xf32> to vector<2x384xf32>
    %787 = vector.extract_strided_slice %785 {offsets = [0, 384], sizes = [2, 384], strides = [1, 1]} : vector<2x768xf32> to vector<2x384xf32>
    %788 = vector.extract_strided_slice %786 {offsets = [0, 0], sizes = [2, 128], strides = [1, 1]} : vector<2x384xf32> to vector<2x128xf32>
    %789 = vector.extract_strided_slice %787 {offsets = [0, 0], sizes = [2, 128], strides = [1, 1]} : vector<2x384xf32> to vector<2x128xf32>
    %790 = arith.addf %788, %789 : vector<2x128xf32>
    %791 = arith.negf %790 : vector<2x128xf32>
    %792 = math.exp %791 : vector<2x128xf32>
    %cst_211 = arith.constant 1.000000e+00 : f32
    %793 = vector.broadcast %cst_211 : f32 to vector<2x128xf32>
    %794 = arith.addf %793, %792 : vector<2x128xf32>
    %795 = arith.divf %793, %794 : vector<2x128xf32>
    %796 = vector.extract_strided_slice %786 {offsets = [0, 128], sizes = [2, 128], strides = [1, 1]} : vector<2x384xf32> to vector<2x128xf32>
    %797 = vector.extract_strided_slice %787 {offsets = [0, 128], sizes = [2, 128], strides = [1, 1]} : vector<2x384xf32> to vector<2x128xf32>
    %798 = arith.addf %796, %797 : vector<2x128xf32>
    %799 = arith.negf %798 : vector<2x128xf32>
    %800 = math.exp %799 : vector<2x128xf32>
    %cst_212 = arith.constant 1.000000e+00 : f32
    %801 = vector.broadcast %cst_212 : f32 to vector<2x128xf32>
    %802 = arith.addf %801, %800 : vector<2x128xf32>
    %803 = arith.divf %801, %802 : vector<2x128xf32>
    %804 = vector.extract_strided_slice %786 {offsets = [0, 256], sizes = [2, 128], strides = [1, 1]} : vector<2x384xf32> to vector<2x128xf32>
    %805 = vector.extract_strided_slice %787 {offsets = [0, 256], sizes = [2, 128], strides = [1, 1]} : vector<2x384xf32> to vector<2x128xf32>
    %806 = arith.mulf %795, %805 : vector<2x128xf32>
    %807 = arith.addf %804, %806 : vector<2x128xf32>
    %808 = math.tanh %807 : vector<2x128xf32>
    %cst_213 = arith.constant 1.000000e+00 : f32
    %809 = vector.broadcast %cst_213 : f32 to vector<2x128xf32>
    %810 = arith.subf %809, %803 : vector<2x128xf32>
    %811 = arith.mulf %810, %808 : vector<2x128xf32>
    %812 = arith.mulf %803, %712 : vector<2x128xf32>
    %813 = arith.addf %811, %812 : vector<2x128xf32>
    %c0_214 = arith.constant 0 : index
    %c0_215 = arith.constant 0 : index
    %814 = vector.load %arg16[%c0_214, %c0_215] : memref<2x128xf32, #tpu.memory_space<vmem>>, vector<2x128xf32>
    tpu.vector_store %arg16[%c0_214, %c0_215], %745 {strides = array<i32>} : memref<2x128xf32, #tpu.memory_space<vmem>>, vector<2x128xf32>,
    %c0_216 = arith.constant 0 : index
    %c0_217 = arith.constant 0 : index
    %815 = vector.load %arg17[%c0_216, %c0_217] : memref<2x128xf32, #tpu.memory_space<vmem>>, vector<2x128xf32>
    tpu.vector_store %arg17[%c0_216, %c0_217], %779 {strides = array<i32>} : memref<2x128xf32, #tpu.memory_space<vmem>>, vector<2x128xf32>,
    %c0_218 = arith.constant 0 : index
    %c0_219 = arith.constant 0 : index
    %816 = vector.load %arg18[%c0_218, %c0_219] : memref<2x128xf32, #tpu.memory_space<vmem>>, vector<2x128xf32>
    tpu.vector_store %arg18[%c0_218, %c0_219], %813 {strides = array<i32>} : memref<2x128xf32, #tpu.memory_space<vmem>>, vector<2x128xf32>,
    %c0_i32_220 = arith.constant 0 : i32
    %817 = arith.cmpi eq, %arg1, %c0_i32_220 : i32
    %818 = arith.extui %817 : i1 to i32
    %c0_i32_221 = arith.constant 0 : i32
    %819 = arith.cmpi ne, %818, %c0_i32_221 : i32
    scf.if %819 {
      %c0_222 = arith.constant 0 : index
      %c0_223 = arith.constant 0 : index
      %820 = vector.load %arg9[%c0_222, %c0_223] : memref<128x32xf32, #tpu.memory_space<vmem>>, vector<128x32xf32>
      %cst_224 = arith.constant dense<0.000000e+00> : vector<2x32xf32>
      %821 = tpu.matmul %813, %820, %cst_224 {dimension_numbers = #tpu.dot_dimension_numbers<[1], [0], [0], [1], [0, 0, 1, 1], [], []>} : vector<2x128xf32>, vector<128x32xf32>, vector<2x32xf32> -> vector<2x32xf32>
      %c0_225 = arith.constant 0 : index
      %c0_226 = arith.constant 0 : index
      %822 = vector.load %arg10[%c0_225, %c0_226] : memref<1x32xf32, #tpu.memory_space<vmem>>, vector<1x32xf32>
      %823 = vector.broadcast %822 : vector<1x32xf32> to vector<2x32xf32>
      %824 = arith.addf %821, %823 : vector<2x32xf32>
      %cst_227 = arith.constant 0.000000e+00 : f32
      %825 = vector.broadcast %cst_227 : f32 to vector<2x32xf32>
      %826 = arith.maximumf %824, %825 : vector<2x32xf32>
      %c0_228 = arith.constant 0 : index
      %c0_229 = arith.constant 0 : index
      %827 = vector.load %arg11[%c0_228, %c0_229] : memref<32x16xf32, #tpu.memory_space<vmem>>, vector<32x16xf32>
      %cst_230 = arith.constant dense<0.000000e+00> : vector<2x16xf32>
      %828 = tpu.matmul %826, %827, %cst_230 {dimension_numbers = #tpu.dot_dimension_numbers<[1], [0], [0], [1], [0, 0, 1, 1], [], []>} : vector<2x32xf32>, vector<32x16xf32>, vector<2x16xf32> -> vector<2x16xf32>
      %c0_231 = arith.constant 0 : index
      %c0_232 = arith.constant 0 : index
      %829 = vector.load %arg12[%c0_231, %c0_232] : memref<1x16xf32, #tpu.memory_space<vmem>>, vector<1x16xf32>
      %830 = vector.broadcast %829 : vector<1x16xf32> to vector<2x16xf32>
      %831 = arith.addf %828, %830 : vector<2x16xf32>
      %cst_233 = arith.constant 0.000000e+00 : f32
      %832 = vector.broadcast %cst_233 : f32 to vector<2x16xf32>
      %833 = arith.maximumf %831, %832 : vector<2x16xf32>
      %c0_234 = arith.constant 0 : index
      %c0_235 = arith.constant 0 : index
      %834 = vector.load %arg13[%c0_234, %c0_235] : memref<16x1xf32, #tpu.memory_space<vmem>>, vector<16x1xf32>
      %cst_236 = arith.constant dense<0.000000e+00> : vector<2x1xf32>
      %835 = tpu.matmul %833, %834, %cst_236 {dimension_numbers = #tpu.dot_dimension_numbers<[1], [0], [0], [1], [0, 0, 1, 1], [], []>} : vector<2x16xf32>, vector<16x1xf32>, vector<2x1xf32> -> vector<2x1xf32>
      %c0_237 = arith.constant 0 : index
      %c0_238 = arith.constant 0 : index
      %836 = vector.load %arg14[%c0_237, %c0_238] : memref<1x1xf32, #tpu.memory_space<vmem>>, vector<1x1xf32>
      %837 = vector.broadcast %836 : vector<1x1xf32> to vector<2x1xf32>
      %838 = arith.addf %835, %837 : vector<2x1xf32>
      %839 = arith.negf %838 : vector<2x1xf32>
      %840 = math.exp %839 : vector<2x1xf32>
      %cst_239 = arith.constant 1.000000e+00 : f32
      %841 = vector.broadcast %cst_239 : f32 to vector<2x1xf32>
      %842 = arith.addf %841, %840 : vector<2x1xf32>
      %843 = arith.divf %841, %842 : vector<2x1xf32>
      %c0_240 = arith.constant 0 : index
      %c0_241 = arith.constant 0 : index
      %844 = vector.load %arg15[%c0_240, %c0_241] : memref<2x1xf32, #tpu.memory_space<vmem>>, vector<2x1xf32>
      tpu.vector_store %arg15[%c0_240, %c0_241], %843 {strides = array<i32>} : memref<2x1xf32, #tpu.memory_space<vmem>>, vector<2x1xf32>,
    } else {
    }
    return
  }
  func.func @transform_0(%arg0: i32, %arg1: i32) -> (i32, i32, i32) {
    %c0_i32 = arith.constant 0 : i32
    %c0_i32_0 = arith.constant 0 : i32
    return %arg1, %arg0, %c0_i32 : i32, i32, i32
  }
  func.func @transform_1(%arg0: i32, %arg1: i32) -> (i32, i32) {
    %c0_i32 = arith.constant 0 : i32
    %c0_i32_0 = arith.constant 0 : i32
    %c0_i32_1 = arith.constant 0 : i32
    return %c0_i32, %c0_i32_0 : i32, i32
  }
  func.func @transform_2(%arg0: i32, %arg1: i32) -> (i32, i32) {
    %c0_i32 = arith.constant 0 : i32
    %c0_i32_0 = arith.constant 0 : i32
    %c0_i32_1 = arith.constant 0 : i32
    return %c0_i32, %c0_i32_0 : i32, i32
  }
  func.func @transform_3(%arg0: i32, %arg1: i32) -> (i32, i32) {
    %c0_i32 = arith.constant 0 : i32
    %c0_i32_0 = arith.constant 0 : i32
    %c0_i32_1 = arith.constant 0 : i32
    return %c0_i32, %c0_i32_0 : i32, i32
  }
  func.func @transform_4(%arg0: i32, %arg1: i32) -> (i32, i32) {
    %c0_i32 = arith.constant 0 : i32
    %c0_i32_0 = arith.constant 0 : i32
    %c0_i32_1 = arith.constant 0 : i32
    return %c0_i32, %c0_i32_0 : i32, i32
  }
  func.func @transform_5(%arg0: i32, %arg1: i32) -> (i32, i32) {
    %c0_i32 = arith.constant 0 : i32
    %c0_i32_0 = arith.constant 0 : i32
    %c0_i32_1 = arith.constant 0 : i32
    return %c0_i32, %c0_i32_0 : i32, i32
  }
  func.func @transform_6(%arg0: i32, %arg1: i32) -> (i32, i32) {
    %c0_i32 = arith.constant 0 : i32
    %c0_i32_0 = arith.constant 0 : i32
    %c0_i32_1 = arith.constant 0 : i32
    return %c0_i32, %c0_i32_0 : i32, i32
  }
  func.func @transform_7(%arg0: i32, %arg1: i32) -> (i32, i32) {
    %c0_i32 = arith.constant 0 : i32
    %c0_i32_0 = arith.constant 0 : i32
    %c0_i32_1 = arith.constant 0 : i32
    return %c0_i32, %c0_i32_0 : i32, i32
  }
  func.func @transform_8(%arg0: i32, %arg1: i32) -> (i32, i32) {
    %c0_i32 = arith.constant 0 : i32
    %c0_i32_0 = arith.constant 0 : i32
    %c0_i32_1 = arith.constant 0 : i32
    return %c0_i32, %c0_i32_0 : i32, i32
  }
  func.func @transform_9(%arg0: i32, %arg1: i32) -> (i32, i32) {
    %c0_i32 = arith.constant 0 : i32
    %c0_i32_0 = arith.constant 0 : i32
    %c0_i32_1 = arith.constant 0 : i32
    return %c0_i32, %c0_i32_0 : i32, i32
  }
  func.func @transform_10(%arg0: i32, %arg1: i32) -> (i32, i32) {
    %c0_i32 = arith.constant 0 : i32
    %c0_i32_0 = arith.constant 0 : i32
    %c0_i32_1 = arith.constant 0 : i32
    return %c0_i32, %c0_i32_0 : i32, i32
  }
  func.func @transform_11(%arg0: i32, %arg1: i32) -> (i32, i32) {
    %c0_i32 = arith.constant 0 : i32
    %c0_i32_0 = arith.constant 0 : i32
    %c0_i32_1 = arith.constant 0 : i32
    return %c0_i32, %c0_i32_0 : i32, i32
  }
  func.func @transform_12(%arg0: i32, %arg1: i32) -> (i32, i32) {
    %c0_i32 = arith.constant 0 : i32
    %c0_i32_0 = arith.constant 0 : i32
    %c0_i32_1 = arith.constant 0 : i32
    return %c0_i32, %c0_i32_0 : i32, i32
  }
  func.func @transform_13(%arg0: i32, %arg1: i32) -> (i32, i32) {
    %c0_i32 = arith.constant 0 : i32
    %c0_i32_0 = arith.constant 0 : i32
    return %arg0, %c0_i32 : i32, i32
  }
}

</mosaic_0001>

<llo_original>
// kernel: discriminator_forward.1
$region0: #{discriminator_forward.1}
  #allocation0 [shape = 'u32[]', space=smem, size = 0x4, offset = 0x4, fixed_abs, tag = 'smem constant byte address 0x4 - core index']
  #allocation1 [shape = 'u32[144,128]{1,0:T(1,128)}', space=vmem, size = 0x12000, scoped, tag = 'internal scratch']
  #allocation2 [shape = 'f32[2,128]{1,0:T(2,128)}', space=vmem, size = 0x400, scoped, tag = 'scratch operand']
  #allocation3 [shape = 'f32[2,128]{1,0:T(2,128)}', space=vmem, size = 0x400, scoped, tag = 'scratch operand']
  #allocation4 [shape = 'f32[2,128]{1,0:T(2,128)}', space=vmem, size = 0x400, scoped, tag = 'scratch operand']
  #allocation5 [shape = 'f32[1,1]{1,0:T(1,128)S(1)}', space=vmem, size = 0x200, scoped, tag = 'scoped memory for discriminator_forward.1']
  %s0 = inlined_call_operand.vmem [shape: f32[8,2,384], index: 0, kind: input, shape index: {}]
  %s1 = inlined_call_operand.vmem [shape: f32[128,384], index: 1, kind: input, shape index: {}]
  %s2 = inlined_call_operand.vmem [shape: f32[1,384], index: 2, kind: input, shape index: {}]
  %s3 = inlined_call_operand.hbm [shape: f32[256,768], index: 3, kind: input, shape index: {}]
  %s4 = inlined_call_operand.vmem [shape: f32[1,768], index: 4, kind: input, shape index: {}]
  %s5 = inlined_call_operand.hbm [shape: f32[256,768], index: 5, kind: input, shape index: {}]
  %s6 = inlined_call_operand.vmem [shape: f32[1,768], index: 6, kind: input, shape index: {}]
  %s7 = inlined_call_operand.vmem [shape: f32[128,32], index: 7, kind: input, shape index: {}]
  %s8 = inlined_call_operand.vmem [shape: f32[1,32], index: 8, kind: input, shape index: {}]
  %s9 = inlined_call_operand.vmem [shape: f32[32,16], index: 9, kind: input, shape index: {}]
  %s10 = inlined_call_operand.vmem [shape: f32[1,16], index: 10, kind: input, shape index: {}]
  %s11 = inlined_call_operand.vmem [shape: f32[16,1], index: 11, kind: input, shape index: {}]
  %s12 = inlined_call_operand.<no memory space> [shape: f32[1,1], index: 12, kind: input, shape index: {}]
  %s13 = inlined_call_operand.vmem [shape: f32[2,1], index: 13, kind: output, shape index: {}]
  %s14 = sld [smem:[#allocation0]]
  $region78: #{discriminator_forward.1} parent=0
    _
  %s16 = ssub.s32 1, %s14
  %s17 = scalar_select 0, %s16, %s14
  %v18 = vstv %s12
  %19 = vst [vmem:[#allocation5] sm:$0x1] %v18
  $region1: #{discriminator_forward.1} parent=0
    #allocation6 [shape = 'u8[786432]{0}', space=vmem, size = 0xc0000, scoped, tag = 'input window, operand 3, single buffered']
    #allocation7 [shape = 's32[1]{0}', space=sflag, size = 0x4, scoped, tag = 'scoped memory for discriminator_forward.1']
    #allocation8 [shape = 'u8[786432]{0}', space=vmem, size = 0xc0000, scoped, tag = 'input window, operand 5, single buffered']
    #allocation9 [shape = 's32[1]{0}', space=sflag, size = 0x4, scoped, tag = 'scoped memory for discriminator_forward.1']
    %20 = vsyncpa [#allocation7], 0
    %21 = vsyncpa [#allocation9], 0
    // Predicated region
    $region2: #{discriminator_forward.1} parent=1 // pred_check
      _
    $region3: #{discriminator_forward.1} parent=1 // pred_check_branch
      %23 = sbr.rel (0) target = $region5
    $region4: #{discriminator_forward.1} parent=1 // pred_region
      _
    $region5: #{discriminator_forward.1} parent=1 // pred_fallthru
      _
    // Predicated region
    $region6: #{discriminator_forward.1} parent=1 // pred_check
      _
    $region7: #{discriminator_forward.1} parent=1 // pred_check_branch
      %25 = sbr.rel (0) target = $region9
    $region8: #{discriminator_forward.1} parent=1 // pred_region
      _
    $region9: #{discriminator_forward.1} parent=1 // pred_fallthru
      _
    // Predicated region
    $region10: #{discriminator_forward.1} parent=1 // pred_check
      _
    $region11: #{discriminator_forward.1} parent=1 // pred_check_branch
      %27 = sbr.rel (0) target = $region13
    $region12: #{discriminator_forward.1} parent=1 // pred_region
      _
    $region13: #{discriminator_forward.1} parent=1 // pred_fallthru
      _
    // Predicated region
    $region14: #{discriminator_forward.1} parent=1 // pred_check
      _
    $region15: #{discriminator_forward.1} parent=1 // pred_check_branch
      %29 = sbr.rel (0) target = $region17
    $region16: #{discriminator_forward.1} parent=1 // pred_region
      %s31 = ssub.s32 24576, 24576
      %32 = vsyncadd [#allocation7], %s31
      %s33 = sshll.u32 [#allocation6], 4
      %s34 = int_to_ptr.vmem [resolvable:$true] %s33
      %39 = dma.hbm_to_vmem [thread:$0]  %s3, 24576, %s34, [#allocation7], 768, 768, 48
    $region17: #{discriminator_forward.1} parent=1 // pred_fallthru
      _
    // Predicated region
    $region18: #{discriminator_forward.1} parent=1 // pred_check
      _
    $region19: #{discriminator_forward.1} parent=1 // pred_check_branch
      %41 = sbr.rel (0) target = $region21
    $region20: #{discriminator_forward.1} parent=1 // pred_region
      _
    $region21: #{discriminator_forward.1} parent=1 // pred_fallthru
      _
    // Predicated region
    $region22: #{discriminator_forward.1} parent=1 // pred_check
      _
    $region23: #{discriminator_forward.1} parent=1 // pred_check_branch
      %43 = sbr.rel (0) target = $region25
    $region24: #{discriminator_forward.1} parent=1 // pred_region
      %s45 = ssub.s32 24576, 24576
      %46 = vsyncadd [#allocation9], %s45
      %s47 = sshll.u32 [#allocation8], 4
      %s48 = int_to_ptr.vmem [resolvable:$true] %s47
      %53 = dma.hbm_to_vmem [thread:$0]  %s5, 24576, %s48, [#allocation9], 768, 768, 48
    $region25: #{discriminator_forward.1} parent=1 // pred_fallthru
      _
    // Predicated region
    $region26: #{discriminator_forward.1} parent=1 // pred_check
      _
    $region27: #{discriminator_forward.1} parent=1 // pred_check_branch
      %55 = sbr.rel (0) target = $region29
    $region28: #{discriminator_forward.1} parent=1 // pred_region
      _
    $region29: #{discriminator_forward.1} parent=1 // pred_fallthru
      _
    // Predicated region
    $region30: #{discriminator_forward.1} parent=1 // pred_check
      _
    $region31: #{discriminator_forward.1} parent=1 // pred_check_branch
      %57 = sbr.rel (0) target = $region33
    $region32: #{discriminator_forward.1} parent=1 // pred_region
      _
    $region33: #{discriminator_forward.1} parent=1 // pred_fallthru
      _
    // Predicated region
    $region34: #{discriminator_forward.1} parent=1 // pred_check
      _
    $region35: #{discriminator_forward.1} parent=1 // pred_check_branch
      %59 = sbr.rel (0) target = $region37
    $region36: #{discriminator_forward.1} parent=1 // pred_region
      _
    $region37: #{discriminator_forward.1} parent=1 // pred_fallthru
      _
    // Predicated region
    $region38: #{discriminator_forward.1} parent=1 // pred_check
      _
    $region39: #{discriminator_forward.1} parent=1 // pred_check_branch
      %61 = sbr.rel (0) target = $region41
    $region40: #{discriminator_forward.1} parent=1 // pred_region
      _
    $region41: #{discriminator_forward.1} parent=1 // pred_fallthru
      _
    // Predicated region
    $region42: #{discriminator_forward.1} parent=1 // pred_check
      _
    $region43: #{discriminator_forward.1} parent=1 // pred_check_branch
      %63 = sbr.rel (0) target = $region45
    $region44: #{discriminator_forward.1} parent=1 // pred_region
      _
    $region45: #{discriminator_forward.1} parent=1 // pred_fallthru
      _
    // Predicated region
    $region46: #{discriminator_forward.1} parent=1 // pred_check
      _
    $region47: #{discriminator_forward.1} parent=1 // pred_check_branch
      %65 = sbr.rel (0) target = $region49
    $region48: #{discriminator_forward.1} parent=1 // pred_region
      _
    $region49: #{discriminator_forward.1} parent=1 // pred_fallthru
      _
    // Predicated region
    $region50: #{discriminator_forward.1} parent=1 // pred_check
      _
    $region51: #{discriminator_forward.1} parent=1 // pred_check_branch
      %67 = sbr.rel (0) target = $region53
    $region52: #{discriminator_forward.1} parent=1 // pred_region
      _
    $region53: #{discriminator_forward.1} parent=1 // pred_fallthru
      _
    // Predicated region
    $region54: #{discriminator_forward.1} parent=1 // pred_check
      _
    $region55: #{discriminator_forward.1} parent=1 // pred_check_branch
      %69 = sbr.rel (0) target = $region57
    $region56: #{discriminator_forward.1} parent=1 // pred_region
      %70 = dma.done [#allocation7], 24576
    $region57: #{discriminator_forward.1} parent=1 // pred_fallthru
      _
    // Predicated region
    $region58: #{discriminator_forward.1} parent=1 // pred_check
      _
    $region59: #{discriminator_forward.1} parent=1 // pred_check_branch
      %72 = sbr.rel (0) target = $region61
    $region60: #{discriminator_forward.1} parent=1 // pred_region
      %73 = dma.done [#allocation9], 24576
    $region61: #{discriminator_forward.1} parent=1 // pred_fallthru
      _
    %p74 = scmp.eq.s32.totalorder 0, 0
    // Predicated region
    $region62: #{discriminator_forward.1} parent=1 // pred_check
      %p75 = pneg %p74
    $region63: #{discriminator_forward.1} parent=1 // pred_check_branch
      %77 = sbr.rel (%p75) target = $region65
    $region64: #{discriminator_forward.1} parent=1 // pred_region
      %78 = vst [vmem:[#allocation2] sm:$0x3] 0.0
      %79 = vst [vmem:[#allocation3] sm:$0x3] 0.0
      %80 = vst [vmem:[#allocation4] sm:$0x3] 0.0
    $region65: #{discriminator_forward.1} parent=1 // pred_fallthru
      _
    %v81 = vld [vmem:[#allocation2] sm:$0x3]
    %v82 = vld [vmem:[#allocation3] sm:$0x3]
    %v83 = vld [vmem:[#allocation4] sm:$0x3]
    %v84 = vld [vmem:[%s0] sm:$0x3f]
    %v85 = vld [vmem:[%s1] sm:$0xff]
    %v86 = vld [vmem:[%s1 + $0x8] sm:$0xff]
    %v87 = vld [vmem:[%s1 + $0x10] sm:$0xff]
    %v88 = vld [vmem:[%s1 + $0x18] sm:$0xff]
    %v89 = vld [vmem:[%s1 + $0x20] sm:$0xff]
    %v90 = vld [vmem:[%s1 + $0x28] sm:$0xff]
    %v91 = vld [vmem:[%s1 + $0x30] sm:$0xff]
    %v92 = vld [vmem:[%s1 + $0x38] sm:$0xff]
    %v93 = vld [vmem:[%s1 + $0x40] sm:$0xff]
    %v94 = vld [vmem:[%s1 + $0x48] sm:$0xff]
    %v95 = vld [vmem:[%s1 + $0x50] sm:$0xff]
    %v96 = vld [vmem:[%s1 + $0x58] sm:$0xff]
    %v97 = vld [vmem:[%s1 + $0x60] sm:$0xff]
    %v98 = vld [vmem:[%s1 + $0x68] sm:$0xff]
    %v99 = vld [vmem:[%s1 + $0x70] sm:$0xff]
    %v100 = vld [vmem:[%s1 + $0x78] sm:$0xff]
    %v101 = vld [vmem:[%s1 + $0x80] sm:$0xff]
    %v102 = vld [vmem:[%s1 + $0x88] sm:$0xff]
    %v103 = vld [vmem:[%s1 + $0x90] sm:$0xff]
    %v104 = vld [vmem:[%s1 + $0x98] sm:$0xff]
    %v105 = vld [vmem:[%s1 + $0xa0] sm:$0xff]
    %v106 = vld [vmem:[%s1 + $0xa8] sm:$0xff]
    %v107 = vld [vmem:[%s1 + $0xb0] sm:$0xff]
    %v108 = vld [vmem:[%s1 + $0xb8] sm:$0xff]
    %v109 = vld [vmem:[%s1 + $0xc0] sm:$0xff]
    %v110 = vld [vmem:[%s1 + $0xc8] sm:$0xff]
    %v111 = vld [vmem:[%s1 + $0xd0] sm:$0xff]
    %v112 = vld [vmem:[%s1 + $0xd8] sm:$0xff]
    %v113 = vld [vmem:[%s1 + $0xe0] sm:$0xff]
    %v114 = vld [vmem:[%s1 + $0xe8] sm:$0xff]
    %v115 = vld [vmem:[%s1 + $0xf0] sm:$0xff]
    %v116 = vld [vmem:[%s1 + $0xf8] sm:$0xff]
    %v117 = vld [vmem:[%s1 + $0x100] sm:$0xff]
    %v118 = vld [vmem:[%s1 + $0x108] sm:$0xff]
    %v119 = vld [vmem:[%s1 + $0x110] sm:$0xff]
    %v120 = vld [vmem:[%s1 + $0x118] sm:$0xff]
    %v121 = vld [vmem:[%s1 + $0x120] sm:$0xff]
    %v122 = vld [vmem:[%s1 + $0x128] sm:$0xff]
    %v123 = vld [vmem:[%s1 + $0x130] sm:$0xff]
    %v124 = vld [vmem:[%s1 + $0x138] sm:$0xff]
    %v125 = vld [vmem:[%s1 + $0x140] sm:$0xff]
    %v126 = vld [vmem:[%s1 + $0x148] sm:$0xff]
    %v127 = vld [vmem:[%s1 + $0x150] sm:$0xff]
    %v128 = vld [vmem:[%s1 + $0x158] sm:$0xff]
    %v129 = vld [vmem:[%s1 + $0x160] sm:$0xff]
    %v130 = vld [vmem:[%s1 + $0x168] sm:$0xff]
    %v131 = vld [vmem:[%s1 + $0x170] sm:$0xff]
    %v132 = vld [vmem:[%s1 + $0x178] sm:$0xff]
    %v133 = vld [vmem:[%s2] sm:$0x7]
    %v135 = vlaneseq
    %v136 = vshrl.u32 %v135, 7
    %v137 = vsub.s32 0, %v136
    %v138 = vrot.slane %v133, %v137
    %v139 = vlaneseq
    %v140 = vshrl.u32 %v139, 7
    %v141 = vsub.s32 1, %v140
    %v142 = vrot.slane %v133, %v141
    %v143 = vlaneseq
    %v144 = vshrl.u32 %v143, 7
    %v145 = vsub.s32 2, %v144
    %v146 = vrot.slane %v133, %v145
    %150 = vmatprep.subr.mxu0 %v86
    %151 = vmatpush1.msra.mxu0 %v85
    %152 = vmatprep.subr.mxu0 %v89
    %153 = vmatpush1.msra.mxu0 %v88
    %154 = vmatprep.subr.mxu0 %v92
    %155 = vmatpush1.msra.mxu0 %v91
    %156 = vmatprep.subr.mxu0 %v95
    %157 = vmatpush1.msra.mxu0 %v94
    %158 = vmatprep.subr.mxu0 %v98
    %159 = vmatpush1.msra.mxu0 %v97
    %160 = vmatprep.subr.mxu0 %v101
    %161 = vmatpush1.msra.mxu0 %v100
    %162 = vmatprep.subr.mxu0 %v104
    %163 = vmatpush1.msra.mxu0 %v103
    %164 = vmatprep.subr.mxu0 %v107
    %165 = vmatpush1.msra.mxu0 %v106
    %166 = vmatprep.subr.mxu0 %v110
    %167 = vmatpush1.msra.mxu0 %v109
    %168 = vmatprep.subr.mxu0 %v113
    %169 = vmatpush1.msra.mxu0 %v112
    %170 = vmatprep.subr.mxu0 %v116
    %171 = vmatpush1.msra.mxu0 %v115
    %172 = vmatprep.subr.mxu0 %v119
    %173 = vmatpush1.msra.mxu0 %v118
    %174 = vmatprep.subr.mxu0 %v122
    %175 = vmatpush1.msra.mxu0 %v121
    %176 = vmatprep.subr.mxu0 %v125
    %177 = vmatpush1.msra.mxu0 %v124
    %178 = vmatprep.subr.mxu0 %v128
    %179 = vmatpush1.msra.mxu0 %v127
    %180 = vmatprep.subr.mxu0 %v131
    %181 = vmatpush1.msra.mxu0 %v130
    %182 = vmatprep.subr.mxu0 0.0
    %183 = vmatpush1.msra.mxu0 0.0
    %184 = vmatprep.subr.mxu0 0.0
    %185 = vmatpush1.msra.mxu0 0.0
    %186 = vmatprep.subr.mxu0 0.0
    %187 = vmatpush1.msra.mxu0 0.0
    %188 = vmatprep.subr.mxu0 0.0
    %189 = vmatpush1.msra.mxu0 0.0
    %190 = vmatprep.subr.mxu0 0.0
    %191 = vmatpush1.msra.mxu0 0.0
    %192 = vmatprep.subr.mxu0 0.0
    %193 = vmatpush1.msra.mxu0 0.0
    %194 = vmatprep.subr.mxu0 0.0
    %195 = vmatpush1.msra.mxu0 0.0
    %196 = vmatprep.subr.mxu0 0.0
    %197 = vmatpush1.msra.mxu0 0.0
    %198 = vmatprep.subr.mxu0 0.0
    %199 = vmatpush1.msra.mxu0 0.0
    %200 = vmatprep.subr.mxu0 0.0
    %201 = vmatpush1.msra.mxu0 0.0
    %202 = vmatprep.subr.mxu0 0.0
    %203 = vmatpush1.msra.mxu0 0.0
    %204 = vmatprep.subr.mxu0 0.0
    %205 = vmatpush1.msra.mxu0 0.0
    %206 = vmatprep.subr.mxu0 0.0
    %207 = vmatpush1.msra.mxu0 0.0
    %208 = vmatprep.subr.mxu0 0.0
    %209 = vmatpush1.msra.mxu0 0.0
    %210 = vmatprep.subr.mxu0 0.0
    %211 = vmatpush1.msra.mxu0 0.0
    %212 = vmatprep.subr.mxu0 0.0
    %213 = vmatpush1.msra.mxu0 0.0
    %214 = vmatprep.mubr.f32.mxu0 0.0
    %215 = vmatmul.mubr.f32.gmra.mrb[0].mxu0 %v81
    %v216 = vpop.f32.mrb[0].mxu0
    %v217 = vadd.f32 %v138, %v216
    %v218 = vpop.f32.mrb[0].mxu0
    %v219 = vadd.f32 %v142, %v218
    %220 = vdwg.mxu0
    %221 = vmatprep.subr.mxu0 0.0
    %222 = vmatpush1.msra.mxu0 %v87
    %223 = vmatprep.subr.mxu0 0.0
    %224 = vmatpush1.msra.mxu0 %v90
    %225 = vmatprep.subr.mxu0 0.0
    %226 = vmatpush1.msra.mxu0 %v93
    %227 = vmatprep.subr.mxu0 0.0
    %228 = vmatpush1.msra.mxu0 %v96
    %229 = vmatprep.subr.mxu0 0.0
    %230 = vmatpush1.msra.mxu0 %v99
    %231 = vmatprep.subr.mxu0 0.0
    %232 = vmatpush1.msra.mxu0 %v102
    %233 = vmatprep.subr.mxu0 0.0
    %234 = vmatpush1.msra.mxu0 %v105
    %235 = vmatprep.subr.mxu0 0.0
    %236 = vmatpush1.msra.mxu0 %v108
    %237 = vmatprep.subr.mxu0 0.0
    %238 = vmatpush1.msra.mxu0 %v111
    %239 = vmatprep.subr.mxu0 0.0
    %240 = vmatpush1.msra.mxu0 %v114
    %241 = vmatprep.subr.mxu0 0.0
    %242 = vmatpush1.msra.mxu0 %v117
    %243 = vmatprep.subr.mxu0 0.0
    %244 = vmatpush1.msra.mxu0 %v120
    %245 = vmatprep.subr.mxu0 0.0
    %246 = vmatpush1.msra.mxu0 %v123
    %247 = vmatprep.subr.mxu0 0.0
    %248 = vmatpush1.msra.mxu0 %v126
    %249 = vmatprep.subr.mxu0 0.0
    %250 = vmatpush1.msra.mxu0 %v129
    %251 = vmatprep.subr.mxu0 0.0
    %252 = vmatpush1.msra.mxu0 %v132
    %253 = vmatprep.subr.mxu0 0.0
    %254 = vmatpush1.msra.mxu0 0.0
    %255 = vmatprep.subr.mxu0 0.0
    %256 = vmatpush1.msra.mxu0 0.0
    %257 = vmatprep.subr.mxu0 0.0
    %258 = vmatpush1.msra.mxu0 0.0
    %259 = vmatprep.subr.mxu0 0.0
    %260 = vmatpush1.msra.mxu0 0.0
    %261 = vmatprep.subr.mxu0 0.0
    %262 = vmatpush1.msra.mxu0 0.0
    %263 = vmatprep.subr.mxu0 0.0
    %264 = vmatpush1.msra.mxu0 0.0
    %265 = vmatprep.subr.mxu0 0.0
    %266 = vmatpush1.msra.mxu0 0.0
    %267 = vmatprep.subr.mxu0 0.0
    %268 = vmatpush1.msra.mxu0 0.0
    %269 = vmatprep.subr.mxu0 0.0
    %270 = vmatpush1.msra.mxu0 0.0
    %271 = vmatprep.subr.mxu0 0.0
    %272 = vmatpush1.msra.mxu0 0.0
    %273 = vmatprep.subr.mxu0 0.0
    %274 = vmatpush1.msra.mxu0 0.0
    %275 = vmatprep.subr.mxu0 0.0
    %276 = vmatpush1.msra.mxu0 0.0
    %277 = vmatprep.subr.mxu0 0.0
    %278 = vmatpush1.msra.mxu0 0.0
    %279 = vmatprep.subr.mxu0 0.0
    %280 = vmatpush1.msra.mxu0 0.0
    %281 = vmatprep.subr.mxu0 0.0
    %282 = vmatpush1.msra.mxu0 0.0
    %283 = vmatprep.subr.mxu0 0.0
    %284 = vmatpush1.msra.mxu0 0.0
    %285 = vmatprep.mubr.f32.mxu0 0.0
    %286 = vmatmul.mubr.f32.gmra.mrb[0].mxu0 %v81
    %v287 = vpop.f32.mrb[0].mxu0
    %v288 = vadd.f32 %v146, %v287
    %v289 = vpop.f32.mrb[0].mxu0
    %290 = vdwg.mxu0
    %v291 = vadd.f32 %v84, %v217
    %v292 = vxor.u32 %v291, 2147483648
    %v293 = vmul.f32 %v292, 1.442695
    %v294 = vpow.pop %v293
    %v295 = vadd.f32 %v294, 1.0
    %v296 = vrcp.pop %v295
    %v297 = vmul.f32 1.0, %v296
    %v299 = vrot.slane %v84, 2
    %v301 = vadd.f32 %v299, %v219
    %v302 = vxor.u32 %v301, 2147483648
    %v303 = vmul.f32 %v302, 1.442695
    %v304 = vpow.pop %v303
    %v305 = vadd.f32 %v304, 1.0
    %v306 = vrcp.pop %v305
    %v307 = vmul.f32 1.0, %v306
    %v308 = vmul.f32 %v297, %v288
    %v309 = vrot.slane %v84, 4
    %v311 = vadd.f32 %v309, %v308
    %v312 = vtanh.pop %v311
    %v313 = vsub.f32 1.0, %v307
    %v314 = vmul.f32 %v313, %v312
    %v315 = vmul.f32 %v307, %v81
    %v316 = vadd.f32 %v314, %v315
    %v317 = vld [vmem:[#allocation6] sm:$0xff]
    %v318 = vld [vmem:[#allocation6 + $0x8] sm:$0xff]
    %v319 = vld [vmem:[#allocation6 + $0x10] sm:$0xff]
    %v320 = vld [vmem:[#allocation6 + $0x18] sm:$0xff]
    %v321 = vld [vmem:[#allocation6 + $0x20] sm:$0xff]
    %v322 = vld [vmem:[#allocation6 + $0x28] sm:$0xff]
    %v323 = vld [vmem:[#allocation6 + $0x30] sm:$0xff]
    %v324 = vld [vmem:[#allocation6 + $0x38] sm:$0xff]
    %v325 = vld [vmem:[#allocation6 + $0x40] sm:$0xff]
    %v326 = vld [vmem:[#allocation6 + $0x48] sm:$0xff]
    %v327 = vld [vmem:[#allocation6 + $0x50] sm:$0xff]
    %v328 = vld [vmem:[#allocation6 + $0x58] sm:$0xff]
    %v329 = vld [vmem:[#allocation6 + $0x60] sm:$0xff]
    %v330 = vld [vmem:[#allocation6 + $0x68] sm:$0xff]
    %v331 = vld [vmem:[#allocation6 + $0x70] sm:$0xff]
    %v332 = vld [vmem:[#allocation6 + $0x78] sm:$0xff]
    %v333 = vld [vmem:[#allocation6 + $0x80] sm:$0xff]
    %v334 = vld [vmem:[#allocation6 + $0x88] sm:$0xff]
    %v335 = vld [vmem:[#allocation6 + $0x90] sm:$0xff]
    %v336 = vld [vmem:[#allocation6 + $0x98] sm:$0xff]
    %v337 = vld [vmem:[#allocation6 + $0xa0] sm:$0xff]
    %v338 = vld [vmem:[#allocation6 + $0xa8] sm:$0xff]
    %v339 = vld [vmem:[#allocation6 + $0xb0] sm:$0xff]
    %v340 = vld [vmem:[#allocation6 + $0xb8] sm:$0xff]
    %v341 = vld [vmem:[#allocation6 + $0xc0] sm:$0xff]
    %v342 = vld [vmem:[#allocation6 + $0xc8] sm:$0xff]
    %v343 = vld [vmem:[#allocation6 + $0xd0] sm:$0xff]
    %v344 = vld [vmem:[#allocation6 + $0xd8] sm:$0xff]
    %v345 = vld [vmem:[#allocation6 + $0xe0] sm:$0xff]
    %v346 = vld [vmem:[#allocation6 + $0xe8] sm:$0xff]
    %v347 = vld [vmem:[#allocation6 + $0xf0] sm:$0xff]
    %v348 = vld [vmem:[#allocation6 + $0xf8] sm:$0xff]
    %v349 = vld [vmem:[#allocation6 + $0x100] sm:$0xff]
    %v350 = vld [vmem:[#allocation6 + $0x108] sm:$0xff]
    %v351 = vld [vmem:[#allocation6 + $0x110] sm:$0xff]
    %v352 = vld [vmem:[#allocation6 + $0x118] sm:$0xff]
    %v353 = vld [vmem:[#allocation6 + $0x120] sm:$0xff]
    %v354 = vld [vmem:[#allocation6 + $0x128] sm:$0xff]
    %v355 = vld [vmem:[#allocation6 + $0x130] sm:$0xff]
    %v356 = vld [vmem:[#allocation6 + $0x138] sm:$0xff]
    %v357 = vld [vmem:[#allocation6 + $0x140] sm:$0xff]
    %v358 = vld [vmem:[#allocation6 + $0x148] sm:$0xff]
    %v359 = vld [vmem:[#allocation6 + $0x150] sm:$0xff]
    %v360 = vld [vmem:[#allocation6 + $0x158] sm:$0xff]
    %v361 = vld [vmem:[#allocation6 + $0x160] sm:$0xff]
    %v362 = vld [vmem:[#allocation6 + $0x168] sm:$0xff]
    %v363 = vld [vmem:[#allocation6 + $0x170] sm:$0xff]
    %v364 = vld [vmem:[#allocation6 + $0x178] sm:$0xff]
    %v365 = vld [vmem:[#allocation6 + $0x180] sm:$0xff]
    %v366 = vld [vmem:[#allocation6 + $0x188] sm:$0xff]
    %v367 = vld [vmem:[#allocation6 + $0x190] sm:$0xff]
    %v368 = vld [vmem:[#allocation6 + $0x198] sm:$0xff]
    %v369 = vld [vmem:[#allocation6 + $0x1a0] sm:$0xff]
    %v370 = vld [vmem:[#allocation6 + $0x1a8] sm:$0xff]
    %v371 = vld [vmem:[#allocation6 + $0x1b0] sm:$0xff]
    %v372 = vld [vmem:[#allocation6 + $0x1b8] sm:$0xff]
    %v373 = vld [vmem:[#allocation6 + $0x1c0] sm:$0xff]
    %v374 = vld [vmem:[#allocation6 + $0x1c8] sm:$0xff]
    %v375 = vld [vmem:[#allocation6 + $0x1d0] sm:$0xff]
    %v376 = vld [vmem:[#allocation6 + $0x1d8] sm:$0xff]
    %v377 = vld [vmem:[#allocation6 + $0x1e0] sm:$0xff]
    %v378 = vld [vmem:[#allocation6 + $0x1e8] sm:$0xff]
    %v379 = vld [vmem:[#allocation6 + $0x1f0] sm:$0xff]
    %v380 = vld [vmem:[#allocation6 + $0x1f8] sm:$0xff]
    %v381 = vld [vmem:[#allocation6 + $0x200] sm:$0xff]
    %v382 = vld [vmem:[#allocation6 + $0x208] sm:$0xff]
    %v383 = vld [vmem:[#allocation6 + $0x210] sm:$0xff]
    %v384 = vld [vmem:[#allocation6 + $0x218] sm:$0xff]
    %v385 = vld [vmem:[#allocation6 + $0x220] sm:$0xff]
    %v386 = vld [vmem:[#allocation6 + $0x228] sm:$0xff]
    %v387 = vld [vmem:[#allocation6 + $0x230] sm:$0xff]
    %v388 = vld [vmem:[#allocation6 + $0x238] sm:$0xff]
    %v389 = vld [vmem:[#allocation6 + $0x240] sm:$0xff]
    %v390 = vld [vmem:[#allocation6 + $0x248] sm:$0xff]
    %v391 = vld [vmem:[#allocation6 + $0x250] sm:$0xff]
    %v392 = vld [vmem:[#allocation6 + $0x258] sm:$0xff]
    %v393 = vld [vmem:[#allocation6 + $0x260] sm:$0xff]
    %v394 = vld [vmem:[#allocation6 + $0x268] sm:$0xff]
    %v395 = vld [vmem:[#allocation6 + $0x270] sm:$0xff]
    %v396 = vld [vmem:[#allocation6 + $0x278] sm:$0xff]
    %v397 = vld [vmem:[#allocation6 + $0x280] sm:$0xff]
    %v398 = vld [vmem:[#allocation6 + $0x288] sm:$0xff]
    %v399 = vld [vmem:[#allocation6 + $0x290] sm:$0xff]
    %v400 = vld [vmem:[#allocation6 + $0x298] sm:$0xff]
    %v401 = vld [vmem:[#allocation6 + $0x2a0] sm:$0xff]
    %v402 = vld [vmem:[#allocation6 + $0x2a8] sm:$0xff]
    %v403 = vld [vmem:[#allocation6 + $0x2b0] sm:$0xff]
    %v404 = vld [vmem:[#allocation6 + $0x2b8] sm:$0xff]
    %v405 = vld [vmem:[#allocation6 + $0x2c0] sm:$0xff]
    %v406 = vld [vmem:[#allocation6 + $0x2c8] sm:$0xff]
    %v407 = vld [vmem:[#allocation6 + $0x2d0] sm:$0xff]
    %v408 = vld [vmem:[#allocation6 + $0x2d8] sm:$0xff]
    %v409 = vld [vmem:[#allocation6 + $0x2e0] sm:$0xff]
    %v410 = vld [vmem:[#allocation6 + $0x2e8] sm:$0xff]
    %v411 = vld [vmem:[#allocation6 + $0x2f0] sm:$0xff]
    %v412 = vld [vmem:[#allocation6 + $0x2f8] sm:$0xff]
    %v413 = vld [vmem:[#allocation6 + $0x300] sm:$0xff]
    %v414 = vld [vmem:[#allocation6 + $0x308] sm:$0xff]
    %v415 = vld [vmem:[#allocation6 + $0x310] sm:$0xff]
    %v416 = vld [vmem:[#allocation6 + $0x318] sm:$0xff]
    %v417 = vld [vmem:[#allocation6 + $0x320] sm:$0xff]
    %v418 = vld [vmem:[#allocation6 + $0x328] sm:$0xff]
    %v419 = vld [vmem:[#allocation6 + $0x330] sm:$0xff]
    %v420 = vld [vmem:[#allocation6 + $0x338] sm:$0xff]
    %v421 = vld [vmem:[#allocation6 + $0x340] sm:$0xff]
    %v422 = vld [vmem:[#allocation6 + $0x348] sm:$0xff]
    %v423 = vld [vmem:[#allocation6 + $0x350] sm:$0xff]
    %v424 = vld [vmem:[#allocation6 + $0x358] sm:$0xff]
    %v425 = vld [vmem:[#allocation6 + $0x360] sm:$0xff]
    %v426 = vld [vmem:[#allocation6 + $0x368] sm:$0xff]
    %v427 = vld [vmem:[#allocation6 + $0x370] sm:$0xff]
    %v428 = vld [vmem:[#allocation6 + $0x378] sm:$0xff]
    %v429 = vld [vmem:[#allocation6 + $0x380] sm:$0xff]
    %v430 = vld [vmem:[#allocation6 + $0x388] sm:$0xff]
    %v431 = vld [vmem:[#allocation6 + $0x390] sm:$0xff]
    %v432 = vld [vmem:[#allocation6 + $0x398] sm:$0xff]
    %v433 = vld [vmem:[#allocation6 + $0x3a0] sm:$0xff]
    %v434 = vld [vmem:[#allocation6 + $0x3a8] sm:$0xff]
    %v435 = vld [vmem:[#allocation6 + $0x3b0] sm:$0xff]
    %v436 = vld [vmem:[#allocation6 + $0x3b8] sm:$0xff]
    %v437 = vld [vmem:[#allocation6 + $0x3c0] sm:$0xff]
    %v438 = vld [vmem:[#allocation6 + $0x3c8] sm:$0xff]
    %v439 = vld [vmem:[#allocation6 + $0x3d0] sm:$0xff]
    %v440 = vld [vmem:[#allocation6 + $0x3d8] sm:$0xff]
    %v441 = vld [vmem:[#allocation6 + $0x3e0] sm:$0xff]
    %v442 = vld [vmem:[#allocation6 + $0x3e8] sm:$0xff]
    %v443 = vld [vmem:[#allocation6 + $0x3f0] sm:$0xff]
    %v444 = vld [vmem:[#allocation6 + $0x3f8] sm:$0xff]
    %v445 = vld [vmem:[#allocation6 + $0x400] sm:$0xff]
    %v446 = vld [vmem:[#allocation6 + $0x408] sm:$0xff]
    %v447 = vld [vmem:[#allocation6 + $0x410] sm:$0xff]
    %v448 = vld [vmem:[#allocation6 + $0x418] sm:$0xff]
    %v449 = vld [vmem:[#allocation6 + $0x420] sm:$0xff]
    %v450 = vld [vmem:[#allocation6 + $0x428] sm:$0xff]
    %v451 = vld [vmem:[#allocation6 + $0x430] sm:$0xff]
    %v452 = vld [vmem:[#allocation6 + $0x438] sm:$0xff]
    %v453 = vld [vmem:[#allocation6 + $0x440] sm:$0xff]
    %v454 = vld [vmem:[#allocation6 + $0x448] sm:$0xff]
    %v455 = vld [vmem:[#allocation6 + $0x450] sm:$0xff]
    %v456 = vld [vmem:[#allocation6 + $0x458] sm:$0xff]
    %v457 = vld [vmem:[#allocation6 + $0x460] sm:$0xff]
    %v458 = vld [vmem:[#allocation6 + $0x468] sm:$0xff]
    %v459 = vld [vmem:[#allocation6 + $0x470] sm:$0xff]
    %v460 = vld [vmem:[#allocation6 + $0x478] sm:$0xff]
    %v461 = vld [vmem:[#allocation6 + $0x480] sm:$0xff]
    %v462 = vld [vmem:[#allocation6 + $0x488] sm:$0xff]
    %v463 = vld [vmem:[#allocation6 + $0x490] sm:$0xff]
    %v464 = vld [vmem:[#allocation6 + $0x498] sm:$0xff]
    %v465 = vld [vmem:[#allocation6 + $0x4a0] sm:$0xff]
    %v466 = vld [vmem:[#allocation6 + $0x4a8] sm:$0xff]
    %v467 = vld [vmem:[#allocation6 + $0x4b0] sm:$0xff]
    %v468 = vld [vmem:[#allocation6 + $0x4b8] sm:$0xff]
    %v469 = vld [vmem:[#allocation6 + $0x4c0] sm:$0xff]
    %v470 = vld [vmem:[#allocation6 + $0x4c8] sm:$0xff]
    %v471 = vld [vmem:[#allocation6 + $0x4d0] sm:$0xff]
    %v472 = vld [vmem:[#allocation6 + $0x4d8] sm:$0xff]
    %v473 = vld [vmem:[#allocation6 + $0x4e0] sm:$0xff]
    %v474 = vld [vmem:[#allocation6 + $0x4e8] sm:$0xff]
    %v475 = vld [vmem:[#allocation6 + $0x4f0] sm:$0xff]
    %v476 = vld [vmem:[#allocation6 + $0x4f8] sm:$0xff]
    %v477 = vld [vmem:[#allocation6 + $0x500] sm:$0xff]
    %v478 = vld [vmem:[#allocation6 + $0x508] sm:$0xff]
    %v479 = vld [vmem:[#allocation6 + $0x510] sm:$0xff]
    %v480 = vld [vmem:[#allocation6 + $0x518] sm:$0xff]
    %v481 = vld [vmem:[#allocation6 + $0x520] sm:$0xff]
    %v482 = vld [vmem:[#allocation6 + $0x528] sm:$0xff]
    %v483 = vld [vmem:[#allocation6 + $0x530] sm:$0xff]
    %v484 = vld [vmem:[#allocation6 + $0x538] sm:$0xff]
    %v485 = vld [vmem:[#allocation6 + $0x540] sm:$0xff]
    %v486 = vld [vmem:[#allocation6 + $0x548] sm:$0xff]
    %v487 = vld [vmem:[#allocation6 + $0x550] sm:$0xff]
    %v488 = vld [vmem:[#allocation6 + $0x558] sm:$0xff]
    %v489 = vld [vmem:[#allocation6 + $0x560] sm:$0xff]
    %v490 = vld [vmem:[#allocation6 + $0x568] sm:$0xff]
    %v491 = vld [vmem:[#allocation6 + $0x570] sm:$0xff]
    %v492 = vld [vmem:[#allocation6 + $0x578] sm:$0xff]
    %v493 = vld [vmem:[#allocation6 + $0x580] sm:$0xff]
    %v494 = vld [vmem:[#allocation6 + $0x588] sm:$0xff]
    %v495 = vld [vmem:[#allocation6 + $0x590] sm:$0xff]
    %v496 = vld [vmem:[#allocation6 + $0x598] sm:$0xff]
    %v497 = vld [vmem:[#allocation6 + $0x5a0] sm:$0xff]
    %v498 = vld [vmem:[#allocation6 + $0x5a8] sm:$0xff]
    %v499 = vld [vmem:[#allocation6 + $0x5b0] sm:$0xff]
    %v500 = vld [vmem:[#allocation6 + $0x5b8] sm:$0xff]
    %v501 = vld [vmem:[#allocation6 + $0x5c0] sm:$0xff]
    %v502 = vld [vmem:[#allocation6 + $0x5c8] sm:$0xff]
    %v503 = vld [vmem:[#allocation6 + $0x5d0] sm:$0xff]
    %v504 = vld [vmem:[#allocation6 + $0x5d8] sm:$0xff]
    %v505 = vld [vmem:[#allocation6 + $0x5e0] sm:$0xff]
    %v506 = vld [vmem:[#allocation6 + $0x5e8] sm:$0xff]
    %v507 = vld [vmem:[#allocation6 + $0x5f0] sm:$0xff]
    %v508 = vld [vmem:[#allocation6 + $0x5f8] sm:$0xff]
    %v509 = vld [vmem:[%s4] sm:$0x3f]
    %v511 = vlaneseq
    %v512 = vshrl.u32 %v511, 7
    %v513 = vsub.s32 0, %v512
    %v514 = vrot.slane %v509, %v513
    %v515 = vlaneseq
    %v516 = vshrl.u32 %v515, 7
    %v517 = vsub.s32 1, %v516
    %v518 = vrot.slane %v509, %v517
    %v519 = vlaneseq
    %v520 = vshrl.u32 %v519, 7
    %v521 = vsub.s32 2, %v520
    %v522 = vrot.slane %v509, %v521
    %v523 = vlaneseq
    %v524 = vshrl.u32 %v523, 7
    %v525 = vsub.s32 3, %v524
    %v526 = vrot.slane %v509, %v525
    %v527 = vlaneseq
    %v528 = vshrl.u32 %v527, 7
    %v529 = vsub.s32 4, %v528
    %v530 = vrot.slane %v509, %v529
    %v531 = vlaneseq
    %v532 = vshrl.u32 %v531, 7
    %v533 = vsub.s32 5, %v532
    %v534 = vrot.slane %v509, %v533
    %541 = vmatprep.subr.mxu0 %v318
    %542 = vmatpush1.msra.mxu0 %v317
    %543 = vmatprep.subr.mxu0 %v324
    %544 = vmatpush1.msra.mxu0 %v323
    %545 = vmatprep.subr.mxu0 %v330
    %546 = vmatpush1.msra.mxu0 %v329
    %547 = vmatprep.subr.mxu0 %v336
    %548 = vmatpush1.msra.mxu0 %v335
    %549 = vmatprep.subr.mxu0 %v342
    %550 = vmatpush1.msra.mxu0 %v341
    %551 = vmatprep.subr.mxu0 %v348
    %552 = vmatpush1.msra.mxu0 %v347
    %553 = vmatprep.subr.mxu0 %v354
    %554 = vmatpush1.msra.mxu0 %v353
    %555 = vmatprep.subr.mxu0 %v360
    %556 = vmatpush1.msra.mxu0 %v359
    %557 = vmatprep.subr.mxu0 %v366
    %558 = vmatpush1.msra.mxu0 %v365
    %559 = vmatprep.subr.mxu0 %v372
    %560 = vmatpush1.msra.mxu0 %v371
    %561 = vmatprep.subr.mxu0 %v378
    %562 = vmatpush1.msra.mxu0 %v377
    %563 = vmatprep.subr.mxu0 %v384
    %564 = vmatpush1.msra.mxu0 %v383
    %565 = vmatprep.subr.mxu0 %v390
    %566 = vmatpush1.msra.mxu0 %v389
    %567 = vmatprep.subr.mxu0 %v396
    %568 = vmatpush1.msra.mxu0 %v395
    %569 = vmatprep.subr.mxu0 %v402
    %570 = vmatpush1.msra.mxu0 %v401
    %571 = vmatprep.subr.mxu0 %v408
    %572 = vmatpush1.msra.mxu0 %v407
    %573 = vmatprep.subr.mxu0 %v414
    %574 = vmatpush1.msra.mxu0 %v413
    %575 = vmatprep.subr.mxu0 %v420
    %576 = vmatpush1.msra.mxu0 %v419
    %577 = vmatprep.subr.mxu0 %v426
    %578 = vmatpush1.msra.mxu0 %v425
    %579 = vmatprep.subr.mxu0 %v432
    %580 = vmatpush1.msra.mxu0 %v431
    %581 = vmatprep.subr.mxu0 %v438
    %582 = vmatpush1.msra.mxu0 %v437
    %583 = vmatprep.subr.mxu0 %v444
    %584 = vmatpush1.msra.mxu0 %v443
    %585 = vmatprep.subr.mxu0 %v450
    %586 = vmatpush1.msra.mxu0 %v449
    %587 = vmatprep.subr.mxu0 %v456
    %588 = vmatpush1.msra.mxu0 %v455
    %589 = vmatprep.subr.mxu0 %v462
    %590 = vmatpush1.msra.mxu0 %v461
    %591 = vmatprep.subr.mxu0 %v468
    %592 = vmatpush1.msra.mxu0 %v467
    %593 = vmatprep.subr.mxu0 %v474
    %594 = vmatpush1.msra.mxu0 %v473
    %595 = vmatprep.subr.mxu0 %v480
    %596 = vmatpush1.msra.mxu0 %v479
    %597 = vmatprep.subr.mxu0 %v486
    %598 = vmatpush1.msra.mxu0 %v485
    %599 = vmatprep.subr.mxu0 %v492
    %600 = vmatpush1.msra.mxu0 %v491
    %601 = vmatprep.subr.mxu0 %v498
    %602 = vmatpush1.msra.mxu0 %v497
    %603 = vmatprep.subr.mxu0 %v504
    %604 = vmatpush1.msra.mxu0 %v503
    %605 = vmatprep.mubr.f32.mxu0 %v82
    %606 = vmatmul.mubr.f32.gmra.mrb[0].mxu0 %v316
    %v607 = vpop.f32.mrb[0].mxu0
    %v608 = vadd.f32 %v514, %v607
    %v609 = vpop.f32.mrb[0].mxu0
    %v610 = vadd.f32 %v518, %v609
    %611 = vdwg.mxu0
    %612 = vmatprep.subr.mxu0 %v320
    %613 = vmatpush1.msra.mxu0 %v319
    %614 = vmatprep.subr.mxu0 %v326
    %615 = vmatpush1.msra.mxu0 %v325
    %616 = vmatprep.subr.mxu0 %v332
    %617 = vmatpush1.msra.mxu0 %v331
    %618 = vmatprep.subr.mxu0 %v338
    %619 = vmatpush1.msra.mxu0 %v337
    %620 = vmatprep.subr.mxu0 %v344
    %621 = vmatpush1.msra.mxu0 %v343
    %622 = vmatprep.subr.mxu0 %v350
    %623 = vmatpush1.msra.mxu0 %v349
    %624 = vmatprep.subr.mxu0 %v356
    %625 = vmatpush1.msra.mxu0 %v355
    %626 = vmatprep.subr.mxu0 %v362
    %627 = vmatpush1.msra.mxu0 %v361
    %628 = vmatprep.subr.mxu0 %v368
    %629 = vmatpush1.msra.mxu0 %v367
    %630 = vmatprep.subr.mxu0 %v374
    %631 = vmatpush1.msra.mxu0 %v373
    %632 = vmatprep.subr.mxu0 %v380
    %633 = vmatpush1.msra.mxu0 %v379
    %634 = vmatprep.subr.mxu0 %v386
    %635 = vmatpush1.msra.mxu0 %v385
    %636 = vmatprep.subr.mxu0 %v392
    %637 = vmatpush1.msra.mxu0 %v391
    %638 = vmatprep.subr.mxu0 %v398
    %639 = vmatpush1.msra.mxu0 %v397
    %640 = vmatprep.subr.mxu0 %v404
    %641 = vmatpush1.msra.mxu0 %v403
    %642 = vmatprep.subr.mxu0 %v410
    %643 = vmatpush1.msra.mxu0 %v409
    %644 = vmatprep.subr.mxu0 %v416
    %645 = vmatpush1.msra.mxu0 %v415
    %646 = vmatprep.subr.mxu0 %v422
    %647 = vmatpush1.msra.mxu0 %v421
    %648 = vmatprep.subr.mxu0 %v428
    %649 = vmatpush1.msra.mxu0 %v427
    %650 = vmatprep.subr.mxu0 %v434
    %651 = vmatpush1.msra.mxu0 %v433
    %652 = vmatprep.subr.mxu0 %v440
    %653 = vmatpush1.msra.mxu0 %v439
    %654 = vmatprep.subr.mxu0 %v446
    %655 = vmatpush1.msra.mxu0 %v445
    %656 = vmatprep.subr.mxu0 %v452
    %657 = vmatpush1.msra.mxu0 %v451
    %658 = vmatprep.subr.mxu0 %v458
    %659 = vmatpush1.msra.mxu0 %v457
    %660 = vmatprep.subr.mxu0 %v464
    %661 = vmatpush1.msra.mxu0 %v463
    %662 = vmatprep.subr.mxu0 %v470
    %663 = vmatpush1.msra.mxu0 %v469
    %664 = vmatprep.subr.mxu0 %v476
    %665 = vmatpush1.msra.mxu0 %v475
    %666 = vmatprep.subr.mxu0 %v482
    %667 = vmatpush1.msra.mxu0 %v481
    %668 = vmatprep.subr.mxu0 %v488
    %669 = vmatpush1.msra.mxu0 %v487
    %670 = vmatprep.subr.mxu0 %v494
    %671 = vmatpush1.msra.mxu0 %v493
    %672 = vmatprep.subr.mxu0 %v500
    %673 = vmatpush1.msra.mxu0 %v499
    %674 = vmatprep.subr.mxu0 %v506
    %675 = vmatpush1.msra.mxu0 %v505
    %676 = vmatprep.mubr.f32.mxu0 %v82
    %677 = vmatmul.mubr.f32.gmra.mrb[0].mxu0 %v316
    %v678 = vpop.f32.mrb[0].mxu0
    %v679 = vadd.f32 %v522, %v678
    %v680 = vpop.f32.mrb[0].mxu0
    %v681 = vadd.f32 %v526, %v680
    %682 = vdwg.mxu0
    %683 = vmatprep.subr.mxu0 %v322
    %684 = vmatpush1.msra.mxu0 %v321
    %685 = vmatprep.subr.mxu0 %v328
    %686 = vmatpush1.msra.mxu0 %v327
    %687 = vmatprep.subr.mxu0 %v334
    %688 = vmatpush1.msra.mxu0 %v333
    %689 = vmatprep.subr.mxu0 %v340
    %690 = vmatpush1.msra.mxu0 %v339
    %691 = vmatprep.subr.mxu0 %v346
    %692 = vmatpush1.msra.mxu0 %v345
    %693 = vmatprep.subr.mxu0 %v352
    %694 = vmatpush1.msra.mxu0 %v351
    %695 = vmatprep.subr.mxu0 %v358
    %696 = vmatpush1.msra.mxu0 %v357
    %697 = vmatprep.subr.mxu0 %v364
    %698 = vmatpush1.msra.mxu0 %v363
    %699 = vmatprep.subr.mxu0 %v370
    %700 = vmatpush1.msra.mxu0 %v369
    %701 = vmatprep.subr.mxu0 %v376
    %702 = vmatpush1.msra.mxu0 %v375
    %703 = vmatprep.subr.mxu0 %v382
    %704 = vmatpush1.msra.mxu0 %v381
    %705 = vmatprep.subr.mxu0 %v388
    %706 = vmatpush1.msra.mxu0 %v387
    %707 = vmatprep.subr.mxu0 %v394
    %708 = vmatpush1.msra.mxu0 %v393
    %709 = vmatprep.subr.mxu0 %v400
    %710 = vmatpush1.msra.mxu0 %v399
    %711 = vmatprep.subr.mxu0 %v406
    %712 = vmatpush1.msra.mxu0 %v405
    %713 = vmatprep.subr.mxu0 %v412
    %714 = vmatpush1.msra.mxu0 %v411
    %715 = vmatprep.subr.mxu0 %v418
    %716 = vmatpush1.msra.mxu0 %v417
    %717 = vmatprep.subr.mxu0 %v424
    %718 = vmatpush1.msra.mxu0 %v423
    %719 = vmatprep.subr.mxu0 %v430
    %720 = vmatpush1.msra.mxu0 %v429
    %721 = vmatprep.subr.mxu0 %v436
    %722 = vmatpush1.msra.mxu0 %v435
    %723 = vmatprep.subr.mxu0 %v442
    %724 = vmatpush1.msra.mxu0 %v441
    %725 = vmatprep.subr.mxu0 %v448
    %726 = vmatpush1.msra.mxu0 %v447
    %727 = vmatprep.subr.mxu0 %v454
    %728 = vmatpush1.msra.mxu0 %v453
    %729 = vmatprep.subr.mxu0 %v460
    %730 = vmatpush1.msra.mxu0 %v459
    %731 = vmatprep.subr.mxu0 %v466
    %732 = vmatpush1.msra.mxu0 %v465
    %733 = vmatprep.subr.mxu0 %v472
    %734 = vmatpush1.msra.mxu0 %v471
    %735 = vmatprep.subr.mxu0 %v478
    %736 = vmatpush1.msra.mxu0 %v477
    %737 = vmatprep.subr.mxu0 %v484
    %738 = vmatpush1.msra.mxu0 %v483
    %739 = vmatprep.subr.mxu0 %v490
    %740 = vmatpush1.msra.mxu0 %v489
    %741 = vmatprep.subr.mxu0 %v496
    %742 = vmatpush1.msra.mxu0 %v495
    %743 = vmatprep.subr.mxu0 %v502
    %744 = vmatpush1.msra.mxu0 %v501
    %745 = vmatprep.subr.mxu0 %v508
    %746 = vmatpush1.msra.mxu0 %v507
    %747 = vmatprep.mubr.f32.mxu0 %v82
    %748 = vmatmul.mubr.f32.gmra.mrb[0].mxu0 %v316
    %v749 = vpop.f32.mrb[0].mxu0
    %v750 = vadd.f32 %v530, %v749
    %v751 = vpop.f32.mrb[0].mxu0
    %v752 = vadd.f32 %v534, %v751
    %753 = vdwg.mxu0
    %v754 = vadd.f32 %v608, %v681
    %v755 = vxor.u32 %v754, 2147483648
    %v756 = vmul.f32 %v755, 1.442695
    %v757 = vpow.pop %v756
    %v758 = vadd.f32 %v757, 1.0
    %v759 = vrcp.pop %v758
    %v760 = vmul.f32 1.0, %v759
    %v761 = vadd.f32 %v610, %v750
    %v762 = vxor.u32 %v761, 2147483648
    %v763 = vmul.f32 %v762, 1.442695
    %v764 = vpow.pop %v763
    %v765 = vadd.f32 %v764, 1.0
    %v766 = vrcp.pop %v765
    %v767 = vmul.f32 1.0, %v766
    %v768 = vmul.f32 %v760, %v752
    %v769 = vadd.f32 %v679, %v768
    %v770 = vtanh.pop %v769
    %v771 = vsub.f32 1.0, %v767
    %v772 = vmul.f32 %v771, %v770
    %v773 = vmul.f32 %v767, %v82
    %v774 = vadd.f32 %v772, %v773
    %v775 = vld [vmem:[#allocation8] sm:$0xff]
    %v776 = vld [vmem:[#allocation8 + $0x8] sm:$0xff]
    %v777 = vld [vmem:[#allocation8 + $0x10] sm:$0xff]
    %v778 = vld [vmem:[#allocation8 + $0x18] sm:$0xff]
    %v779 = vld [vmem:[#allocation8 + $0x20] sm:$0xff]
    %v780 = vld [vmem:[#allocation8 + $0x28] sm:$0xff]
    %v781 = vld [vmem:[#allocation8 + $0x30] sm:$0xff]
    %v782 = vld [vmem:[#allocation8 + $0x38] sm:$0xff]
    %v783 = vld [vmem:[#allocation8 + $0x40] sm:$0xff]
    %v784 = vld [vmem:[#allocation8 + $0x48] sm:$0xff]
    %v785 = vld [vmem:[#allocation8 + $0x50] sm:$0xff]
    %v786 = vld [vmem:[#allocation8 + $0x58] sm:$0xff]
    %v787 = vld [vmem:[#allocation8 + $0x60] sm:$0xff]
    %v788 = vld [vmem:[#allocation8 + $0x68] sm:$0xff]
    %v789 = vld [vmem:[#allocation8 + $0x70] sm:$0xff]
    %v790 = vld [vmem:[#allocation8 + $0x78] sm:$0xff]
    %v791 = vld [vmem:[#allocation8 + $0x80] sm:$0xff]
    %v792 = vld [vmem:[#allocation8 + $0x88] sm:$0xff]
    %v793 = vld [vmem:[#allocation8 + $0x90] sm:$0xff]
    %v794 = vld [vmem:[#allocation8 + $0x98] sm:$0xff]
    %v795 = vld [vmem:[#allocation8 + $0xa0] sm:$0xff]
    %v796 = vld [vmem:[#allocation8 + $0xa8] sm:$0xff]
    %v797 = vld [vmem:[#allocation8 + $0xb0] sm:$0xff]
    %v798 = vld [vmem:[#allocation8 + $0xb8] sm:$0xff]
    %v799 = vld [vmem:[#allocation8 + $0xc0] sm:$0xff]
    %v800 = vld [vmem:[#allocation8 + $0xc8] sm:$0xff]
    %v801 = vld [vmem:[#allocation8 + $0xd0] sm:$0xff]
    %v802 = vld [vmem:[#allocation8 + $0xd8] sm:$0xff]
    %v803 = vld [vmem:[#allocation8 + $0xe0] sm:$0xff]
    %v804 = vld [vmem:[#allocation8 + $0xe8] sm:$0xff]
    %v805 = vld [vmem:[#allocation8 + $0xf0] sm:$0xff]
    %v806 = vld [vmem:[#allocation8 + $0xf8] sm:$0xff]
    %v807 = vld [vmem:[#allocation8 + $0x100] sm:$0xff]
    %v808 = vld [vmem:[#allocation8 + $0x108] sm:$0xff]
    %v809 = vld [vmem:[#allocation8 + $0x110] sm:$0xff]
    %v810 = vld [vmem:[#allocation8 + $0x118] sm:$0xff]
    %v811 = vld [vmem:[#allocation8 + $0x120] sm:$0xff]
    %v812 = vld [vmem:[#allocation8 + $0x128] sm:$0xff]
    %v813 = vld [vmem:[#allocation8 + $0x130] sm:$0xff]
    %v814 = vld [vmem:[#allocation8 + $0x138] sm:$0xff]
    %v815 = vld [vmem:[#allocation8 + $0x140] sm:$0xff]
    %v816 = vld [vmem:[#allocation8 + $0x148] sm:$0xff]
    %v817 = vld [vmem:[#allocation8 + $0x150] sm:$0xff]
    %v818 = vld [vmem:[#allocation8 + $0x158] sm:$0xff]
    %v819 = vld [vmem:[#allocation8 + $0x160] sm:$0xff]
    %v820 = vld [vmem:[#allocation8 + $0x168] sm:$0xff]
    %v821 = vld [vmem:[#allocation8 + $0x170] sm:$0xff]
    %v822 = vld [vmem:[#allocation8 + $0x178] sm:$0xff]
    %v823 = vld [vmem:[#allocation8 + $0x180] sm:$0xff]
    %v824 = vld [vmem:[#allocation8 + $0x188] sm:$0xff]
    %v825 = vld [vmem:[#allocation8 + $0x190] sm:$0xff]
    %v826 = vld [vmem:[#allocation8 + $0x198] sm:$0xff]
    %v827 = vld [vmem:[#allocation8 + $0x1a0] sm:$0xff]
    %v828 = vld [vmem:[#allocation8 + $0x1a8] sm:$0xff]
    %v829 = vld [vmem:[#allocation8 + $0x1b0] sm:$0xff]
    %v830 = vld [vmem:[#allocation8 + $0x1b8] sm:$0xff]
    %v831 = vld [vmem:[#allocation8 + $0x1c0] sm:$0xff]
    %v832 = vld [vmem:[#allocation8 + $0x1c8] sm:$0xff]
    %v833 = vld [vmem:[#allocation8 + $0x1d0] sm:$0xff]
    %v834 = vld [vmem:[#allocation8 + $0x1d8] sm:$0xff]
    %v835 = vld [vmem:[#allocation8 + $0x1e0] sm:$0xff]
    %v836 = vld [vmem:[#allocation8 + $0x1e8] sm:$0xff]
    %v837 = vld [vmem:[#allocation8 + $0x1f0] sm:$0xff]
    %v838 = vld [vmem:[#allocation8 + $0x1f8] sm:$0xff]
    %v839 = vld [vmem:[#allocation8 + $0x200] sm:$0xff]
    %v840 = vld [vmem:[#allocation8 + $0x208] sm:$0xff]
    %v841 = vld [vmem:[#allocation8 + $0x210] sm:$0xff]
    %v842 = vld [vmem:[#allocation8 + $0x218] sm:$0xff]
    %v843 = vld [vmem:[#allocation8 + $0x220] sm:$0xff]
    %v844 = vld [vmem:[#allocation8 + $0x228] sm:$0xff]
    %v845 = vld [vmem:[#allocation8 + $0x230] sm:$0xff]
    %v846 = vld [vmem:[#allocation8 + $0x238] sm:$0xff]
    %v847 = vld [vmem:[#allocation8 + $0x240] sm:$0xff]
    %v848 = vld [vmem:[#allocation8 + $0x248] sm:$0xff]
    %v849 = vld [vmem:[#allocation8 + $0x250] sm:$0xff]
    %v850 = vld [vmem:[#allocation8 + $0x258] sm:$0xff]
    %v851 = vld [vmem:[#allocation8 + $0x260] sm:$0xff]
    %v852 = vld [vmem:[#allocation8 + $0x268] sm:$0xff]
    %v853 = vld [vmem:[#allocation8 + $0x270] sm:$0xff]
    %v854 = vld [vmem:[#allocation8 + $0x278] sm:$0xff]
    %v855 = vld [vmem:[#allocation8 + $0x280] sm:$0xff]
    %v856 = vld [vmem:[#allocation8 + $0x288] sm:$0xff]
    %v857 = vld [vmem:[#allocation8 + $0x290] sm:$0xff]
    %v858 = vld [vmem:[#allocation8 + $0x298] sm:$0xff]
    %v859 = vld [vmem:[#allocation8 + $0x2a0] sm:$0xff]
    %v860 = vld [vmem:[#allocation8 + $0x2a8] sm:$0xff]
    %v861 = vld [vmem:[#allocation8 + $0x2b0] sm:$0xff]
    %v862 = vld [vmem:[#allocation8 + $0x2b8] sm:$0xff]
    %v863 = vld [vmem:[#allocation8 + $0x2c0] sm:$0xff]
    %v864 = vld [vmem:[#allocation8 + $0x2c8] sm:$0xff]
    %v865 = vld [vmem:[#allocation8 + $0x2d0] sm:$0xff]
    %v866 = vld [vmem:[#allocation8 + $0x2d8] sm:$0xff]
    %v867 = vld [vmem:[#allocation8 + $0x2e0] sm:$0xff]
    %v868 = vld [vmem:[#allocation8 + $0x2e8] sm:$0xff]
    %v869 = vld [vmem:[#allocation8 + $0x2f0] sm:$0xff]
    %v870 = vld [vmem:[#allocation8 + $0x2f8] sm:$0xff]
    %v871 = vld [vmem:[#allocation8 + $0x300] sm:$0xff]
    %v872 = vld [vmem:[#allocation8 + $0x308] sm:$0xff]
    %v873 = vld [vmem:[#allocation8 + $0x310] sm:$0xff]
    %v874 = vld [vmem:[#allocation8 + $0x318] sm:$0xff]
    %v875 = vld [vmem:[#allocation8 + $0x320] sm:$0xff]
    %v876 = vld [vmem:[#allocation8 + $0x328] sm:$0xff]
    %v877 = vld [vmem:[#allocation8 + $0x330] sm:$0xff]
    %v878 = vld [vmem:[#allocation8 + $0x338] sm:$0xff]
    %v879 = vld [vmem:[#allocation8 + $0x340] sm:$0xff]
    %v880 = vld [vmem:[#allocation8 + $0x348] sm:$0xff]
    %v881 = vld [vmem:[#allocation8 + $0x350] sm:$0xff]
    %v882 = vld [vmem:[#allocation8 + $0x358] sm:$0xff]
    %v883 = vld [vmem:[#allocation8 + $0x360] sm:$0xff]
    %v884 = vld [vmem:[#allocation8 + $0x368] sm:$0xff]
    %v885 = vld [vmem:[#allocation8 + $0x370] sm:$0xff]
    %v886 = vld [vmem:[#allocation8 + $0x378] sm:$0xff]
    %v887 = vld [vmem:[#allocation8 + $0x380] sm:$0xff]
    %v888 = vld [vmem:[#allocation8 + $0x388] sm:$0xff]
    %v889 = vld [vmem:[#allocation8 + $0x390] sm:$0xff]
    %v890 = vld [vmem:[#allocation8 + $0x398] sm:$0xff]
    %v891 = vld [vmem:[#allocation8 + $0x3a0] sm:$0xff]
    %v892 = vld [vmem:[#allocation8 + $0x3a8] sm:$0xff]
    %v893 = vld [vmem:[#allocation8 + $0x3b0] sm:$0xff]
    %v894 = vld [vmem:[#allocation8 + $0x3b8] sm:$0xff]
    %v895 = vld [vmem:[#allocation8 + $0x3c0] sm:$0xff]
    %v896 = vld [vmem:[#allocation8 + $0x3c8] sm:$0xff]
    %v897 = vld [vmem:[#allocation8 + $0x3d0] sm:$0xff]
    %v898 = vld [vmem:[#allocation8 + $0x3d8] sm:$0xff]
    %v899 = vld [vmem:[#allocation8 + $0x3e0] sm:$0xff]
    %v900 = vld [vmem:[#allocation8 + $0x3e8] sm:$0xff]
    %v901 = vld [vmem:[#allocation8 + $0x3f0] sm:$0xff]
    %v902 = vld [vmem:[#allocation8 + $0x3f8] sm:$0xff]
    %v903 = vld [vmem:[#allocation8 + $0x400] sm:$0xff]
    %v904 = vld [vmem:[#allocation8 + $0x408] sm:$0xff]
    %v905 = vld [vmem:[#allocation8 + $0x410] sm:$0xff]
    %v906 = vld [vmem:[#allocation8 + $0x418] sm:$0xff]
    %v907 = vld [vmem:[#allocation8 + $0x420] sm:$0xff]
    %v908 = vld [vmem:[#allocation8 + $0x428] sm:$0xff]
    %v909 = vld [vmem:[#allocation8 + $0x430] sm:$0xff]
    %v910 = vld [vmem:[#allocation8 + $0x438] sm:$0xff]
    %v911 = vld [vmem:[#allocation8 + $0x440] sm:$0xff]
    %v912 = vld [vmem:[#allocation8 + $0x448] sm:$0xff]
    %v913 = vld [vmem:[#allocation8 + $0x450] sm:$0xff]
    %v914 = vld [vmem:[#allocation8 + $0x458] sm:$0xff]
    %v915 = vld [vmem:[#allocation8 + $0x460] sm:$0xff]
    %v916 = vld [vmem:[#allocation8 + $0x468] sm:$0xff]
    %v917 = vld [vmem:[#allocation8 + $0x470] sm:$0xff]
    %v918 = vld [vmem:[#allocation8 + $0x478] sm:$0xff]
    %v919 = vld [vmem:[#allocation8 + $0x480] sm:$0xff]
    %v920 = vld [vmem:[#allocation8 + $0x488] sm:$0xff]
    %v921 = vld [vmem:[#allocation8 + $0x490] sm:$0xff]
    %v922 = vld [vmem:[#allocation8 + $0x498] sm:$0xff]
    %v923 = vld [vmem:[#allocation8 + $0x4a0] sm:$0xff]
    %v924 = vld [vmem:[#allocation8 + $0x4a8] sm:$0xff]
    %v925 = vld [vmem:[#allocation8 + $0x4b0] sm:$0xff]
    %v926 = vld [vmem:[#allocation8 + $0x4b8] sm:$0xff]
    %v927 = vld [vmem:[#allocation8 + $0x4c0] sm:$0xff]
    %v928 = vld [vmem:[#allocation8 + $0x4c8] sm:$0xff]
    %v929 = vld [vmem:[#allocation8 + $0x4d0] sm:$0xff]
    %v930 = vld [vmem:[#allocation8 + $0x4d8] sm:$0xff]
    %v931 = vld [vmem:[#allocation8 + $0x4e0] sm:$0xff]
    %v932 = vld [vmem:[#allocation8 + $0x4e8] sm:$0xff]
    %v933 = vld [vmem:[#allocation8 + $0x4f0] sm:$0xff]
    %v934 = vld [vmem:[#allocation8 + $0x4f8] sm:$0xff]
    %v935 = vld [vmem:[#allocation8 + $0x500] sm:$0xff]
    %v936 = vld [vmem:[#allocation8 + $0x508] sm:$0xff]
    %v937 = vld [vmem:[#allocation8 + $0x510] sm:$0xff]
    %v938 = vld [vmem:[#allocation8 + $0x518] sm:$0xff]
    %v939 = vld [vmem:[#allocation8 + $0x520] sm:$0xff]
    %v940 = vld [vmem:[#allocation8 + $0x528] sm:$0xff]
    %v941 = vld [vmem:[#allocation8 + $0x530] sm:$0xff]
    %v942 = vld [vmem:[#allocation8 + $0x538] sm:$0xff]
    %v943 = vld [vmem:[#allocation8 + $0x540] sm:$0xff]
    %v944 = vld [vmem:[#allocation8 + $0x548] sm:$0xff]
    %v945 = vld [vmem:[#allocation8 + $0x550] sm:$0xff]
    %v946 = vld [vmem:[#allocation8 + $0x558] sm:$0xff]
    %v947 = vld [vmem:[#allocation8 + $0x560] sm:$0xff]
    %v948 = vld [vmem:[#allocation8 + $0x568] sm:$0xff]
    %v949 = vld [vmem:[#allocation8 + $0x570] sm:$0xff]
    %v950 = vld [vmem:[#allocation8 + $0x578] sm:$0xff]
    %v951 = vld [vmem:[#allocation8 + $0x580] sm:$0xff]
    %v952 = vld [vmem:[#allocation8 + $0x588] sm:$0xff]
    %v953 = vld [vmem:[#allocation8 + $0x590] sm:$0xff]
    %v954 = vld [vmem:[#allocation8 + $0x598] sm:$0xff]
    %v955 = vld [vmem:[#allocation8 + $0x5a0] sm:$0xff]
    %v956 = vld [vmem:[#allocation8 + $0x5a8] sm:$0xff]
    %v957 = vld [vmem:[#allocation8 + $0x5b0] sm:$0xff]
    %v958 = vld [vmem:[#allocation8 + $0x5b8] sm:$0xff]
    %v959 = vld [vmem:[#allocation8 + $0x5c0] sm:$0xff]
    %v960 = vld [vmem:[#allocation8 + $0x5c8] sm:$0xff]
    %v961 = vld [vmem:[#allocation8 + $0x5d0] sm:$0xff]
    %v962 = vld [vmem:[#allocation8 + $0x5d8] sm:$0xff]
    %v963 = vld [vmem:[#allocation8 + $0x5e0] sm:$0xff]
    %v964 = vld [vmem:[#allocation8 + $0x5e8] sm:$0xff]
    %v965 = vld [vmem:[#allocation8 + $0x5f0] sm:$0xff]
    %v966 = vld [vmem:[#allocation8 + $0x5f8] sm:$0xff]
    %v967 = vld [vmem:[%s6] sm:$0x3f]
    %v969 = vlaneseq
    %v970 = vshrl.u32 %v969, 7
    %v971 = vsub.s32 0, %v970
    %v972 = vrot.slane %v967, %v971
    %v973 = vlaneseq
    %v974 = vshrl.u32 %v973, 7
    %v975 = vsub.s32 1, %v974
    %v976 = vrot.slane %v967, %v975
    %v977 = vlaneseq
    %v978 = vshrl.u32 %v977, 7
    %v979 = vsub.s32 2, %v978
    %v980 = vrot.slane %v967, %v979
    %v981 = vlaneseq
    %v982 = vshrl.u32 %v981, 7
    %v983 = vsub.s32 3, %v982
    %v984 = vrot.slane %v967, %v983
    %v985 = vlaneseq
    %v986 = vshrl.u32 %v985, 7
    %v987 = vsub.s32 4, %v986
    %v988 = vrot.slane %v967, %v987
    %v989 = vlaneseq
    %v990 = vshrl.u32 %v989, 7
    %v991 = vsub.s32 5, %v990
    %v992 = vrot.slane %v967, %v991
    %999 = vmatprep.subr.mxu0 %v776
    %1000 = vmatpush1.msra.mxu0 %v775
    %1001 = vmatprep.subr.mxu0 %v782
    %1002 = vmatpush1.msra.mxu0 %v781
    %1003 = vmatprep.subr.mxu0 %v788
    %1004 = vmatpush1.msra.mxu0 %v787
    %1005 = vmatprep.subr.mxu0 %v794
    %1006 = vmatpush1.msra.mxu0 %v793
    %1007 = vmatprep.subr.mxu0 %v800
    %1008 = vmatpush1.msra.mxu0 %v799
    %1009 = vmatprep.subr.mxu0 %v806
    %1010 = vmatpush1.msra.mxu0 %v805
    %1011 = vmatprep.subr.mxu0 %v812
    %1012 = vmatpush1.msra.mxu0 %v811
    %1013 = vmatprep.subr.mxu0 %v818
    %1014 = vmatpush1.msra.mxu0 %v817
    %1015 = vmatprep.subr.mxu0 %v824
    %1016 = vmatpush1.msra.mxu0 %v823
    %1017 = vmatprep.subr.mxu0 %v830
    %1018 = vmatpush1.msra.mxu0 %v829
    %1019 = vmatprep.subr.mxu0 %v836
    %1020 = vmatpush1.msra.mxu0 %v835
    %1021 = vmatprep.subr.mxu0 %v842
    %1022 = vmatpush1.msra.mxu0 %v841
    %1023 = vmatprep.subr.mxu0 %v848
    %1024 = vmatpush1.msra.mxu0 %v847
    %1025 = vmatprep.subr.mxu0 %v854
    %1026 = vmatpush1.msra.mxu0 %v853
    %1027 = vmatprep.subr.mxu0 %v860
    %1028 = vmatpush1.msra.mxu0 %v859
    %1029 = vmatprep.subr.mxu0 %v866
    %1030 = vmatpush1.msra.mxu0 %v865
    %1031 = vmatprep.subr.mxu0 %v872
    %1032 = vmatpush1.msra.mxu0 %v871
    %1033 = vmatprep.subr.mxu0 %v878
    %1034 = vmatpush1.msra.mxu0 %v877
    %1035 = vmatprep.subr.mxu0 %v884
    %1036 = vmatpush1.msra.mxu0 %v883
    %1037 = vmatprep.subr.mxu0 %v890
    %1038 = vmatpush1.msra.mxu0 %v889
    %1039 = vmatprep.subr.mxu0 %v896
    %1040 = vmatpush1.msra.mxu0 %v895
    %1041 = vmatprep.subr.mxu0 %v902
    %1042 = vmatpush1.msra.mxu0 %v901
    %1043 = vmatprep.subr.mxu0 %v908
    %1044 = vmatpush1.msra.mxu0 %v907
    %1045 = vmatprep.subr.mxu0 %v914
    %1046 = vmatpush1.msra.mxu0 %v913
    %1047 = vmatprep.subr.mxu0 %v920
    %1048 = vmatpush1.msra.mxu0 %v919
    %1049 = vmatprep.subr.mxu0 %v926
    %1050 = vmatpush1.msra.mxu0 %v925
    %1051 = vmatprep.subr.mxu0 %v932
    %1052 = vmatpush1.msra.mxu0 %v931
    %1053 = vmatprep.subr.mxu0 %v938
    %1054 = vmatpush1.msra.mxu0 %v937
    %1055 = vmatprep.subr.mxu0 %v944
    %1056 = vmatpush1.msra.mxu0 %v943
    %1057 = vmatprep.subr.mxu0 %v950
    %1058 = vmatpush1.msra.mxu0 %v949
    %1059 = vmatprep.subr.mxu0 %v956
    %1060 = vmatpush1.msra.mxu0 %v955
    %1061 = vmatprep.subr.mxu0 %v962
    %1062 = vmatpush1.msra.mxu0 %v961
    %1063 = vmatprep.mubr.f32.mxu0 %v83
    %1064 = vmatmul.mubr.f32.gmra.mrb[0].mxu0 %v774
    %v1065 = vpop.f32.mrb[0].mxu0
    %v1066 = vadd.f32 %v972, %v1065
    %v1067 = vpop.f32.mrb[0].mxu0
    %v1068 = vadd.f32 %v976, %v1067
    %1069 = vdwg.mxu0
    %1070 = vmatprep.subr.mxu0 %v778
    %1071 = vmatpush1.msra.mxu0 %v777
    %1072 = vmatprep.subr.mxu0 %v784
    %1073 = vmatpush1.msra.mxu0 %v783
    %1074 = vmatprep.subr.mxu0 %v790
    %1075 = vmatpush1.msra.mxu0 %v789
    %1076 = vmatprep.subr.mxu0 %v796
    %1077 = vmatpush1.msra.mxu0 %v795
    %1078 = vmatprep.subr.mxu0 %v802
    %1079 = vmatpush1.msra.mxu0 %v801
    %1080 = vmatprep.subr.mxu0 %v808
    %1081 = vmatpush1.msra.mxu0 %v807
    %1082 = vmatprep.subr.mxu0 %v814
    %1083 = vmatpush1.msra.mxu0 %v813
    %1084 = vmatprep.subr.mxu0 %v820
    %1085 = vmatpush1.msra.mxu0 %v819
    %1086 = vmatprep.subr.mxu0 %v826
    %1087 = vmatpush1.msra.mxu0 %v825
    %1088 = vmatprep.subr.mxu0 %v832
    %1089 = vmatpush1.msra.mxu0 %v831
    %1090 = vmatprep.subr.mxu0 %v838
    %1091 = vmatpush1.msra.mxu0 %v837
    %1092 = vmatprep.subr.mxu0 %v844
    %1093 = vmatpush1.msra.mxu0 %v843
    %1094 = vmatprep.subr.mxu0 %v850
    %1095 = vmatpush1.msra.mxu0 %v849
    %1096 = vmatprep.subr.mxu0 %v856
    %1097 = vmatpush1.msra.mxu0 %v855
    %1098 = vmatprep.subr.mxu0 %v862
    %1099 = vmatpush1.msra.mxu0 %v861
    %1100 = vmatprep.subr.mxu0 %v868
    %1101 = vmatpush1.msra.mxu0 %v867
    %1102 = vmatprep.subr.mxu0 %v874
    %1103 = vmatpush1.msra.mxu0 %v873
    %1104 = vmatprep.subr.mxu0 %v880
    %1105 = vmatpush1.msra.mxu0 %v879
    %1106 = vmatprep.subr.mxu0 %v886
    %1107 = vmatpush1.msra.mxu0 %v885
    %1108 = vmatprep.subr.mxu0 %v892
    %1109 = vmatpush1.msra.mxu0 %v891
    %1110 = vmatprep.subr.mxu0 %v898
    %1111 = vmatpush1.msra.mxu0 %v897
    %1112 = vmatprep.subr.mxu0 %v904
    %1113 = vmatpush1.msra.mxu0 %v903
    %1114 = vmatprep.subr.mxu0 %v910
    %1115 = vmatpush1.msra.mxu0 %v909
    %1116 = vmatprep.subr.mxu0 %v916
    %1117 = vmatpush1.msra.mxu0 %v915
    %1118 = vmatprep.subr.mxu0 %v922
    %1119 = vmatpush1.msra.mxu0 %v921
    %1120 = vmatprep.subr.mxu0 %v928
    %1121 = vmatpush1.msra.mxu0 %v927
    %1122 = vmatprep.subr.mxu0 %v934
    %1123 = vmatpush1.msra.mxu0 %v933
    %1124 = vmatprep.subr.mxu0 %v940
    %1125 = vmatpush1.msra.mxu0 %v939
    %1126 = vmatprep.subr.mxu0 %v946
    %1127 = vmatpush1.msra.mxu0 %v945
    %1128 = vmatprep.subr.mxu0 %v952
    %1129 = vmatpush1.msra.mxu0 %v951
    %1130 = vmatprep.subr.mxu0 %v958
    %1131 = vmatpush1.msra.mxu0 %v957
    %1132 = vmatprep.subr.mxu0 %v964
    %1133 = vmatpush1.msra.mxu0 %v963
    %1134 = vmatprep.mubr.f32.mxu0 %v83
    %1135 = vmatmul.mubr.f32.gmra.mrb[0].mxu0 %v774
    %v1136 = vpop.f32.mrb[0].mxu0
    %v1137 = vadd.f32 %v980, %v1136
    %v1138 = vpop.f32.mrb[0].mxu0
    %v1139 = vadd.f32 %v984, %v1138
    %1140 = vdwg.mxu0
    %1141 = vmatprep.subr.mxu0 %v780
    %1142 = vmatpush1.msra.mxu0 %v779
    %1143 = vmatprep.subr.mxu0 %v786
    %1144 = vmatpush1.msra.mxu0 %v785
    %1145 = vmatprep.subr.mxu0 %v792
    %1146 = vmatpush1.msra.mxu0 %v791
    %1147 = vmatprep.subr.mxu0 %v798
    %1148 = vmatpush1.msra.mxu0 %v797
    %1149 = vmatprep.subr.mxu0 %v804
    %1150 = vmatpush1.msra.mxu0 %v803
    %1151 = vmatprep.subr.mxu0 %v810
    %1152 = vmatpush1.msra.mxu0 %v809
    %1153 = vmatprep.subr.mxu0 %v816
    %1154 = vmatpush1.msra.mxu0 %v815
    %1155 = vmatprep.subr.mxu0 %v822
    %1156 = vmatpush1.msra.mxu0 %v821
    %1157 = vmatprep.subr.mxu0 %v828
    %1158 = vmatpush1.msra.mxu0 %v827
    %1159 = vmatprep.subr.mxu0 %v834
    %1160 = vmatpush1.msra.mxu0 %v833
    %1161 = vmatprep.subr.mxu0 %v840
    %1162 = vmatpush1.msra.mxu0 %v839
    %1163 = vmatprep.subr.mxu0 %v846
    %1164 = vmatpush1.msra.mxu0 %v845
    %1165 = vmatprep.subr.mxu0 %v852
    %1166 = vmatpush1.msra.mxu0 %v851
    %1167 = vmatprep.subr.mxu0 %v858
    %1168 = vmatpush1.msra.mxu0 %v857
    %1169 = vmatprep.subr.mxu0 %v864
    %1170 = vmatpush1.msra.mxu0 %v863
    %1171 = vmatprep.subr.mxu0 %v870
    %1172 = vmatpush1.msra.mxu0 %v869
    %1173 = vmatprep.subr.mxu0 %v876
    %1174 = vmatpush1.msra.mxu0 %v875
    %1175 = vmatprep.subr.mxu0 %v882
    %1176 = vmatpush1.msra.mxu0 %v881
    %1177 = vmatprep.subr.mxu0 %v888
    %1178 = vmatpush1.msra.mxu0 %v887
    %1179 = vmatprep.subr.mxu0 %v894
    %1180 = vmatpush1.msra.mxu0 %v893
    %1181 = vmatprep.subr.mxu0 %v900
    %1182 = vmatpush1.msra.mxu0 %v899
    %1183 = vmatprep.subr.mxu0 %v906
    %1184 = vmatpush1.msra.mxu0 %v905
    %1185 = vmatprep.subr.mxu0 %v912
    %1186 = vmatpush1.msra.mxu0 %v911
    %1187 = vmatprep.subr.mxu0 %v918
    %1188 = vmatpush1.msra.mxu0 %v917
    %1189 = vmatprep.subr.mxu0 %v924
    %1190 = vmatpush1.msra.mxu0 %v923
    %1191 = vmatprep.subr.mxu0 %v930
    %1192 = vmatpush1.msra.mxu0 %v929
    %1193 = vmatprep.subr.mxu0 %v936
    %1194 = vmatpush1.msra.mxu0 %v935
    %1195 = vmatprep.subr.mxu0 %v942
    %1196 = vmatpush1.msra.mxu0 %v941
    %1197 = vmatprep.subr.mxu0 %v948
    %1198 = vmatpush1.msra.mxu0 %v947
    %1199 = vmatprep.subr.mxu0 %v954
    %1200 = vmatpush1.msra.mxu0 %v953
    %1201 = vmatprep.subr.mxu0 %v960
    %1202 = vmatpush1.msra.mxu0 %v959
    %1203 = vmatprep.subr.mxu0 %v966
    %1204 = vmatpush1.msra.mxu0 %v965
    %1205 = vmatprep.mubr.f32.mxu0 %v83
    %1206 = vmatmul.mubr.f32.gmra.mrb[0].mxu0 %v774
    %v1207 = vpop.f32.mrb[0].mxu0
    %v1208 = vadd.f32 %v988, %v1207
    %v1209 = vpop.f32.mrb[0].mxu0
    %v1210 = vadd.f32 %v992, %v1209
    %1211 = vdwg.mxu0
    %v1212 = vadd.f32 %v1066, %v1139
    %v1213 = vxor.u32 %v1212, 2147483648
    %v1214 = vmul.f32 %v1213, 1.442695
    %v1215 = vpow.pop %v1214
    %v1216 = vadd.f32 %v1215, 1.0
    %v1217 = vrcp.pop %v1216
    %v1218 = vmul.f32 1.0, %v1217
    %v1219 = vadd.f32 %v1068, %v1208
    %v1220 = vxor.u32 %v1219, 2147483648
    %v1221 = vmul.f32 %v1220, 1.442695
    %v1222 = vpow.pop %v1221
    %v1223 = vadd.f32 %v1222, 1.0
    %v1224 = vrcp.pop %v1223
    %v1225 = vmul.f32 1.0, %v1224
    %v1226 = vmul.f32 %v1218, %v1210
    %v1227 = vadd.f32 %v1137, %v1226
    %v1228 = vtanh.pop %v1227
    %v1229 = vsub.f32 1.0, %v1225
    %v1230 = vmul.f32 %v1229, %v1228
    %v1231 = vmul.f32 %v1225, %v83
    %v1232 = vadd.f32 %v1230, %v1231
    %s1233 = scalar_lea.vmem %s0, 6
    %v1234 = vld [vmem:[%s1233] sm:$0x3f]
    %1235 = vmatprep.subr.mxu0 %v86
    %1236 = vmatpush1.msra.mxu0 %v85
    %1237 = vmatprep.subr.mxu0 %v89
    %1238 = vmatpush1.msra.mxu0 %v88
    %1239 = vmatprep.subr.mxu0 %v92
    %1240 = vmatpush1.msra.mxu0 %v91
    %1241 = vmatprep.subr.mxu0 %v95
    %1242 = vmatpush1.msra.mxu0 %v94
    %1243 = vmatprep.subr.mxu0 %v98
    %1244 = vmatpush1.msra.mxu0 %v97
    %1245 = vmatprep.subr.mxu0 %v101
    %1246 = vmatpush1.msra.mxu0 %v100
    %1247 = vmatprep.subr.mxu0 %v104
    %1248 = vmatpush1.msra.mxu0 %v103
    %1249 = vmatprep.subr.mxu0 %v107
    %1250 = vmatpush1.msra.mxu0 %v106
    %1251 = vmatprep.subr.mxu0 %v110
    %1252 = vmatpush1.msra.mxu0 %v109
    %1253 = vmatprep.subr.mxu0 %v113
    %1254 = vmatpush1.msra.mxu0 %v112
    %1255 = vmatprep.subr.mxu0 %v116
    %1256 = vmatpush1.msra.mxu0 %v115
    %1257 = vmatprep.subr.mxu0 %v119
    %1258 = vmatpush1.msra.mxu0 %v118
    %1259 = vmatprep.subr.mxu0 %v122
    %1260 = vmatpush1.msra.mxu0 %v121
    %1261 = vmatprep.subr.mxu0 %v125
    %1262 = vmatpush1.msra.mxu0 %v124
    %1263 = vmatprep.subr.mxu0 %v128
    %1264 = vmatpush1.msra.mxu0 %v127
    %1265 = vmatprep.subr.mxu0 %v131
    %1266 = vmatpush1.msra.mxu0 %v130
    %1267 = vmatprep.subr.mxu0 0.0
    %1268 = vmatpush1.msra.mxu0 0.0
    %1269 = vmatprep.subr.mxu0 0.0
    %1270 = vmatpush1.msra.mxu0 0.0
    %1271 = vmatprep.subr.mxu0 0.0
    %1272 = vmatpush1.msra.mxu0 0.0
    %1273 = vmatprep.subr.mxu0 0.0
    %1274 = vmatpush1.msra.mxu0 0.0
    %1275 = vmatprep.subr.mxu0 0.0
    %1276 = vmatpush1.msra.mxu0 0.0
    %1277 = vmatprep.subr.mxu0 0.0
    %1278 = vmatpush1.msra.mxu0 0.0
    %1279 = vmatprep.subr.mxu0 0.0
    %1280 = vmatpush1.msra.mxu0 0.0
    %1281 = vmatprep.subr.mxu0 0.0
    %1282 = vmatpush1.msra.mxu0 0.0
    %1283 = vmatprep.subr.mxu0 0.0
    %1284 = vmatpush1.msra.mxu0 0.0
    %1285 = vmatprep.subr.mxu0 0.0
    %1286 = vmatpush1.msra.mxu0 0.0
    %1287 = vmatprep.subr.mxu0 0.0
    %1288 = vmatpush1.msra.mxu0 0.0
    %1289 = vmatprep.subr.mxu0 0.0
    %1290 = vmatpush1.msra.mxu0 0.0
    %1291 = vmatprep.subr.mxu0 0.0
    %1292 = vmatpush1.msra.mxu0 0.0
    %1293 = vmatprep.subr.mxu0 0.0
    %1294 = vmatpush1.msra.mxu0 0.0
    %1295 = vmatprep.subr.mxu0 0.0
    %1296 = vmatpush1.msra.mxu0 0.0
    %1297 = vmatprep.subr.mxu0 0.0
    %1298 = vmatpush1.msra.mxu0 0.0
    %1299 = vmatprep.mubr.f32.mxu0 0.0
    %1300 = vmatmul.mubr.f32.gmra.mrb[0].mxu0 %v316
    %v1301 = vpop.f32.mrb[0].mxu0
    %v1302 = vadd.f32 %v138, %v1301
    %v1303 = vpop.f32.mrb[0].mxu0
    %v1304 = vadd.f32 %v142, %v1303
    %1305 = vdwg.mxu0
    %1306 = vmatprep.subr.mxu0 0.0
    %1307 = vmatpush1.msra.mxu0 %v87
    %1308 = vmatprep.subr.mxu0 0.0
    %1309 = vmatpush1.msra.mxu0 %v90
    %1310 = vmatprep.subr.mxu0 0.0
    %1311 = vmatpush1.msra.mxu0 %v93
    %1312 = vmatprep.subr.mxu0 0.0
    %1313 = vmatpush1.msra.mxu0 %v96
    %1314 = vmatprep.subr.mxu0 0.0
    %1315 = vmatpush1.msra.mxu0 %v99
    %1316 = vmatprep.subr.mxu0 0.0
    %1317 = vmatpush1.msra.mxu0 %v102
    %1318 = vmatprep.subr.mxu0 0.0
    %1319 = vmatpush1.msra.mxu0 %v105
    %1320 = vmatprep.subr.mxu0 0.0
    %1321 = vmatpush1.msra.mxu0 %v108
    %1322 = vmatprep.subr.mxu0 0.0
    %1323 = vmatpush1.msra.mxu0 %v111
    %1324 = vmatprep.subr.mxu0 0.0
    %1325 = vmatpush1.msra.mxu0 %v114
    %1326 = vmatprep.subr.mxu0 0.0
    %1327 = vmatpush1.msra.mxu0 %v117
    %1328 = vmatprep.subr.mxu0 0.0
    %1329 = vmatpush1.msra.mxu0 %v120
    %1330 = vmatprep.subr.mxu0 0.0
    %1331 = vmatpush1.msra.mxu0 %v123
    %1332 = vmatprep.subr.mxu0 0.0
    %1333 = vmatpush1.msra.mxu0 %v126
    %1334 = vmatprep.subr.mxu0 0.0
    %1335 = vmatpush1.msra.mxu0 %v129
    %1336 = vmatprep.subr.mxu0 0.0
    %1337 = vmatpush1.msra.mxu0 %v132
    %1338 = vmatprep.subr.mxu0 0.0
    %1339 = vmatpush1.msra.mxu0 0.0
    %1340 = vmatprep.subr.mxu0 0.0
    %1341 = vmatpush1.msra.mxu0 0.0
    %1342 = vmatprep.subr.mxu0 0.0
    %1343 = vmatpush1.msra.mxu0 0.0
    %1344 = vmatprep.subr.mxu0 0.0
    %1345 = vmatpush1.msra.mxu0 0.0
    %1346 = vmatprep.subr.mxu0 0.0
    %1347 = vmatpush1.msra.mxu0 0.0
    %1348 = vmatprep.subr.mxu0 0.0
    %1349 = vmatpush1.msra.mxu0 0.0
    %1350 = vmatprep.subr.mxu0 0.0
    %1351 = vmatpush1.msra.mxu0 0.0
    %1352 = vmatprep.subr.mxu0 0.0
    %1353 = vmatpush1.msra.mxu0 0.0
    %1354 = vmatprep.subr.mxu0 0.0
    %1355 = vmatpush1.msra.mxu0 0.0
    %1356 = vmatprep.subr.mxu0 0.0
    %1357 = vmatpush1.msra.mxu0 0.0
    %1358 = vmatprep.subr.mxu0 0.0
    %1359 = vmatpush1.msra.mxu0 0.0
    %1360 = vmatprep.subr.mxu0 0.0
    %1361 = vmatpush1.msra.mxu0 0.0
    %1362 = vmatprep.subr.mxu0 0.0
    %1363 = vmatpush1.msra.mxu0 0.0
    %1364 = vmatprep.subr.mxu0 0.0
    %1365 = vmatpush1.msra.mxu0 0.0
    %1366 = vmatprep.subr.mxu0 0.0
    %1367 = vmatpush1.msra.mxu0 0.0
    %1368 = vmatprep.subr.mxu0 0.0
    %1369 = vmatpush1.msra.mxu0 0.0
    %1370 = vmatprep.mubr.f32.mxu0 0.0
    %1371 = vmatmul.mubr.f32.gmra.mrb[0].mxu0 %v316
    %v1372 = vpop.f32.mrb[0].mxu0
    %v1373 = vadd.f32 %v146, %v1372
    %v1374 = vpop.f32.mrb[0].mxu0
    %1375 = vdwg.mxu0
    %v1376 = vadd.f32 %v1234, %v1302
    %v1377 = vxor.u32 %v1376, 2147483648
    %v1378 = vmul.f32 %v1377, 1.442695
    %v1379 = vpow.pop %v1378
    %v1380 = vadd.f32 %v1379, 1.0
    %v1381 = vrcp.pop %v1380
    %v1382 = vmul.f32 1.0, %v1381
    %v1384 = vrot.slane %v1234, 2
    %v1386 = vadd.f32 %v1384, %v1304
    %v1387 = vxor.u32 %v1386, 2147483648
    %v1388 = vmul.f32 %v1387, 1.442695
    %v1389 = vpow.pop %v1388
    %v1390 = vadd.f32 %v1389, 1.0
    %v1391 = vrcp.pop %v1390
    %v1392 = vmul.f32 1.0, %v1391
    %v1393 = vmul.f32 %v1382, %v1373
    %v1394 = vrot.slane %v1234, 4
    %v1396 = vadd.f32 %v1394, %v1393
    %v1397 = vtanh.pop %v1396
    %v1398 = vsub.f32 1.0, %v1392
    %v1399 = vmul.f32 %v1398, %v1397
    %v1400 = vmul.f32 %v1392, %v316
    %v1401 = vadd.f32 %v1399, %v1400
    %1402 = vmatprep.subr.mxu0 %v318
    %1403 = vmatpush1.msra.mxu0 %v317
    %1404 = vmatprep.subr.mxu0 %v324
    %1405 = vmatpush1.msra.mxu0 %v323
    %1406 = vmatprep.subr.mxu0 %v330
    %1407 = vmatpush1.msra.mxu0 %v329
    %1408 = vmatprep.subr.mxu0 %v336
    %1409 = vmatpush1.msra.mxu0 %v335
    %1410 = vmatprep.subr.mxu0 %v342
    %1411 = vmatpush1.msra.mxu0 %v341
    %1412 = vmatprep.subr.mxu0 %v348
    %1413 = vmatpush1.msra.mxu0 %v347
    %1414 = vmatprep.subr.mxu0 %v354
    %1415 = vmatpush1.msra.mxu0 %v353
    %1416 = vmatprep.subr.mxu0 %v360
    %1417 = vmatpush1.msra.mxu0 %v359
    %1418 = vmatprep.subr.mxu0 %v366
    %1419 = vmatpush1.msra.mxu0 %v365
    %1420 = vmatprep.subr.mxu0 %v372
    %1421 = vmatpush1.msra.mxu0 %v371
    %1422 = vmatprep.subr.mxu0 %v378
    %1423 = vmatpush1.msra.mxu0 %v377
    %1424 = vmatprep.subr.mxu0 %v384
    %1425 = vmatpush1.msra.mxu0 %v383
    %1426 = vmatprep.subr.mxu0 %v390
    %1427 = vmatpush1.msra.mxu0 %v389
    %1428 = vmatprep.subr.mxu0 %v396
    %1429 = vmatpush1.msra.mxu0 %v395
    %1430 = vmatprep.subr.mxu0 %v402
    %1431 = vmatpush1.msra.mxu0 %v401
    %1432 = vmatprep.subr.mxu0 %v408
    %1433 = vmatpush1.msra.mxu0 %v407
    %1434 = vmatprep.subr.mxu0 %v414
    %1435 = vmatpush1.msra.mxu0 %v413
    %1436 = vmatprep.subr.mxu0 %v420
    %1437 = vmatpush1.msra.mxu0 %v419
    %1438 = vmatprep.subr.mxu0 %v426
    %1439 = vmatpush1.msra.mxu0 %v425
    %1440 = vmatprep.subr.mxu0 %v432
    %1441 = vmatpush1.msra.mxu0 %v431
    %1442 = vmatprep.subr.mxu0 %v438
    %1443 = vmatpush1.msra.mxu0 %v437
    %1444 = vmatprep.subr.mxu0 %v444
    %1445 = vmatpush1.msra.mxu0 %v443
    %1446 = vmatprep.subr.mxu0 %v450
    %1447 = vmatpush1.msra.mxu0 %v449
    %1448 = vmatprep.subr.mxu0 %v456
    %1449 = vmatpush1.msra.mxu0 %v455
    %1450 = vmatprep.subr.mxu0 %v462
    %1451 = vmatpush1.msra.mxu0 %v461
    %1452 = vmatprep.subr.mxu0 %v468
    %1453 = vmatpush1.msra.mxu0 %v467
    %1454 = vmatprep.subr.mxu0 %v474
    %1455 = vmatpush1.msra.mxu0 %v473
    %1456 = vmatprep.subr.mxu0 %v480
    %1457 = vmatpush1.msra.mxu0 %v479
    %1458 = vmatprep.subr.mxu0 %v486
    %1459 = vmatpush1.msra.mxu0 %v485
    %1460 = vmatprep.subr.mxu0 %v492
    %1461 = vmatpush1.msra.mxu0 %v491
    %1462 = vmatprep.subr.mxu0 %v498
    %1463 = vmatpush1.msra.mxu0 %v497
    %1464 = vmatprep.subr.mxu0 %v504
    %1465 = vmatpush1.msra.mxu0 %v503
    %1466 = vmatprep.mubr.f32.mxu0 %v774
    %1467 = vmatmul.mubr.f32.gmra.mrb[0].mxu0 %v1401
    %v1468 = vpop.f32.mrb[0].mxu0
    %v1469 = vadd.f32 %v514, %v1468
    %v1470 = vpop.f32.mrb[0].mxu0
    %v1471 = vadd.f32 %v518, %v1470
    %1472 = vdwg.mxu0
    %1473 = vmatprep.subr.mxu0 %v320
    %1474 = vmatpush1.msra.mxu0 %v319
    %1475 = vmatprep.subr.mxu0 %v326
    %1476 = vmatpush1.msra.mxu0 %v325
    %1477 = vmatprep.subr.mxu0 %v332
    %1478 = vmatpush1.msra.mxu0 %v331
    %1479 = vmatprep.subr.mxu0 %v338
    %1480 = vmatpush1.msra.mxu0 %v337
    %1481 = vmatprep.subr.mxu0 %v344
    %1482 = vmatpush1.msra.mxu0 %v343
    %1483 = vmatprep.subr.mxu0 %v350
    %1484 = vmatpush1.msra.mxu0 %v349
    %1485 = vmatprep.subr.mxu0 %v356
    %1486 = vmatpush1.msra.mxu0 %v355
    %1487 = vmatprep.subr.mxu0 %v362
    %1488 = vmatpush1.msra.mxu0 %v361
    %1489 = vmatprep.subr.mxu0 %v368
    %1490 = vmatpush1.msra.mxu0 %v367
    %1491 = vmatprep.subr.mxu0 %v374
    %1492 = vmatpush1.msra.mxu0 %v373
    %1493 = vmatprep.subr.mxu0 %v380
    %1494 = vmatpush1.msra.mxu0 %v379
    %1495 = vmatprep.subr.mxu0 %v386
    %1496 = vmatpush1.msra.mxu0 %v385
    %1497 = vmatprep.subr.mxu0 %v392
    %1498 = vmatpush1.msra.mxu0 %v391
    %1499 = vmatprep.subr.mxu0 %v398
    %1500 = vmatpush1.msra.mxu0 %v397
    %1501 = vmatprep.subr.mxu0 %v404
    %1502 = vmatpush1.msra.mxu0 %v403
    %1503 = vmatprep.subr.mxu0 %v410
    %1504 = vmatpush1.msra.mxu0 %v409
    %1505 = vmatprep.subr.mxu0 %v416
    %1506 = vmatpush1.msra.mxu0 %v415
    %1507 = vmatprep.subr.mxu0 %v422
    %1508 = vmatpush1.msra.mxu0 %v421
    %1509 = vmatprep.subr.mxu0 %v428
    %1510 = vmatpush1.msra.mxu0 %v427
    %1511 = vmatprep.subr.mxu0 %v434
    %1512 = vmatpush1.msra.mxu0 %v433
    %1513 = vmatprep.subr.mxu0 %v440
    %1514 = vmatpush1.msra.mxu0 %v439
    %1515 = vmatprep.subr.mxu0 %v446
    %1516 = vmatpush1.msra.mxu0 %v445
    %1517 = vmatprep.subr.mxu0 %v452
    %1518 = vmatpush1.msra.mxu0 %v451
    %1519 = vmatprep.subr.mxu0 %v458
    %1520 = vmatpush1.msra.mxu0 %v457
    %1521 = vmatprep.subr.mxu0 %v464
    %1522 = vmatpush1.msra.mxu0 %v463
    %1523 = vmatprep.subr.mxu0 %v470
    %1524 = vmatpush1.msra.mxu0 %v469
    %1525 = vmatprep.subr.mxu0 %v476
    %1526 = vmatpush1.msra.mxu0 %v475
    %1527 = vmatprep.subr.mxu0 %v482
    %1528 = vmatpush1.msra.mxu0 %v481
    %1529 = vmatprep.subr.mxu0 %v488
    %1530 = vmatpush1.msra.mxu0 %v487
    %1531 = vmatprep.subr.mxu0 %v494
    %1532 = vmatpush1.msra.mxu0 %v493
    %1533 = vmatprep.subr.mxu0 %v500
    %1534 = vmatpush1.msra.mxu0 %v499
    %1535 = vmatprep.subr.mxu0 %v506
    %1536 = vmatpush1.msra.mxu0 %v505
    %1537 = vmatprep.mubr.f32.mxu0 %v774
    %1538 = vmatmul.mubr.f32.gmra.mrb[0].mxu0 %v1401
    %v1539 = vpop.f32.mrb[0].mxu0
    %v1540 = vadd.f32 %v522, %v1539
    %v1541 = vpop.f32.mrb[0].mxu0
    %v1542 = vadd.f32 %v526, %v1541
    %1543 = vdwg.mxu0
    %1544 = vmatprep.subr.mxu0 %v322
    %1545 = vmatpush1.msra.mxu0 %v321
    %1546 = vmatprep.subr.mxu0 %v328
    %1547 = vmatpush1.msra.mxu0 %v327
    %1548 = vmatprep.subr.mxu0 %v334
    %1549 = vmatpush1.msra.mxu0 %v333
    %1550 = vmatprep.subr.mxu0 %v340
    %1551 = vmatpush1.msra.mxu0 %v339
    %1552 = vmatprep.subr.mxu0 %v346
    %1553 = vmatpush1.msra.mxu0 %v345
    %1554 = vmatprep.subr.mxu0 %v352
    %1555 = vmatpush1.msra.mxu0 %v351
    %1556 = vmatprep.subr.mxu0 %v358
    %1557 = vmatpush1.msra.mxu0 %v357
    %1558 = vmatprep.subr.mxu0 %v364
    %1559 = vmatpush1.msra.mxu0 %v363
    %1560 = vmatprep.subr.mxu0 %v370
    %1561 = vmatpush1.msra.mxu0 %v369
    %1562 = vmatprep.subr.mxu0 %v376
    %1563 = vmatpush1.msra.mxu0 %v375
    %1564 = vmatprep.subr.mxu0 %v382
    %1565 = vmatpush1.msra.mxu0 %v381
    %1566 = vmatprep.subr.mxu0 %v388
    %1567 = vmatpush1.msra.mxu0 %v387
    %1568 = vmatprep.subr.mxu0 %v394
    %1569 = vmatpush1.msra.mxu0 %v393
    %1570 = vmatprep.subr.mxu0 %v400
    %1571 = vmatpush1.msra.mxu0 %v399
    %1572 = vmatprep.subr.mxu0 %v406
    %1573 = vmatpush1.msra.mxu0 %v405
    %1574 = vmatprep.subr.mxu0 %v412
    %1575 = vmatpush1.msra.mxu0 %v411
    %1576 = vmatprep.subr.mxu0 %v418
    %1577 = vmatpush1.msra.mxu0 %v417
    %1578 = vmatprep.subr.mxu0 %v424
    %1579 = vmatpush1.msra.mxu0 %v423
    %1580 = vmatprep.subr.mxu0 %v430
    %1581 = vmatpush1.msra.mxu0 %v429
    %1582 = vmatprep.subr.mxu0 %v436
    %1583 = vmatpush1.msra.mxu0 %v435
    %1584 = vmatprep.subr.mxu0 %v442
    %1585 = vmatpush1.msra.mxu0 %v441
    %1586 = vmatprep.subr.mxu0 %v448
    %1587 = vmatpush1.msra.mxu0 %v447
    %1588 = vmatprep.subr.mxu0 %v454
    %1589 = vmatpush1.msra.mxu0 %v453
    %1590 = vmatprep.subr.mxu0 %v460
    %1591 = vmatpush1.msra.mxu0 %v459
    %1592 = vmatprep.subr.mxu0 %v466
    %1593 = vmatpush1.msra.mxu0 %v465
    %1594 = vmatprep.subr.mxu0 %v472
    %1595 = vmatpush1.msra.mxu0 %v471
    %1596 = vmatprep.subr.mxu0 %v478
    %1597 = vmatpush1.msra.mxu0 %v477
    %1598 = vmatprep.subr.mxu0 %v484
    %1599 = vmatpush1.msra.mxu0 %v483
    %1600 = vmatprep.subr.mxu0 %v490
    %1601 = vmatpush1.msra.mxu0 %v489
    %1602 = vmatprep.subr.mxu0 %v496
    %1603 = vmatpush1.msra.mxu0 %v495
    %1604 = vmatprep.subr.mxu0 %v502
    %1605 = vmatpush1.msra.mxu0 %v501
    %1606 = vmatprep.subr.mxu0 %v508
    %1607 = vmatpush1.msra.mxu0 %v507
    %1608 = vmatprep.mubr.f32.mxu0 %v774
    %1609 = vmatmul.mubr.f32.gmra.mrb[0].mxu0 %v1401
    %v1610 = vpop.f32.mrb[0].mxu0
    %v1611 = vadd.f32 %v530, %v1610
    %v1612 = vpop.f32.mrb[0].mxu0
    %v1613 = vadd.f32 %v534, %v1612
    %1614 = vdwg.mxu0
    %v1615 = vadd.f32 %v1469, %v1542
    %v1616 = vxor.u32 %v1615, 2147483648
    %v1617 = vmul.f32 %v1616, 1.442695
    %v1618 = vpow.pop %v1617
    %v1619 = vadd.f32 %v1618, 1.0
    %v1620 = vrcp.pop %v1619
    %v1621 = vmul.f32 1.0, %v1620
    %v1622 = vadd.f32 %v1471, %v1611
    %v1623 = vxor.u32 %v1622, 2147483648
    %v1624 = vmul.f32 %v1623, 1.442695
    %v1625 = vpow.pop %v1624
    %v1626 = vadd.f32 %v1625, 1.0
    %v1627 = vrcp.pop %v1626
    %v1628 = vmul.f32 1.0, %v1627
    %v1629 = vmul.f32 %v1621, %v1613
    %v1630 = vadd.f32 %v1540, %v1629
    %v1631 = vtanh.pop %v1630
    %v1632 = vsub.f32 1.0, %v1628
    %v1633 = vmul.f32 %v1632, %v1631
    %v1634 = vmul.f32 %v1628, %v774
    %v1635 = vadd.f32 %v1633, %v1634
    %1636 = vmatprep.subr.mxu0 %v776
    %1637 = vmatpush1.msra.mxu0 %v775
    %1638 = vmatprep.subr.mxu0 %v782
    %1639 = vmatpush1.msra.mxu0 %v781
    %1640 = vmatprep.subr.mxu0 %v788
    %1641 = vmatpush1.msra.mxu0 %v787
    %1642 = vmatprep.subr.mxu0 %v794
    %1643 = vmatpush1.msra.mxu0 %v793
    %1644 = vmatprep.subr.mxu0 %v800
    %1645 = vmatpush1.msra.mxu0 %v799
    %1646 = vmatprep.subr.mxu0 %v806
    %1647 = vmatpush1.msra.mxu0 %v805
    %1648 = vmatprep.subr.mxu0 %v812
    %1649 = vmatpush1.msra.mxu0 %v811
    %1650 = vmatprep.subr.mxu0 %v818
    %1651 = vmatpush1.msra.mxu0 %v817
    %1652 = vmatprep.subr.mxu0 %v824
    %1653 = vmatpush1.msra.mxu0 %v823
    %1654 = vmatprep.subr.mxu0 %v830
    %1655 = vmatpush1.msra.mxu0 %v829
    %1656 = vmatprep.subr.mxu0 %v836
    %1657 = vmatpush1.msra.mxu0 %v835
    %1658 = vmatprep.subr.mxu0 %v842
    %1659 = vmatpush1.msra.mxu0 %v841
    %1660 = vmatprep.subr.mxu0 %v848
    %1661 = vmatpush1.msra.mxu0 %v847
    %1662 = vmatprep.subr.mxu0 %v854
    %1663 = vmatpush1.msra.mxu0 %v853
    %1664 = vmatprep.subr.mxu0 %v860
    %1665 = vmatpush1.msra.mxu0 %v859
    %1666 = vmatprep.subr.mxu0 %v866
    %1667 = vmatpush1.msra.mxu0 %v865
    %1668 = vmatprep.subr.mxu0 %v872
    %1669 = vmatpush1.msra.mxu0 %v871
    %1670 = vmatprep.subr.mxu0 %v878
    %1671 = vmatpush1.msra.mxu0 %v877
    %1672 = vmatprep.subr.mxu0 %v884
    %1673 = vmatpush1.msra.mxu0 %v883
    %1674 = vmatprep.subr.mxu0 %v890
    %1675 = vmatpush1.msra.mxu0 %v889
    %1676 = vmatprep.subr.mxu0 %v896
    %1677 = vmatpush1.msra.mxu0 %v895
    %1678 = vmatprep.subr.mxu0 %v902
    %1679 = vmatpush1.msra.mxu0 %v901
    %1680 = vmatprep.subr.mxu0 %v908
    %1681 = vmatpush1.msra.mxu0 %v907
    %1682 = vmatprep.subr.mxu0 %v914
    %1683 = vmatpush1.msra.mxu0 %v913
    %1684 = vmatprep.subr.mxu0 %v920
    %1685 = vmatpush1.msra.mxu0 %v919
    %1686 = vmatprep.subr.mxu0 %v926
    %1687 = vmatpush1.msra.mxu0 %v925
    %1688 = vmatprep.subr.mxu0 %v932
    %1689 = vmatpush1.msra.mxu0 %v931
    %1690 = vmatprep.subr.mxu0 %v938
    %1691 = vmatpush1.msra.mxu0 %v937
    %1692 = vmatprep.subr.mxu0 %v944
    %1693 = vmatpush1.msra.mxu0 %v943
    %1694 = vmatprep.subr.mxu0 %v950
    %1695 = vmatpush1.msra.mxu0 %v949
    %1696 = vmatprep.subr.mxu0 %v956
    %1697 = vmatpush1.msra.mxu0 %v955
    %1698 = vmatprep.subr.mxu0 %v962
    %1699 = vmatpush1.msra.mxu0 %v961
    %1700 = vmatprep.mubr.f32.mxu0 %v1232
    %1701 = vmatmul.mubr.f32.gmra.mrb[0].mxu0 %v1635
    %v1702 = vpop.f32.mrb[0].mxu0
    %v1703 = vadd.f32 %v972, %v1702
    %v1704 = vpop.f32.mrb[0].mxu0
    %v1705 = vadd.f32 %v976, %v1704
    %1706 = vdwg.mxu0
    %1707 = vmatprep.subr.mxu0 %v778
    %1708 = vmatpush1.msra.mxu0 %v777
    %1709 = vmatprep.subr.mxu0 %v784
    %1710 = vmatpush1.msra.mxu0 %v783
    %1711 = vmatprep.subr.mxu0 %v790
    %1712 = vmatpush1.msra.mxu0 %v789
    %1713 = vmatprep.subr.mxu0 %v796
    %1714 = vmatpush1.msra.mxu0 %v795
    %1715 = vmatprep.subr.mxu0 %v802
    %1716 = vmatpush1.msra.mxu0 %v801
    %1717 = vmatprep.subr.mxu0 %v808
    %1718 = vmatpush1.msra.mxu0 %v807
    %1719 = vmatprep.subr.mxu0 %v814
    %1720 = vmatpush1.msra.mxu0 %v813
    %1721 = vmatprep.subr.mxu0 %v820
    %1722 = vmatpush1.msra.mxu0 %v819
    %1723 = vmatprep.subr.mxu0 %v826
    %1724 = vmatpush1.msra.mxu0 %v825
    %1725 = vmatprep.subr.mxu0 %v832
    %1726 = vmatpush1.msra.mxu0 %v831
    %1727 = vmatprep.subr.mxu0 %v838
    %1728 = vmatpush1.msra.mxu0 %v837
    %1729 = vmatprep.subr.mxu0 %v844
    %1730 = vmatpush1.msra.mxu0 %v843
    %1731 = vmatprep.subr.mxu0 %v850
    %1732 = vmatpush1.msra.mxu0 %v849
    %1733 = vmatprep.subr.mxu0 %v856
    %1734 = vmatpush1.msra.mxu0 %v855
    %1735 = vmatprep.subr.mxu0 %v862
    %1736 = vmatpush1.msra.mxu0 %v861
    %1737 = vmatprep.subr.mxu0 %v868
    %1738 = vmatpush1.msra.mxu0 %v867
    %1739 = vmatprep.subr.mxu0 %v874
    %1740 = vmatpush1.msra.mxu0 %v873
    %1741 = vmatprep.subr.mxu0 %v880
    %1742 = vmatpush1.msra.mxu0 %v879
    %1743 = vmatprep.subr.mxu0 %v886
    %1744 = vmatpush1.msra.mxu0 %v885
    %1745 = vmatprep.subr.mxu0 %v892
    %1746 = vmatpush1.msra.mxu0 %v891
    %1747 = vmatprep.subr.mxu0 %v898
    %1748 = vmatpush1.msra.mxu0 %v897
    %1749 = vmatprep.subr.mxu0 %v904
    %1750 = vmatpush1.msra.mxu0 %v903
    %1751 = vmatprep.subr.mxu0 %v910
    %1752 = vmatpush1.msra.mxu0 %v909
    %1753 = vmatprep.subr.mxu0 %v916
    %1754 = vmatpush1.msra.mxu0 %v915
    %1755 = vmatprep.subr.mxu0 %v922
    %1756 = vmatpush1.msra.mxu0 %v921
    %1757 = vmatprep.subr.mxu0 %v928
    %1758 = vmatpush1.msra.mxu0 %v927
    %1759 = vmatprep.subr.mxu0 %v934
    %1760 = vmatpush1.msra.mxu0 %v933
    %1761 = vmatprep.subr.mxu0 %v940
    %1762 = vmatpush1.msra.mxu0 %v939
    %1763 = vmatprep.subr.mxu0 %v946
    %1764 = vmatpush1.msra.mxu0 %v945
    %1765 = vmatprep.subr.mxu0 %v952
    %1766 = vmatpush1.msra.mxu0 %v951
    %1767 = vmatprep.subr.mxu0 %v958
    %1768 = vmatpush1.msra.mxu0 %v957
    %1769 = vmatprep.subr.mxu0 %v964
    %1770 = vmatpush1.msra.mxu0 %v963
    %1771 = vmatprep.mubr.f32.mxu0 %v1232
    %1772 = vmatmul.mubr.f32.gmra.mrb[0].mxu0 %v1635
    %v1773 = vpop.f32.mrb[0].mxu0
    %v1774 = vadd.f32 %v980, %v1773
    %v1775 = vpop.f32.mrb[0].mxu0
    %v1776 = vadd.f32 %v984, %v1775
    %1777 = vdwg.mxu0
    %1778 = vmatprep.subr.mxu0 %v780
    %1779 = vmatpush1.msra.mxu0 %v779
    %1780 = vmatprep.subr.mxu0 %v786
    %1781 = vmatpush1.msra.mxu0 %v785
    %1782 = vmatprep.subr.mxu0 %v792
    %1783 = vmatpush1.msra.mxu0 %v791
    %1784 = vmatprep.subr.mxu0 %v798
    %1785 = vmatpush1.msra.mxu0 %v797
    %1786 = vmatprep.subr.mxu0 %v804
    %1787 = vmatpush1.msra.mxu0 %v803
    %1788 = vmatprep.subr.mxu0 %v810
    %1789 = vmatpush1.msra.mxu0 %v809
    %1790 = vmatprep.subr.mxu0 %v816
    %1791 = vmatpush1.msra.mxu0 %v815
    %1792 = vmatprep.subr.mxu0 %v822
    %1793 = vmatpush1.msra.mxu0 %v821
    %1794 = vmatprep.subr.mxu0 %v828
    %1795 = vmatpush1.msra.mxu0 %v827
    %1796 = vmatprep.subr.mxu0 %v834
    %1797 = vmatpush1.msra.mxu0 %v833
    %1798 = vmatprep.subr.mxu0 %v840
    %1799 = vmatpush1.msra.mxu0 %v839
    %1800 = vmatprep.subr.mxu0 %v846
    %1801 = vmatpush1.msra.mxu0 %v845
    %1802 = vmatprep.subr.mxu0 %v852
    %1803 = vmatpush1.msra.mxu0 %v851
    %1804 = vmatprep.subr.mxu0 %v858
    %1805 = vmatpush1.msra.mxu0 %v857
    %1806 = vmatprep.subr.mxu0 %v864
    %1807 = vmatpush1.msra.mxu0 %v863
    %1808 = vmatprep.subr.mxu0 %v870
    %1809 = vmatpush1.msra.mxu0 %v869
    %1810 = vmatprep.subr.mxu0 %v876
    %1811 = vmatpush1.msra.mxu0 %v875
    %1812 = vmatprep.subr.mxu0 %v882
    %1813 = vmatpush1.msra.mxu0 %v881
    %1814 = vmatprep.subr.mxu0 %v888
    %1815 = vmatpush1.msra.mxu0 %v887
    %1816 = vmatprep.subr.mxu0 %v894
    %1817 = vmatpush1.msra.mxu0 %v893
    %1818 = vmatprep.subr.mxu0 %v900
    %1819 = vmatpush1.msra.mxu0 %v899
    %1820 = vmatprep.subr.mxu0 %v906
    %1821 = vmatpush1.msra.mxu0 %v905
    %1822 = vmatprep.subr.mxu0 %v912
    %1823 = vmatpush1.msra.mxu0 %v911
    %1824 = vmatprep.subr.mxu0 %v918
    %1825 = vmatpush1.msra.mxu0 %v917
    %1826 = vmatprep.subr.mxu0 %v924
    %1827 = vmatpush1.msra.mxu0 %v923
    %1828 = vmatprep.subr.mxu0 %v930
    %1829 = vmatpush1.msra.mxu0 %v929
    %1830 = vmatprep.subr.mxu0 %v936
    %1831 = vmatpush1.msra.mxu0 %v935
    %1832 = vmatprep.subr.mxu0 %v942
    %1833 = vmatpush1.msra.mxu0 %v941
    %1834 = vmatprep.subr.mxu0 %v948
    %1835 = vmatpush1.msra.mxu0 %v947
    %1836 = vmatprep.subr.mxu0 %v954
    %1837 = vmatpush1.msra.mxu0 %v953
    %1838 = vmatprep.subr.mxu0 %v960
    %1839 = vmatpush1.msra.mxu0 %v959
    %1840 = vmatprep.subr.mxu0 %v966
    %1841 = vmatpush1.msra.mxu0 %v965
    %1842 = vmatprep.mubr.f32.mxu0 %v1232
    %1843 = vmatmul.mubr.f32.gmra.mrb[0].mxu0 %v1635
    %v1844 = vpop.f32.mrb[0].mxu0
    %v1845 = vadd.f32 %v988, %v1844
    %v1846 = vpop.f32.mrb[0].mxu0
    %v1847 = vadd.f32 %v992, %v1846
    %1848 = vdwg.mxu0
    %v1849 = vadd.f32 %v1703, %v1776
    %v1850 = vxor.u32 %v1849, 2147483648
    %v1851 = vmul.f32 %v1850, 1.442695
    %v1852 = vpow.pop %v1851
    %v1853 = vadd.f32 %v1852, 1.0
    %v1854 = vrcp.pop %v1853
    %v1855 = vmul.f32 1.0, %v1854
    %v1856 = vadd.f32 %v1705, %v1845
    %v1857 = vxor.u32 %v1856, 2147483648
    %v1858 = vmul.f32 %v1857, 1.442695
    %v1859 = vpow.pop %v1858
    %v1860 = vadd.f32 %v1859, 1.0
    %v1861 = vrcp.pop %v1860
    %v1862 = vmul.f32 1.0, %v1861
    %v1863 = vmul.f32 %v1855, %v1847
    %v1864 = vadd.f32 %v1774, %v1863
    %v1865 = vtanh.pop %v1864
    %v1866 = vsub.f32 1.0, %v1862
    %v1867 = vmul.f32 %v1866, %v1865
    %v1868 = vmul.f32 %v1862, %v1232
    %v1869 = vadd.f32 %v1867, %v1868
    %s1870 = scalar_lea.vmem %s0, 12
    %v1871 = vld [vmem:[%s1870] sm:$0x3f]
    %1872 = vmatprep.subr.mxu0 %v86
    %1873 = vmatpush1.msra.mxu0 %v85
    %1874 = vmatprep.subr.mxu0 %v89
    %1875 = vmatpush1.msra.mxu0 %v88
    %1876 = vmatprep.subr.mxu0 %v92
    %1877 = vmatpush1.msra.mxu0 %v91
    %1878 = vmatprep.subr.mxu0 %v95
    %1879 = vmatpush1.msra.mxu0 %v94
    %1880 = vmatprep.subr.mxu0 %v98
    %1881 = vmatpush1.msra.mxu0 %v97
    %1882 = vmatprep.subr.mxu0 %v101
    %1883 = vmatpush1.msra.mxu0 %v100
    %1884 = vmatprep.subr.mxu0 %v104
    %1885 = vmatpush1.msra.mxu0 %v103
    %1886 = vmatprep.subr.mxu0 %v107
    %1887 = vmatpush1.msra.mxu0 %v106
    %1888 = vmatprep.subr.mxu0 %v110
    %1889 = vmatpush1.msra.mxu0 %v109
    %1890 = vmatprep.subr.mxu0 %v113
    %1891 = vmatpush1.msra.mxu0 %v112
    %1892 = vmatprep.subr.mxu0 %v116
    %1893 = vmatpush1.msra.mxu0 %v115
    %1894 = vmatprep.subr.mxu0 %v119
    %1895 = vmatpush1.msra.mxu0 %v118
    %1896 = vmatprep.subr.mxu0 %v122
    %1897 = vmatpush1.msra.mxu0 %v121
    %1898 = vmatprep.subr.mxu0 %v125
    %1899 = vmatpush1.msra.mxu0 %v124
    %1900 = vmatprep.subr.mxu0 %v128
    %1901 = vmatpush1.msra.mxu0 %v127
    %1902 = vmatprep.subr.mxu0 %v131
    %1903 = vmatpush1.msra.mxu0 %v130
    %1904 = vmatprep.subr.mxu0 0.0
    %1905 = vmatpush1.msra.mxu0 0.0
    %1906 = vmatprep.subr.mxu0 0.0
    %1907 = vmatpush1.msra.mxu0 0.0
    %1908 = vmatprep.subr.mxu0 0.0
    %1909 = vmatpush1.msra.mxu0 0.0
    %1910 = vmatprep.subr.mxu0 0.0
    %1911 = vmatpush1.msra.mxu0 0.0
    %1912 = vmatprep.subr.mxu0 0.0
    %1913 = vmatpush1.msra.mxu0 0.0
    %1914 = vmatprep.subr.mxu0 0.0
    %1915 = vmatpush1.msra.mxu0 0.0
    %1916 = vmatprep.subr.mxu0 0.0
    %1917 = vmatpush1.msra.mxu0 0.0
    %1918 = vmatprep.subr.mxu0 0.0
    %1919 = vmatpush1.msra.mxu0 0.0
    %1920 = vmatprep.subr.mxu0 0.0
    %1921 = vmatpush1.msra.mxu0 0.0
    %1922 = vmatprep.subr.mxu0 0.0
    %1923 = vmatpush1.msra.mxu0 0.0
    %1924 = vmatprep.subr.mxu0 0.0
    %1925 = vmatpush1.msra.mxu0 0.0
    %1926 = vmatprep.subr.mxu0 0.0
    %1927 = vmatpush1.msra.mxu0 0.0
    %1928 = vmatprep.subr.mxu0 0.0
    %1929 = vmatpush1.msra.mxu0 0.0
    %1930 = vmatprep.subr.mxu0 0.0
    %1931 = vmatpush1.msra.mxu0 0.0
    %1932 = vmatprep.subr.mxu0 0.0
    %1933 = vmatpush1.msra.mxu0 0.0
    %1934 = vmatprep.subr.mxu0 0.0
    %1935 = vmatpush1.msra.mxu0 0.0
    %1936 = vmatprep.mubr.f32.mxu0 0.0
    %1937 = vmatmul.mubr.f32.gmra.mrb[0].mxu0 %v1401
    %v1938 = vpop.f32.mrb[0].mxu0
    %v1939 = vadd.f32 %v138, %v1938
    %v1940 = vpop.f32.mrb[0].mxu0
    %v1941 = vadd.f32 %v142, %v1940
    %1942 = vdwg.mxu0
    %1943 = vmatprep.subr.mxu0 0.0
    %1944 = vmatpush1.msra.mxu0 %v87
    %1945 = vmatprep.subr.mxu0 0.0
    %1946 = vmatpush1.msra.mxu0 %v90
    %1947 = vmatprep.subr.mxu0 0.0
    %1948 = vmatpush1.msra.mxu0 %v93
    %1949 = vmatprep.subr.mxu0 0.0
    %1950 = vmatpush1.msra.mxu0 %v96
    %1951 = vmatprep.subr.mxu0 0.0
    %1952 = vmatpush1.msra.mxu0 %v99
    %1953 = vmatprep.subr.mxu0 0.0
    %1954 = vmatpush1.msra.mxu0 %v102
    %1955 = vmatprep.subr.mxu0 0.0
    %1956 = vmatpush1.msra.mxu0 %v105
    %1957 = vmatprep.subr.mxu0 0.0
    %1958 = vmatpush1.msra.mxu0 %v108
    %1959 = vmatprep.subr.mxu0 0.0
    %1960 = vmatpush1.msra.mxu0 %v111
    %1961 = vmatprep.subr.mxu0 0.0
    %1962 = vmatpush1.msra.mxu0 %v114
    %1963 = vmatprep.subr.mxu0 0.0
    %1964 = vmatpush1.msra.mxu0 %v117
    %1965 = vmatprep.subr.mxu0 0.0
    %1966 = vmatpush1.msra.mxu0 %v120
    %1967 = vmatprep.subr.mxu0 0.0
    %1968 = vmatpush1.msra.mxu0 %v123
    %1969 = vmatprep.subr.mxu0 0.0
    %1970 = vmatpush1.msra.mxu0 %v126
    %1971 = vmatprep.subr.mxu0 0.0
    %1972 = vmatpush1.msra.mxu0 %v129
    %1973 = vmatprep.subr.mxu0 0.0
    %1974 = vmatpush1.msra.mxu0 %v132
    %1975 = vmatprep.subr.mxu0 0.0
    %1976 = vmatpush1.msra.mxu0 0.0
    %1977 = vmatprep.subr.mxu0 0.0
    %1978 = vmatpush1.msra.mxu0 0.0
    %1979 = vmatprep.subr.mxu0 0.0
    %1980 = vmatpush1.msra.mxu0 0.0
    %1981 = vmatprep.subr.mxu0 0.0
    %1982 = vmatpush1.msra.mxu0 0.0
    %1983 = vmatprep.subr.mxu0 0.0
    %1984 = vmatpush1.msra.mxu0 0.0
    %1985 = vmatprep.subr.mxu0 0.0
    %1986 = vmatpush1.msra.mxu0 0.0
    %1987 = vmatprep.subr.mxu0 0.0
    %1988 = vmatpush1.msra.mxu0 0.0
    %1989 = vmatprep.subr.mxu0 0.0
    %1990 = vmatpush1.msra.mxu0 0.0
    %1991 = vmatprep.subr.mxu0 0.0
    %1992 = vmatpush1.msra.mxu0 0.0
    %1993 = vmatprep.subr.mxu0 0.0
    %1994 = vmatpush1.msra.mxu0 0.0
    %1995 = vmatprep.subr.mxu0 0.0
    %1996 = vmatpush1.msra.mxu0 0.0
    %1997 = vmatprep.subr.mxu0 0.0
    %1998 = vmatpush1.msra.mxu0 0.0
    %1999 = vmatprep.subr.mxu0 0.0
    %2000 = vmatpush1.msra.mxu0 0.0
    %2001 = vmatprep.subr.mxu0 0.0
    %2002 = vmatpush1.msra.mxu0 0.0
    %2003 = vmatprep.subr.mxu0 0.0
    %2004 = vmatpush1.msra.mxu0 0.0
    %2005 = vmatprep.subr.mxu0 0.0
    %2006 = vmatpush1.msra.mxu0 0.0
    %2007 = vmatprep.mubr.f32.mxu0 0.0
    %2008 = vmatmul.mubr.f32.gmra.mrb[0].mxu0 %v1401
    %v2009 = vpop.f32.mrb[0].mxu0
    %v2010 = vadd.f32 %v146, %v2009
    %v2011 = vpop.f32.mrb[0].mxu0
    %2012 = vdwg.mxu0
    %v2013 = vadd.f32 %v1871, %v1939
    %v2014 = vxor.u32 %v2013, 2147483648
    %v2015 = vmul.f32 %v2014, 1.442695
    %v2016 = vpow.pop %v2015
    %v2017 = vadd.f32 %v2016, 1.0
    %v2018 = vrcp.pop %v2017
    %v2019 = vmul.f32 1.0, %v2018
    %v2021 = vrot.slane %v1871, 2
    %v2023 = vadd.f32 %v2021, %v1941
    %v2024 = vxor.u32 %v2023, 2147483648
    %v2025 = vmul.f32 %v2024, 1.442695
    %v2026 = vpow.pop %v2025
    %v2027 = vadd.f32 %v2026, 1.0
    %v2028 = vrcp.pop %v2027
    %v2029 = vmul.f32 1.0, %v2028
    %v2030 = vmul.f32 %v2019, %v2010
    %v2031 = vrot.slane %v1871, 4
    %v2033 = vadd.f32 %v2031, %v2030
    %v2034 = vtanh.pop %v2033
    %v2035 = vsub.f32 1.0, %v2029
    %v2036 = vmul.f32 %v2035, %v2034
    %v2037 = vmul.f32 %v2029, %v1401
    %v2038 = vadd.f32 %v2036, %v2037
    %2039 = vmatprep.subr.mxu0 %v318
    %2040 = vmatpush1.msra.mxu0 %v317
    %2041 = vmatprep.subr.mxu0 %v324
    %2042 = vmatpush1.msra.mxu0 %v323
    %2043 = vmatprep.subr.mxu0 %v330
    %2044 = vmatpush1.msra.mxu0 %v329
    %2045 = vmatprep.subr.mxu0 %v336
    %2046 = vmatpush1.msra.mxu0 %v335
    %2047 = vmatprep.subr.mxu0 %v342
    %2048 = vmatpush1.msra.mxu0 %v341
    %2049 = vmatprep.subr.mxu0 %v348
    %2050 = vmatpush1.msra.mxu0 %v347
    %2051 = vmatprep.subr.mxu0 %v354
    %2052 = vmatpush1.msra.mxu0 %v353
    %2053 = vmatprep.subr.mxu0 %v360
    %2054 = vmatpush1.msra.mxu0 %v359
    %2055 = vmatprep.subr.mxu0 %v366
    %2056 = vmatpush1.msra.mxu0 %v365
    %2057 = vmatprep.subr.mxu0 %v372
    %2058 = vmatpush1.msra.mxu0 %v371
    %2059 = vmatprep.subr.mxu0 %v378
    %2060 = vmatpush1.msra.mxu0 %v377
    %2061 = vmatprep.subr.mxu0 %v384
    %2062 = vmatpush1.msra.mxu0 %v383
    %2063 = vmatprep.subr.mxu0 %v390
    %2064 = vmatpush1.msra.mxu0 %v389
    %2065 = vmatprep.subr.mxu0 %v396
    %2066 = vmatpush1.msra.mxu0 %v395
    %2067 = vmatprep.subr.mxu0 %v402
    %2068 = vmatpush1.msra.mxu0 %v401
    %2069 = vmatprep.subr.mxu0 %v408
    %2070 = vmatpush1.msra.mxu0 %v407
    %2071 = vmatprep.subr.mxu0 %v414
    %2072 = vmatpush1.msra.mxu0 %v413
    %2073 = vmatprep.subr.mxu0 %v420
    %2074 = vmatpush1.msra.mxu0 %v419
    %2075 = vmatprep.subr.mxu0 %v426
    %2076 = vmatpush1.msra.mxu0 %v425
    %2077 = vmatprep.subr.mxu0 %v432
    %2078 = vmatpush1.msra.mxu0 %v431
    %2079 = vmatprep.subr.mxu0 %v438
    %2080 = vmatpush1.msra.mxu0 %v437
    %2081 = vmatprep.subr.mxu0 %v444
    %2082 = vmatpush1.msra.mxu0 %v443
    %2083 = vmatprep.subr.mxu0 %v450
    %2084 = vmatpush1.msra.mxu0 %v449
    %2085 = vmatprep.subr.mxu0 %v456
    %2086 = vmatpush1.msra.mxu0 %v455
    %2087 = vmatprep.subr.mxu0 %v462
    %2088 = vmatpush1.msra.mxu0 %v461
    %2089 = vmatprep.subr.mxu0 %v468
    %2090 = vmatpush1.msra.mxu0 %v467
    %2091 = vmatprep.subr.mxu0 %v474
    %2092 = vmatpush1.msra.mxu0 %v473
    %2093 = vmatprep.subr.mxu0 %v480
    %2094 = vmatpush1.msra.mxu0 %v479
    %2095 = vmatprep.subr.mxu0 %v486
    %2096 = vmatpush1.msra.mxu0 %v485
    %2097 = vmatprep.subr.mxu0 %v492
    %2098 = vmatpush1.msra.mxu0 %v491
    %2099 = vmatprep.subr.mxu0 %v498
    %2100 = vmatpush1.msra.mxu0 %v497
    %2101 = vmatprep.subr.mxu0 %v504
    %2102 = vmatpush1.msra.mxu0 %v503
    %2103 = vmatprep.mubr.f32.mxu0 %v1635
    %2104 = vmatmul.mubr.f32.gmra.mrb[0].mxu0 %v2038
    %v2105 = vpop.f32.mrb[0].mxu0
    %v2106 = vadd.f32 %v514, %v2105
    %v2107 = vpop.f32.mrb[0].mxu0
    %v2108 = vadd.f32 %v518, %v2107
    %2109 = vdwg.mxu0
    %2110 = vmatprep.subr.mxu0 %v320
    %2111 = vmatpush1.msra.mxu0 %v319
    %2112 = vmatprep.subr.mxu0 %v326
    %2113 = vmatpush1.msra.mxu0 %v325
    %2114 = vmatprep.subr.mxu0 %v332
    %2115 = vmatpush1.msra.mxu0 %v331
    %2116 = vmatprep.subr.mxu0 %v338
    %2117 = vmatpush1.msra.mxu0 %v337
    %2118 = vmatprep.subr.mxu0 %v344
    %2119 = vmatpush1.msra.mxu0 %v343
    %2120 = vmatprep.subr.mxu0 %v350
    %2121 = vmatpush1.msra.mxu0 %v349
    %2122 = vmatprep.subr.mxu0 %v356
    %2123 = vmatpush1.msra.mxu0 %v355
    %2124 = vmatprep.subr.mxu0 %v362
    %2125 = vmatpush1.msra.mxu0 %v361
    %2126 = vmatprep.subr.mxu0 %v368
    %2127 = vmatpush1.msra.mxu0 %v367
    %2128 = vmatprep.subr.mxu0 %v374
    %2129 = vmatpush1.msra.mxu0 %v373
    %2130 = vmatprep.subr.mxu0 %v380
    %2131 = vmatpush1.msra.mxu0 %v379
    %2132 = vmatprep.subr.mxu0 %v386
    %2133 = vmatpush1.msra.mxu0 %v385
    %2134 = vmatprep.subr.mxu0 %v392
    %2135 = vmatpush1.msra.mxu0 %v391
    %2136 = vmatprep.subr.mxu0 %v398
    %2137 = vmatpush1.msra.mxu0 %v397
    %2138 = vmatprep.subr.mxu0 %v404
    %2139 = vmatpush1.msra.mxu0 %v403
    %2140 = vmatprep.subr.mxu0 %v410
    %2141 = vmatpush1.msra.mxu0 %v409
    %2142 = vmatprep.subr.mxu0 %v416
    %2143 = vmatpush1.msra.mxu0 %v415
    %2144 = vmatprep.subr.mxu0 %v422
    %2145 = vmatpush1.msra.mxu0 %v421
    %2146 = vmatprep.subr.mxu0 %v428
    %2147 = vmatpush1.msra.mxu0 %v427
    %2148 = vmatprep.subr.mxu0 %v434
    %2149 = vmatpush1.msra.mxu0 %v433
    %2150 = vmatprep.subr.mxu0 %v440
    %2151 = vmatpush1.msra.mxu0 %v439
    %2152 = vmatprep.subr.mxu0 %v446
    %2153 = vmatpush1.msra.mxu0 %v445
    %2154 = vmatprep.subr.mxu0 %v452
    %2155 = vmatpush1.msra.mxu0 %v451
    %2156 = vmatprep.subr.mxu0 %v458
    %2157 = vmatpush1.msra.mxu0 %v457
    %2158 = vmatprep.subr.mxu0 %v464
    %2159 = vmatpush1.msra.mxu0 %v463
    %2160 = vmatprep.subr.mxu0 %v470
    %2161 = vmatpush1.msra.mxu0 %v469
    %2162 = vmatprep.subr.mxu0 %v476
    %2163 = vmatpush1.msra.mxu0 %v475
    %2164 = vmatprep.subr.mxu0 %v482
    %2165 = vmatpush1.msra.mxu0 %v481
    %2166 = vmatprep.subr.mxu0 %v488
    %2167 = vmatpush1.msra.mxu0 %v487
    %2168 = vmatprep.subr.mxu0 %v494
    %2169 = vmatpush1.msra.mxu0 %v493
    %2170 = vmatprep.subr.mxu0 %v500
    %2171 = vmatpush1.msra.mxu0 %v499
    %2172 = vmatprep.subr.mxu0 %v506
    %2173 = vmatpush1.msra.mxu0 %v505
    %2174 = vmatprep.mubr.f32.mxu0 %v1635
    %2175 = vmatmul.mubr.f32.gmra.mrb[0].mxu0 %v2038
    %v2176 = vpop.f32.mrb[0].mxu0
    %v2177 = vadd.f32 %v522, %v2176
    %v2178 = vpop.f32.mrb[0].mxu0
    %v2179 = vadd.f32 %v526, %v2178
    %2180 = vdwg.mxu0
    %2181 = vmatprep.subr.mxu0 %v322
    %2182 = vmatpush1.msra.mxu0 %v321
    %2183 = vmatprep.subr.mxu0 %v328
    %2184 = vmatpush1.msra.mxu0 %v327
    %2185 = vmatprep.subr.mxu0 %v334
    %2186 = vmatpush1.msra.mxu0 %v333
    %2187 = vmatprep.subr.mxu0 %v340
    %2188 = vmatpush1.msra.mxu0 %v339
    %2189 = vmatprep.subr.mxu0 %v346
    %2190 = vmatpush1.msra.mxu0 %v345
    %2191 = vmatprep.subr.mxu0 %v352
    %2192 = vmatpush1.msra.mxu0 %v351
    %2193 = vmatprep.subr.mxu0 %v358
    %2194 = vmatpush1.msra.mxu0 %v357
    %2195 = vmatprep.subr.mxu0 %v364
    %2196 = vmatpush1.msra.mxu0 %v363
    %2197 = vmatprep.subr.mxu0 %v370
    %2198 = vmatpush1.msra.mxu0 %v369
    %2199 = vmatprep.subr.mxu0 %v376
    %2200 = vmatpush1.msra.mxu0 %v375
    %2201 = vmatprep.subr.mxu0 %v382
    %2202 = vmatpush1.msra.mxu0 %v381
    %2203 = vmatprep.subr.mxu0 %v388
    %2204 = vmatpush1.msra.mxu0 %v387
    %2205 = vmatprep.subr.mxu0 %v394
    %2206 = vmatpush1.msra.mxu0 %v393
    %2207 = vmatprep.subr.mxu0 %v400
    %2208 = vmatpush1.msra.mxu0 %v399
    %2209 = vmatprep.subr.mxu0 %v406
    %2210 = vmatpush1.msra.mxu0 %v405
    %2211 = vmatprep.subr.mxu0 %v412
    %2212 = vmatpush1.msra.mxu0 %v411
    %2213 = vmatprep.subr.mxu0 %v418
    %2214 = vmatpush1.msra.mxu0 %v417
    %2215 = vmatprep.subr.mxu0 %v424
    %2216 = vmatpush1.msra.mxu0 %v423
    %2217 = vmatprep.subr.mxu0 %v430
    %2218 = vmatpush1.msra.mxu0 %v429
    %2219 = vmatprep.subr.mxu0 %v436
    %2220 = vmatpush1.msra.mxu0 %v435
    %2221 = vmatprep.subr.mxu0 %v442
    %2222 = vmatpush1.msra.mxu0 %v441
    %2223 = vmatprep.subr.mxu0 %v448
    %2224 = vmatpush1.msra.mxu0 %v447
    %2225 = vmatprep.subr.mxu0 %v454
    %2226 = vmatpush1.msra.mxu0 %v453
    %2227 = vmatprep.subr.mxu0 %v460
    %2228 = vmatpush1.msra.mxu0 %v459
    %2229 = vmatprep.subr.mxu0 %v466
    %2230 = vmatpush1.msra.mxu0 %v465
    %2231 = vmatprep.subr.mxu0 %v472
    %2232 = vmatpush1.msra.mxu0 %v471
    %2233 = vmatprep.subr.mxu0 %v478
    %2234 = vmatpush1.msra.mxu0 %v477
    %2235 = vmatprep.subr.mxu0 %v484
    %2236 = vmatpush1.msra.mxu0 %v483
    %2237 = vmatprep.subr.mxu0 %v490
    %2238 = vmatpush1.msra.mxu0 %v489
    %2239 = vmatprep.subr.mxu0 %v496
    %2240 = vmatpush1.msra.mxu0 %v495
    %2241 = vmatprep.subr.mxu0 %v502
    %2242 = vmatpush1.msra.mxu0 %v501
    %2243 = vmatprep.subr.mxu0 %v508
    %2244 = vmatpush1.msra.mxu0 %v507
    %2245 = vmatprep.mubr.f32.mxu0 %v1635
    %2246 = vmatmul.mubr.f32.gmra.mrb[0].mxu0 %v2038
    %v2247 = vpop.f32.mrb[0].mxu0
    %v2248 = vadd.f32 %v530, %v2247
    %v2249 = vpop.f32.mrb[0].mxu0
    %v2250 = vadd.f32 %v534, %v2249
    %2251 = vdwg.mxu0
    %v2252 = vadd.f32 %v2106, %v2179
    %v2253 = vxor.u32 %v2252, 2147483648
    %v2254 = vmul.f32 %v2253, 1.442695
    %v2255 = vpow.pop %v2254
    %v2256 = vadd.f32 %v2255, 1.0
    %v2257 = vrcp.pop %v2256
    %v2258 = vmul.f32 1.0, %v2257
    %v2259 = vadd.f32 %v2108, %v2248
    %v2260 = vxor.u32 %v2259, 2147483648
    %v2261 = vmul.f32 %v2260, 1.442695
    %v2262 = vpow.pop %v2261
    %v2263 = vadd.f32 %v2262, 1.0
    %v2264 = vrcp.pop %v2263
    %v2265 = vmul.f32 1.0, %v2264
    %v2266 = vmul.f32 %v2258, %v2250
    %v2267 = vadd.f32 %v2177, %v2266
    %v2268 = vtanh.pop %v2267
    %v2269 = vsub.f32 1.0, %v2265
    %v2270 = vmul.f32 %v2269, %v2268
    %v2271 = vmul.f32 %v2265, %v1635
    %v2272 = vadd.f32 %v2270, %v2271
    %2273 = vmatprep.subr.mxu0 %v776
    %2274 = vmatpush1.msra.mxu0 %v775
    %2275 = vmatprep.subr.mxu0 %v782
    %2276 = vmatpush1.msra.mxu0 %v781
    %2277 = vmatprep.subr.mxu0 %v788
    %2278 = vmatpush1.msra.mxu0 %v787
    %2279 = vmatprep.subr.mxu0 %v794
    %2280 = vmatpush1.msra.mxu0 %v793
    %2281 = vmatprep.subr.mxu0 %v800
    %2282 = vmatpush1.msra.mxu0 %v799
    %2283 = vmatprep.subr.mxu0 %v806
    %2284 = vmatpush1.msra.mxu0 %v805
    %2285 = vmatprep.subr.mxu0 %v812
    %2286 = vmatpush1.msra.mxu0 %v811
    %2287 = vmatprep.subr.mxu0 %v818
    %2288 = vmatpush1.msra.mxu0 %v817
    %2289 = vmatprep.subr.mxu0 %v824
    %2290 = vmatpush1.msra.mxu0 %v823
    %2291 = vmatprep.subr.mxu0 %v830
    %2292 = vmatpush1.msra.mxu0 %v829
    %2293 = vmatprep.subr.mxu0 %v836
    %2294 = vmatpush1.msra.mxu0 %v835
    %2295 = vmatprep.subr.mxu0 %v842
    %2296 = vmatpush1.msra.mxu0 %v841
    %2297 = vmatprep.subr.mxu0 %v848
    %2298 = vmatpush1.msra.mxu0 %v847
    %2299 = vmatprep.subr.mxu0 %v854
    %2300 = vmatpush1.msra.mxu0 %v853
    %2301 = vmatprep.subr.mxu0 %v860
    %2302 = vmatpush1.msra.mxu0 %v859
    %2303 = vmatprep.subr.mxu0 %v866
    %2304 = vmatpush1.msra.mxu0 %v865
    %2305 = vmatprep.subr.mxu0 %v872
    %2306 = vmatpush1.msra.mxu0 %v871
    %2307 = vmatprep.subr.mxu0 %v878
    %2308 = vmatpush1.msra.mxu0 %v877
    %2309 = vmatprep.subr.mxu0 %v884
    %2310 = vmatpush1.msra.mxu0 %v883
    %2311 = vmatprep.subr.mxu0 %v890
    %2312 = vmatpush1.msra.mxu0 %v889
    %2313 = vmatprep.subr.mxu0 %v896
    %2314 = vmatpush1.msra.mxu0 %v895
    %2315 = vmatprep.subr.mxu0 %v902
    %2316 = vmatpush1.msra.mxu0 %v901
    %2317 = vmatprep.subr.mxu0 %v908
    %2318 = vmatpush1.msra.mxu0 %v907
    %2319 = vmatprep.subr.mxu0 %v914
    %2320 = vmatpush1.msra.mxu0 %v913
    %2321 = vmatprep.subr.mxu0 %v920
    %2322 = vmatpush1.msra.mxu0 %v919
    %2323 = vmatprep.subr.mxu0 %v926
    %2324 = vmatpush1.msra.mxu0 %v925
    %2325 = vmatprep.subr.mxu0 %v932
    %2326 = vmatpush1.msra.mxu0 %v931
    %2327 = vmatprep.subr.mxu0 %v938
    %2328 = vmatpush1.msra.mxu0 %v937
    %2329 = vmatprep.subr.mxu0 %v944
    %2330 = vmatpush1.msra.mxu0 %v943
    %2331 = vmatprep.subr.mxu0 %v950
    %2332 = vmatpush1.msra.mxu0 %v949
    %2333 = vmatprep.subr.mxu0 %v956
    %2334 = vmatpush1.msra.mxu0 %v955
    %2335 = vmatprep.subr.mxu0 %v962
    %2336 = vmatpush1.msra.mxu0 %v961
    %2337 = vmatprep.mubr.f32.mxu0 %v1869
    %2338 = vmatmul.mubr.f32.gmra.mrb[0].mxu0 %v2272
    %v2339 = vpop.f32.mrb[0].mxu0
    %v2340 = vadd.f32 %v972, %v2339
    %v2341 = vpop.f32.mrb[0].mxu0
    %v2342 = vadd.f32 %v976, %v2341
    %2343 = vdwg.mxu0
    %2344 = vmatprep.subr.mxu0 %v778
    %2345 = vmatpush1.msra.mxu0 %v777
    %2346 = vmatprep.subr.mxu0 %v784
    %2347 = vmatpush1.msra.mxu0 %v783
    %2348 = vmatprep.subr.mxu0 %v790
    %2349 = vmatpush1.msra.mxu0 %v789
    %2350 = vmatprep.subr.mxu0 %v796
    %2351 = vmatpush1.msra.mxu0 %v795
    %2352 = vmatprep.subr.mxu0 %v802
    %2353 = vmatpush1.msra.mxu0 %v801
    %2354 = vmatprep.subr.mxu0 %v808
    %2355 = vmatpush1.msra.mxu0 %v807
    %2356 = vmatprep.subr.mxu0 %v814
    %2357 = vmatpush1.msra.mxu0 %v813
    %2358 = vmatprep.subr.mxu0 %v820
    %2359 = vmatpush1.msra.mxu0 %v819
    %2360 = vmatprep.subr.mxu0 %v826
    %2361 = vmatpush1.msra.mxu0 %v825
    %2362 = vmatprep.subr.mxu0 %v832
    %2363 = vmatpush1.msra.mxu0 %v831
    %2364 = vmatprep.subr.mxu0 %v838
    %2365 = vmatpush1.msra.mxu0 %v837
    %2366 = vmatprep.subr.mxu0 %v844
    %2367 = vmatpush1.msra.mxu0 %v843
    %2368 = vmatprep.subr.mxu0 %v850
    %2369 = vmatpush1.msra.mxu0 %v849
    %2370 = vmatprep.subr.mxu0 %v856
    %2371 = vmatpush1.msra.mxu0 %v855
    %2372 = vmatprep.subr.mxu0 %v862
    %2373 = vmatpush1.msra.mxu0 %v861
    %2374 = vmatprep.subr.mxu0 %v868
    %2375 = vmatpush1.msra.mxu0 %v867
    %2376 = vmatprep.subr.mxu0 %v874
    %2377 = vmatpush1.msra.mxu0 %v873
    %2378 = vmatprep.subr.mxu0 %v880
    %2379 = vmatpush1.msra.mxu0 %v879
    %2380 = vmatprep.subr.mxu0 %v886
    %2381 = vmatpush1.msra.mxu0 %v885
    %2382 = vmatprep.subr.mxu0 %v892
    %2383 = vmatpush1.msra.mxu0 %v891
    %2384 = vmatprep.subr.mxu0 %v898
    %2385 = vmatpush1.msra.mxu0 %v897
    %2386 = vmatprep.subr.mxu0 %v904
    %2387 = vmatpush1.msra.mxu0 %v903
    %2388 = vmatprep.subr.mxu0 %v910
    %2389 = vmatpush1.msra.mxu0 %v909
    %2390 = vmatprep.subr.mxu0 %v916
    %2391 = vmatpush1.msra.mxu0 %v915
    %2392 = vmatprep.subr.mxu0 %v922
    %2393 = vmatpush1.msra.mxu0 %v921
    %2394 = vmatprep.subr.mxu0 %v928
    %2395 = vmatpush1.msra.mxu0 %v927
    %2396 = vmatprep.subr.mxu0 %v934
    %2397 = vmatpush1.msra.mxu0 %v933
    %2398 = vmatprep.subr.mxu0 %v940
    %2399 = vmatpush1.msra.mxu0 %v939
    %2400 = vmatprep.subr.mxu0 %v946
    %2401 = vmatpush1.msra.mxu0 %v945
    %2402 = vmatprep.subr.mxu0 %v952
    %2403 = vmatpush1.msra.mxu0 %v951
    %2404 = vmatprep.subr.mxu0 %v958
    %2405 = vmatpush1.msra.mxu0 %v957
    %2406 = vmatprep.subr.mxu0 %v964
    %2407 = vmatpush1.msra.mxu0 %v963
    %2408 = vmatprep.mubr.f32.mxu0 %v1869
    %2409 = vmatmul.mubr.f32.gmra.mrb[0].mxu0 %v2272
    %v2410 = vpop.f32.mrb[0].mxu0
    %v2411 = vadd.f32 %v980, %v2410
    %v2412 = vpop.f32.mrb[0].mxu0
    %v2413 = vadd.f32 %v984, %v2412
    %2414 = vdwg.mxu0
    %2415 = vmatprep.subr.mxu0 %v780
    %2416 = vmatpush1.msra.mxu0 %v779
    %2417 = vmatprep.subr.mxu0 %v786
    %2418 = vmatpush1.msra.mxu0 %v785
    %2419 = vmatprep.subr.mxu0 %v792
    %2420 = vmatpush1.msra.mxu0 %v791
    %2421 = vmatprep.subr.mxu0 %v798
    %2422 = vmatpush1.msra.mxu0 %v797
    %2423 = vmatprep.subr.mxu0 %v804
    %2424 = vmatpush1.msra.mxu0 %v803
    %2425 = vmatprep.subr.mxu0 %v810
    %2426 = vmatpush1.msra.mxu0 %v809
    %2427 = vmatprep.subr.mxu0 %v816
    %2428 = vmatpush1.msra.mxu0 %v815
    %2429 = vmatprep.subr.mxu0 %v822
    %2430 = vmatpush1.msra.mxu0 %v821
    %2431 = vmatprep.subr.mxu0 %v828
    %2432 = vmatpush1.msra.mxu0 %v827
    %2433 = vmatprep.subr.mxu0 %v834
    %2434 = vmatpush1.msra.mxu0 %v833
    %2435 = vmatprep.subr.mxu0 %v840
    %2436 = vmatpush1.msra.mxu0 %v839
    %2437 = vmatprep.subr.mxu0 %v846
    %2438 = vmatpush1.msra.mxu0 %v845
    %2439 = vmatprep.subr.mxu0 %v852
    %2440 = vmatpush1.msra.mxu0 %v851
    %2441 = vmatprep.subr.mxu0 %v858
    %2442 = vmatpush1.msra.mxu0 %v857
    %2443 = vmatprep.subr.mxu0 %v864
    %2444 = vmatpush1.msra.mxu0 %v863
    %2445 = vmatprep.subr.mxu0 %v870
    %2446 = vmatpush1.msra.mxu0 %v869
    %2447 = vmatprep.subr.mxu0 %v876
    %2448 = vmatpush1.msra.mxu0 %v875
    %2449 = vmatprep.subr.mxu0 %v882
    %2450 = vmatpush1.msra.mxu0 %v881
    %2451 = vmatprep.subr.mxu0 %v888
    %2452 = vmatpush1.msra.mxu0 %v887
    %2453 = vmatprep.subr.mxu0 %v894
    %2454 = vmatpush1.msra.mxu0 %v893
    %2455 = vmatprep.subr.mxu0 %v900
    %2456 = vmatpush1.msra.mxu0 %v899
    %2457 = vmatprep.subr.mxu0 %v906
    %2458 = vmatpush1.msra.mxu0 %v905
    %2459 = vmatprep.subr.mxu0 %v912
    %2460 = vmatpush1.msra.mxu0 %v911
    %2461 = vmatprep.subr.mxu0 %v918
    %2462 = vmatpush1.msra.mxu0 %v917
    %2463 = vmatprep.subr.mxu0 %v924
    %2464 = vmatpush1.msra.mxu0 %v923
    %2465 = vmatprep.subr.mxu0 %v930
    %2466 = vmatpush1.msra.mxu0 %v929
    %2467 = vmatprep.subr.mxu0 %v936
    %2468 = vmatpush1.msra.mxu0 %v935
    %2469 = vmatprep.subr.mxu0 %v942
    %2470 = vmatpush1.msra.mxu0 %v941
    %2471 = vmatprep.subr.mxu0 %v948
    %2472 = vmatpush1.msra.mxu0 %v947
    %2473 = vmatprep.subr.mxu0 %v954
    %2474 = vmatpush1.msra.mxu0 %v953
    %2475 = vmatprep.subr.mxu0 %v960
    %2476 = vmatpush1.msra.mxu0 %v959
    %2477 = vmatprep.subr.mxu0 %v966
    %2478 = vmatpush1.msra.mxu0 %v965
    %2479 = vmatprep.mubr.f32.mxu0 %v1869
    %2480 = vmatmul.mubr.f32.gmra.mrb[0].mxu0 %v2272
    %v2481 = vpop.f32.mrb[0].mxu0
    %v2482 = vadd.f32 %v988, %v2481
    %v2483 = vpop.f32.mrb[0].mxu0
    %v2484 = vadd.f32 %v992, %v2483
    %2485 = vdwg.mxu0
    %v2486 = vadd.f32 %v2340, %v2413
    %v2487 = vxor.u32 %v2486, 2147483648
    %v2488 = vmul.f32 %v2487, 1.442695
    %v2489 = vpow.pop %v2488
    %v2490 = vadd.f32 %v2489, 1.0
    %v2491 = vrcp.pop %v2490
    %v2492 = vmul.f32 1.0, %v2491
    %v2493 = vadd.f32 %v2342, %v2482
    %v2494 = vxor.u32 %v2493, 2147483648
    %v2495 = vmul.f32 %v2494, 1.442695
    %v2496 = vpow.pop %v2495
    %v2497 = vadd.f32 %v2496, 1.0
    %v2498 = vrcp.pop %v2497
    %v2499 = vmul.f32 1.0, %v2498
    %v2500 = vmul.f32 %v2492, %v2484
    %v2501 = vadd.f32 %v2411, %v2500
    %v2502 = vtanh.pop %v2501
    %v2503 = vsub.f32 1.0, %v2499
    %v2504 = vmul.f32 %v2503, %v2502
    %v2505 = vmul.f32 %v2499, %v1869
    %v2506 = vadd.f32 %v2504, %v2505
    %s2507 = scalar_lea.vmem %s0, 18
    %v2508 = vld [vmem:[%s2507] sm:$0x3f]
    %2509 = vmatprep.subr.mxu0 %v86
    %2510 = vmatpush1.msra.mxu0 %v85
    %2511 = vmatprep.subr.mxu0 %v89
    %2512 = vmatpush1.msra.mxu0 %v88
    %2513 = vmatprep.subr.mxu0 %v92
    %2514 = vmatpush1.msra.mxu0 %v91
    %2515 = vmatprep.subr.mxu0 %v95
    %2516 = vmatpush1.msra.mxu0 %v94
    %2517 = vmatprep.subr.mxu0 %v98
    %2518 = vmatpush1.msra.mxu0 %v97
    %2519 = vmatprep.subr.mxu0 %v101
    %2520 = vmatpush1.msra.mxu0 %v100
    %2521 = vmatprep.subr.mxu0 %v104
    %2522 = vmatpush1.msra.mxu0 %v103
    %2523 = vmatprep.subr.mxu0 %v107
    %2524 = vmatpush1.msra.mxu0 %v106
    %2525 = vmatprep.subr.mxu0 %v110
    %2526 = vmatpush1.msra.mxu0 %v109
    %2527 = vmatprep.subr.mxu0 %v113
    %2528 = vmatpush1.msra.mxu0 %v112
    %2529 = vmatprep.subr.mxu0 %v116
    %2530 = vmatpush1.msra.mxu0 %v115
    %2531 = vmatprep.subr.mxu0 %v119
    %2532 = vmatpush1.msra.mxu0 %v118
    %2533 = vmatprep.subr.mxu0 %v122
    %2534 = vmatpush1.msra.mxu0 %v121
    %2535 = vmatprep.subr.mxu0 %v125
    %2536 = vmatpush1.msra.mxu0 %v124
    %2537 = vmatprep.subr.mxu0 %v128
    %2538 = vmatpush1.msra.mxu0 %v127
    %2539 = vmatprep.subr.mxu0 %v131
    %2540 = vmatpush1.msra.mxu0 %v130
    %2541 = vmatprep.subr.mxu0 0.0
    %2542 = vmatpush1.msra.mxu0 0.0
    %2543 = vmatprep.subr.mxu0 0.0
    %2544 = vmatpush1.msra.mxu0 0.0
    %2545 = vmatprep.subr.mxu0 0.0
    %2546 = vmatpush1.msra.mxu0 0.0
    %2547 = vmatprep.subr.mxu0 0.0
    %2548 = vmatpush1.msra.mxu0 0.0
    %2549 = vmatprep.subr.mxu0 0.0
    %2550 = vmatpush1.msra.mxu0 0.0
    %2551 = vmatprep.subr.mxu0 0.0
    %2552 = vmatpush1.msra.mxu0 0.0
    %2553 = vmatprep.subr.mxu0 0.0
    %2554 = vmatpush1.msra.mxu0 0.0
    %2555 = vmatprep.subr.mxu0 0.0
    %2556 = vmatpush1.msra.mxu0 0.0
    %2557 = vmatprep.subr.mxu0 0.0
    %2558 = vmatpush1.msra.mxu0 0.0
    %2559 = vmatprep.subr.mxu0 0.0
    %2560 = vmatpush1.msra.mxu0 0.0
    %2561 = vmatprep.subr.mxu0 0.0
    %2562 = vmatpush1.msra.mxu0 0.0
    %2563 = vmatprep.subr.mxu0 0.0
    %2564 = vmatpush1.msra.mxu0 0.0
    %2565 = vmatprep.subr.mxu0 0.0
    %2566 = vmatpush1.msra.mxu0 0.0
    %2567 = vmatprep.subr.mxu0 0.0
    %2568 = vmatpush1.msra.mxu0 0.0
    %2569 = vmatprep.subr.mxu0 0.0
    %2570 = vmatpush1.msra.mxu0 0.0
    %2571 = vmatprep.subr.mxu0 0.0
    %2572 = vmatpush1.msra.mxu0 0.0
    %2573 = vmatprep.mubr.f32.mxu0 0.0
    %2574 = vmatmul.mubr.f32.gmra.mrb[0].mxu0 %v2038
    %v2575 = vpop.f32.mrb[0].mxu0
    %v2576 = vadd.f32 %v138, %v2575
    %v2577 = vpop.f32.mrb[0].mxu0
    %v2578 = vadd.f32 %v142, %v2577
    %2579 = vdwg.mxu0
    %2580 = vmatprep.subr.mxu0 0.0
    %2581 = vmatpush1.msra.mxu0 %v87
    %2582 = vmatprep.subr.mxu0 0.0
    %2583 = vmatpush1.msra.mxu0 %v90
    %2584 = vmatprep.subr.mxu0 0.0
    %2585 = vmatpush1.msra.mxu0 %v93
    %2586 = vmatprep.subr.mxu0 0.0
    %2587 = vmatpush1.msra.mxu0 %v96
    %2588 = vmatprep.subr.mxu0 0.0
    %2589 = vmatpush1.msra.mxu0 %v99
    %2590 = vmatprep.subr.mxu0 0.0
    %2591 = vmatpush1.msra.mxu0 %v102
    %2592 = vmatprep.subr.mxu0 0.0
    %2593 = vmatpush1.msra.mxu0 %v105
    %2594 = vmatprep.subr.mxu0 0.0
    %2595 = vmatpush1.msra.mxu0 %v108
    %2596 = vmatprep.subr.mxu0 0.0
    %2597 = vmatpush1.msra.mxu0 %v111
    %2598 = vmatprep.subr.mxu0 0.0
    %2599 = vmatpush1.msra.mxu0 %v114
    %2600 = vmatprep.subr.mxu0 0.0
    %2601 = vmatpush1.msra.mxu0 %v117
    %2602 = vmatprep.subr.mxu0 0.0
    %2603 = vmatpush1.msra.mxu0 %v120
    %2604 = vmatprep.subr.mxu0 0.0
    %2605 = vmatpush1.msra.mxu0 %v123
    %2606 = vmatprep.subr.mxu0 0.0
    %2607 = vmatpush1.msra.mxu0 %v126
    %2608 = vmatprep.subr.mxu0 0.0
    %2609 = vmatpush1.msra.mxu0 %v129
    %2610 = vmatprep.subr.mxu0 0.0
    %2611 = vmatpush1.msra.mxu0 %v132
    %2612 = vmatprep.subr.mxu0 0.0
    %2613 = vmatpush1.msra.mxu0 0.0
    %2614 = vmatprep.subr.mxu0 0.0
    %2615 = vmatpush1.msra.mxu0 0.0
    %2616 = vmatprep.subr.mxu0 0.0
    %2617 = vmatpush1.msra.mxu0 0.0
    %2618 = vmatprep.subr.mxu0 0.0
    %2619 = vmatpush1.msra.mxu0 0.0
    %2620 = vmatprep.subr.mxu0 0.0
    %2621 = vmatpush1.msra.mxu0 0.0
    %2622 = vmatprep.subr.mxu0 0.0
    %2623 = vmatpush1.msra.mxu0 0.0
    %2624 = vmatprep.subr.mxu0 0.0
    %2625 = vmatpush1.msra.mxu0 0.0
    %2626 = vmatprep.subr.mxu0 0.0
    %2627 = vmatpush1.msra.mxu0 0.0
    %2628 = vmatprep.subr.mxu0 0.0
    %2629 = vmatpush1.msra.mxu0 0.0
    %2630 = vmatprep.subr.mxu0 0.0
    %2631 = vmatpush1.msra.mxu0 0.0
    %2632 = vmatprep.subr.mxu0 0.0
    %2633 = vmatpush1.msra.mxu0 0.0
    %2634 = vmatprep.subr.mxu0 0.0
    %2635 = vmatpush1.msra.mxu0 0.0
    %2636 = vmatprep.subr.mxu0 0.0
    %2637 = vmatpush1.msra.mxu0 0.0
    %2638 = vmatprep.subr.mxu0 0.0
    %2639 = vmatpush1.msra.mxu0 0.0
    %2640 = vmatprep.subr.mxu0 0.0
    %2641 = vmatpush1.msra.mxu0 0.0
    %2642 = vmatprep.subr.mxu0 0.0
    %2643 = vmatpush1.msra.mxu0 0.0
    %2644 = vmatprep.mubr.f32.mxu0 0.0
    %2645 = vmatmul.mubr.f32.gmra.mrb[0].mxu0 %v2038
    %v2646 = vpop.f32.mrb[0].mxu0
    %v2647 = vadd.f32 %v146, %v2646
    %v2648 = vpop.f32.mrb[0].mxu0
    %2649 = vdwg.mxu0
    %v2650 = vadd.f32 %v2508, %v2576
    %v2651 = vxor.u32 %v2650, 2147483648
    %v2652 = vmul.f32 %v2651, 1.442695
    %v2653 = vpow.pop %v2652
    %v2654 = vadd.f32 %v2653, 1.0
    %v2655 = vrcp.pop %v2654
    %v2656 = vmul.f32 1.0, %v2655
    %v2658 = vrot.slane %v2508, 2
    %v2660 = vadd.f32 %v2658, %v2578
    %v2661 = vxor.u32 %v2660, 2147483648
    %v2662 = vmul.f32 %v2661, 1.442695
    %v2663 = vpow.pop %v2662
    %v2664 = vadd.f32 %v2663, 1.0
    %v2665 = vrcp.pop %v2664
    %v2666 = vmul.f32 1.0, %v2665
    %v2667 = vmul.f32 %v2656, %v2647
    %v2668 = vrot.slane %v2508, 4
    %v2670 = vadd.f32 %v2668, %v2667
    %v2671 = vtanh.pop %v2670
    %v2672 = vsub.f32 1.0, %v2666
    %v2673 = vmul.f32 %v2672, %v2671
    %v2674 = vmul.f32 %v2666, %v2038
    %v2675 = vadd.f32 %v2673, %v2674
    %2676 = vmatprep.subr.mxu0 %v318
    %2677 = vmatpush1.msra.mxu0 %v317
    %2678 = vmatprep.subr.mxu0 %v324
    %2679 = vmatpush1.msra.mxu0 %v323
    %2680 = vmatprep.subr.mxu0 %v330
    %2681 = vmatpush1.msra.mxu0 %v329
    %2682 = vmatprep.subr.mxu0 %v336
    %2683 = vmatpush1.msra.mxu0 %v335
    %2684 = vmatprep.subr.mxu0 %v342
    %2685 = vmatpush1.msra.mxu0 %v341
    %2686 = vmatprep.subr.mxu0 %v348
    %2687 = vmatpush1.msra.mxu0 %v347
    %2688 = vmatprep.subr.mxu0 %v354
    %2689 = vmatpush1.msra.mxu0 %v353
    %2690 = vmatprep.subr.mxu0 %v360
    %2691 = vmatpush1.msra.mxu0 %v359
    %2692 = vmatprep.subr.mxu0 %v366
    %2693 = vmatpush1.msra.mxu0 %v365
    %2694 = vmatprep.subr.mxu0 %v372
    %2695 = vmatpush1.msra.mxu0 %v371
    %2696 = vmatprep.subr.mxu0 %v378
    %2697 = vmatpush1.msra.mxu0 %v377
    %2698 = vmatprep.subr.mxu0 %v384
    %2699 = vmatpush1.msra.mxu0 %v383
    %2700 = vmatprep.subr.mxu0 %v390
    %2701 = vmatpush1.msra.mxu0 %v389
    %2702 = vmatprep.subr.mxu0 %v396
    %2703 = vmatpush1.msra.mxu0 %v395
    %2704 = vmatprep.subr.mxu0 %v402
    %2705 = vmatpush1.msra.mxu0 %v401
    %2706 = vmatprep.subr.mxu0 %v408
    %2707 = vmatpush1.msra.mxu0 %v407
    %2708 = vmatprep.subr.mxu0 %v414
    %2709 = vmatpush1.msra.mxu0 %v413
    %2710 = vmatprep.subr.mxu0 %v420
    %2711 = vmatpush1.msra.mxu0 %v419
    %2712 = vmatprep.subr.mxu0 %v426
    %2713 = vmatpush1.msra.mxu0 %v425
    %2714 = vmatprep.subr.mxu0 %v432
    %2715 = vmatpush1.msra.mxu0 %v431
    %2716 = vmatprep.subr.mxu0 %v438
    %2717 = vmatpush1.msra.mxu0 %v437
    %2718 = vmatprep.subr.mxu0 %v444
    %2719 = vmatpush1.msra.mxu0 %v443
    %2720 = vmatprep.subr.mxu0 %v450
    %2721 = vmatpush1.msra.mxu0 %v449
    %2722 = vmatprep.subr.mxu0 %v456
    %2723 = vmatpush1.msra.mxu0 %v455
    %2724 = vmatprep.subr.mxu0 %v462
    %2725 = vmatpush1.msra.mxu0 %v461
    %2726 = vmatprep.subr.mxu0 %v468
    %2727 = vmatpush1.msra.mxu0 %v467
    %2728 = vmatprep.subr.mxu0 %v474
    %2729 = vmatpush1.msra.mxu0 %v473
    %2730 = vmatprep.subr.mxu0 %v480
    %2731 = vmatpush1.msra.mxu0 %v479
    %2732 = vmatprep.subr.mxu0 %v486
    %2733 = vmatpush1.msra.mxu0 %v485
    %2734 = vmatprep.subr.mxu0 %v492
    %2735 = vmatpush1.msra.mxu0 %v491
    %2736 = vmatprep.subr.mxu0 %v498
    %2737 = vmatpush1.msra.mxu0 %v497
    %2738 = vmatprep.subr.mxu0 %v504
    %2739 = vmatpush1.msra.mxu0 %v503
    %2740 = vmatprep.mubr.f32.mxu0 %v2272
    %2741 = vmatmul.mubr.f32.gmra.mrb[0].mxu0 %v2675
    %v2742 = vpop.f32.mrb[0].mxu0
    %v2743 = vadd.f32 %v514, %v2742
    %v2744 = vpop.f32.mrb[0].mxu0
    %v2745 = vadd.f32 %v518, %v2744
    %2746 = vdwg.mxu0
    %2747 = vmatprep.subr.mxu0 %v320
    %2748 = vmatpush1.msra.mxu0 %v319
    %2749 = vmatprep.subr.mxu0 %v326
    %2750 = vmatpush1.msra.mxu0 %v325
    %2751 = vmatprep.subr.mxu0 %v332
    %2752 = vmatpush1.msra.mxu0 %v331
    %2753 = vmatprep.subr.mxu0 %v338
    %2754 = vmatpush1.msra.mxu0 %v337
    %2755 = vmatprep.subr.mxu0 %v344
    %2756 = vmatpush1.msra.mxu0 %v343
    %2757 = vmatprep.subr.mxu0 %v350
    %2758 = vmatpush1.msra.mxu0 %v349
    %2759 = vmatprep.subr.mxu0 %v356
    %2760 = vmatpush1.msra.mxu0 %v355
    %2761 = vmatprep.subr.mxu0 %v362
    %2762 = vmatpush1.msra.mxu0 %v361
    %2763 = vmatprep.subr.mxu0 %v368
    %2764 = vmatpush1.msra.mxu0 %v367
    %2765 = vmatprep.subr.mxu0 %v374
    %2766 = vmatpush1.msra.mxu0 %v373
    %2767 = vmatprep.subr.mxu0 %v380
    %2768 = vmatpush1.msra.mxu0 %v379
    %2769 = vmatprep.subr.mxu0 %v386
    %2770 = vmatpush1.msra.mxu0 %v385
    %2771 = vmatprep.subr.mxu0 %v392
    %2772 = vmatpush1.msra.mxu0 %v391
    %2773 = vmatprep.subr.mxu0 %v398
    %2774 = vmatpush1.msra.mxu0 %v397
    %2775 = vmatprep.subr.mxu0 %v404
    %2776 = vmatpush1.msra.mxu0 %v403
    %2777 = vmatprep.subr.mxu0 %v410
    %2778 = vmatpush1.msra.mxu0 %v409
    %2779 = vmatprep.subr.mxu0 %v416
    %2780 = vmatpush1.msra.mxu0 %v415
    %2781 = vmatprep.subr.mxu0 %v422
    %2782 = vmatpush1.msra.mxu0 %v421
    %2783 = vmatprep.subr.mxu0 %v428
    %2784 = vmatpush1.msra.mxu0 %v427
    %2785 = vmatprep.subr.mxu0 %v434
    %2786 = vmatpush1.msra.mxu0 %v433
    %2787 = vmatprep.subr.mxu0 %v440
    %2788 = vmatpush1.msra.mxu0 %v439
    %2789 = vmatprep.subr.mxu0 %v446
    %2790 = vmatpush1.msra.mxu0 %v445
    %2791 = vmatprep.subr.mxu0 %v452
    %2792 = vmatpush1.msra.mxu0 %v451
    %2793 = vmatprep.subr.mxu0 %v458
    %2794 = vmatpush1.msra.mxu0 %v457
    %2795 = vmatprep.subr.mxu0 %v464
    %2796 = vmatpush1.msra.mxu0 %v463
    %2797 = vmatprep.subr.mxu0 %v470
    %2798 = vmatpush1.msra.mxu0 %v469
    %2799 = vmatprep.subr.mxu0 %v476
    %2800 = vmatpush1.msra.mxu0 %v475
    %2801 = vmatprep.subr.mxu0 %v482
    %2802 = vmatpush1.msra.mxu0 %v481
    %2803 = vmatprep.subr.mxu0 %v488
    %2804 = vmatpush1.msra.mxu0 %v487
    %2805 = vmatprep.subr.mxu0 %v494
    %2806 = vmatpush1.msra.mxu0 %v493
    %2807 = vmatprep.subr.mxu0 %v500
    %2808 = vmatpush1.msra.mxu0 %v499
    %2809 = vmatprep.subr.mxu0 %v506
    %2810 = vmatpush1.msra.mxu0 %v505
    %2811 = vmatprep.mubr.f32.mxu0 %v2272
    %2812 = vmatmul.mubr.f32.gmra.mrb[0].mxu0 %v2675
    %v2813 = vpop.f32.mrb[0].mxu0
    %v2814 = vadd.f32 %v522, %v2813
    %v2815 = vpop.f32.mrb[0].mxu0
    %v2816 = vadd.f32 %v526, %v2815
    %2817 = vdwg.mxu0
    %2818 = vmatprep.subr.mxu0 %v322
    %2819 = vmatpush1.msra.mxu0 %v321
    %2820 = vmatprep.subr.mxu0 %v328
    %2821 = vmatpush1.msra.mxu0 %v327
    %2822 = vmatprep.subr.mxu0 %v334
    %2823 = vmatpush1.msra.mxu0 %v333
    %2824 = vmatprep.subr.mxu0 %v340
    %2825 = vmatpush1.msra.mxu0 %v339
    %2826 = vmatprep.subr.mxu0 %v346
    %2827 = vmatpush1.msra.mxu0 %v345
    %2828 = vmatprep.subr.mxu0 %v352
    %2829 = vmatpush1.msra.mxu0 %v351
    %2830 = vmatprep.subr.mxu0 %v358
    %2831 = vmatpush1.msra.mxu0 %v357
    %2832 = vmatprep.subr.mxu0 %v364
    %2833 = vmatpush1.msra.mxu0 %v363
    %2834 = vmatprep.subr.mxu0 %v370
    %2835 = vmatpush1.msra.mxu0 %v369
    %2836 = vmatprep.subr.mxu0 %v376
    %2837 = vmatpush1.msra.mxu0 %v375
    %2838 = vmatprep.subr.mxu0 %v382
    %2839 = vmatpush1.msra.mxu0 %v381
    %2840 = vmatprep.subr.mxu0 %v388
    %2841 = vmatpush1.msra.mxu0 %v387
    %2842 = vmatprep.subr.mxu0 %v394
    %2843 = vmatpush1.msra.mxu0 %v393
    %2844 = vmatprep.subr.mxu0 %v400
    %2845 = vmatpush1.msra.mxu0 %v399
    %2846 = vmatprep.subr.mxu0 %v406
    %2847 = vmatpush1.msra.mxu0 %v405
    %2848 = vmatprep.subr.mxu0 %v412
    %2849 = vmatpush1.msra.mxu0 %v411
    %2850 = vmatprep.subr.mxu0 %v418
    %2851 = vmatpush1.msra.mxu0 %v417
    %2852 = vmatprep.subr.mxu0 %v424
    %2853 = vmatpush1.msra.mxu0 %v423
    %2854 = vmatprep.subr.mxu0 %v430
    %2855 = vmatpush1.msra.mxu0 %v429
    %2856 = vmatprep.subr.mxu0 %v436
    %2857 = vmatpush1.msra.mxu0 %v435
    %2858 = vmatprep.subr.mxu0 %v442
    %2859 = vmatpush1.msra.mxu0 %v441
    %2860 = vmatprep.subr.mxu0 %v448
    %2861 = vmatpush1.msra.mxu0 %v447
    %2862 = vmatprep.subr.mxu0 %v454
    %2863 = vmatpush1.msra.mxu0 %v453
    %2864 = vmatprep.subr.mxu0 %v460
    %2865 = vmatpush1.msra.mxu0 %v459
    %2866 = vmatprep.subr.mxu0 %v466
    %2867 = vmatpush1.msra.mxu0 %v465
    %2868 = vmatprep.subr.mxu0 %v472
    %2869 = vmatpush1.msra.mxu0 %v471
    %2870 = vmatprep.subr.mxu0 %v478
    %2871 = vmatpush1.msra.mxu0 %v477
    %2872 = vmatprep.subr.mxu0 %v484
    %2873 = vmatpush1.msra.mxu0 %v483
    %2874 = vmatprep.subr.mxu0 %v490
    %2875 = vmatpush1.msra.mxu0 %v489
    %2876 = vmatprep.subr.mxu0 %v496
    %2877 = vmatpush1.msra.mxu0 %v495
    %2878 = vmatprep.subr.mxu0 %v502
    %2879 = vmatpush1.msra.mxu0 %v501
    %2880 = vmatprep.subr.mxu0 %v508
    %2881 = vmatpush1.msra.mxu0 %v507
    %2882 = vmatprep.mubr.f32.mxu0 %v2272
    %2883 = vmatmul.mubr.f32.gmra.mrb[0].mxu0 %v2675
    %v2884 = vpop.f32.mrb[0].mxu0
    %v2885 = vadd.f32 %v530, %v2884
    %v2886 = vpop.f32.mrb[0].mxu0
    %v2887 = vadd.f32 %v534, %v2886
    %2888 = vdwg.mxu0
    %v2889 = vadd.f32 %v2743, %v2816
    %v2890 = vxor.u32 %v2889, 2147483648
    %v2891 = vmul.f32 %v2890, 1.442695
    %v2892 = vpow.pop %v2891
    %v2893 = vadd.f32 %v2892, 1.0
    %v2894 = vrcp.pop %v2893
    %v2895 = vmul.f32 1.0, %v2894
    %v2896 = vadd.f32 %v2745, %v2885
    %v2897 = vxor.u32 %v2896, 2147483648
    %v2898 = vmul.f32 %v2897, 1.442695
    %v2899 = vpow.pop %v2898
    %v2900 = vadd.f32 %v2899, 1.0
    %v2901 = vrcp.pop %v2900
    %v2902 = vmul.f32 1.0, %v2901
    %v2903 = vmul.f32 %v2895, %v2887
    %v2904 = vadd.f32 %v2814, %v2903
    %v2905 = vtanh.pop %v2904
    %v2906 = vsub.f32 1.0, %v2902
    %v2907 = vmul.f32 %v2906, %v2905
    %v2908 = vmul.f32 %v2902, %v2272
    %v2909 = vadd.f32 %v2907, %v2908
    %2910 = vmatprep.subr.mxu0 %v776
    %2911 = vmatpush1.msra.mxu0 %v775
    %2912 = vmatprep.subr.mxu0 %v782
    %2913 = vmatpush1.msra.mxu0 %v781
    %2914 = vmatprep.subr.mxu0 %v788
    %2915 = vmatpush1.msra.mxu0 %v787
    %2916 = vmatprep.subr.mxu0 %v794
    %2917 = vmatpush1.msra.mxu0 %v793
    %2918 = vmatprep.subr.mxu0 %v800
    %2919 = vmatpush1.msra.mxu0 %v799
    %2920 = vmatprep.subr.mxu0 %v806
    %2921 = vmatpush1.msra.mxu0 %v805
    %2922 = vmatprep.subr.mxu0 %v812
    %2923 = vmatpush1.msra.mxu0 %v811
    %2924 = vmatprep.subr.mxu0 %v818
    %2925 = vmatpush1.msra.mxu0 %v817
    %2926 = vmatprep.subr.mxu0 %v824
    %2927 = vmatpush1.msra.mxu0 %v823
    %2928 = vmatprep.subr.mxu0 %v830
    %2929 = vmatpush1.msra.mxu0 %v829
    %2930 = vmatprep.subr.mxu0 %v836
    %2931 = vmatpush1.msra.mxu0 %v835
    %2932 = vmatprep.subr.mxu0 %v842
    %2933 = vmatpush1.msra.mxu0 %v841
    %2934 = vmatprep.subr.mxu0 %v848
    %2935 = vmatpush1.msra.mxu0 %v847
    %2936 = vmatprep.subr.mxu0 %v854
    %2937 = vmatpush1.msra.mxu0 %v853
    %2938 = vmatprep.subr.mxu0 %v860
    %2939 = vmatpush1.msra.mxu0 %v859
    %2940 = vmatprep.subr.mxu0 %v866
    %2941 = vmatpush1.msra.mxu0 %v865
    %2942 = vmatprep.subr.mxu0 %v872
    %2943 = vmatpush1.msra.mxu0 %v871
    %2944 = vmatprep.subr.mxu0 %v878
    %2945 = vmatpush1.msra.mxu0 %v877
    %2946 = vmatprep.subr.mxu0 %v884
    %2947 = vmatpush1.msra.mxu0 %v883
    %2948 = vmatprep.subr.mxu0 %v890
    %2949 = vmatpush1.msra.mxu0 %v889
    %2950 = vmatprep.subr.mxu0 %v896
    %2951 = vmatpush1.msra.mxu0 %v895
    %2952 = vmatprep.subr.mxu0 %v902
    %2953 = vmatpush1.msra.mxu0 %v901
    %2954 = vmatprep.subr.mxu0 %v908
    %2955 = vmatpush1.msra.mxu0 %v907
    %2956 = vmatprep.subr.mxu0 %v914
    %2957 = vmatpush1.msra.mxu0 %v913
    %2958 = vmatprep.subr.mxu0 %v920
    %2959 = vmatpush1.msra.mxu0 %v919
    %2960 = vmatprep.subr.mxu0 %v926
    %2961 = vmatpush1.msra.mxu0 %v925
    %2962 = vmatprep.subr.mxu0 %v932
    %2963 = vmatpush1.msra.mxu0 %v931
    %2964 = vmatprep.subr.mxu0 %v938
    %2965 = vmatpush1.msra.mxu0 %v937
    %2966 = vmatprep.subr.mxu0 %v944
    %2967 = vmatpush1.msra.mxu0 %v943
    %2968 = vmatprep.subr.mxu0 %v950
    %2969 = vmatpush1.msra.mxu0 %v949
    %2970 = vmatprep.subr.mxu0 %v956
    %2971 = vmatpush1.msra.mxu0 %v955
    %2972 = vmatprep.subr.mxu0 %v962
    %2973 = vmatpush1.msra.mxu0 %v961
    %2974 = vmatprep.mubr.f32.mxu0 %v2506
    %2975 = vmatmul.mubr.f32.gmra.mrb[0].mxu0 %v2909
    %v2976 = vpop.f32.mrb[0].mxu0
    %v2977 = vadd.f32 %v972, %v2976
    %v2978 = vpop.f32.mrb[0].mxu0
    %v2979 = vadd.f32 %v976, %v2978
    %2980 = vdwg.mxu0
    %2981 = vmatprep.subr.mxu0 %v778
    %2982 = vmatpush1.msra.mxu0 %v777
    %2983 = vmatprep.subr.mxu0 %v784
    %2984 = vmatpush1.msra.mxu0 %v783
    %2985 = vmatprep.subr.mxu0 %v790
    %2986 = vmatpush1.msra.mxu0 %v789
    %2987 = vmatprep.subr.mxu0 %v796
    %2988 = vmatpush1.msra.mxu0 %v795
    %2989 = vmatprep.subr.mxu0 %v802
    %2990 = vmatpush1.msra.mxu0 %v801
    %2991 = vmatprep.subr.mxu0 %v808
    %2992 = vmatpush1.msra.mxu0 %v807
    %2993 = vmatprep.subr.mxu0 %v814
    %2994 = vmatpush1.msra.mxu0 %v813
    %2995 = vmatprep.subr.mxu0 %v820
    %2996 = vmatpush1.msra.mxu0 %v819
    %2997 = vmatprep.subr.mxu0 %v826
    %2998 = vmatpush1.msra.mxu0 %v825
    %2999 = vmatprep.subr.mxu0 %v832
    %3000 = vmatpush1.msra.mxu0 %v831
    %3001 = vmatprep.subr.mxu0 %v838
    %3002 = vmatpush1.msra.mxu0 %v837
    %3003 = vmatprep.subr.mxu0 %v844
    %3004 = vmatpush1.msra.mxu0 %v843
    %3005 = vmatprep.subr.mxu0 %v850
    %3006 = vmatpush1.msra.mxu0 %v849
    %3007 = vmatprep.subr.mxu0 %v856
    %3008 = vmatpush1.msra.mxu0 %v855
    %3009 = vmatprep.subr.mxu0 %v862
    %3010 = vmatpush1.msra.mxu0 %v861
    %3011 = vmatprep.subr.mxu0 %v868
    %3012 = vmatpush1.msra.mxu0 %v867
    %3013 = vmatprep.subr.mxu0 %v874
    %3014 = vmatpush1.msra.mxu0 %v873
    %3015 = vmatprep.subr.mxu0 %v880
    %3016 = vmatpush1.msra.mxu0 %v879
    %3017 = vmatprep.subr.mxu0 %v886
    %3018 = vmatpush1.msra.mxu0 %v885
    %3019 = vmatprep.subr.mxu0 %v892
    %3020 = vmatpush1.msra.mxu0 %v891
    %3021 = vmatprep.subr.mxu0 %v898
    %3022 = vmatpush1.msra.mxu0 %v897
    %3023 = vmatprep.subr.mxu0 %v904
    %3024 = vmatpush1.msra.mxu0 %v903
    %3025 = vmatprep.subr.mxu0 %v910
    %3026 = vmatpush1.msra.mxu0 %v909
    %3027 = vmatprep.subr.mxu0 %v916
    %3028 = vmatpush1.msra.mxu0 %v915
    %3029 = vmatprep.subr.mxu0 %v922
    %3030 = vmatpush1.msra.mxu0 %v921
    %3031 = vmatprep.subr.mxu0 %v928
    %3032 = vmatpush1.msra.mxu0 %v927
    %3033 = vmatprep.subr.mxu0 %v934
    %3034 = vmatpush1.msra.mxu0 %v933
    %3035 = vmatprep.subr.mxu0 %v940
    %3036 = vmatpush1.msra.mxu0 %v939
    %3037 = vmatprep.subr.mxu0 %v946
    %3038 = vmatpush1.msra.mxu0 %v945
    %3039 = vmatprep.subr.mxu0 %v952
    %3040 = vmatpush1.msra.mxu0 %v951
    %3041 = vmatprep.subr.mxu0 %v958
    %3042 = vmatpush1.msra.mxu0 %v957
    %3043 = vmatprep.subr.mxu0 %v964
    %3044 = vmatpush1.msra.mxu0 %v963
    %3045 = vmatprep.mubr.f32.mxu0 %v2506
    %3046 = vmatmul.mubr.f32.gmra.mrb[0].mxu0 %v2909
    %v3047 = vpop.f32.mrb[0].mxu0
    %v3048 = vadd.f32 %v980, %v3047
    %v3049 = vpop.f32.mrb[0].mxu0
    %v3050 = vadd.f32 %v984, %v3049
    %3051 = vdwg.mxu0
    %3052 = vmatprep.subr.mxu0 %v780
    %3053 = vmatpush1.msra.mxu0 %v779
    %3054 = vmatprep.subr.mxu0 %v786
    %3055 = vmatpush1.msra.mxu0 %v785
    %3056 = vmatprep.subr.mxu0 %v792
    %3057 = vmatpush1.msra.mxu0 %v791
    %3058 = vmatprep.subr.mxu0 %v798
    %3059 = vmatpush1.msra.mxu0 %v797
    %3060 = vmatprep.subr.mxu0 %v804
    %3061 = vmatpush1.msra.mxu0 %v803
    %3062 = vmatprep.subr.mxu0 %v810
    %3063 = vmatpush1.msra.mxu0 %v809
    %3064 = vmatprep.subr.mxu0 %v816
    %3065 = vmatpush1.msra.mxu0 %v815
    %3066 = vmatprep.subr.mxu0 %v822
    %3067 = vmatpush1.msra.mxu0 %v821
    %3068 = vmatprep.subr.mxu0 %v828
    %3069 = vmatpush1.msra.mxu0 %v827
    %3070 = vmatprep.subr.mxu0 %v834
    %3071 = vmatpush1.msra.mxu0 %v833
    %3072 = vmatprep.subr.mxu0 %v840
    %3073 = vmatpush1.msra.mxu0 %v839
    %3074 = vmatprep.subr.mxu0 %v846
    %3075 = vmatpush1.msra.mxu0 %v845
    %3076 = vmatprep.subr.mxu0 %v852
    %3077 = vmatpush1.msra.mxu0 %v851
    %3078 = vmatprep.subr.mxu0 %v858
    %3079 = vmatpush1.msra.mxu0 %v857
    %3080 = vmatprep.subr.mxu0 %v864
    %3081 = vmatpush1.msra.mxu0 %v863
    %3082 = vmatprep.subr.mxu0 %v870
    %3083 = vmatpush1.msra.mxu0 %v869
    %3084 = vmatprep.subr.mxu0 %v876
    %3085 = vmatpush1.msra.mxu0 %v875
    %3086 = vmatprep.subr.mxu0 %v882
    %3087 = vmatpush1.msra.mxu0 %v881
    %3088 = vmatprep.subr.mxu0 %v888
    %3089 = vmatpush1.msra.mxu0 %v887
    %3090 = vmatprep.subr.mxu0 %v894
    %3091 = vmatpush1.msra.mxu0 %v893
    %3092 = vmatprep.subr.mxu0 %v900
    %3093 = vmatpush1.msra.mxu0 %v899
    %3094 = vmatprep.subr.mxu0 %v906
    %3095 = vmatpush1.msra.mxu0 %v905
    %3096 = vmatprep.subr.mxu0 %v912
    %3097 = vmatpush1.msra.mxu0 %v911
    %3098 = vmatprep.subr.mxu0 %v918
    %3099 = vmatpush1.msra.mxu0 %v917
    %3100 = vmatprep.subr.mxu0 %v924
    %3101 = vmatpush1.msra.mxu0 %v923
    %3102 = vmatprep.subr.mxu0 %v930
    %3103 = vmatpush1.msra.mxu0 %v929
    %3104 = vmatprep.subr.mxu0 %v936
    %3105 = vmatpush1.msra.mxu0 %v935
    %3106 = vmatprep.subr.mxu0 %v942
    %3107 = vmatpush1.msra.mxu0 %v941
    %3108 = vmatprep.subr.mxu0 %v948
    %3109 = vmatpush1.msra.mxu0 %v947
    %3110 = vmatprep.subr.mxu0 %v954
    %3111 = vmatpush1.msra.mxu0 %v953
    %3112 = vmatprep.subr.mxu0 %v960
    %3113 = vmatpush1.msra.mxu0 %v959
    %3114 = vmatprep.subr.mxu0 %v966
    %3115 = vmatpush1.msra.mxu0 %v965
    %3116 = vmatprep.mubr.f32.mxu0 %v2506
    %3117 = vmatmul.mubr.f32.gmra.mrb[0].mxu0 %v2909
    %v3118 = vpop.f32.mrb[0].mxu0
    %v3119 = vadd.f32 %v988, %v3118
    %v3120 = vpop.f32.mrb[0].mxu0
    %v3121 = vadd.f32 %v992, %v3120
    %3122 = vdwg.mxu0
    %v3123 = vadd.f32 %v2977, %v3050
    %v3124 = vxor.u32 %v3123, 2147483648
    %v3125 = vmul.f32 %v3124, 1.442695
    %v3126 = vpow.pop %v3125
    %v3127 = vadd.f32 %v3126, 1.0
    %v3128 = vrcp.pop %v3127
    %v3129 = vmul.f32 1.0, %v3128
    %v3130 = vadd.f32 %v2979, %v3119
    %v3131 = vxor.u32 %v3130, 2147483648
    %v3132 = vmul.f32 %v3131, 1.442695
    %v3133 = vpow.pop %v3132
    %v3134 = vadd.f32 %v3133, 1.0
    %v3135 = vrcp.pop %v3134
    %v3136 = vmul.f32 1.0, %v3135
    %v3137 = vmul.f32 %v3129, %v3121
    %v3138 = vadd.f32 %v3048, %v3137
    %v3139 = vtanh.pop %v3138
    %v3140 = vsub.f32 1.0, %v3136
    %v3141 = vmul.f32 %v3140, %v3139
    %v3142 = vmul.f32 %v3136, %v2506
    %v3143 = vadd.f32 %v3141, %v3142
    %s3144 = scalar_lea.vmem %s0, 24
    %v3145 = vld [vmem:[%s3144] sm:$0x3f]
    %3146 = vmatprep.subr.mxu0 %v86
    %3147 = vmatpush1.msra.mxu0 %v85
    %3148 = vmatprep.subr.mxu0 %v89
    %3149 = vmatpush1.msra.mxu0 %v88
    %3150 = vmatprep.subr.mxu0 %v92
    %3151 = vmatpush1.msra.mxu0 %v91
    %3152 = vmatprep.subr.mxu0 %v95
    %3153 = vmatpush1.msra.mxu0 %v94
    %3154 = vmatprep.subr.mxu0 %v98
    %3155 = vmatpush1.msra.mxu0 %v97
    %3156 = vmatprep.subr.mxu0 %v101
    %3157 = vmatpush1.msra.mxu0 %v100
    %3158 = vmatprep.subr.mxu0 %v104
    %3159 = vmatpush1.msra.mxu0 %v103
    %3160 = vmatprep.subr.mxu0 %v107
    %3161 = vmatpush1.msra.mxu0 %v106
    %3162 = vmatprep.subr.mxu0 %v110
    %3163 = vmatpush1.msra.mxu0 %v109
    %3164 = vmatprep.subr.mxu0 %v113
    %3165 = vmatpush1.msra.mxu0 %v112
    %3166 = vmatprep.subr.mxu0 %v116
    %3167 = vmatpush1.msra.mxu0 %v115
    %3168 = vmatprep.subr.mxu0 %v119
    %3169 = vmatpush1.msra.mxu0 %v118
    %3170 = vmatprep.subr.mxu0 %v122
    %3171 = vmatpush1.msra.mxu0 %v121
    %3172 = vmatprep.subr.mxu0 %v125
    %3173 = vmatpush1.msra.mxu0 %v124
    %3174 = vmatprep.subr.mxu0 %v128
    %3175 = vmatpush1.msra.mxu0 %v127
    %3176 = vmatprep.subr.mxu0 %v131
    %3177 = vmatpush1.msra.mxu0 %v130
    %3178 = vmatprep.subr.mxu0 0.0
    %3179 = vmatpush1.msra.mxu0 0.0
    %3180 = vmatprep.subr.mxu0 0.0
    %3181 = vmatpush1.msra.mxu0 0.0
    %3182 = vmatprep.subr.mxu0 0.0
    %3183 = vmatpush1.msra.mxu0 0.0
    %3184 = vmatprep.subr.mxu0 0.0
    %3185 = vmatpush1.msra.mxu0 0.0
    %3186 = vmatprep.subr.mxu0 0.0
    %3187 = vmatpush1.msra.mxu0 0.0
    %3188 = vmatprep.subr.mxu0 0.0
    %3189 = vmatpush1.msra.mxu0 0.0
    %3190 = vmatprep.subr.mxu0 0.0
    %3191 = vmatpush1.msra.mxu0 0.0
    %3192 = vmatprep.subr.mxu0 0.0
    %3193 = vmatpush1.msra.mxu0 0.0
    %3194 = vmatprep.subr.mxu0 0.0
    %3195 = vmatpush1.msra.mxu0 0.0
    %3196 = vmatprep.subr.mxu0 0.0
    %3197 = vmatpush1.msra.mxu0 0.0
    %3198 = vmatprep.subr.mxu0 0.0
    %3199 = vmatpush1.msra.mxu0 0.0
    %3200 = vmatprep.subr.mxu0 0.0
    %3201 = vmatpush1.msra.mxu0 0.0
    %3202 = vmatprep.subr.mxu0 0.0
    %3203 = vmatpush1.msra.mxu0 0.0
    %3204 = vmatprep.subr.mxu0 0.0
    %3205 = vmatpush1.msra.mxu0 0.0
    %3206 = vmatprep.subr.mxu0 0.0
    %3207 = vmatpush1.msra.mxu0 0.0
    %3208 = vmatprep.subr.mxu0 0.0
    %3209 = vmatpush1.msra.mxu0 0.0
    %3210 = vmatprep.mubr.f32.mxu0 0.0
    %3211 = vmatmul.mubr.f32.gmra.mrb[0].mxu0 %v2675
    %v3212 = vpop.f32.mrb[0].mxu0
    %v3213 = vadd.f32 %v138, %v3212
    %v3214 = vpop.f32.mrb[0].mxu0
    %v3215 = vadd.f32 %v142, %v3214
    %3216 = vdwg.mxu0
    %3217 = vmatprep.subr.mxu0 0.0
    %3218 = vmatpush1.msra.mxu0 %v87
    %3219 = vmatprep.subr.mxu0 0.0
    %3220 = vmatpush1.msra.mxu0 %v90
    %3221 = vmatprep.subr.mxu0 0.0
    %3222 = vmatpush1.msra.mxu0 %v93
    %3223 = vmatprep.subr.mxu0 0.0
    %3224 = vmatpush1.msra.mxu0 %v96
    %3225 = vmatprep.subr.mxu0 0.0
    %3226 = vmatpush1.msra.mxu0 %v99
    %3227 = vmatprep.subr.mxu0 0.0
    %3228 = vmatpush1.msra.mxu0 %v102
    %3229 = vmatprep.subr.mxu0 0.0
    %3230 = vmatpush1.msra.mxu0 %v105
    %3231 = vmatprep.subr.mxu0 0.0
    %3232 = vmatpush1.msra.mxu0 %v108
    %3233 = vmatprep.subr.mxu0 0.0
    %3234 = vmatpush1.msra.mxu0 %v111
    %3235 = vmatprep.subr.mxu0 0.0
    %3236 = vmatpush1.msra.mxu0 %v114
    %3237 = vmatprep.subr.mxu0 0.0
    %3238 = vmatpush1.msra.mxu0 %v117
    %3239 = vmatprep.subr.mxu0 0.0
    %3240 = vmatpush1.msra.mxu0 %v120
    %3241 = vmatprep.subr.mxu0 0.0
    %3242 = vmatpush1.msra.mxu0 %v123
    %3243 = vmatprep.subr.mxu0 0.0
    %3244 = vmatpush1.msra.mxu0 %v126
    %3245 = vmatprep.subr.mxu0 0.0
    %3246 = vmatpush1.msra.mxu0 %v129
    %3247 = vmatprep.subr.mxu0 0.0
    %3248 = vmatpush1.msra.mxu0 %v132
    %3249 = vmatprep.subr.mxu0 0.0
    %3250 = vmatpush1.msra.mxu0 0.0
    %3251 = vmatprep.subr.mxu0 0.0
    %3252 = vmatpush1.msra.mxu0 0.0
    %3253 = vmatprep.subr.mxu0 0.0
    %3254 = vmatpush1.msra.mxu0 0.0
    %3255 = vmatprep.subr.mxu0 0.0
    %3256 = vmatpush1.msra.mxu0 0.0
    %3257 = vmatprep.subr.mxu0 0.0
    %3258 = vmatpush1.msra.mxu0 0.0
    %3259 = vmatprep.subr.mxu0 0.0
    %3260 = vmatpush1.msra.mxu0 0.0
    %3261 = vmatprep.subr.mxu0 0.0
    %3262 = vmatpush1.msra.mxu0 0.0
    %3263 = vmatprep.subr.mxu0 0.0
    %3264 = vmatpush1.msra.mxu0 0.0
    %3265 = vmatprep.subr.mxu0 0.0
    %3266 = vmatpush1.msra.mxu0 0.0
    %3267 = vmatprep.subr.mxu0 0.0
    %3268 = vmatpush1.msra.mxu0 0.0
    %3269 = vmatprep.subr.mxu0 0.0
    %3270 = vmatpush1.msra.mxu0 0.0
    %3271 = vmatprep.subr.mxu0 0.0
    %3272 = vmatpush1.msra.mxu0 0.0
    %3273 = vmatprep.subr.mxu0 0.0
    %3274 = vmatpush1.msra.mxu0 0.0
    %3275 = vmatprep.subr.mxu0 0.0
    %3276 = vmatpush1.msra.mxu0 0.0
    %3277 = vmatprep.subr.mxu0 0.0
    %3278 = vmatpush1.msra.mxu0 0.0
    %3279 = vmatprep.subr.mxu0 0.0
    %3280 = vmatpush1.msra.mxu0 0.0
    %3281 = vmatprep.mubr.f32.mxu0 0.0
    %3282 = vmatmul.mubr.f32.gmra.mrb[0].mxu0 %v2675
    %v3283 = vpop.f32.mrb[0].mxu0
    %v3284 = vadd.f32 %v146, %v3283
    %v3285 = vpop.f32.mrb[0].mxu0
    %3286 = vdwg.mxu0
    %v3287 = vadd.f32 %v3145, %v3213
    %v3288 = vxor.u32 %v3287, 2147483648
    %v3289 = vmul.f32 %v3288, 1.442695
    %v3290 = vpow.pop %v3289
    %v3291 = vadd.f32 %v3290, 1.0
    %v3292 = vrcp.pop %v3291
    %v3293 = vmul.f32 1.0, %v3292
    %v3295 = vrot.slane %v3145, 2
    %v3297 = vadd.f32 %v3295, %v3215
    %v3298 = vxor.u32 %v3297, 2147483648
    %v3299 = vmul.f32 %v3298, 1.442695
    %v3300 = vpow.pop %v3299
    %v3301 = vadd.f32 %v3300, 1.0
    %v3302 = vrcp.pop %v3301
    %v3303 = vmul.f32 1.0, %v3302
    %v3304 = vmul.f32 %v3293, %v3284
    %v3305 = vrot.slane %v3145, 4
    %v3307 = vadd.f32 %v3305, %v3304
    %v3308 = vtanh.pop %v3307
    %v3309 = vsub.f32 1.0, %v3303
    %v3310 = vmul.f32 %v3309, %v3308
    %v3311 = vmul.f32 %v3303, %v2675
    %v3312 = vadd.f32 %v3310, %v3311
    %3313 = vmatprep.subr.mxu0 %v318
    %3314 = vmatpush1.msra.mxu0 %v317
    %3315 = vmatprep.subr.mxu0 %v324
    %3316 = vmatpush1.msra.mxu0 %v323
    %3317 = vmatprep.subr.mxu0 %v330
    %3318 = vmatpush1.msra.mxu0 %v329
    %3319 = vmatprep.subr.mxu0 %v336
    %3320 = vmatpush1.msra.mxu0 %v335
    %3321 = vmatprep.subr.mxu0 %v342
    %3322 = vmatpush1.msra.mxu0 %v341
    %3323 = vmatprep.subr.mxu0 %v348
    %3324 = vmatpush1.msra.mxu0 %v347
    %3325 = vmatprep.subr.mxu0 %v354
    %3326 = vmatpush1.msra.mxu0 %v353
    %3327 = vmatprep.subr.mxu0 %v360
    %3328 = vmatpush1.msra.mxu0 %v359
    %3329 = vmatprep.subr.mxu0 %v366
    %3330 = vmatpush1.msra.mxu0 %v365
    %3331 = vmatprep.subr.mxu0 %v372
    %3332 = vmatpush1.msra.mxu0 %v371
    %3333 = vmatprep.subr.mxu0 %v378
    %3334 = vmatpush1.msra.mxu0 %v377
    %3335 = vmatprep.subr.mxu0 %v384
    %3336 = vmatpush1.msra.mxu0 %v383
    %3337 = vmatprep.subr.mxu0 %v390
    %3338 = vmatpush1.msra.mxu0 %v389
    %3339 = vmatprep.subr.mxu0 %v396
    %3340 = vmatpush1.msra.mxu0 %v395
    %3341 = vmatprep.subr.mxu0 %v402
    %3342 = vmatpush1.msra.mxu0 %v401
    %3343 = vmatprep.subr.mxu0 %v408
    %3344 = vmatpush1.msra.mxu0 %v407
    %3345 = vmatprep.subr.mxu0 %v414
    %3346 = vmatpush1.msra.mxu0 %v413
    %3347 = vmatprep.subr.mxu0 %v420
    %3348 = vmatpush1.msra.mxu0 %v419
    %3349 = vmatprep.subr.mxu0 %v426
    %3350 = vmatpush1.msra.mxu0 %v425
    %3351 = vmatprep.subr.mxu0 %v432
    %3352 = vmatpush1.msra.mxu0 %v431
    %3353 = vmatprep.subr.mxu0 %v438
    %3354 = vmatpush1.msra.mxu0 %v437
    %3355 = vmatprep.subr.mxu0 %v444
    %3356 = vmatpush1.msra.mxu0 %v443
    %3357 = vmatprep.subr.mxu0 %v450
    %3358 = vmatpush1.msra.mxu0 %v449
    %3359 = vmatprep.subr.mxu0 %v456
    %3360 = vmatpush1.msra.mxu0 %v455
    %3361 = vmatprep.subr.mxu0 %v462
    %3362 = vmatpush1.msra.mxu0 %v461
    %3363 = vmatprep.subr.mxu0 %v468
    %3364 = vmatpush1.msra.mxu0 %v467
    %3365 = vmatprep.subr.mxu0 %v474
    %3366 = vmatpush1.msra.mxu0 %v473
    %3367 = vmatprep.subr.mxu0 %v480
    %3368 = vmatpush1.msra.mxu0 %v479
    %3369 = vmatprep.subr.mxu0 %v486
    %3370 = vmatpush1.msra.mxu0 %v485
    %3371 = vmatprep.subr.mxu0 %v492
    %3372 = vmatpush1.msra.mxu0 %v491
    %3373 = vmatprep.subr.mxu0 %v498
    %3374 = vmatpush1.msra.mxu0 %v497
    %3375 = vmatprep.subr.mxu0 %v504
    %3376 = vmatpush1.msra.mxu0 %v503
    %3377 = vmatprep.mubr.f32.mxu0 %v2909
    %3378 = vmatmul.mubr.f32.gmra.mrb[0].mxu0 %v3312
    %v3379 = vpop.f32.mrb[0].mxu0
    %v3380 = vadd.f32 %v514, %v3379
    %v3381 = vpop.f32.mrb[0].mxu0
    %v3382 = vadd.f32 %v518, %v3381
    %3383 = vdwg.mxu0
    %3384 = vmatprep.subr.mxu0 %v320
    %3385 = vmatpush1.msra.mxu0 %v319
    %3386 = vmatprep.subr.mxu0 %v326
    %3387 = vmatpush1.msra.mxu0 %v325
    %3388 = vmatprep.subr.mxu0 %v332
    %3389 = vmatpush1.msra.mxu0 %v331
    %3390 = vmatprep.subr.mxu0 %v338
    %3391 = vmatpush1.msra.mxu0 %v337
    %3392 = vmatprep.subr.mxu0 %v344
    %3393 = vmatpush1.msra.mxu0 %v343
    %3394 = vmatprep.subr.mxu0 %v350
    %3395 = vmatpush1.msra.mxu0 %v349
    %3396 = vmatprep.subr.mxu0 %v356
    %3397 = vmatpush1.msra.mxu0 %v355
    %3398 = vmatprep.subr.mxu0 %v362
    %3399 = vmatpush1.msra.mxu0 %v361
    %3400 = vmatprep.subr.mxu0 %v368
    %3401 = vmatpush1.msra.mxu0 %v367
    %3402 = vmatprep.subr.mxu0 %v374
    %3403 = vmatpush1.msra.mxu0 %v373
    %3404 = vmatprep.subr.mxu0 %v380
    %3405 = vmatpush1.msra.mxu0 %v379
    %3406 = vmatprep.subr.mxu0 %v386
    %3407 = vmatpush1.msra.mxu0 %v385
    %3408 = vmatprep.subr.mxu0 %v392
    %3409 = vmatpush1.msra.mxu0 %v391
    %3410 = vmatprep.subr.mxu0 %v398
    %3411 = vmatpush1.msra.mxu0 %v397
    %3412 = vmatprep.subr.mxu0 %v404
    %3413 = vmatpush1.msra.mxu0 %v403
    %3414 = vmatprep.subr.mxu0 %v410
    %3415 = vmatpush1.msra.mxu0 %v409
    %3416 = vmatprep.subr.mxu0 %v416
    %3417 = vmatpush1.msra.mxu0 %v415
    %3418 = vmatprep.subr.mxu0 %v422
    %3419 = vmatpush1.msra.mxu0 %v421
    %3420 = vmatprep.subr.mxu0 %v428
    %3421 = vmatpush1.msra.mxu0 %v427
    %3422 = vmatprep.subr.mxu0 %v434
    %3423 = vmatpush1.msra.mxu0 %v433
    %3424 = vmatprep.subr.mxu0 %v440
    %3425 = vmatpush1.msra.mxu0 %v439
    %3426 = vmatprep.subr.mxu0 %v446
    %3427 = vmatpush1.msra.mxu0 %v445
    %3428 = vmatprep.subr.mxu0 %v452
    %3429 = vmatpush1.msra.mxu0 %v451
    %3430 = vmatprep.subr.mxu0 %v458
    %3431 = vmatpush1.msra.mxu0 %v457
    %3432 = vmatprep.subr.mxu0 %v464
    %3433 = vmatpush1.msra.mxu0 %v463
    %3434 = vmatprep.subr.mxu0 %v470
    %3435 = vmatpush1.msra.mxu0 %v469
    %3436 = vmatprep.subr.mxu0 %v476
    %3437 = vmatpush1.msra.mxu0 %v475
    %3438 = vmatprep.subr.mxu0 %v482
    %3439 = vmatpush1.msra.mxu0 %v481
    %3440 = vmatprep.subr.mxu0 %v488
    %3441 = vmatpush1.msra.mxu0 %v487
    %3442 = vmatprep.subr.mxu0 %v494
    %3443 = vmatpush1.msra.mxu0 %v493
    %3444 = vmatprep.subr.mxu0 %v500
    %3445 = vmatpush1.msra.mxu0 %v499
    %3446 = vmatprep.subr.mxu0 %v506
    %3447 = vmatpush1.msra.mxu0 %v505
    %3448 = vmatprep.mubr.f32.mxu0 %v2909
    %3449 = vmatmul.mubr.f32.gmra.mrb[0].mxu0 %v3312
    %v3450 = vpop.f32.mrb[0].mxu0
    %v3451 = vadd.f32 %v522, %v3450
    %v3452 = vpop.f32.mrb[0].mxu0
    %v3453 = vadd.f32 %v526, %v3452
    %3454 = vdwg.mxu0
    %3455 = vmatprep.subr.mxu0 %v322
    %3456 = vmatpush1.msra.mxu0 %v321
    %3457 = vmatprep.subr.mxu0 %v328
    %3458 = vmatpush1.msra.mxu0 %v327
    %3459 = vmatprep.subr.mxu0 %v334
    %3460 = vmatpush1.msra.mxu0 %v333
    %3461 = vmatprep.subr.mxu0 %v340
    %3462 = vmatpush1.msra.mxu0 %v339
    %3463 = vmatprep.subr.mxu0 %v346
    %3464 = vmatpush1.msra.mxu0 %v345
    %3465 = vmatprep.subr.mxu0 %v352
    %3466 = vmatpush1.msra.mxu0 %v351
    %3467 = vmatprep.subr.mxu0 %v358
    %3468 = vmatpush1.msra.mxu0 %v357
    %3469 = vmatprep.subr.mxu0 %v364
    %3470 = vmatpush1.msra.mxu0 %v363
    %3471 = vmatprep.subr.mxu0 %v370
    %3472 = vmatpush1.msra.mxu0 %v369
    %3473 = vmatprep.subr.mxu0 %v376
    %3474 = vmatpush1.msra.mxu0 %v375
    %3475 = vmatprep.subr.mxu0 %v382
    %3476 = vmatpush1.msra.mxu0 %v381
    %3477 = vmatprep.subr.mxu0 %v388
    %3478 = vmatpush1.msra.mxu0 %v387
    %3479 = vmatprep.subr.mxu0 %v394
    %3480 = vmatpush1.msra.mxu0 %v393
    %3481 = vmatprep.subr.mxu0 %v400
    %3482 = vmatpush1.msra.mxu0 %v399
    %3483 = vmatprep.subr.mxu0 %v406
    %3484 = vmatpush1.msra.mxu0 %v405
    %3485 = vmatprep.subr.mxu0 %v412
    %3486 = vmatpush1.msra.mxu0 %v411
    %3487 = vmatprep.subr.mxu0 %v418
    %3488 = vmatpush1.msra.mxu0 %v417
    %3489 = vmatprep.subr.mxu0 %v424
    %3490 = vmatpush1.msra.mxu0 %v423
    %3491 = vmatprep.subr.mxu0 %v430
    %3492 = vmatpush1.msra.mxu0 %v429
    %3493 = vmatprep.subr.mxu0 %v436
    %3494 = vmatpush1.msra.mxu0 %v435
    %3495 = vmatprep.subr.mxu0 %v442
    %3496 = vmatpush1.msra.mxu0 %v441
    %3497 = vmatprep.subr.mxu0 %v448
    %3498 = vmatpush1.msra.mxu0 %v447
    %3499 = vmatprep.subr.mxu0 %v454
    %3500 = vmatpush1.msra.mxu0 %v453
    %3501 = vmatprep.subr.mxu0 %v460
    %3502 = vmatpush1.msra.mxu0 %v459
    %3503 = vmatprep.subr.mxu0 %v466
    %3504 = vmatpush1.msra.mxu0 %v465
    %3505 = vmatprep.subr.mxu0 %v472
    %3506 = vmatpush1.msra.mxu0 %v471
    %3507 = vmatprep.subr.mxu0 %v478
    %3508 = vmatpush1.msra.mxu0 %v477
    %3509 = vmatprep.subr.mxu0 %v484
    %3510 = vmatpush1.msra.mxu0 %v483
    %3511 = vmatprep.subr.mxu0 %v490
    %3512 = vmatpush1.msra.mxu0 %v489
    %3513 = vmatprep.subr.mxu0 %v496
    %3514 = vmatpush1.msra.mxu0 %v495
    %3515 = vmatprep.subr.mxu0 %v502
    %3516 = vmatpush1.msra.mxu0 %v501
    %3517 = vmatprep.subr.mxu0 %v508
    %3518 = vmatpush1.msra.mxu0 %v507
    %3519 = vmatprep.mubr.f32.mxu0 %v2909
    %3520 = vmatmul.mubr.f32.gmra.mrb[0].mxu0 %v3312
    %v3521 = vpop.f32.mrb[0].mxu0
    %v3522 = vadd.f32 %v530, %v3521
    %v3523 = vpop.f32.mrb[0].mxu0
    %v3524 = vadd.f32 %v534, %v3523
    %3525 = vdwg.mxu0
    %v3526 = vadd.f32 %v3380, %v3453
    %v3527 = vxor.u32 %v3526, 2147483648
    %v3528 = vmul.f32 %v3527, 1.442695
    %v3529 = vpow.pop %v3528
    %v3530 = vadd.f32 %v3529, 1.0
    %v3531 = vrcp.pop %v3530
    %v3532 = vmul.f32 1.0, %v3531
    %v3533 = vadd.f32 %v3382, %v3522
    %v3534 = vxor.u32 %v3533, 2147483648
    %v3535 = vmul.f32 %v3534, 1.442695
    %v3536 = vpow.pop %v3535
    %v3537 = vadd.f32 %v3536, 1.0
    %v3538 = vrcp.pop %v3537
    %v3539 = vmul.f32 1.0, %v3538
    %v3540 = vmul.f32 %v3532, %v3524
    %v3541 = vadd.f32 %v3451, %v3540
    %v3542 = vtanh.pop %v3541
    %v3543 = vsub.f32 1.0, %v3539
    %v3544 = vmul.f32 %v3543, %v3542
    %v3545 = vmul.f32 %v3539, %v2909
    %v3546 = vadd.f32 %v3544, %v3545
    %3547 = vmatprep.subr.mxu0 %v776
    %3548 = vmatpush1.msra.mxu0 %v775
    %3549 = vmatprep.subr.mxu0 %v782
    %3550 = vmatpush1.msra.mxu0 %v781
    %3551 = vmatprep.subr.mxu0 %v788
    %3552 = vmatpush1.msra.mxu0 %v787
    %3553 = vmatprep.subr.mxu0 %v794
    %3554 = vmatpush1.msra.mxu0 %v793
    %3555 = vmatprep.subr.mxu0 %v800
    %3556 = vmatpush1.msra.mxu0 %v799
    %3557 = vmatprep.subr.mxu0 %v806
    %3558 = vmatpush1.msra.mxu0 %v805
    %3559 = vmatprep.subr.mxu0 %v812
    %3560 = vmatpush1.msra.mxu0 %v811
    %3561 = vmatprep.subr.mxu0 %v818
    %3562 = vmatpush1.msra.mxu0 %v817
    %3563 = vmatprep.subr.mxu0 %v824
    %3564 = vmatpush1.msra.mxu0 %v823
    %3565 = vmatprep.subr.mxu0 %v830
    %3566 = vmatpush1.msra.mxu0 %v829
    %3567 = vmatprep.subr.mxu0 %v836
    %3568 = vmatpush1.msra.mxu0 %v835
    %3569 = vmatprep.subr.mxu0 %v842
    %3570 = vmatpush1.msra.mxu0 %v841
    %3571 = vmatprep.subr.mxu0 %v848
    %3572 = vmatpush1.msra.mxu0 %v847
    %3573 = vmatprep.subr.mxu0 %v854
    %3574 = vmatpush1.msra.mxu0 %v853
    %3575 = vmatprep.subr.mxu0 %v860
    %3576 = vmatpush1.msra.mxu0 %v859
    %3577 = vmatprep.subr.mxu0 %v866
    %3578 = vmatpush1.msra.mxu0 %v865
    %3579 = vmatprep.subr.mxu0 %v872
    %3580 = vmatpush1.msra.mxu0 %v871
    %3581 = vmatprep.subr.mxu0 %v878
    %3582 = vmatpush1.msra.mxu0 %v877
    %3583 = vmatprep.subr.mxu0 %v884
    %3584 = vmatpush1.msra.mxu0 %v883
    %3585 = vmatprep.subr.mxu0 %v890
    %3586 = vmatpush1.msra.mxu0 %v889
    %3587 = vmatprep.subr.mxu0 %v896
    %3588 = vmatpush1.msra.mxu0 %v895
    %3589 = vmatprep.subr.mxu0 %v902
    %3590 = vmatpush1.msra.mxu0 %v901
    %3591 = vmatprep.subr.mxu0 %v908
    %3592 = vmatpush1.msra.mxu0 %v907
    %3593 = vmatprep.subr.mxu0 %v914
    %3594 = vmatpush1.msra.mxu0 %v913
    %3595 = vmatprep.subr.mxu0 %v920
    %3596 = vmatpush1.msra.mxu0 %v919
    %3597 = vmatprep.subr.mxu0 %v926
    %3598 = vmatpush1.msra.mxu0 %v925
    %3599 = vmatprep.subr.mxu0 %v932
    %3600 = vmatpush1.msra.mxu0 %v931
    %3601 = vmatprep.subr.mxu0 %v938
    %3602 = vmatpush1.msra.mxu0 %v937
    %3603 = vmatprep.subr.mxu0 %v944
    %3604 = vmatpush1.msra.mxu0 %v943
    %3605 = vmatprep.subr.mxu0 %v950
    %3606 = vmatpush1.msra.mxu0 %v949
    %3607 = vmatprep.subr.mxu0 %v956
    %3608 = vmatpush1.msra.mxu0 %v955
    %3609 = vmatprep.subr.mxu0 %v962
    %3610 = vmatpush1.msra.mxu0 %v961
    %3611 = vmatprep.mubr.f32.mxu0 %v3143
    %3612 = vmatmul.mubr.f32.gmra.mrb[0].mxu0 %v3546
    %v3613 = vpop.f32.mrb[0].mxu0
    %v3614 = vadd.f32 %v972, %v3613
    %v3615 = vpop.f32.mrb[0].mxu0
    %v3616 = vadd.f32 %v976, %v3615
    %3617 = vdwg.mxu0
    %3618 = vmatprep.subr.mxu0 %v778
    %3619 = vmatpush1.msra.mxu0 %v777
    %3620 = vmatprep.subr.mxu0 %v784
    %3621 = vmatpush1.msra.mxu0 %v783
    %3622 = vmatprep.subr.mxu0 %v790
    %3623 = vmatpush1.msra.mxu0 %v789
    %3624 = vmatprep.subr.mxu0 %v796
    %3625 = vmatpush1.msra.mxu0 %v795
    %3626 = vmatprep.subr.mxu0 %v802
    %3627 = vmatpush1.msra.mxu0 %v801
    %3628 = vmatprep.subr.mxu0 %v808
    %3629 = vmatpush1.msra.mxu0 %v807
    %3630 = vmatprep.subr.mxu0 %v814
    %3631 = vmatpush1.msra.mxu0 %v813
    %3632 = vmatprep.subr.mxu0 %v820
    %3633 = vmatpush1.msra.mxu0 %v819
    %3634 = vmatprep.subr.mxu0 %v826
    %3635 = vmatpush1.msra.mxu0 %v825
    %3636 = vmatprep.subr.mxu0 %v832
    %3637 = vmatpush1.msra.mxu0 %v831
    %3638 = vmatprep.subr.mxu0 %v838
    %3639 = vmatpush1.msra.mxu0 %v837
    %3640 = vmatprep.subr.mxu0 %v844
    %3641 = vmatpush1.msra.mxu0 %v843
    %3642 = vmatprep.subr.mxu0 %v850
    %3643 = vmatpush1.msra.mxu0 %v849
    %3644 = vmatprep.subr.mxu0 %v856
    %3645 = vmatpush1.msra.mxu0 %v855
    %3646 = vmatprep.subr.mxu0 %v862
    %3647 = vmatpush1.msra.mxu0 %v861
    %3648 = vmatprep.subr.mxu0 %v868
    %3649 = vmatpush1.msra.mxu0 %v867
    %3650 = vmatprep.subr.mxu0 %v874
    %3651 = vmatpush1.msra.mxu0 %v873
    %3652 = vmatprep.subr.mxu0 %v880
    %3653 = vmatpush1.msra.mxu0 %v879
    %3654 = vmatprep.subr.mxu0 %v886
    %3655 = vmatpush1.msra.mxu0 %v885
    %3656 = vmatprep.subr.mxu0 %v892
    %3657 = vmatpush1.msra.mxu0 %v891
    %3658 = vmatprep.subr.mxu0 %v898
    %3659 = vmatpush1.msra.mxu0 %v897
    %3660 = vmatprep.subr.mxu0 %v904
    %3661 = vmatpush1.msra.mxu0 %v903
    %3662 = vmatprep.subr.mxu0 %v910
    %3663 = vmatpush1.msra.mxu0 %v909
    %3664 = vmatprep.subr.mxu0 %v916
    %3665 = vmatpush1.msra.mxu0 %v915
    %3666 = vmatprep.subr.mxu0 %v922
    %3667 = vmatpush1.msra.mxu0 %v921
    %3668 = vmatprep.subr.mxu0 %v928
    %3669 = vmatpush1.msra.mxu0 %v927
    %3670 = vmatprep.subr.mxu0 %v934
    %3671 = vmatpush1.msra.mxu0 %v933
    %3672 = vmatprep.subr.mxu0 %v940
    %3673 = vmatpush1.msra.mxu0 %v939
    %3674 = vmatprep.subr.mxu0 %v946
    %3675 = vmatpush1.msra.mxu0 %v945
    %3676 = vmatprep.subr.mxu0 %v952
    %3677 = vmatpush1.msra.mxu0 %v951
    %3678 = vmatprep.subr.mxu0 %v958
    %3679 = vmatpush1.msra.mxu0 %v957
    %3680 = vmatprep.subr.mxu0 %v964
    %3681 = vmatpush1.msra.mxu0 %v963
    %3682 = vmatprep.mubr.f32.mxu0 %v3143
    %3683 = vmatmul.mubr.f32.gmra.mrb[0].mxu0 %v3546
    %v3684 = vpop.f32.mrb[0].mxu0
    %v3685 = vadd.f32 %v980, %v3684
    %v3686 = vpop.f32.mrb[0].mxu0
    %v3687 = vadd.f32 %v984, %v3686
    %3688 = vdwg.mxu0
    %3689 = vmatprep.subr.mxu0 %v780
    %3690 = vmatpush1.msra.mxu0 %v779
    %3691 = vmatprep.subr.mxu0 %v786
    %3692 = vmatpush1.msra.mxu0 %v785
    %3693 = vmatprep.subr.mxu0 %v792
    %3694 = vmatpush1.msra.mxu0 %v791
    %3695 = vmatprep.subr.mxu0 %v798
    %3696 = vmatpush1.msra.mxu0 %v797
    %3697 = vmatprep.subr.mxu0 %v804
    %3698 = vmatpush1.msra.mxu0 %v803
    %3699 = vmatprep.subr.mxu0 %v810
    %3700 = vmatpush1.msra.mxu0 %v809
    %3701 = vmatprep.subr.mxu0 %v816
    %3702 = vmatpush1.msra.mxu0 %v815
    %3703 = vmatprep.subr.mxu0 %v822
    %3704 = vmatpush1.msra.mxu0 %v821
    %3705 = vmatprep.subr.mxu0 %v828
    %3706 = vmatpush1.msra.mxu0 %v827
    %3707 = vmatprep.subr.mxu0 %v834
    %3708 = vmatpush1.msra.mxu0 %v833
    %3709 = vmatprep.subr.mxu0 %v840
    %3710 = vmatpush1.msra.mxu0 %v839
    %3711 = vmatprep.subr.mxu0 %v846
    %3712 = vmatpush1.msra.mxu0 %v845
    %3713 = vmatprep.subr.mxu0 %v852
    %3714 = vmatpush1.msra.mxu0 %v851
    %3715 = vmatprep.subr.mxu0 %v858
    %3716 = vmatpush1.msra.mxu0 %v857
    %3717 = vmatprep.subr.mxu0 %v864
    %3718 = vmatpush1.msra.mxu0 %v863
    %3719 = vmatprep.subr.mxu0 %v870
    %3720 = vmatpush1.msra.mxu0 %v869
    %3721 = vmatprep.subr.mxu0 %v876
    %3722 = vmatpush1.msra.mxu0 %v875
    %3723 = vmatprep.subr.mxu0 %v882
    %3724 = vmatpush1.msra.mxu0 %v881
    %3725 = vmatprep.subr.mxu0 %v888
    %3726 = vmatpush1.msra.mxu0 %v887
    %3727 = vmatprep.subr.mxu0 %v894
    %3728 = vmatpush1.msra.mxu0 %v893
    %3729 = vmatprep.subr.mxu0 %v900
    %3730 = vmatpush1.msra.mxu0 %v899
    %3731 = vmatprep.subr.mxu0 %v906
    %3732 = vmatpush1.msra.mxu0 %v905
    %3733 = vmatprep.subr.mxu0 %v912
    %3734 = vmatpush1.msra.mxu0 %v911
    %3735 = vmatprep.subr.mxu0 %v918
    %3736 = vmatpush1.msra.mxu0 %v917
    %3737 = vmatprep.subr.mxu0 %v924
    %3738 = vmatpush1.msra.mxu0 %v923
    %3739 = vmatprep.subr.mxu0 %v930
    %3740 = vmatpush1.msra.mxu0 %v929
    %3741 = vmatprep.subr.mxu0 %v936
    %3742 = vmatpush1.msra.mxu0 %v935
    %3743 = vmatprep.subr.mxu0 %v942
    %3744 = vmatpush1.msra.mxu0 %v941
    %3745 = vmatprep.subr.mxu0 %v948
    %3746 = vmatpush1.msra.mxu0 %v947
    %3747 = vmatprep.subr.mxu0 %v954
    %3748 = vmatpush1.msra.mxu0 %v953
    %3749 = vmatprep.subr.mxu0 %v960
    %3750 = vmatpush1.msra.mxu0 %v959
    %3751 = vmatprep.subr.mxu0 %v966
    %3752 = vmatpush1.msra.mxu0 %v965
    %3753 = vmatprep.mubr.f32.mxu0 %v3143
    %3754 = vmatmul.mubr.f32.gmra.mrb[0].mxu0 %v3546
    %v3755 = vpop.f32.mrb[0].mxu0
    %v3756 = vadd.f32 %v988, %v3755
    %v3757 = vpop.f32.mrb[0].mxu0
    %v3758 = vadd.f32 %v992, %v3757
    %3759 = vdwg.mxu0
    %v3760 = vadd.f32 %v3614, %v3687
    %v3761 = vxor.u32 %v3760, 2147483648
    %v3762 = vmul.f32 %v3761, 1.442695
    %v3763 = vpow.pop %v3762
    %v3764 = vadd.f32 %v3763, 1.0
    %v3765 = vrcp.pop %v3764
    %v3766 = vmul.f32 1.0, %v3765
    %v3767 = vadd.f32 %v3616, %v3756
    %v3768 = vxor.u32 %v3767, 2147483648
    %v3769 = vmul.f32 %v3768, 1.442695
    %v3770 = vpow.pop %v3769
    %v3771 = vadd.f32 %v3770, 1.0
    %v3772 = vrcp.pop %v3771
    %v3773 = vmul.f32 1.0, %v3772
    %v3774 = vmul.f32 %v3766, %v3758
    %v3775 = vadd.f32 %v3685, %v3774
    %v3776 = vtanh.pop %v3775
    %v3777 = vsub.f32 1.0, %v3773
    %v3778 = vmul.f32 %v3777, %v3776
    %v3779 = vmul.f32 %v3773, %v3143
    %v3780 = vadd.f32 %v3778, %v3779
    %s3781 = scalar_lea.vmem %s0, 30
    %v3782 = vld [vmem:[%s3781] sm:$0x3f]
    %3783 = vmatprep.subr.mxu0 %v86
    %3784 = vmatpush1.msra.mxu0 %v85
    %3785 = vmatprep.subr.mxu0 %v89
    %3786 = vmatpush1.msra.mxu0 %v88
    %3787 = vmatprep.subr.mxu0 %v92
    %3788 = vmatpush1.msra.mxu0 %v91
    %3789 = vmatprep.subr.mxu0 %v95
    %3790 = vmatpush1.msra.mxu0 %v94
    %3791 = vmatprep.subr.mxu0 %v98
    %3792 = vmatpush1.msra.mxu0 %v97
    %3793 = vmatprep.subr.mxu0 %v101
    %3794 = vmatpush1.msra.mxu0 %v100
    %3795 = vmatprep.subr.mxu0 %v104
    %3796 = vmatpush1.msra.mxu0 %v103
    %3797 = vmatprep.subr.mxu0 %v107
    %3798 = vmatpush1.msra.mxu0 %v106
    %3799 = vmatprep.subr.mxu0 %v110
    %3800 = vmatpush1.msra.mxu0 %v109
    %3801 = vmatprep.subr.mxu0 %v113
    %3802 = vmatpush1.msra.mxu0 %v112
    %3803 = vmatprep.subr.mxu0 %v116
    %3804 = vmatpush1.msra.mxu0 %v115
    %3805 = vmatprep.subr.mxu0 %v119
    %3806 = vmatpush1.msra.mxu0 %v118
    %3807 = vmatprep.subr.mxu0 %v122
    %3808 = vmatpush1.msra.mxu0 %v121
    %3809 = vmatprep.subr.mxu0 %v125
    %3810 = vmatpush1.msra.mxu0 %v124
    %3811 = vmatprep.subr.mxu0 %v128
    %3812 = vmatpush1.msra.mxu0 %v127
    %3813 = vmatprep.subr.mxu0 %v131
    %3814 = vmatpush1.msra.mxu0 %v130
    %3815 = vmatprep.subr.mxu0 0.0
    %3816 = vmatpush1.msra.mxu0 0.0
    %3817 = vmatprep.subr.mxu0 0.0
    %3818 = vmatpush1.msra.mxu0 0.0
    %3819 = vmatprep.subr.mxu0 0.0
    %3820 = vmatpush1.msra.mxu0 0.0
    %3821 = vmatprep.subr.mxu0 0.0
    %3822 = vmatpush1.msra.mxu0 0.0
    %3823 = vmatprep.subr.mxu0 0.0
    %3824 = vmatpush1.msra.mxu0 0.0
    %3825 = vmatprep.subr.mxu0 0.0
    %3826 = vmatpush1.msra.mxu0 0.0
    %3827 = vmatprep.subr.mxu0 0.0
    %3828 = vmatpush1.msra.mxu0 0.0
    %3829 = vmatprep.subr.mxu0 0.0
    %3830 = vmatpush1.msra.mxu0 0.0
    %3831 = vmatprep.subr.mxu0 0.0
    %3832 = vmatpush1.msra.mxu0 0.0
    %3833 = vmatprep.subr.mxu0 0.0
    %3834 = vmatpush1.msra.mxu0 0.0
    %3835 = vmatprep.subr.mxu0 0.0
    %3836 = vmatpush1.msra.mxu0 0.0
    %3837 = vmatprep.subr.mxu0 0.0
    %3838 = vmatpush1.msra.mxu0 0.0
    %3839 = vmatprep.subr.mxu0 0.0
    %3840 = vmatpush1.msra.mxu0 0.0
    %3841 = vmatprep.subr.mxu0 0.0
    %3842 = vmatpush1.msra.mxu0 0.0
    %3843 = vmatprep.subr.mxu0 0.0
    %3844 = vmatpush1.msra.mxu0 0.0
    %3845 = vmatprep.subr.mxu0 0.0
    %3846 = vmatpush1.msra.mxu0 0.0
    %3847 = vmatprep.mubr.f32.mxu0 0.0
    %3848 = vmatmul.mubr.f32.gmra.mrb[0].mxu0 %v3312
    %v3849 = vpop.f32.mrb[0].mxu0
    %v3850 = vadd.f32 %v138, %v3849
    %v3851 = vpop.f32.mrb[0].mxu0
    %v3852 = vadd.f32 %v142, %v3851
    %3853 = vdwg.mxu0
    %3854 = vmatprep.subr.mxu0 0.0
    %3855 = vmatpush1.msra.mxu0 %v87
    %3856 = vmatprep.subr.mxu0 0.0
    %3857 = vmatpush1.msra.mxu0 %v90
    %3858 = vmatprep.subr.mxu0 0.0
    %3859 = vmatpush1.msra.mxu0 %v93
    %3860 = vmatprep.subr.mxu0 0.0
    %3861 = vmatpush1.msra.mxu0 %v96
    %3862 = vmatprep.subr.mxu0 0.0
    %3863 = vmatpush1.msra.mxu0 %v99
    %3864 = vmatprep.subr.mxu0 0.0
    %3865 = vmatpush1.msra.mxu0 %v102
    %3866 = vmatprep.subr.mxu0 0.0
    %3867 = vmatpush1.msra.mxu0 %v105
    %3868 = vmatprep.subr.mxu0 0.0
    %3869 = vmatpush1.msra.mxu0 %v108
    %3870 = vmatprep.subr.mxu0 0.0
    %3871 = vmatpush1.msra.mxu0 %v111
    %3872 = vmatprep.subr.mxu0 0.0
    %3873 = vmatpush1.msra.mxu0 %v114
    %3874 = vmatprep.subr.mxu0 0.0
    %3875 = vmatpush1.msra.mxu0 %v117
    %3876 = vmatprep.subr.mxu0 0.0
    %3877 = vmatpush1.msra.mxu0 %v120
    %3878 = vmatprep.subr.mxu0 0.0
    %3879 = vmatpush1.msra.mxu0 %v123
    %3880 = vmatprep.subr.mxu0 0.0
    %3881 = vmatpush1.msra.mxu0 %v126
    %3882 = vmatprep.subr.mxu0 0.0
    %3883 = vmatpush1.msra.mxu0 %v129
    %3884 = vmatprep.subr.mxu0 0.0
    %3885 = vmatpush1.msra.mxu0 %v132
    %3886 = vmatprep.subr.mxu0 0.0
    %3887 = vmatpush1.msra.mxu0 0.0
    %3888 = vmatprep.subr.mxu0 0.0
    %3889 = vmatpush1.msra.mxu0 0.0
    %3890 = vmatprep.subr.mxu0 0.0
    %3891 = vmatpush1.msra.mxu0 0.0
    %3892 = vmatprep.subr.mxu0 0.0
    %3893 = vmatpush1.msra.mxu0 0.0
    %3894 = vmatprep.subr.mxu0 0.0
    %3895 = vmatpush1.msra.mxu0 0.0
    %3896 = vmatprep.subr.mxu0 0.0
    %3897 = vmatpush1.msra.mxu0 0.0
    %3898 = vmatprep.subr.mxu0 0.0
    %3899 = vmatpush1.msra.mxu0 0.0
    %3900 = vmatprep.subr.mxu0 0.0
    %3901 = vmatpush1.msra.mxu0 0.0
    %3902 = vmatprep.subr.mxu0 0.0
    %3903 = vmatpush1.msra.mxu0 0.0
    %3904 = vmatprep.subr.mxu0 0.0
    %3905 = vmatpush1.msra.mxu0 0.0
    %3906 = vmatprep.subr.mxu0 0.0
    %3907 = vmatpush1.msra.mxu0 0.0
    %3908 = vmatprep.subr.mxu0 0.0
    %3909 = vmatpush1.msra.mxu0 0.0
    %3910 = vmatprep.subr.mxu0 0.0
    %3911 = vmatpush1.msra.mxu0 0.0
    %3912 = vmatprep.subr.mxu0 0.0
    %3913 = vmatpush1.msra.mxu0 0.0
    %3914 = vmatprep.subr.mxu0 0.0
    %3915 = vmatpush1.msra.mxu0 0.0
    %3916 = vmatprep.subr.mxu0 0.0
    %3917 = vmatpush1.msra.mxu0 0.0
    %3918 = vmatprep.mubr.f32.mxu0 0.0
    %3919 = vmatmul.mubr.f32.gmra.mrb[0].mxu0 %v3312
    %v3920 = vpop.f32.mrb[0].mxu0
    %v3921 = vadd.f32 %v146, %v3920
    %v3922 = vpop.f32.mrb[0].mxu0
    %3923 = vdwg.mxu0
    %v3924 = vadd.f32 %v3782, %v3850
    %v3925 = vxor.u32 %v3924, 2147483648
    %v3926 = vmul.f32 %v3925, 1.442695
    %v3927 = vpow.pop %v3926
    %v3928 = vadd.f32 %v3927, 1.0
    %v3929 = vrcp.pop %v3928
    %v3930 = vmul.f32 1.0, %v3929
    %v3932 = vrot.slane %v3782, 2
    %v3934 = vadd.f32 %v3932, %v3852
    %v3935 = vxor.u32 %v3934, 2147483648
    %v3936 = vmul.f32 %v3935, 1.442695
    %v3937 = vpow.pop %v3936
    %v3938 = vadd.f32 %v3937, 1.0
    %v3939 = vrcp.pop %v3938
    %v3940 = vmul.f32 1.0, %v3939
    %v3941 = vmul.f32 %v3930, %v3921
    %v3942 = vrot.slane %v3782, 4
    %v3944 = vadd.f32 %v3942, %v3941
    %v3945 = vtanh.pop %v3944
    %v3946 = vsub.f32 1.0, %v3940
    %v3947 = vmul.f32 %v3946, %v3945
    %v3948 = vmul.f32 %v3940, %v3312
    %v3949 = vadd.f32 %v3947, %v3948
    %3950 = vmatprep.subr.mxu0 %v318
    %3951 = vmatpush1.msra.mxu0 %v317
    %3952 = vmatprep.subr.mxu0 %v324
    %3953 = vmatpush1.msra.mxu0 %v323
    %3954 = vmatprep.subr.mxu0 %v330
    %3955 = vmatpush1.msra.mxu0 %v329
    %3956 = vmatprep.subr.mxu0 %v336
    %3957 = vmatpush1.msra.mxu0 %v335
    %3958 = vmatprep.subr.mxu0 %v342
    %3959 = vmatpush1.msra.mxu0 %v341
    %3960 = vmatprep.subr.mxu0 %v348
    %3961 = vmatpush1.msra.mxu0 %v347
    %3962 = vmatprep.subr.mxu0 %v354
    %3963 = vmatpush1.msra.mxu0 %v353
    %3964 = vmatprep.subr.mxu0 %v360
    %3965 = vmatpush1.msra.mxu0 %v359
    %3966 = vmatprep.subr.mxu0 %v366
    %3967 = vmatpush1.msra.mxu0 %v365
    %3968 = vmatprep.subr.mxu0 %v372
    %3969 = vmatpush1.msra.mxu0 %v371
    %3970 = vmatprep.subr.mxu0 %v378
    %3971 = vmatpush1.msra.mxu0 %v377
    %3972 = vmatprep.subr.mxu0 %v384
    %3973 = vmatpush1.msra.mxu0 %v383
    %3974 = vmatprep.subr.mxu0 %v390
    %3975 = vmatpush1.msra.mxu0 %v389
    %3976 = vmatprep.subr.mxu0 %v396
    %3977 = vmatpush1.msra.mxu0 %v395
    %3978 = vmatprep.subr.mxu0 %v402
    %3979 = vmatpush1.msra.mxu0 %v401
    %3980 = vmatprep.subr.mxu0 %v408
    %3981 = vmatpush1.msra.mxu0 %v407
    %3982 = vmatprep.subr.mxu0 %v414
    %3983 = vmatpush1.msra.mxu0 %v413
    %3984 = vmatprep.subr.mxu0 %v420
    %3985 = vmatpush1.msra.mxu0 %v419
    %3986 = vmatprep.subr.mxu0 %v426
    %3987 = vmatpush1.msra.mxu0 %v425
    %3988 = vmatprep.subr.mxu0 %v432
    %3989 = vmatpush1.msra.mxu0 %v431
    %3990 = vmatprep.subr.mxu0 %v438
    %3991 = vmatpush1.msra.mxu0 %v437
    %3992 = vmatprep.subr.mxu0 %v444
    %3993 = vmatpush1.msra.mxu0 %v443
    %3994 = vmatprep.subr.mxu0 %v450
    %3995 = vmatpush1.msra.mxu0 %v449
    %3996 = vmatprep.subr.mxu0 %v456
    %3997 = vmatpush1.msra.mxu0 %v455
    %3998 = vmatprep.subr.mxu0 %v462
    %3999 = vmatpush1.msra.mxu0 %v461
    %4000 = vmatprep.subr.mxu0 %v468
    %4001 = vmatpush1.msra.mxu0 %v467
    %4002 = vmatprep.subr.mxu0 %v474
    %4003 = vmatpush1.msra.mxu0 %v473
    %4004 = vmatprep.subr.mxu0 %v480
    %4005 = vmatpush1.msra.mxu0 %v479
    %4006 = vmatprep.subr.mxu0 %v486
    %4007 = vmatpush1.msra.mxu0 %v485
    %4008 = vmatprep.subr.mxu0 %v492
    %4009 = vmatpush1.msra.mxu0 %v491
    %4010 = vmatprep.subr.mxu0 %v498
    %4011 = vmatpush1.msra.mxu0 %v497
    %4012 = vmatprep.subr.mxu0 %v504
    %4013 = vmatpush1.msra.mxu0 %v503
    %4014 = vmatprep.mubr.f32.mxu0 %v3546
    %4015 = vmatmul.mubr.f32.gmra.mrb[0].mxu0 %v3949
    %v4016 = vpop.f32.mrb[0].mxu0
    %v4017 = vadd.f32 %v514, %v4016
    %v4018 = vpop.f32.mrb[0].mxu0
    %v4019 = vadd.f32 %v518, %v4018
    %4020 = vdwg.mxu0
    %4021 = vmatprep.subr.mxu0 %v320
    %4022 = vmatpush1.msra.mxu0 %v319
    %4023 = vmatprep.subr.mxu0 %v326
    %4024 = vmatpush1.msra.mxu0 %v325
    %4025 = vmatprep.subr.mxu0 %v332
    %4026 = vmatpush1.msra.mxu0 %v331
    %4027 = vmatprep.subr.mxu0 %v338
    %4028 = vmatpush1.msra.mxu0 %v337
    %4029 = vmatprep.subr.mxu0 %v344
    %4030 = vmatpush1.msra.mxu0 %v343
    %4031 = vmatprep.subr.mxu0 %v350
    %4032 = vmatpush1.msra.mxu0 %v349
    %4033 = vmatprep.subr.mxu0 %v356
    %4034 = vmatpush1.msra.mxu0 %v355
    %4035 = vmatprep.subr.mxu0 %v362
    %4036 = vmatpush1.msra.mxu0 %v361
    %4037 = vmatprep.subr.mxu0 %v368
    %4038 = vmatpush1.msra.mxu0 %v367
    %4039 = vmatprep.subr.mxu0 %v374
    %4040 = vmatpush1.msra.mxu0 %v373
    %4041 = vmatprep.subr.mxu0 %v380
    %4042 = vmatpush1.msra.mxu0 %v379
    %4043 = vmatprep.subr.mxu0 %v386
    %4044 = vmatpush1.msra.mxu0 %v385
    %4045 = vmatprep.subr.mxu0 %v392
    %4046 = vmatpush1.msra.mxu0 %v391
    %4047 = vmatprep.subr.mxu0 %v398
    %4048 = vmatpush1.msra.mxu0 %v397
    %4049 = vmatprep.subr.mxu0 %v404
    %4050 = vmatpush1.msra.mxu0 %v403
    %4051 = vmatprep.subr.mxu0 %v410
    %4052 = vmatpush1.msra.mxu0 %v409
    %4053 = vmatprep.subr.mxu0 %v416
    %4054 = vmatpush1.msra.mxu0 %v415
    %4055 = vmatprep.subr.mxu0 %v422
    %4056 = vmatpush1.msra.mxu0 %v421
    %4057 = vmatprep.subr.mxu0 %v428
    %4058 = vmatpush1.msra.mxu0 %v427
    %4059 = vmatprep.subr.mxu0 %v434
    %4060 = vmatpush1.msra.mxu0 %v433
    %4061 = vmatprep.subr.mxu0 %v440
    %4062 = vmatpush1.msra.mxu0 %v439
    %4063 = vmatprep.subr.mxu0 %v446
    %4064 = vmatpush1.msra.mxu0 %v445
    %4065 = vmatprep.subr.mxu0 %v452
    %4066 = vmatpush1.msra.mxu0 %v451
    %4067 = vmatprep.subr.mxu0 %v458
    %4068 = vmatpush1.msra.mxu0 %v457
    %4069 = vmatprep.subr.mxu0 %v464
    %4070 = vmatpush1.msra.mxu0 %v463
    %4071 = vmatprep.subr.mxu0 %v470
    %4072 = vmatpush1.msra.mxu0 %v469
    %4073 = vmatprep.subr.mxu0 %v476
    %4074 = vmatpush1.msra.mxu0 %v475
    %4075 = vmatprep.subr.mxu0 %v482
    %4076 = vmatpush1.msra.mxu0 %v481
    %4077 = vmatprep.subr.mxu0 %v488
    %4078 = vmatpush1.msra.mxu0 %v487
    %4079 = vmatprep.subr.mxu0 %v494
    %4080 = vmatpush1.msra.mxu0 %v493
    %4081 = vmatprep.subr.mxu0 %v500
    %4082 = vmatpush1.msra.mxu0 %v499
    %4083 = vmatprep.subr.mxu0 %v506
    %4084 = vmatpush1.msra.mxu0 %v505
    %4085 = vmatprep.mubr.f32.mxu0 %v3546
    %4086 = vmatmul.mubr.f32.gmra.mrb[0].mxu0 %v3949
    %v4087 = vpop.f32.mrb[0].mxu0
    %v4088 = vadd.f32 %v522, %v4087
    %v4089 = vpop.f32.mrb[0].mxu0
    %v4090 = vadd.f32 %v526, %v4089
    %4091 = vdwg.mxu0
    %4092 = vmatprep.subr.mxu0 %v322
    %4093 = vmatpush1.msra.mxu0 %v321
    %4094 = vmatprep.subr.mxu0 %v328
    %4095 = vmatpush1.msra.mxu0 %v327
    %4096 = vmatprep.subr.mxu0 %v334
    %4097 = vmatpush1.msra.mxu0 %v333
    %4098 = vmatprep.subr.mxu0 %v340
    %4099 = vmatpush1.msra.mxu0 %v339
    %4100 = vmatprep.subr.mxu0 %v346
    %4101 = vmatpush1.msra.mxu0 %v345
    %4102 = vmatprep.subr.mxu0 %v352
    %4103 = vmatpush1.msra.mxu0 %v351
    %4104 = vmatprep.subr.mxu0 %v358
    %4105 = vmatpush1.msra.mxu0 %v357
    %4106 = vmatprep.subr.mxu0 %v364
    %4107 = vmatpush1.msra.mxu0 %v363
    %4108 = vmatprep.subr.mxu0 %v370
    %4109 = vmatpush1.msra.mxu0 %v369
    %4110 = vmatprep.subr.mxu0 %v376
    %4111 = vmatpush1.msra.mxu0 %v375
    %4112 = vmatprep.subr.mxu0 %v382
    %4113 = vmatpush1.msra.mxu0 %v381
    %4114 = vmatprep.subr.mxu0 %v388
    %4115 = vmatpush1.msra.mxu0 %v387
    %4116 = vmatprep.subr.mxu0 %v394
    %4117 = vmatpush1.msra.mxu0 %v393
    %4118 = vmatprep.subr.mxu0 %v400
    %4119 = vmatpush1.msra.mxu0 %v399
    %4120 = vmatprep.subr.mxu0 %v406
    %4121 = vmatpush1.msra.mxu0 %v405
    %4122 = vmatprep.subr.mxu0 %v412
    %4123 = vmatpush1.msra.mxu0 %v411
    %4124 = vmatprep.subr.mxu0 %v418
    %4125 = vmatpush1.msra.mxu0 %v417
    %4126 = vmatprep.subr.mxu0 %v424
    %4127 = vmatpush1.msra.mxu0 %v423
    %4128 = vmatprep.subr.mxu0 %v430
    %4129 = vmatpush1.msra.mxu0 %v429
    %4130 = vmatprep.subr.mxu0 %v436
    %4131 = vmatpush1.msra.mxu0 %v435
    %4132 = vmatprep.subr.mxu0 %v442
    %4133 = vmatpush1.msra.mxu0 %v441
    %4134 = vmatprep.subr.mxu0 %v448
    %4135 = vmatpush1.msra.mxu0 %v447
    %4136 = vmatprep.subr.mxu0 %v454
    %4137 = vmatpush1.msra.mxu0 %v453
    %4138 = vmatprep.subr.mxu0 %v460
    %4139 = vmatpush1.msra.mxu0 %v459
    %4140 = vmatprep.subr.mxu0 %v466
    %4141 = vmatpush1.msra.mxu0 %v465
    %4142 = vmatprep.subr.mxu0 %v472
    %4143 = vmatpush1.msra.mxu0 %v471
    %4144 = vmatprep.subr.mxu0 %v478
    %4145 = vmatpush1.msra.mxu0 %v477
    %4146 = vmatprep.subr.mxu0 %v484
    %4147 = vmatpush1.msra.mxu0 %v483
    %4148 = vmatprep.subr.mxu0 %v490
    %4149 = vmatpush1.msra.mxu0 %v489
    %4150 = vmatprep.subr.mxu0 %v496
    %4151 = vmatpush1.msra.mxu0 %v495
    %4152 = vmatprep.subr.mxu0 %v502
    %4153 = vmatpush1.msra.mxu0 %v501
    %4154 = vmatprep.subr.mxu0 %v508
    %4155 = vmatpush1.msra.mxu0 %v507
    %4156 = vmatprep.mubr.f32.mxu0 %v3546
    %4157 = vmatmul.mubr.f32.gmra.mrb[0].mxu0 %v3949
    %v4158 = vpop.f32.mrb[0].mxu0
    %v4159 = vadd.f32 %v530, %v4158
    %v4160 = vpop.f32.mrb[0].mxu0
    %v4161 = vadd.f32 %v534, %v4160
    %4162 = vdwg.mxu0
    %v4163 = vadd.f32 %v4017, %v4090
    %v4164 = vxor.u32 %v4163, 2147483648
    %v4165 = vmul.f32 %v4164, 1.442695
    %v4166 = vpow.pop %v4165
    %v4167 = vadd.f32 %v4166, 1.0
    %v4168 = vrcp.pop %v4167
    %v4169 = vmul.f32 1.0, %v4168
    %v4170 = vadd.f32 %v4019, %v4159
    %v4171 = vxor.u32 %v4170, 2147483648
    %v4172 = vmul.f32 %v4171, 1.442695
    %v4173 = vpow.pop %v4172
    %v4174 = vadd.f32 %v4173, 1.0
    %v4175 = vrcp.pop %v4174
    %v4176 = vmul.f32 1.0, %v4175
    %v4177 = vmul.f32 %v4169, %v4161
    %v4178 = vadd.f32 %v4088, %v4177
    %v4179 = vtanh.pop %v4178
    %v4180 = vsub.f32 1.0, %v4176
    %v4181 = vmul.f32 %v4180, %v4179
    %v4182 = vmul.f32 %v4176, %v3546
    %v4183 = vadd.f32 %v4181, %v4182
    %4184 = vmatprep.subr.mxu0 %v776
    %4185 = vmatpush1.msra.mxu0 %v775
    %4186 = vmatprep.subr.mxu0 %v782
    %4187 = vmatpush1.msra.mxu0 %v781
    %4188 = vmatprep.subr.mxu0 %v788
    %4189 = vmatpush1.msra.mxu0 %v787
    %4190 = vmatprep.subr.mxu0 %v794
    %4191 = vmatpush1.msra.mxu0 %v793
    %4192 = vmatprep.subr.mxu0 %v800
    %4193 = vmatpush1.msra.mxu0 %v799
    %4194 = vmatprep.subr.mxu0 %v806
    %4195 = vmatpush1.msra.mxu0 %v805
    %4196 = vmatprep.subr.mxu0 %v812
    %4197 = vmatpush1.msra.mxu0 %v811
    %4198 = vmatprep.subr.mxu0 %v818
    %4199 = vmatpush1.msra.mxu0 %v817
    %4200 = vmatprep.subr.mxu0 %v824
    %4201 = vmatpush1.msra.mxu0 %v823
    %4202 = vmatprep.subr.mxu0 %v830
    %4203 = vmatpush1.msra.mxu0 %v829
    %4204 = vmatprep.subr.mxu0 %v836
    %4205 = vmatpush1.msra.mxu0 %v835
    %4206 = vmatprep.subr.mxu0 %v842
    %4207 = vmatpush1.msra.mxu0 %v841
    %4208 = vmatprep.subr.mxu0 %v848
    %4209 = vmatpush1.msra.mxu0 %v847
    %4210 = vmatprep.subr.mxu0 %v854
    %4211 = vmatpush1.msra.mxu0 %v853
    %4212 = vmatprep.subr.mxu0 %v860
    %4213 = vmatpush1.msra.mxu0 %v859
    %4214 = vmatprep.subr.mxu0 %v866
    %4215 = vmatpush1.msra.mxu0 %v865
    %4216 = vmatprep.subr.mxu0 %v872
    %4217 = vmatpush1.msra.mxu0 %v871
    %4218 = vmatprep.subr.mxu0 %v878
    %4219 = vmatpush1.msra.mxu0 %v877
    %4220 = vmatprep.subr.mxu0 %v884
    %4221 = vmatpush1.msra.mxu0 %v883
    %4222 = vmatprep.subr.mxu0 %v890
    %4223 = vmatpush1.msra.mxu0 %v889
    %4224 = vmatprep.subr.mxu0 %v896
    %4225 = vmatpush1.msra.mxu0 %v895
    %4226 = vmatprep.subr.mxu0 %v902
    %4227 = vmatpush1.msra.mxu0 %v901
    %4228 = vmatprep.subr.mxu0 %v908
    %4229 = vmatpush1.msra.mxu0 %v907
    %4230 = vmatprep.subr.mxu0 %v914
    %4231 = vmatpush1.msra.mxu0 %v913
    %4232 = vmatprep.subr.mxu0 %v920
    %4233 = vmatpush1.msra.mxu0 %v919
    %4234 = vmatprep.subr.mxu0 %v926
    %4235 = vmatpush1.msra.mxu0 %v925
    %4236 = vmatprep.subr.mxu0 %v932
    %4237 = vmatpush1.msra.mxu0 %v931
    %4238 = vmatprep.subr.mxu0 %v938
    %4239 = vmatpush1.msra.mxu0 %v937
    %4240 = vmatprep.subr.mxu0 %v944
    %4241 = vmatpush1.msra.mxu0 %v943
    %4242 = vmatprep.subr.mxu0 %v950
    %4243 = vmatpush1.msra.mxu0 %v949
    %4244 = vmatprep.subr.mxu0 %v956
    %4245 = vmatpush1.msra.mxu0 %v955
    %4246 = vmatprep.subr.mxu0 %v962
    %4247 = vmatpush1.msra.mxu0 %v961
    %4248 = vmatprep.mubr.f32.mxu0 %v3780
    %4249 = vmatmul.mubr.f32.gmra.mrb[0].mxu0 %v4183
    %v4250 = vpop.f32.mrb[0].mxu0
    %v4251 = vadd.f32 %v972, %v4250
    %v4252 = vpop.f32.mrb[0].mxu0
    %v4253 = vadd.f32 %v976, %v4252
    %4254 = vdwg.mxu0
    %4255 = vmatprep.subr.mxu0 %v778
    %4256 = vmatpush1.msra.mxu0 %v777
    %4257 = vmatprep.subr.mxu0 %v784
    %4258 = vmatpush1.msra.mxu0 %v783
    %4259 = vmatprep.subr.mxu0 %v790
    %4260 = vmatpush1.msra.mxu0 %v789
    %4261 = vmatprep.subr.mxu0 %v796
    %4262 = vmatpush1.msra.mxu0 %v795
    %4263 = vmatprep.subr.mxu0 %v802
    %4264 = vmatpush1.msra.mxu0 %v801
    %4265 = vmatprep.subr.mxu0 %v808
    %4266 = vmatpush1.msra.mxu0 %v807
    %4267 = vmatprep.subr.mxu0 %v814
    %4268 = vmatpush1.msra.mxu0 %v813
    %4269 = vmatprep.subr.mxu0 %v820
    %4270 = vmatpush1.msra.mxu0 %v819
    %4271 = vmatprep.subr.mxu0 %v826
    %4272 = vmatpush1.msra.mxu0 %v825
    %4273 = vmatprep.subr.mxu0 %v832
    %4274 = vmatpush1.msra.mxu0 %v831
    %4275 = vmatprep.subr.mxu0 %v838
    %4276 = vmatpush1.msra.mxu0 %v837
    %4277 = vmatprep.subr.mxu0 %v844
    %4278 = vmatpush1.msra.mxu0 %v843
    %4279 = vmatprep.subr.mxu0 %v850
    %4280 = vmatpush1.msra.mxu0 %v849
    %4281 = vmatprep.subr.mxu0 %v856
    %4282 = vmatpush1.msra.mxu0 %v855
    %4283 = vmatprep.subr.mxu0 %v862
    %4284 = vmatpush1.msra.mxu0 %v861
    %4285 = vmatprep.subr.mxu0 %v868
    %4286 = vmatpush1.msra.mxu0 %v867
    %4287 = vmatprep.subr.mxu0 %v874
    %4288 = vmatpush1.msra.mxu0 %v873
    %4289 = vmatprep.subr.mxu0 %v880
    %4290 = vmatpush1.msra.mxu0 %v879
    %4291 = vmatprep.subr.mxu0 %v886
    %4292 = vmatpush1.msra.mxu0 %v885
    %4293 = vmatprep.subr.mxu0 %v892
    %4294 = vmatpush1.msra.mxu0 %v891
    %4295 = vmatprep.subr.mxu0 %v898
    %4296 = vmatpush1.msra.mxu0 %v897
    %4297 = vmatprep.subr.mxu0 %v904
    %4298 = vmatpush1.msra.mxu0 %v903
    %4299 = vmatprep.subr.mxu0 %v910
    %4300 = vmatpush1.msra.mxu0 %v909
    %4301 = vmatprep.subr.mxu0 %v916
    %4302 = vmatpush1.msra.mxu0 %v915
    %4303 = vmatprep.subr.mxu0 %v922
    %4304 = vmatpush1.msra.mxu0 %v921
    %4305 = vmatprep.subr.mxu0 %v928
    %4306 = vmatpush1.msra.mxu0 %v927
    %4307 = vmatprep.subr.mxu0 %v934
    %4308 = vmatpush1.msra.mxu0 %v933
    %4309 = vmatprep.subr.mxu0 %v940
    %4310 = vmatpush1.msra.mxu0 %v939
    %4311 = vmatprep.subr.mxu0 %v946
    %4312 = vmatpush1.msra.mxu0 %v945
    %4313 = vmatprep.subr.mxu0 %v952
    %4314 = vmatpush1.msra.mxu0 %v951
    %4315 = vmatprep.subr.mxu0 %v958
    %4316 = vmatpush1.msra.mxu0 %v957
    %4317 = vmatprep.subr.mxu0 %v964
    %4318 = vmatpush1.msra.mxu0 %v963
    %4319 = vmatprep.mubr.f32.mxu0 %v3780
    %4320 = vmatmul.mubr.f32.gmra.mrb[0].mxu0 %v4183
    %v4321 = vpop.f32.mrb[0].mxu0
    %v4322 = vadd.f32 %v980, %v4321
    %v4323 = vpop.f32.mrb[0].mxu0
    %v4324 = vadd.f32 %v984, %v4323
    %4325 = vdwg.mxu0
    %4326 = vmatprep.subr.mxu0 %v780
    %4327 = vmatpush1.msra.mxu0 %v779
    %4328 = vmatprep.subr.mxu0 %v786
    %4329 = vmatpush1.msra.mxu0 %v785
    %4330 = vmatprep.subr.mxu0 %v792
    %4331 = vmatpush1.msra.mxu0 %v791
    %4332 = vmatprep.subr.mxu0 %v798
    %4333 = vmatpush1.msra.mxu0 %v797
    %4334 = vmatprep.subr.mxu0 %v804
    %4335 = vmatpush1.msra.mxu0 %v803
    %4336 = vmatprep.subr.mxu0 %v810
    %4337 = vmatpush1.msra.mxu0 %v809
    %4338 = vmatprep.subr.mxu0 %v816
    %4339 = vmatpush1.msra.mxu0 %v815
    %4340 = vmatprep.subr.mxu0 %v822
    %4341 = vmatpush1.msra.mxu0 %v821
    %4342 = vmatprep.subr.mxu0 %v828
    %4343 = vmatpush1.msra.mxu0 %v827
    %4344 = vmatprep.subr.mxu0 %v834
    %4345 = vmatpush1.msra.mxu0 %v833
    %4346 = vmatprep.subr.mxu0 %v840
    %4347 = vmatpush1.msra.mxu0 %v839
    %4348 = vmatprep.subr.mxu0 %v846
    %4349 = vmatpush1.msra.mxu0 %v845
    %4350 = vmatprep.subr.mxu0 %v852
    %4351 = vmatpush1.msra.mxu0 %v851
    %4352 = vmatprep.subr.mxu0 %v858
    %4353 = vmatpush1.msra.mxu0 %v857
    %4354 = vmatprep.subr.mxu0 %v864
    %4355 = vmatpush1.msra.mxu0 %v863
    %4356 = vmatprep.subr.mxu0 %v870
    %4357 = vmatpush1.msra.mxu0 %v869
    %4358 = vmatprep.subr.mxu0 %v876
    %4359 = vmatpush1.msra.mxu0 %v875
    %4360 = vmatprep.subr.mxu0 %v882
    %4361 = vmatpush1.msra.mxu0 %v881
    %4362 = vmatprep.subr.mxu0 %v888
    %4363 = vmatpush1.msra.mxu0 %v887
    %4364 = vmatprep.subr.mxu0 %v894
    %4365 = vmatpush1.msra.mxu0 %v893
    %4366 = vmatprep.subr.mxu0 %v900
    %4367 = vmatpush1.msra.mxu0 %v899
    %4368 = vmatprep.subr.mxu0 %v906
    %4369 = vmatpush1.msra.mxu0 %v905
    %4370 = vmatprep.subr.mxu0 %v912
    %4371 = vmatpush1.msra.mxu0 %v911
    %4372 = vmatprep.subr.mxu0 %v918
    %4373 = vmatpush1.msra.mxu0 %v917
    %4374 = vmatprep.subr.mxu0 %v924
    %4375 = vmatpush1.msra.mxu0 %v923
    %4376 = vmatprep.subr.mxu0 %v930
    %4377 = vmatpush1.msra.mxu0 %v929
    %4378 = vmatprep.subr.mxu0 %v936
    %4379 = vmatpush1.msra.mxu0 %v935
    %4380 = vmatprep.subr.mxu0 %v942
    %4381 = vmatpush1.msra.mxu0 %v941
    %4382 = vmatprep.subr.mxu0 %v948
    %4383 = vmatpush1.msra.mxu0 %v947
    %4384 = vmatprep.subr.mxu0 %v954
    %4385 = vmatpush1.msra.mxu0 %v953
    %4386 = vmatprep.subr.mxu0 %v960
    %4387 = vmatpush1.msra.mxu0 %v959
    %4388 = vmatprep.subr.mxu0 %v966
    %4389 = vmatpush1.msra.mxu0 %v965
    %4390 = vmatprep.mubr.f32.mxu0 %v3780
    %4391 = vmatmul.mubr.f32.gmra.mrb[0].mxu0 %v4183
    %v4392 = vpop.f32.mrb[0].mxu0
    %v4393 = vadd.f32 %v988, %v4392
    %v4394 = vpop.f32.mrb[0].mxu0
    %v4395 = vadd.f32 %v992, %v4394
    %4396 = vdwg.mxu0
    %v4397 = vadd.f32 %v4251, %v4324
    %v4398 = vxor.u32 %v4397, 2147483648
    %v4399 = vmul.f32 %v4398, 1.442695
    %v4400 = vpow.pop %v4399
    %v4401 = vadd.f32 %v4400, 1.0
    %v4402 = vrcp.pop %v4401
    %v4403 = vmul.f32 1.0, %v4402
    %v4404 = vadd.f32 %v4253, %v4393
    %v4405 = vxor.u32 %v4404, 2147483648
    %v4406 = vmul.f32 %v4405, 1.442695
    %v4407 = vpow.pop %v4406
    %v4408 = vadd.f32 %v4407, 1.0
    %v4409 = vrcp.pop %v4408
    %v4410 = vmul.f32 1.0, %v4409
    %v4411 = vmul.f32 %v4403, %v4395
    %v4412 = vadd.f32 %v4322, %v4411
    %v4413 = vtanh.pop %v4412
    %v4414 = vsub.f32 1.0, %v4410
    %v4415 = vmul.f32 %v4414, %v4413
    %v4416 = vmul.f32 %v4410, %v3780
    %v4417 = vadd.f32 %v4415, %v4416
    %s4418 = scalar_lea.vmem %s0, 36
    %v4419 = vld [vmem:[%s4418] sm:$0x3f]
    %4420 = vmatprep.subr.mxu0 %v86
    %4421 = vmatpush1.msra.mxu0 %v85
    %4422 = vmatprep.subr.mxu0 %v89
    %4423 = vmatpush1.msra.mxu0 %v88
    %4424 = vmatprep.subr.mxu0 %v92
    %4425 = vmatpush1.msra.mxu0 %v91
    %4426 = vmatprep.subr.mxu0 %v95
    %4427 = vmatpush1.msra.mxu0 %v94
    %4428 = vmatprep.subr.mxu0 %v98
    %4429 = vmatpush1.msra.mxu0 %v97
    %4430 = vmatprep.subr.mxu0 %v101
    %4431 = vmatpush1.msra.mxu0 %v100
    %4432 = vmatprep.subr.mxu0 %v104
    %4433 = vmatpush1.msra.mxu0 %v103
    %4434 = vmatprep.subr.mxu0 %v107
    %4435 = vmatpush1.msra.mxu0 %v106
    %4436 = vmatprep.subr.mxu0 %v110
    %4437 = vmatpush1.msra.mxu0 %v109
    %4438 = vmatprep.subr.mxu0 %v113
    %4439 = vmatpush1.msra.mxu0 %v112
    %4440 = vmatprep.subr.mxu0 %v116
    %4441 = vmatpush1.msra.mxu0 %v115
    %4442 = vmatprep.subr.mxu0 %v119
    %4443 = vmatpush1.msra.mxu0 %v118
    %4444 = vmatprep.subr.mxu0 %v122
    %4445 = vmatpush1.msra.mxu0 %v121
    %4446 = vmatprep.subr.mxu0 %v125
    %4447 = vmatpush1.msra.mxu0 %v124
    %4448 = vmatprep.subr.mxu0 %v128
    %4449 = vmatpush1.msra.mxu0 %v127
    %4450 = vmatprep.subr.mxu0 %v131
    %4451 = vmatpush1.msra.mxu0 %v130
    %4452 = vmatprep.subr.mxu0 0.0
    %4453 = vmatpush1.msra.mxu0 0.0
    %4454 = vmatprep.subr.mxu0 0.0
    %4455 = vmatpush1.msra.mxu0 0.0
    %4456 = vmatprep.subr.mxu0 0.0
    %4457 = vmatpush1.msra.mxu0 0.0
    %4458 = vmatprep.subr.mxu0 0.0
    %4459 = vmatpush1.msra.mxu0 0.0
    %4460 = vmatprep.subr.mxu0 0.0
    %4461 = vmatpush1.msra.mxu0 0.0
    %4462 = vmatprep.subr.mxu0 0.0
    %4463 = vmatpush1.msra.mxu0 0.0
    %4464 = vmatprep.subr.mxu0 0.0
    %4465 = vmatpush1.msra.mxu0 0.0
    %4466 = vmatprep.subr.mxu0 0.0
    %4467 = vmatpush1.msra.mxu0 0.0
    %4468 = vmatprep.subr.mxu0 0.0
    %4469 = vmatpush1.msra.mxu0 0.0
    %4470 = vmatprep.subr.mxu0 0.0
    %4471 = vmatpush1.msra.mxu0 0.0
    %4472 = vmatprep.subr.mxu0 0.0
    %4473 = vmatpush1.msra.mxu0 0.0
    %4474 = vmatprep.subr.mxu0 0.0
    %4475 = vmatpush1.msra.mxu0 0.0
    %4476 = vmatprep.subr.mxu0 0.0
    %4477 = vmatpush1.msra.mxu0 0.0
    %4478 = vmatprep.subr.mxu0 0.0
    %4479 = vmatpush1.msra.mxu0 0.0
    %4480 = vmatprep.subr.mxu0 0.0
    %4481 = vmatpush1.msra.mxu0 0.0
    %4482 = vmatprep.subr.mxu0 0.0
    %4483 = vmatpush1.msra.mxu0 0.0
    %4484 = vmatprep.mubr.f32.mxu0 0.0
    %4485 = vmatmul.mubr.f32.gmra.mrb[0].mxu0 %v3949
    %v4486 = vpop.f32.mrb[0].mxu0
    %v4487 = vadd.f32 %v138, %v4486
    %v4488 = vpop.f32.mrb[0].mxu0
    %v4489 = vadd.f32 %v142, %v4488
    %4490 = vdwg.mxu0
    %4491 = vmatprep.subr.mxu0 0.0
    %4492 = vmatpush1.msra.mxu0 %v87
    %4493 = vmatprep.subr.mxu0 0.0
    %4494 = vmatpush1.msra.mxu0 %v90
    %4495 = vmatprep.subr.mxu0 0.0
    %4496 = vmatpush1.msra.mxu0 %v93
    %4497 = vmatprep.subr.mxu0 0.0
    %4498 = vmatpush1.msra.mxu0 %v96
    %4499 = vmatprep.subr.mxu0 0.0
    %4500 = vmatpush1.msra.mxu0 %v99
    %4501 = vmatprep.subr.mxu0 0.0
    %4502 = vmatpush1.msra.mxu0 %v102
    %4503 = vmatprep.subr.mxu0 0.0
    %4504 = vmatpush1.msra.mxu0 %v105
    %4505 = vmatprep.subr.mxu0 0.0
    %4506 = vmatpush1.msra.mxu0 %v108
    %4507 = vmatprep.subr.mxu0 0.0
    %4508 = vmatpush1.msra.mxu0 %v111
    %4509 = vmatprep.subr.mxu0 0.0
    %4510 = vmatpush1.msra.mxu0 %v114
    %4511 = vmatprep.subr.mxu0 0.0
    %4512 = vmatpush1.msra.mxu0 %v117
    %4513 = vmatprep.subr.mxu0 0.0
    %4514 = vmatpush1.msra.mxu0 %v120
    %4515 = vmatprep.subr.mxu0 0.0
    %4516 = vmatpush1.msra.mxu0 %v123
    %4517 = vmatprep.subr.mxu0 0.0
    %4518 = vmatpush1.msra.mxu0 %v126
    %4519 = vmatprep.subr.mxu0 0.0
    %4520 = vmatpush1.msra.mxu0 %v129
    %4521 = vmatprep.subr.mxu0 0.0
    %4522 = vmatpush1.msra.mxu0 %v132
    %4523 = vmatprep.subr.mxu0 0.0
    %4524 = vmatpush1.msra.mxu0 0.0
    %4525 = vmatprep.subr.mxu0 0.0
    %4526 = vmatpush1.msra.mxu0 0.0
    %4527 = vmatprep.subr.mxu0 0.0
    %4528 = vmatpush1.msra.mxu0 0.0
    %4529 = vmatprep.subr.mxu0 0.0
    %4530 = vmatpush1.msra.mxu0 0.0
    %4531 = vmatprep.subr.mxu0 0.0
    %4532 = vmatpush1.msra.mxu0 0.0
    %4533 = vmatprep.subr.mxu0 0.0
    %4534 = vmatpush1.msra.mxu0 0.0
    %4535 = vmatprep.subr.mxu0 0.0
    %4536 = vmatpush1.msra.mxu0 0.0
    %4537 = vmatprep.subr.mxu0 0.0
    %4538 = vmatpush1.msra.mxu0 0.0
    %4539 = vmatprep.subr.mxu0 0.0
    %4540 = vmatpush1.msra.mxu0 0.0
    %4541 = vmatprep.subr.mxu0 0.0
    %4542 = vmatpush1.msra.mxu0 0.0
    %4543 = vmatprep.subr.mxu0 0.0
    %4544 = vmatpush1.msra.mxu0 0.0
    %4545 = vmatprep.subr.mxu0 0.0
    %4546 = vmatpush1.msra.mxu0 0.0
    %4547 = vmatprep.subr.mxu0 0.0
    %4548 = vmatpush1.msra.mxu0 0.0
    %4549 = vmatprep.subr.mxu0 0.0
    %4550 = vmatpush1.msra.mxu0 0.0
    %4551 = vmatprep.subr.mxu0 0.0
    %4552 = vmatpush1.msra.mxu0 0.0
    %4553 = vmatprep.subr.mxu0 0.0
    %4554 = vmatpush1.msra.mxu0 0.0
    %4555 = vmatprep.mubr.f32.mxu0 0.0
    %4556 = vmatmul.mubr.f32.gmra.mrb[0].mxu0 %v3949
    %v4557 = vpop.f32.mrb[0].mxu0
    %v4558 = vadd.f32 %v146, %v4557
    %v4559 = vpop.f32.mrb[0].mxu0
    %4560 = vdwg.mxu0
    %v4561 = vadd.f32 %v4419, %v4487
    %v4562 = vxor.u32 %v4561, 2147483648
    %v4563 = vmul.f32 %v4562, 1.442695
    %v4564 = vpow.pop %v4563
    %v4565 = vadd.f32 %v4564, 1.0
    %v4566 = vrcp.pop %v4565
    %v4567 = vmul.f32 1.0, %v4566
    %v4569 = vrot.slane %v4419, 2
    %v4571 = vadd.f32 %v4569, %v4489
    %v4572 = vxor.u32 %v4571, 2147483648
    %v4573 = vmul.f32 %v4572, 1.442695
    %v4574 = vpow.pop %v4573
    %v4575 = vadd.f32 %v4574, 1.0
    %v4576 = vrcp.pop %v4575
    %v4577 = vmul.f32 1.0, %v4576
    %v4578 = vmul.f32 %v4567, %v4558
    %v4579 = vrot.slane %v4419, 4
    %v4581 = vadd.f32 %v4579, %v4578
    %v4582 = vtanh.pop %v4581
    %v4583 = vsub.f32 1.0, %v4577
    %v4584 = vmul.f32 %v4583, %v4582
    %v4585 = vmul.f32 %v4577, %v3949
    %v4586 = vadd.f32 %v4584, %v4585
    %4587 = vmatprep.subr.mxu0 %v318
    %4588 = vmatpush1.msra.mxu0 %v317
    %4589 = vmatprep.subr.mxu0 %v324
    %4590 = vmatpush1.msra.mxu0 %v323
    %4591 = vmatprep.subr.mxu0 %v330
    %4592 = vmatpush1.msra.mxu0 %v329
    %4593 = vmatprep.subr.mxu0 %v336
    %4594 = vmatpush1.msra.mxu0 %v335
    %4595 = vmatprep.subr.mxu0 %v342
    %4596 = vmatpush1.msra.mxu0 %v341
    %4597 = vmatprep.subr.mxu0 %v348
    %4598 = vmatpush1.msra.mxu0 %v347
    %4599 = vmatprep.subr.mxu0 %v354
    %4600 = vmatpush1.msra.mxu0 %v353
    %4601 = vmatprep.subr.mxu0 %v360
    %4602 = vmatpush1.msra.mxu0 %v359
    %4603 = vmatprep.subr.mxu0 %v366
    %4604 = vmatpush1.msra.mxu0 %v365
    %4605 = vmatprep.subr.mxu0 %v372
    %4606 = vmatpush1.msra.mxu0 %v371
    %4607 = vmatprep.subr.mxu0 %v378
    %4608 = vmatpush1.msra.mxu0 %v377
    %4609 = vmatprep.subr.mxu0 %v384
    %4610 = vmatpush1.msra.mxu0 %v383
    %4611 = vmatprep.subr.mxu0 %v390
    %4612 = vmatpush1.msra.mxu0 %v389
    %4613 = vmatprep.subr.mxu0 %v396
    %4614 = vmatpush1.msra.mxu0 %v395
    %4615 = vmatprep.subr.mxu0 %v402
    %4616 = vmatpush1.msra.mxu0 %v401
    %4617 = vmatprep.subr.mxu0 %v408
    %4618 = vmatpush1.msra.mxu0 %v407
    %4619 = vmatprep.subr.mxu0 %v414
    %4620 = vmatpush1.msra.mxu0 %v413
    %4621 = vmatprep.subr.mxu0 %v420
    %4622 = vmatpush1.msra.mxu0 %v419
    %4623 = vmatprep.subr.mxu0 %v426
    %4624 = vmatpush1.msra.mxu0 %v425
    %4625 = vmatprep.subr.mxu0 %v432
    %4626 = vmatpush1.msra.mxu0 %v431
    %4627 = vmatprep.subr.mxu0 %v438
    %4628 = vmatpush1.msra.mxu0 %v437
    %4629 = vmatprep.subr.mxu0 %v444
    %4630 = vmatpush1.msra.mxu0 %v443
    %4631 = vmatprep.subr.mxu0 %v450
    %4632 = vmatpush1.msra.mxu0 %v449
    %4633 = vmatprep.subr.mxu0 %v456
    %4634 = vmatpush1.msra.mxu0 %v455
    %4635 = vmatprep.subr.mxu0 %v462
    %4636 = vmatpush1.msra.mxu0 %v461
    %4637 = vmatprep.subr.mxu0 %v468
    %4638 = vmatpush1.msra.mxu0 %v467
    %4639 = vmatprep.subr.mxu0 %v474
    %4640 = vmatpush1.msra.mxu0 %v473
    %4641 = vmatprep.subr.mxu0 %v480
    %4642 = vmatpush1.msra.mxu0 %v479
    %4643 = vmatprep.subr.mxu0 %v486
    %4644 = vmatpush1.msra.mxu0 %v485
    %4645 = vmatprep.subr.mxu0 %v492
    %4646 = vmatpush1.msra.mxu0 %v491
    %4647 = vmatprep.subr.mxu0 %v498
    %4648 = vmatpush1.msra.mxu0 %v497
    %4649 = vmatprep.subr.mxu0 %v504
    %4650 = vmatpush1.msra.mxu0 %v503
    %4651 = vmatprep.mubr.f32.mxu0 %v4183
    %4652 = vmatmul.mubr.f32.gmra.mrb[0].mxu0 %v4586
    %v4653 = vpop.f32.mrb[0].mxu0
    %v4654 = vadd.f32 %v514, %v4653
    %v4655 = vpop.f32.mrb[0].mxu0
    %v4656 = vadd.f32 %v518, %v4655
    %4657 = vdwg.mxu0
    %4658 = vmatprep.subr.mxu0 %v320
    %4659 = vmatpush1.msra.mxu0 %v319
    %4660 = vmatprep.subr.mxu0 %v326
    %4661 = vmatpush1.msra.mxu0 %v325
    %4662 = vmatprep.subr.mxu0 %v332
    %4663 = vmatpush1.msra.mxu0 %v331
    %4664 = vmatprep.subr.mxu0 %v338
    %4665 = vmatpush1.msra.mxu0 %v337
    %4666 = vmatprep.subr.mxu0 %v344
    %4667 = vmatpush1.msra.mxu0 %v343
    %4668 = vmatprep.subr.mxu0 %v350
    %4669 = vmatpush1.msra.mxu0 %v349
    %4670 = vmatprep.subr.mxu0 %v356
    %4671 = vmatpush1.msra.mxu0 %v355
    %4672 = vmatprep.subr.mxu0 %v362
    %4673 = vmatpush1.msra.mxu0 %v361
    %4674 = vmatprep.subr.mxu0 %v368
    %4675 = vmatpush1.msra.mxu0 %v367
    %4676 = vmatprep.subr.mxu0 %v374
    %4677 = vmatpush1.msra.mxu0 %v373
    %4678 = vmatprep.subr.mxu0 %v380
    %4679 = vmatpush1.msra.mxu0 %v379
    %4680 = vmatprep.subr.mxu0 %v386
    %4681 = vmatpush1.msra.mxu0 %v385
    %4682 = vmatprep.subr.mxu0 %v392
    %4683 = vmatpush1.msra.mxu0 %v391
    %4684 = vmatprep.subr.mxu0 %v398
    %4685 = vmatpush1.msra.mxu0 %v397
    %4686 = vmatprep.subr.mxu0 %v404
    %4687 = vmatpush1.msra.mxu0 %v403
    %4688 = vmatprep.subr.mxu0 %v410
    %4689 = vmatpush1.msra.mxu0 %v409
    %4690 = vmatprep.subr.mxu0 %v416
    %4691 = vmatpush1.msra.mxu0 %v415
    %4692 = vmatprep.subr.mxu0 %v422
    %4693 = vmatpush1.msra.mxu0 %v421
    %4694 = vmatprep.subr.mxu0 %v428
    %4695 = vmatpush1.msra.mxu0 %v427
    %4696 = vmatprep.subr.mxu0 %v434
    %4697 = vmatpush1.msra.mxu0 %v433
    %4698 = vmatprep.subr.mxu0 %v440
    %4699 = vmatpush1.msra.mxu0 %v439
    %4700 = vmatprep.subr.mxu0 %v446
    %4701 = vmatpush1.msra.mxu0 %v445
    %4702 = vmatprep.subr.mxu0 %v452
    %4703 = vmatpush1.msra.mxu0 %v451
    %4704 = vmatprep.subr.mxu0 %v458
    %4705 = vmatpush1.msra.mxu0 %v457
    %4706 = vmatprep.subr.mxu0 %v464
    %4707 = vmatpush1.msra.mxu0 %v463
    %4708 = vmatprep.subr.mxu0 %v470
    %4709 = vmatpush1.msra.mxu0 %v469
    %4710 = vmatprep.subr.mxu0 %v476
    %4711 = vmatpush1.msra.mxu0 %v475
    %4712 = vmatprep.subr.mxu0 %v482
    %4713 = vmatpush1.msra.mxu0 %v481
    %4714 = vmatprep.subr.mxu0 %v488
    %4715 = vmatpush1.msra.mxu0 %v487
    %4716 = vmatprep.subr.mxu0 %v494
    %4717 = vmatpush1.msra.mxu0 %v493
    %4718 = vmatprep.subr.mxu0 %v500
    %4719 = vmatpush1.msra.mxu0 %v499
    %4720 = vmatprep.subr.mxu0 %v506
    %4721 = vmatpush1.msra.mxu0 %v505
    %4722 = vmatprep.mubr.f32.mxu0 %v4183
    %4723 = vmatmul.mubr.f32.gmra.mrb[0].mxu0 %v4586
    %v4724 = vpop.f32.mrb[0].mxu0
    %v4725 = vadd.f32 %v522, %v4724
    %v4726 = vpop.f32.mrb[0].mxu0
    %v4727 = vadd.f32 %v526, %v4726
    %4728 = vdwg.mxu0
    %4729 = vmatprep.subr.mxu0 %v322
    %4730 = vmatpush1.msra.mxu0 %v321
    %4731 = vmatprep.subr.mxu0 %v328
    %4732 = vmatpush1.msra.mxu0 %v327
    %4733 = vmatprep.subr.mxu0 %v334
    %4734 = vmatpush1.msra.mxu0 %v333
    %4735 = vmatprep.subr.mxu0 %v340
    %4736 = vmatpush1.msra.mxu0 %v339
    %4737 = vmatprep.subr.mxu0 %v346
    %4738 = vmatpush1.msra.mxu0 %v345
    %4739 = vmatprep.subr.mxu0 %v352
    %4740 = vmatpush1.msra.mxu0 %v351
    %4741 = vmatprep.subr.mxu0 %v358
    %4742 = vmatpush1.msra.mxu0 %v357
    %4743 = vmatprep.subr.mxu0 %v364
    %4744 = vmatpush1.msra.mxu0 %v363
    %4745 = vmatprep.subr.mxu0 %v370
    %4746 = vmatpush1.msra.mxu0 %v369
    %4747 = vmatprep.subr.mxu0 %v376
    %4748 = vmatpush1.msra.mxu0 %v375
    %4749 = vmatprep.subr.mxu0 %v382
    %4750 = vmatpush1.msra.mxu0 %v381
    %4751 = vmatprep.subr.mxu0 %v388
    %4752 = vmatpush1.msra.mxu0 %v387
    %4753 = vmatprep.subr.mxu0 %v394
    %4754 = vmatpush1.msra.mxu0 %v393
    %4755 = vmatprep.subr.mxu0 %v400
    %4756 = vmatpush1.msra.mxu0 %v399
    %4757 = vmatprep.subr.mxu0 %v406
    %4758 = vmatpush1.msra.mxu0 %v405
    %4759 = vmatprep.subr.mxu0 %v412
    %4760 = vmatpush1.msra.mxu0 %v411
    %4761 = vmatprep.subr.mxu0 %v418
    %4762 = vmatpush1.msra.mxu0 %v417
    %4763 = vmatprep.subr.mxu0 %v424
    %4764 = vmatpush1.msra.mxu0 %v423
    %4765 = vmatprep.subr.mxu0 %v430
    %4766 = vmatpush1.msra.mxu0 %v429
    %4767 = vmatprep.subr.mxu0 %v436
    %4768 = vmatpush1.msra.mxu0 %v435
    %4769 = vmatprep.subr.mxu0 %v442
    %4770 = vmatpush1.msra.mxu0 %v441
    %4771 = vmatprep.subr.mxu0 %v448
    %4772 = vmatpush1.msra.mxu0 %v447
    %4773 = vmatprep.subr.mxu0 %v454
    %4774 = vmatpush1.msra.mxu0 %v453
    %4775 = vmatprep.subr.mxu0 %v460
    %4776 = vmatpush1.msra.mxu0 %v459
    %4777 = vmatprep.subr.mxu0 %v466
    %4778 = vmatpush1.msra.mxu0 %v465
    %4779 = vmatprep.subr.mxu0 %v472
    %4780 = vmatpush1.msra.mxu0 %v471
    %4781 = vmatprep.subr.mxu0 %v478
    %4782 = vmatpush1.msra.mxu0 %v477
    %4783 = vmatprep.subr.mxu0 %v484
    %4784 = vmatpush1.msra.mxu0 %v483
    %4785 = vmatprep.subr.mxu0 %v490
    %4786 = vmatpush1.msra.mxu0 %v489
    %4787 = vmatprep.subr.mxu0 %v496
    %4788 = vmatpush1.msra.mxu0 %v495
    %4789 = vmatprep.subr.mxu0 %v502
    %4790 = vmatpush1.msra.mxu0 %v501
    %4791 = vmatprep.subr.mxu0 %v508
    %4792 = vmatpush1.msra.mxu0 %v507
    %4793 = vmatprep.mubr.f32.mxu0 %v4183
    %4794 = vmatmul.mubr.f32.gmra.mrb[0].mxu0 %v4586
    %v4795 = vpop.f32.mrb[0].mxu0
    %v4796 = vadd.f32 %v530, %v4795
    %v4797 = vpop.f32.mrb[0].mxu0
    %v4798 = vadd.f32 %v534, %v4797
    %4799 = vdwg.mxu0
    %v4800 = vadd.f32 %v4654, %v4727
    %v4801 = vxor.u32 %v4800, 2147483648
    %v4802 = vmul.f32 %v4801, 1.442695
    %v4803 = vpow.pop %v4802
    %v4804 = vadd.f32 %v4803, 1.0
    %v4805 = vrcp.pop %v4804
    %v4806 = vmul.f32 1.0, %v4805
    %v4807 = vadd.f32 %v4656, %v4796
    %v4808 = vxor.u32 %v4807, 2147483648
    %v4809 = vmul.f32 %v4808, 1.442695
    %v4810 = vpow.pop %v4809
    %v4811 = vadd.f32 %v4810, 1.0
    %v4812 = vrcp.pop %v4811
    %v4813 = vmul.f32 1.0, %v4812
    %v4814 = vmul.f32 %v4806, %v4798
    %v4815 = vadd.f32 %v4725, %v4814
    %v4816 = vtanh.pop %v4815
    %v4817 = vsub.f32 1.0, %v4813
    %v4818 = vmul.f32 %v4817, %v4816
    %v4819 = vmul.f32 %v4813, %v4183
    %v4820 = vadd.f32 %v4818, %v4819
    %4821 = vmatprep.subr.mxu0 %v776
    %4822 = vmatpush1.msra.mxu0 %v775
    %4823 = vmatprep.subr.mxu0 %v782
    %4824 = vmatpush1.msra.mxu0 %v781
    %4825 = vmatprep.subr.mxu0 %v788
    %4826 = vmatpush1.msra.mxu0 %v787
    %4827 = vmatprep.subr.mxu0 %v794
    %4828 = vmatpush1.msra.mxu0 %v793
    %4829 = vmatprep.subr.mxu0 %v800
    %4830 = vmatpush1.msra.mxu0 %v799
    %4831 = vmatprep.subr.mxu0 %v806
    %4832 = vmatpush1.msra.mxu0 %v805
    %4833 = vmatprep.subr.mxu0 %v812
    %4834 = vmatpush1.msra.mxu0 %v811
    %4835 = vmatprep.subr.mxu0 %v818
    %4836 = vmatpush1.msra.mxu0 %v817
    %4837 = vmatprep.subr.mxu0 %v824
    %4838 = vmatpush1.msra.mxu0 %v823
    %4839 = vmatprep.subr.mxu0 %v830
    %4840 = vmatpush1.msra.mxu0 %v829
    %4841 = vmatprep.subr.mxu0 %v836
    %4842 = vmatpush1.msra.mxu0 %v835
    %4843 = vmatprep.subr.mxu0 %v842
    %4844 = vmatpush1.msra.mxu0 %v841
    %4845 = vmatprep.subr.mxu0 %v848
    %4846 = vmatpush1.msra.mxu0 %v847
    %4847 = vmatprep.subr.mxu0 %v854
    %4848 = vmatpush1.msra.mxu0 %v853
    %4849 = vmatprep.subr.mxu0 %v860
    %4850 = vmatpush1.msra.mxu0 %v859
    %4851 = vmatprep.subr.mxu0 %v866
    %4852 = vmatpush1.msra.mxu0 %v865
    %4853 = vmatprep.subr.mxu0 %v872
    %4854 = vmatpush1.msra.mxu0 %v871
    %4855 = vmatprep.subr.mxu0 %v878
    %4856 = vmatpush1.msra.mxu0 %v877
    %4857 = vmatprep.subr.mxu0 %v884
    %4858 = vmatpush1.msra.mxu0 %v883
    %4859 = vmatprep.subr.mxu0 %v890
    %4860 = vmatpush1.msra.mxu0 %v889
    %4861 = vmatprep.subr.mxu0 %v896
    %4862 = vmatpush1.msra.mxu0 %v895
    %4863 = vmatprep.subr.mxu0 %v902
    %4864 = vmatpush1.msra.mxu0 %v901
    %4865 = vmatprep.subr.mxu0 %v908
    %4866 = vmatpush1.msra.mxu0 %v907
    %4867 = vmatprep.subr.mxu0 %v914
    %4868 = vmatpush1.msra.mxu0 %v913
    %4869 = vmatprep.subr.mxu0 %v920
    %4870 = vmatpush1.msra.mxu0 %v919
    %4871 = vmatprep.subr.mxu0 %v926
    %4872 = vmatpush1.msra.mxu0 %v925
    %4873 = vmatprep.subr.mxu0 %v932
    %4874 = vmatpush1.msra.mxu0 %v931
    %4875 = vmatprep.subr.mxu0 %v938
    %4876 = vmatpush1.msra.mxu0 %v937
    %4877 = vmatprep.subr.mxu0 %v944
    %4878 = vmatpush1.msra.mxu0 %v943
    %4879 = vmatprep.subr.mxu0 %v950
    %4880 = vmatpush1.msra.mxu0 %v949
    %4881 = vmatprep.subr.mxu0 %v956
    %4882 = vmatpush1.msra.mxu0 %v955
    %4883 = vmatprep.subr.mxu0 %v962
    %4884 = vmatpush1.msra.mxu0 %v961
    %4885 = vmatprep.mubr.f32.mxu0 %v4417
    %4886 = vmatmul.mubr.f32.gmra.mrb[0].mxu0 %v4820
    %v4887 = vpop.f32.mrb[0].mxu0
    %v4888 = vadd.f32 %v972, %v4887
    %v4889 = vpop.f32.mrb[0].mxu0
    %v4890 = vadd.f32 %v976, %v4889
    %4891 = vdwg.mxu0
    %4892 = vmatprep.subr.mxu0 %v778
    %4893 = vmatpush1.msra.mxu0 %v777
    %4894 = vmatprep.subr.mxu0 %v784
    %4895 = vmatpush1.msra.mxu0 %v783
    %4896 = vmatprep.subr.mxu0 %v790
    %4897 = vmatpush1.msra.mxu0 %v789
    %4898 = vmatprep.subr.mxu0 %v796
    %4899 = vmatpush1.msra.mxu0 %v795
    %4900 = vmatprep.subr.mxu0 %v802
    %4901 = vmatpush1.msra.mxu0 %v801
    %4902 = vmatprep.subr.mxu0 %v808
    %4903 = vmatpush1.msra.mxu0 %v807
    %4904 = vmatprep.subr.mxu0 %v814
    %4905 = vmatpush1.msra.mxu0 %v813
    %4906 = vmatprep.subr.mxu0 %v820
    %4907 = vmatpush1.msra.mxu0 %v819
    %4908 = vmatprep.subr.mxu0 %v826
    %4909 = vmatpush1.msra.mxu0 %v825
    %4910 = vmatprep.subr.mxu0 %v832
    %4911 = vmatpush1.msra.mxu0 %v831
    %4912 = vmatprep.subr.mxu0 %v838
    %4913 = vmatpush1.msra.mxu0 %v837
    %4914 = vmatprep.subr.mxu0 %v844
    %4915 = vmatpush1.msra.mxu0 %v843
    %4916 = vmatprep.subr.mxu0 %v850
    %4917 = vmatpush1.msra.mxu0 %v849
    %4918 = vmatprep.subr.mxu0 %v856
    %4919 = vmatpush1.msra.mxu0 %v855
    %4920 = vmatprep.subr.mxu0 %v862
    %4921 = vmatpush1.msra.mxu0 %v861
    %4922 = vmatprep.subr.mxu0 %v868
    %4923 = vmatpush1.msra.mxu0 %v867
    %4924 = vmatprep.subr.mxu0 %v874
    %4925 = vmatpush1.msra.mxu0 %v873
    %4926 = vmatprep.subr.mxu0 %v880
    %4927 = vmatpush1.msra.mxu0 %v879
    %4928 = vmatprep.subr.mxu0 %v886
    %4929 = vmatpush1.msra.mxu0 %v885
    %4930 = vmatprep.subr.mxu0 %v892
    %4931 = vmatpush1.msra.mxu0 %v891
    %4932 = vmatprep.subr.mxu0 %v898
    %4933 = vmatpush1.msra.mxu0 %v897
    %4934 = vmatprep.subr.mxu0 %v904
    %4935 = vmatpush1.msra.mxu0 %v903
    %4936 = vmatprep.subr.mxu0 %v910
    %4937 = vmatpush1.msra.mxu0 %v909
    %4938 = vmatprep.subr.mxu0 %v916
    %4939 = vmatpush1.msra.mxu0 %v915
    %4940 = vmatprep.subr.mxu0 %v922
    %4941 = vmatpush1.msra.mxu0 %v921
    %4942 = vmatprep.subr.mxu0 %v928
    %4943 = vmatpush1.msra.mxu0 %v927
    %4944 = vmatprep.subr.mxu0 %v934
    %4945 = vmatpush1.msra.mxu0 %v933
    %4946 = vmatprep.subr.mxu0 %v940
    %4947 = vmatpush1.msra.mxu0 %v939
    %4948 = vmatprep.subr.mxu0 %v946
    %4949 = vmatpush1.msra.mxu0 %v945
    %4950 = vmatprep.subr.mxu0 %v952
    %4951 = vmatpush1.msra.mxu0 %v951
    %4952 = vmatprep.subr.mxu0 %v958
    %4953 = vmatpush1.msra.mxu0 %v957
    %4954 = vmatprep.subr.mxu0 %v964
    %4955 = vmatpush1.msra.mxu0 %v963
    %4956 = vmatprep.mubr.f32.mxu0 %v4417
    %4957 = vmatmul.mubr.f32.gmra.mrb[0].mxu0 %v4820
    %v4958 = vpop.f32.mrb[0].mxu0
    %v4959 = vadd.f32 %v980, %v4958
    %v4960 = vpop.f32.mrb[0].mxu0
    %v4961 = vadd.f32 %v984, %v4960
    %4962 = vdwg.mxu0
    %4963 = vmatprep.subr.mxu0 %v780
    %4964 = vmatpush1.msra.mxu0 %v779
    %4965 = vmatprep.subr.mxu0 %v786
    %4966 = vmatpush1.msra.mxu0 %v785
    %4967 = vmatprep.subr.mxu0 %v792
    %4968 = vmatpush1.msra.mxu0 %v791
    %4969 = vmatprep.subr.mxu0 %v798
    %4970 = vmatpush1.msra.mxu0 %v797
    %4971 = vmatprep.subr.mxu0 %v804
    %4972 = vmatpush1.msra.mxu0 %v803
    %4973 = vmatprep.subr.mxu0 %v810
    %4974 = vmatpush1.msra.mxu0 %v809
    %4975 = vmatprep.subr.mxu0 %v816
    %4976 = vmatpush1.msra.mxu0 %v815
    %4977 = vmatprep.subr.mxu0 %v822
    %4978 = vmatpush1.msra.mxu0 %v821
    %4979 = vmatprep.subr.mxu0 %v828
    %4980 = vmatpush1.msra.mxu0 %v827
    %4981 = vmatprep.subr.mxu0 %v834
    %4982 = vmatpush1.msra.mxu0 %v833
    %4983 = vmatprep.subr.mxu0 %v840
    %4984 = vmatpush1.msra.mxu0 %v839
    %4985 = vmatprep.subr.mxu0 %v846
    %4986 = vmatpush1.msra.mxu0 %v845
    %4987 = vmatprep.subr.mxu0 %v852
    %4988 = vmatpush1.msra.mxu0 %v851
    %4989 = vmatprep.subr.mxu0 %v858
    %4990 = vmatpush1.msra.mxu0 %v857
    %4991 = vmatprep.subr.mxu0 %v864
    %4992 = vmatpush1.msra.mxu0 %v863
    %4993 = vmatprep.subr.mxu0 %v870
    %4994 = vmatpush1.msra.mxu0 %v869
    %4995 = vmatprep.subr.mxu0 %v876
    %4996 = vmatpush1.msra.mxu0 %v875
    %4997 = vmatprep.subr.mxu0 %v882
    %4998 = vmatpush1.msra.mxu0 %v881
    %4999 = vmatprep.subr.mxu0 %v888
    %5000 = vmatpush1.msra.mxu0 %v887
    %5001 = vmatprep.subr.mxu0 %v894
    %5002 = vmatpush1.msra.mxu0 %v893
    %5003 = vmatprep.subr.mxu0 %v900
    %5004 = vmatpush1.msra.mxu0 %v899
    %5005 = vmatprep.subr.mxu0 %v906
    %5006 = vmatpush1.msra.mxu0 %v905
    %5007 = vmatprep.subr.mxu0 %v912
    %5008 = vmatpush1.msra.mxu0 %v911
    %5009 = vmatprep.subr.mxu0 %v918
    %5010 = vmatpush1.msra.mxu0 %v917
    %5011 = vmatprep.subr.mxu0 %v924
    %5012 = vmatpush1.msra.mxu0 %v923
    %5013 = vmatprep.subr.mxu0 %v930
    %5014 = vmatpush1.msra.mxu0 %v929
    %5015 = vmatprep.subr.mxu0 %v936
    %5016 = vmatpush1.msra.mxu0 %v935
    %5017 = vmatprep.subr.mxu0 %v942
    %5018 = vmatpush1.msra.mxu0 %v941
    %5019 = vmatprep.subr.mxu0 %v948
    %5020 = vmatpush1.msra.mxu0 %v947
    %5021 = vmatprep.subr.mxu0 %v954
    %5022 = vmatpush1.msra.mxu0 %v953
    %5023 = vmatprep.subr.mxu0 %v960
    %5024 = vmatpush1.msra.mxu0 %v959
    %5025 = vmatprep.subr.mxu0 %v966
    %5026 = vmatpush1.msra.mxu0 %v965
    %5027 = vmatprep.mubr.f32.mxu0 %v4417
    %5028 = vmatmul.mubr.f32.gmra.mrb[0].mxu0 %v4820
    %v5029 = vpop.f32.mrb[0].mxu0
    %v5030 = vadd.f32 %v988, %v5029
    %v5031 = vpop.f32.mrb[0].mxu0
    %v5032 = vadd.f32 %v992, %v5031
    %5033 = vdwg.mxu0
    %v5034 = vadd.f32 %v4888, %v4961
    %v5035 = vxor.u32 %v5034, 2147483648
    %v5036 = vmul.f32 %v5035, 1.442695
    %v5037 = vpow.pop %v5036
    %v5038 = vadd.f32 %v5037, 1.0
    %v5039 = vrcp.pop %v5038
    %v5040 = vmul.f32 1.0, %v5039
    %v5041 = vadd.f32 %v4890, %v5030
    %v5042 = vxor.u32 %v5041, 2147483648
    %v5043 = vmul.f32 %v5042, 1.442695
    %v5044 = vpow.pop %v5043
    %v5045 = vadd.f32 %v5044, 1.0
    %v5046 = vrcp.pop %v5045
    %v5047 = vmul.f32 1.0, %v5046
    %v5048 = vmul.f32 %v5040, %v5032
    %v5049 = vadd.f32 %v4959, %v5048
    %v5050 = vtanh.pop %v5049
    %v5051 = vsub.f32 1.0, %v5047
    %v5052 = vmul.f32 %v5051, %v5050
    %v5053 = vmul.f32 %v5047, %v4417
    %v5054 = vadd.f32 %v5052, %v5053
    %s5055 = scalar_lea.vmem %s0, 42
    %v5056 = vld [vmem:[%s5055] sm:$0x3f]
    %5057 = vmatprep.subr.mxu0 %v86
    %5058 = vmatpush1.msra.mxu0 %v85
    %5059 = vmatprep.subr.mxu0 %v89
    %5060 = vmatpush1.msra.mxu0 %v88
    %5061 = vmatprep.subr.mxu0 %v92
    %5062 = vmatpush1.msra.mxu0 %v91
    %5063 = vmatprep.subr.mxu0 %v95
    %5064 = vmatpush1.msra.mxu0 %v94
    %5065 = vmatprep.subr.mxu0 %v98
    %5066 = vmatpush1.msra.mxu0 %v97
    %5067 = vmatprep.subr.mxu0 %v101
    %5068 = vmatpush1.msra.mxu0 %v100
    %5069 = vmatprep.subr.mxu0 %v104
    %5070 = vmatpush1.msra.mxu0 %v103
    %5071 = vmatprep.subr.mxu0 %v107
    %5072 = vmatpush1.msra.mxu0 %v106
    %5073 = vmatprep.subr.mxu0 %v110
    %5074 = vmatpush1.msra.mxu0 %v109
    %5075 = vmatprep.subr.mxu0 %v113
    %5076 = vmatpush1.msra.mxu0 %v112
    %5077 = vmatprep.subr.mxu0 %v116
    %5078 = vmatpush1.msra.mxu0 %v115
    %5079 = vmatprep.subr.mxu0 %v119
    %5080 = vmatpush1.msra.mxu0 %v118
    %5081 = vmatprep.subr.mxu0 %v122
    %5082 = vmatpush1.msra.mxu0 %v121
    %5083 = vmatprep.subr.mxu0 %v125
    %5084 = vmatpush1.msra.mxu0 %v124
    %5085 = vmatprep.subr.mxu0 %v128
    %5086 = vmatpush1.msra.mxu0 %v127
    %5087 = vmatprep.subr.mxu0 %v131
    %5088 = vmatpush1.msra.mxu0 %v130
    %5089 = vmatprep.subr.mxu0 0.0
    %5090 = vmatpush1.msra.mxu0 0.0
    %5091 = vmatprep.subr.mxu0 0.0
    %5092 = vmatpush1.msra.mxu0 0.0
    %5093 = vmatprep.subr.mxu0 0.0
    %5094 = vmatpush1.msra.mxu0 0.0
    %5095 = vmatprep.subr.mxu0 0.0
    %5096 = vmatpush1.msra.mxu0 0.0
    %5097 = vmatprep.subr.mxu0 0.0
    %5098 = vmatpush1.msra.mxu0 0.0
    %5099 = vmatprep.subr.mxu0 0.0
    %5100 = vmatpush1.msra.mxu0 0.0
    %5101 = vmatprep.subr.mxu0 0.0
    %5102 = vmatpush1.msra.mxu0 0.0
    %5103 = vmatprep.subr.mxu0 0.0
    %5104 = vmatpush1.msra.mxu0 0.0
    %5105 = vmatprep.subr.mxu0 0.0
    %5106 = vmatpush1.msra.mxu0 0.0
    %5107 = vmatprep.subr.mxu0 0.0
    %5108 = vmatpush1.msra.mxu0 0.0
    %5109 = vmatprep.subr.mxu0 0.0
    %5110 = vmatpush1.msra.mxu0 0.0
    %5111 = vmatprep.subr.mxu0 0.0
    %5112 = vmatpush1.msra.mxu0 0.0
    %5113 = vmatprep.subr.mxu0 0.0
    %5114 = vmatpush1.msra.mxu0 0.0
    %5115 = vmatprep.subr.mxu0 0.0
    %5116 = vmatpush1.msra.mxu0 0.0
    %5117 = vmatprep.subr.mxu0 0.0
    %5118 = vmatpush1.msra.mxu0 0.0
    %5119 = vmatprep.subr.mxu0 0.0
    %5120 = vmatpush1.msra.mxu0 0.0
    %5121 = vmatprep.mubr.f32.mxu0 0.0
    %5122 = vmatmul.mubr.f32.gmra.mrb[0].mxu0 %v4586
    %v5123 = vpop.f32.mrb[0].mxu0
    %v5124 = vadd.f32 %v138, %v5123
    %v5125 = vpop.f32.mrb[0].mxu0
    %v5126 = vadd.f32 %v142, %v5125
    %5127 = vdwg.mxu0
    %5128 = vmatprep.subr.mxu0 0.0
    %5129 = vmatpush1.msra.mxu0 %v87
    %5130 = vmatprep.subr.mxu0 0.0
    %5131 = vmatpush1.msra.mxu0 %v90
    %5132 = vmatprep.subr.mxu0 0.0
    %5133 = vmatpush1.msra.mxu0 %v93
    %5134 = vmatprep.subr.mxu0 0.0
    %5135 = vmatpush1.msra.mxu0 %v96
    %5136 = vmatprep.subr.mxu0 0.0
    %5137 = vmatpush1.msra.mxu0 %v99
    %5138 = vmatprep.subr.mxu0 0.0
    %5139 = vmatpush1.msra.mxu0 %v102
    %5140 = vmatprep.subr.mxu0 0.0
    %5141 = vmatpush1.msra.mxu0 %v105
    %5142 = vmatprep.subr.mxu0 0.0
    %5143 = vmatpush1.msra.mxu0 %v108
    %5144 = vmatprep.subr.mxu0 0.0
    %5145 = vmatpush1.msra.mxu0 %v111
    %5146 = vmatprep.subr.mxu0 0.0
    %5147 = vmatpush1.msra.mxu0 %v114
    %5148 = vmatprep.subr.mxu0 0.0
    %5149 = vmatpush1.msra.mxu0 %v117
    %5150 = vmatprep.subr.mxu0 0.0
    %5151 = vmatpush1.msra.mxu0 %v120
    %5152 = vmatprep.subr.mxu0 0.0
    %5153 = vmatpush1.msra.mxu0 %v123
    %5154 = vmatprep.subr.mxu0 0.0
    %5155 = vmatpush1.msra.mxu0 %v126
    %5156 = vmatprep.subr.mxu0 0.0
    %5157 = vmatpush1.msra.mxu0 %v129
    %5158 = vmatprep.subr.mxu0 0.0
    %5159 = vmatpush1.msra.mxu0 %v132
    %5160 = vmatprep.subr.mxu0 0.0
    %5161 = vmatpush1.msra.mxu0 0.0
    %5162 = vmatprep.subr.mxu0 0.0
    %5163 = vmatpush1.msra.mxu0 0.0
    %5164 = vmatprep.subr.mxu0 0.0
    %5165 = vmatpush1.msra.mxu0 0.0
    %5166 = vmatprep.subr.mxu0 0.0
    %5167 = vmatpush1.msra.mxu0 0.0
    %5168 = vmatprep.subr.mxu0 0.0
    %5169 = vmatpush1.msra.mxu0 0.0
    %5170 = vmatprep.subr.mxu0 0.0
    %5171 = vmatpush1.msra.mxu0 0.0
    %5172 = vmatprep.subr.mxu0 0.0
    %5173 = vmatpush1.msra.mxu0 0.0
    %5174 = vmatprep.subr.mxu0 0.0
    %5175 = vmatpush1.msra.mxu0 0.0
    %5176 = vmatprep.subr.mxu0 0.0
    %5177 = vmatpush1.msra.mxu0 0.0
    %5178 = vmatprep.subr.mxu0 0.0
    %5179 = vmatpush1.msra.mxu0 0.0
    %5180 = vmatprep.subr.mxu0 0.0
    %5181 = vmatpush1.msra.mxu0 0.0
    %5182 = vmatprep.subr.mxu0 0.0
    %5183 = vmatpush1.msra.mxu0 0.0
    %5184 = vmatprep.subr.mxu0 0.0
    %5185 = vmatpush1.msra.mxu0 0.0
    %5186 = vmatprep.subr.mxu0 0.0
    %5187 = vmatpush1.msra.mxu0 0.0
    %5188 = vmatprep.subr.mxu0 0.0
    %5189 = vmatpush1.msra.mxu0 0.0
    %5190 = vmatprep.subr.mxu0 0.0
    %5191 = vmatpush1.msra.mxu0 0.0
    %5192 = vmatprep.mubr.f32.mxu0 0.0
    %5193 = vmatmul.mubr.f32.gmra.mrb[0].mxu0 %v4586
    %v5194 = vpop.f32.mrb[0].mxu0
    %v5195 = vadd.f32 %v146, %v5194
    %v5196 = vpop.f32.mrb[0].mxu0
    %5197 = vdwg.mxu0
    %v5198 = vadd.f32 %v5056, %v5124
    %v5199 = vxor.u32 %v5198, 2147483648
    %v5200 = vmul.f32 %v5199, 1.442695
    %v5201 = vpow.pop %v5200
    %v5202 = vadd.f32 %v5201, 1.0
    %v5203 = vrcp.pop %v5202
    %v5204 = vmul.f32 1.0, %v5203
    %v5206 = vrot.slane %v5056, 2
    %v5208 = vadd.f32 %v5206, %v5126
    %v5209 = vxor.u32 %v5208, 2147483648
    %v5210 = vmul.f32 %v5209, 1.442695
    %v5211 = vpow.pop %v5210
    %v5212 = vadd.f32 %v5211, 1.0
    %v5213 = vrcp.pop %v5212
    %v5214 = vmul.f32 1.0, %v5213
    %v5215 = vmul.f32 %v5204, %v5195
    %v5216 = vrot.slane %v5056, 4
    %v5218 = vadd.f32 %v5216, %v5215
    %v5219 = vtanh.pop %v5218
    %v5220 = vsub.f32 1.0, %v5214
    %v5221 = vmul.f32 %v5220, %v5219
    %v5222 = vmul.f32 %v5214, %v4586
    %v5223 = vadd.f32 %v5221, %v5222
    %5224 = vmatprep.subr.mxu0 %v318
    %5225 = vmatpush1.msra.mxu0 %v317
    %5226 = vmatprep.subr.mxu0 %v324
    %5227 = vmatpush1.msra.mxu0 %v323
    %5228 = vmatprep.subr.mxu0 %v330
    %5229 = vmatpush1.msra.mxu0 %v329
    %5230 = vmatprep.subr.mxu0 %v336
    %5231 = vmatpush1.msra.mxu0 %v335
    %5232 = vmatprep.subr.mxu0 %v342
    %5233 = vmatpush1.msra.mxu0 %v341
    %5234 = vmatprep.subr.mxu0 %v348
    %5235 = vmatpush1.msra.mxu0 %v347
    %5236 = vmatprep.subr.mxu0 %v354
    %5237 = vmatpush1.msra.mxu0 %v353
    %5238 = vmatprep.subr.mxu0 %v360
    %5239 = vmatpush1.msra.mxu0 %v359
    %5240 = vmatprep.subr.mxu0 %v366
    %5241 = vmatpush1.msra.mxu0 %v365
    %5242 = vmatprep.subr.mxu0 %v372
    %5243 = vmatpush1.msra.mxu0 %v371
    %5244 = vmatprep.subr.mxu0 %v378
    %5245 = vmatpush1.msra.mxu0 %v377
    %5246 = vmatprep.subr.mxu0 %v384
    %5247 = vmatpush1.msra.mxu0 %v383
    %5248 = vmatprep.subr.mxu0 %v390
    %5249 = vmatpush1.msra.mxu0 %v389
    %5250 = vmatprep.subr.mxu0 %v396
    %5251 = vmatpush1.msra.mxu0 %v395
    %5252 = vmatprep.subr.mxu0 %v402
    %5253 = vmatpush1.msra.mxu0 %v401
    %5254 = vmatprep.subr.mxu0 %v408
    %5255 = vmatpush1.msra.mxu0 %v407
    %5256 = vmatprep.subr.mxu0 %v414
    %5257 = vmatpush1.msra.mxu0 %v413
    %5258 = vmatprep.subr.mxu0 %v420
    %5259 = vmatpush1.msra.mxu0 %v419
    %5260 = vmatprep.subr.mxu0 %v426
    %5261 = vmatpush1.msra.mxu0 %v425
    %5262 = vmatprep.subr.mxu0 %v432
    %5263 = vmatpush1.msra.mxu0 %v431
    %5264 = vmatprep.subr.mxu0 %v438
    %5265 = vmatpush1.msra.mxu0 %v437
    %5266 = vmatprep.subr.mxu0 %v444
    %5267 = vmatpush1.msra.mxu0 %v443
    %5268 = vmatprep.subr.mxu0 %v450
    %5269 = vmatpush1.msra.mxu0 %v449
    %5270 = vmatprep.subr.mxu0 %v456
    %5271 = vmatpush1.msra.mxu0 %v455
    %5272 = vmatprep.subr.mxu0 %v462
    %5273 = vmatpush1.msra.mxu0 %v461
    %5274 = vmatprep.subr.mxu0 %v468
    %5275 = vmatpush1.msra.mxu0 %v467
    %5276 = vmatprep.subr.mxu0 %v474
    %5277 = vmatpush1.msra.mxu0 %v473
    %5278 = vmatprep.subr.mxu0 %v480
    %5279 = vmatpush1.msra.mxu0 %v479
    %5280 = vmatprep.subr.mxu0 %v486
    %5281 = vmatpush1.msra.mxu0 %v485
    %5282 = vmatprep.subr.mxu0 %v492
    %5283 = vmatpush1.msra.mxu0 %v491
    %5284 = vmatprep.subr.mxu0 %v498
    %5285 = vmatpush1.msra.mxu0 %v497
    %5286 = vmatprep.subr.mxu0 %v504
    %5287 = vmatpush1.msra.mxu0 %v503
    %5288 = vmatprep.mubr.f32.mxu0 %v4820
    %5289 = vmatmul.mubr.f32.gmra.mrb[0].mxu0 %v5223
    %v5290 = vpop.f32.mrb[0].mxu0
    %v5291 = vadd.f32 %v514, %v5290
    %v5292 = vpop.f32.mrb[0].mxu0
    %v5293 = vadd.f32 %v518, %v5292
    %5294 = vdwg.mxu0
    %5295 = vmatprep.subr.mxu0 %v320
    %5296 = vmatpush1.msra.mxu0 %v319
    %5297 = vmatprep.subr.mxu0 %v326
    %5298 = vmatpush1.msra.mxu0 %v325
    %5299 = vmatprep.subr.mxu0 %v332
    %5300 = vmatpush1.msra.mxu0 %v331
    %5301 = vmatprep.subr.mxu0 %v338
    %5302 = vmatpush1.msra.mxu0 %v337
    %5303 = vmatprep.subr.mxu0 %v344
    %5304 = vmatpush1.msra.mxu0 %v343
    %5305 = vmatprep.subr.mxu0 %v350
    %5306 = vmatpush1.msra.mxu0 %v349
    %5307 = vmatprep.subr.mxu0 %v356
    %5308 = vmatpush1.msra.mxu0 %v355
    %5309 = vmatprep.subr.mxu0 %v362
    %5310 = vmatpush1.msra.mxu0 %v361
    %5311 = vmatprep.subr.mxu0 %v368
    %5312 = vmatpush1.msra.mxu0 %v367
    %5313 = vmatprep.subr.mxu0 %v374
    %5314 = vmatpush1.msra.mxu0 %v373
    %5315 = vmatprep.subr.mxu0 %v380
    %5316 = vmatpush1.msra.mxu0 %v379
    %5317 = vmatprep.subr.mxu0 %v386
    %5318 = vmatpush1.msra.mxu0 %v385
    %5319 = vmatprep.subr.mxu0 %v392
    %5320 = vmatpush1.msra.mxu0 %v391
    %5321 = vmatprep.subr.mxu0 %v398
    %5322 = vmatpush1.msra.mxu0 %v397
    %5323 = vmatprep.subr.mxu0 %v404
    %5324 = vmatpush1.msra.mxu0 %v403
    %5325 = vmatprep.subr.mxu0 %v410
    %5326 = vmatpush1.msra.mxu0 %v409
    %5327 = vmatprep.subr.mxu0 %v416
    %5328 = vmatpush1.msra.mxu0 %v415
    %5329 = vmatprep.subr.mxu0 %v422
    %5330 = vmatpush1.msra.mxu0 %v421
    %5331 = vmatprep.subr.mxu0 %v428
    %5332 = vmatpush1.msra.mxu0 %v427
    %5333 = vmatprep.subr.mxu0 %v434
    %5334 = vmatpush1.msra.mxu0 %v433
    %5335 = vmatprep.subr.mxu0 %v440
    %5336 = vmatpush1.msra.mxu0 %v439
    %5337 = vmatprep.subr.mxu0 %v446
    %5338 = vmatpush1.msra.mxu0 %v445
    %5339 = vmatprep.subr.mxu0 %v452
    %5340 = vmatpush1.msra.mxu0 %v451
    %5341 = vmatprep.subr.mxu0 %v458
    %5342 = vmatpush1.msra.mxu0 %v457
    %5343 = vmatprep.subr.mxu0 %v464
    %5344 = vmatpush1.msra.mxu0 %v463
    %5345 = vmatprep.subr.mxu0 %v470
    %5346 = vmatpush1.msra.mxu0 %v469
    %5347 = vmatprep.subr.mxu0 %v476
    %5348 = vmatpush1.msra.mxu0 %v475
    %5349 = vmatprep.subr.mxu0 %v482
    %5350 = vmatpush1.msra.mxu0 %v481
    %5351 = vmatprep.subr.mxu0 %v488
    %5352 = vmatpush1.msra.mxu0 %v487
    %5353 = vmatprep.subr.mxu0 %v494
    %5354 = vmatpush1.msra.mxu0 %v493
    %5355 = vmatprep.subr.mxu0 %v500
    %5356 = vmatpush1.msra.mxu0 %v499
    %5357 = vmatprep.subr.mxu0 %v506
    %5358 = vmatpush1.msra.mxu0 %v505
    %5359 = vmatprep.mubr.f32.mxu0 %v4820
    %5360 = vmatmul.mubr.f32.gmra.mrb[0].mxu0 %v5223
    %v5361 = vpop.f32.mrb[0].mxu0
    %v5362 = vadd.f32 %v522, %v5361
    %v5363 = vpop.f32.mrb[0].mxu0
    %v5364 = vadd.f32 %v526, %v5363
    %5365 = vdwg.mxu0
    %5366 = vmatprep.subr.mxu0 %v322
    %5367 = vmatpush1.msra.mxu0 %v321
    %5368 = vmatprep.subr.mxu0 %v328
    %5369 = vmatpush1.msra.mxu0 %v327
    %5370 = vmatprep.subr.mxu0 %v334
    %5371 = vmatpush1.msra.mxu0 %v333
    %5372 = vmatprep.subr.mxu0 %v340
    %5373 = vmatpush1.msra.mxu0 %v339
    %5374 = vmatprep.subr.mxu0 %v346
    %5375 = vmatpush1.msra.mxu0 %v345
    %5376 = vmatprep.subr.mxu0 %v352
    %5377 = vmatpush1.msra.mxu0 %v351
    %5378 = vmatprep.subr.mxu0 %v358
    %5379 = vmatpush1.msra.mxu0 %v357
    %5380 = vmatprep.subr.mxu0 %v364
    %5381 = vmatpush1.msra.mxu0 %v363
    %5382 = vmatprep.subr.mxu0 %v370
    %5383 = vmatpush1.msra.mxu0 %v369
    %5384 = vmatprep.subr.mxu0 %v376
    %5385 = vmatpush1.msra.mxu0 %v375
    %5386 = vmatprep.subr.mxu0 %v382
    %5387 = vmatpush1.msra.mxu0 %v381
    %5388 = vmatprep.subr.mxu0 %v388
    %5389 = vmatpush1.msra.mxu0 %v387
    %5390 = vmatprep.subr.mxu0 %v394
    %5391 = vmatpush1.msra.mxu0 %v393
    %5392 = vmatprep.subr.mxu0 %v400
    %5393 = vmatpush1.msra.mxu0 %v399
    %5394 = vmatprep.subr.mxu0 %v406
    %5395 = vmatpush1.msra.mxu0 %v405
    %5396 = vmatprep.subr.mxu0 %v412
    %5397 = vmatpush1.msra.mxu0 %v411
    %5398 = vmatprep.subr.mxu0 %v418
    %5399 = vmatpush1.msra.mxu0 %v417
    %5400 = vmatprep.subr.mxu0 %v424
    %5401 = vmatpush1.msra.mxu0 %v423
    %5402 = vmatprep.subr.mxu0 %v430
    %5403 = vmatpush1.msra.mxu0 %v429
    %5404 = vmatprep.subr.mxu0 %v436
    %5405 = vmatpush1.msra.mxu0 %v435
    %5406 = vmatprep.subr.mxu0 %v442
    %5407 = vmatpush1.msra.mxu0 %v441
    %5408 = vmatprep.subr.mxu0 %v448
    %5409 = vmatpush1.msra.mxu0 %v447
    %5410 = vmatprep.subr.mxu0 %v454
    %5411 = vmatpush1.msra.mxu0 %v453
    %5412 = vmatprep.subr.mxu0 %v460
    %5413 = vmatpush1.msra.mxu0 %v459
    %5414 = vmatprep.subr.mxu0 %v466
    %5415 = vmatpush1.msra.mxu0 %v465
    %5416 = vmatprep.subr.mxu0 %v472
    %5417 = vmatpush1.msra.mxu0 %v471
    %5418 = vmatprep.subr.mxu0 %v478
    %5419 = vmatpush1.msra.mxu0 %v477
    %5420 = vmatprep.subr.mxu0 %v484
    %5421 = vmatpush1.msra.mxu0 %v483
    %5422 = vmatprep.subr.mxu0 %v490
    %5423 = vmatpush1.msra.mxu0 %v489
    %5424 = vmatprep.subr.mxu0 %v496
    %5425 = vmatpush1.msra.mxu0 %v495
    %5426 = vmatprep.subr.mxu0 %v502
    %5427 = vmatpush1.msra.mxu0 %v501
    %5428 = vmatprep.subr.mxu0 %v508
    %5429 = vmatpush1.msra.mxu0 %v507
    %5430 = vmatprep.mubr.f32.mxu0 %v4820
    %5431 = vmatmul.mubr.f32.gmra.mrb[0].mxu0 %v5223
    %v5432 = vpop.f32.mrb[0].mxu0
    %v5433 = vadd.f32 %v530, %v5432
    %v5434 = vpop.f32.mrb[0].mxu0
    %v5435 = vadd.f32 %v534, %v5434
    %5436 = vdwg.mxu0
    %v5437 = vadd.f32 %v5291, %v5364
    %v5438 = vxor.u32 %v5437, 2147483648
    %v5439 = vmul.f32 %v5438, 1.442695
    %v5440 = vpow.pop %v5439
    %v5441 = vadd.f32 %v5440, 1.0
    %v5442 = vrcp.pop %v5441
    %v5443 = vmul.f32 1.0, %v5442
    %v5444 = vadd.f32 %v5293, %v5433
    %v5445 = vxor.u32 %v5444, 2147483648
    %v5446 = vmul.f32 %v5445, 1.442695
    %v5447 = vpow.pop %v5446
    %v5448 = vadd.f32 %v5447, 1.0
    %v5449 = vrcp.pop %v5448
    %v5450 = vmul.f32 1.0, %v5449
    %v5451 = vmul.f32 %v5443, %v5435
    %v5452 = vadd.f32 %v5362, %v5451
    %v5453 = vtanh.pop %v5452
    %v5454 = vsub.f32 1.0, %v5450
    %v5455 = vmul.f32 %v5454, %v5453
    %v5456 = vmul.f32 %v5450, %v4820
    %v5457 = vadd.f32 %v5455, %v5456
    %5458 = vmatprep.subr.mxu0 %v776
    %5459 = vmatpush1.msra.mxu0 %v775
    %5460 = vmatprep.subr.mxu0 %v782
    %5461 = vmatpush1.msra.mxu0 %v781
    %5462 = vmatprep.subr.mxu0 %v788
    %5463 = vmatpush1.msra.mxu0 %v787
    %5464 = vmatprep.subr.mxu0 %v794
    %5465 = vmatpush1.msra.mxu0 %v793
    %5466 = vmatprep.subr.mxu0 %v800
    %5467 = vmatpush1.msra.mxu0 %v799
    %5468 = vmatprep.subr.mxu0 %v806
    %5469 = vmatpush1.msra.mxu0 %v805
    %5470 = vmatprep.subr.mxu0 %v812
    %5471 = vmatpush1.msra.mxu0 %v811
    %5472 = vmatprep.subr.mxu0 %v818
    %5473 = vmatpush1.msra.mxu0 %v817
    %5474 = vmatprep.subr.mxu0 %v824
    %5475 = vmatpush1.msra.mxu0 %v823
    %5476 = vmatprep.subr.mxu0 %v830
    %5477 = vmatpush1.msra.mxu0 %v829
    %5478 = vmatprep.subr.mxu0 %v836
    %5479 = vmatpush1.msra.mxu0 %v835
    %5480 = vmatprep.subr.mxu0 %v842
    %5481 = vmatpush1.msra.mxu0 %v841
    %5482 = vmatprep.subr.mxu0 %v848
    %5483 = vmatpush1.msra.mxu0 %v847
    %5484 = vmatprep.subr.mxu0 %v854
    %5485 = vmatpush1.msra.mxu0 %v853
    %5486 = vmatprep.subr.mxu0 %v860
    %5487 = vmatpush1.msra.mxu0 %v859
    %5488 = vmatprep.subr.mxu0 %v866
    %5489 = vmatpush1.msra.mxu0 %v865
    %5490 = vmatprep.subr.mxu0 %v872
    %5491 = vmatpush1.msra.mxu0 %v871
    %5492 = vmatprep.subr.mxu0 %v878
    %5493 = vmatpush1.msra.mxu0 %v877
    %5494 = vmatprep.subr.mxu0 %v884
    %5495 = vmatpush1.msra.mxu0 %v883
    %5496 = vmatprep.subr.mxu0 %v890
    %5497 = vmatpush1.msra.mxu0 %v889
    %5498 = vmatprep.subr.mxu0 %v896
    %5499 = vmatpush1.msra.mxu0 %v895
    %5500 = vmatprep.subr.mxu0 %v902
    %5501 = vmatpush1.msra.mxu0 %v901
    %5502 = vmatprep.subr.mxu0 %v908
    %5503 = vmatpush1.msra.mxu0 %v907
    %5504 = vmatprep.subr.mxu0 %v914
    %5505 = vmatpush1.msra.mxu0 %v913
    %5506 = vmatprep.subr.mxu0 %v920
    %5507 = vmatpush1.msra.mxu0 %v919
    %5508 = vmatprep.subr.mxu0 %v926
    %5509 = vmatpush1.msra.mxu0 %v925
    %5510 = vmatprep.subr.mxu0 %v932
    %5511 = vmatpush1.msra.mxu0 %v931
    %5512 = vmatprep.subr.mxu0 %v938
    %5513 = vmatpush1.msra.mxu0 %v937
    %5514 = vmatprep.subr.mxu0 %v944
    %5515 = vmatpush1.msra.mxu0 %v943
    %5516 = vmatprep.subr.mxu0 %v950
    %5517 = vmatpush1.msra.mxu0 %v949
    %5518 = vmatprep.subr.mxu0 %v956
    %5519 = vmatpush1.msra.mxu0 %v955
    %5520 = vmatprep.subr.mxu0 %v962
    %5521 = vmatpush1.msra.mxu0 %v961
    %5522 = vmatprep.mubr.f32.mxu0 %v5054
    %5523 = vmatmul.mubr.f32.gmra.mrb[0].mxu0 %v5457
    %v5524 = vpop.f32.mrb[0].mxu0
    %v5525 = vadd.f32 %v972, %v5524
    %v5526 = vpop.f32.mrb[0].mxu0
    %v5527 = vadd.f32 %v976, %v5526
    %5528 = vdwg.mxu0
    %5529 = vmatprep.subr.mxu0 %v778
    %5530 = vmatpush1.msra.mxu0 %v777
    %5531 = vmatprep.subr.mxu0 %v784
    %5532 = vmatpush1.msra.mxu0 %v783
    %5533 = vmatprep.subr.mxu0 %v790
    %5534 = vmatpush1.msra.mxu0 %v789
    %5535 = vmatprep.subr.mxu0 %v796
    %5536 = vmatpush1.msra.mxu0 %v795
    %5537 = vmatprep.subr.mxu0 %v802
    %5538 = vmatpush1.msra.mxu0 %v801
    %5539 = vmatprep.subr.mxu0 %v808
    %5540 = vmatpush1.msra.mxu0 %v807
    %5541 = vmatprep.subr.mxu0 %v814
    %5542 = vmatpush1.msra.mxu0 %v813
    %5543 = vmatprep.subr.mxu0 %v820
    %5544 = vmatpush1.msra.mxu0 %v819
    %5545 = vmatprep.subr.mxu0 %v826
    %5546 = vmatpush1.msra.mxu0 %v825
    %5547 = vmatprep.subr.mxu0 %v832
    %5548 = vmatpush1.msra.mxu0 %v831
    %5549 = vmatprep.subr.mxu0 %v838
    %5550 = vmatpush1.msra.mxu0 %v837
    %5551 = vmatprep.subr.mxu0 %v844
    %5552 = vmatpush1.msra.mxu0 %v843
    %5553 = vmatprep.subr.mxu0 %v850
    %5554 = vmatpush1.msra.mxu0 %v849
    %5555 = vmatprep.subr.mxu0 %v856
    %5556 = vmatpush1.msra.mxu0 %v855
    %5557 = vmatprep.subr.mxu0 %v862
    %5558 = vmatpush1.msra.mxu0 %v861
    %5559 = vmatprep.subr.mxu0 %v868
    %5560 = vmatpush1.msra.mxu0 %v867
    %5561 = vmatprep.subr.mxu0 %v874
    %5562 = vmatpush1.msra.mxu0 %v873
    %5563 = vmatprep.subr.mxu0 %v880
    %5564 = vmatpush1.msra.mxu0 %v879
    %5565 = vmatprep.subr.mxu0 %v886
    %5566 = vmatpush1.msra.mxu0 %v885
    %5567 = vmatprep.subr.mxu0 %v892
    %5568 = vmatpush1.msra.mxu0 %v891
    %5569 = vmatprep.subr.mxu0 %v898
    %5570 = vmatpush1.msra.mxu0 %v897
    %5571 = vmatprep.subr.mxu0 %v904
    %5572 = vmatpush1.msra.mxu0 %v903
    %5573 = vmatprep.subr.mxu0 %v910
    %5574 = vmatpush1.msra.mxu0 %v909
    %5575 = vmatprep.subr.mxu0 %v916
    %5576 = vmatpush1.msra.mxu0 %v915
    %5577 = vmatprep.subr.mxu0 %v922
    %5578 = vmatpush1.msra.mxu0 %v921
    %5579 = vmatprep.subr.mxu0 %v928
    %5580 = vmatpush1.msra.mxu0 %v927
    %5581 = vmatprep.subr.mxu0 %v934
    %5582 = vmatpush1.msra.mxu0 %v933
    %5583 = vmatprep.subr.mxu0 %v940
    %5584 = vmatpush1.msra.mxu0 %v939
    %5585 = vmatprep.subr.mxu0 %v946
    %5586 = vmatpush1.msra.mxu0 %v945
    %5587 = vmatprep.subr.mxu0 %v952
    %5588 = vmatpush1.msra.mxu0 %v951
    %5589 = vmatprep.subr.mxu0 %v958
    %5590 = vmatpush1.msra.mxu0 %v957
    %5591 = vmatprep.subr.mxu0 %v964
    %5592 = vmatpush1.msra.mxu0 %v963
    %5593 = vmatprep.mubr.f32.mxu0 %v5054
    %5594 = vmatmul.mubr.f32.gmra.mrb[0].mxu0 %v5457
    %v5595 = vpop.f32.mrb[0].mxu0
    %v5596 = vadd.f32 %v980, %v5595
    %v5597 = vpop.f32.mrb[0].mxu0
    %v5598 = vadd.f32 %v984, %v5597
    %5599 = vdwg.mxu0
    %5600 = vmatprep.subr.mxu0 %v780
    %5601 = vmatpush1.msra.mxu0 %v779
    %5602 = vmatprep.subr.mxu0 %v786
    %5603 = vmatpush1.msra.mxu0 %v785
    %5604 = vmatprep.subr.mxu0 %v792
    %5605 = vmatpush1.msra.mxu0 %v791
    %5606 = vmatprep.subr.mxu0 %v798
    %5607 = vmatpush1.msra.mxu0 %v797
    %5608 = vmatprep.subr.mxu0 %v804
    %5609 = vmatpush1.msra.mxu0 %v803
    %5610 = vmatprep.subr.mxu0 %v810
    %5611 = vmatpush1.msra.mxu0 %v809
    %5612 = vmatprep.subr.mxu0 %v816
    %5613 = vmatpush1.msra.mxu0 %v815
    %5614 = vmatprep.subr.mxu0 %v822
    %5615 = vmatpush1.msra.mxu0 %v821
    %5616 = vmatprep.subr.mxu0 %v828
    %5617 = vmatpush1.msra.mxu0 %v827
    %5618 = vmatprep.subr.mxu0 %v834
    %5619 = vmatpush1.msra.mxu0 %v833
    %5620 = vmatprep.subr.mxu0 %v840
    %5621 = vmatpush1.msra.mxu0 %v839
    %5622 = vmatprep.subr.mxu0 %v846
    %5623 = vmatpush1.msra.mxu0 %v845
    %5624 = vmatprep.subr.mxu0 %v852
    %5625 = vmatpush1.msra.mxu0 %v851
    %5626 = vmatprep.subr.mxu0 %v858
    %5627 = vmatpush1.msra.mxu0 %v857
    %5628 = vmatprep.subr.mxu0 %v864
    %5629 = vmatpush1.msra.mxu0 %v863
    %5630 = vmatprep.subr.mxu0 %v870
    %5631 = vmatpush1.msra.mxu0 %v869
    %5632 = vmatprep.subr.mxu0 %v876
    %5633 = vmatpush1.msra.mxu0 %v875
    %5634 = vmatprep.subr.mxu0 %v882
    %5635 = vmatpush1.msra.mxu0 %v881
    %5636 = vmatprep.subr.mxu0 %v888
    %5637 = vmatpush1.msra.mxu0 %v887
    %5638 = vmatprep.subr.mxu0 %v894
    %5639 = vmatpush1.msra.mxu0 %v893
    %5640 = vmatprep.subr.mxu0 %v900
    %5641 = vmatpush1.msra.mxu0 %v899
    %5642 = vmatprep.subr.mxu0 %v906
    %5643 = vmatpush1.msra.mxu0 %v905
    %5644 = vmatprep.subr.mxu0 %v912
    %5645 = vmatpush1.msra.mxu0 %v911
    %5646 = vmatprep.subr.mxu0 %v918
    %5647 = vmatpush1.msra.mxu0 %v917
    %5648 = vmatprep.subr.mxu0 %v924
    %5649 = vmatpush1.msra.mxu0 %v923
    %5650 = vmatprep.subr.mxu0 %v930
    %5651 = vmatpush1.msra.mxu0 %v929
    %5652 = vmatprep.subr.mxu0 %v936
    %5653 = vmatpush1.msra.mxu0 %v935
    %5654 = vmatprep.subr.mxu0 %v942
    %5655 = vmatpush1.msra.mxu0 %v941
    %5656 = vmatprep.subr.mxu0 %v948
    %5657 = vmatpush1.msra.mxu0 %v947
    %5658 = vmatprep.subr.mxu0 %v954
    %5659 = vmatpush1.msra.mxu0 %v953
    %5660 = vmatprep.subr.mxu0 %v960
    %5661 = vmatpush1.msra.mxu0 %v959
    %5662 = vmatprep.subr.mxu0 %v966
    %5663 = vmatpush1.msra.mxu0 %v965
    %5664 = vmatprep.mubr.f32.mxu0 %v5054
    %5665 = vmatmul.mubr.f32.gmra.mrb[0].mxu0 %v5457
    %v5666 = vpop.f32.mrb[0].mxu0
    %v5667 = vadd.f32 %v988, %v5666
    %v5668 = vpop.f32.mrb[0].mxu0
    %v5669 = vadd.f32 %v992, %v5668
    %5670 = vdwg.mxu0
    %v5671 = vadd.f32 %v5525, %v5598
    %v5672 = vxor.u32 %v5671, 2147483648
    %v5673 = vmul.f32 %v5672, 1.442695
    %v5674 = vpow.pop %v5673
    %v5675 = vadd.f32 %v5674, 1.0
    %v5676 = vrcp.pop %v5675
    %v5677 = vmul.f32 1.0, %v5676
    %v5678 = vadd.f32 %v5527, %v5667
    %v5679 = vxor.u32 %v5678, 2147483648
    %v5680 = vmul.f32 %v5679, 1.442695
    %v5681 = vpow.pop %v5680
    %v5682 = vadd.f32 %v5681, 1.0
    %v5683 = vrcp.pop %v5682
    %v5684 = vmul.f32 1.0, %v5683
    %v5685 = vmul.f32 %v5677, %v5669
    %v5686 = vadd.f32 %v5596, %v5685
    %v5687 = vtanh.pop %v5686
    %v5688 = vsub.f32 1.0, %v5684
    %v5689 = vmul.f32 %v5688, %v5687
    %v5690 = vmul.f32 %v5684, %v5054
    %v5691 = vadd.f32 %v5689, %v5690
    %5692 = vst [vmem:[#allocation2] sm:$0x3] %v5223
    %5693 = vst [vmem:[#allocation3] sm:$0x3] %v5457
    %5694 = vst [vmem:[#allocation4] sm:$0x3] %v5691
    // Predicated region
    $region66: #{discriminator_forward.1} parent=1 // pred_check
      %p5695 = pneg %p74
    $region67: #{discriminator_forward.1} parent=1 // pred_check_branch
      %5697 = sbr.rel (%p5695) target = $region69
    $region68: #{discriminator_forward.1} parent=1 // pred_region
      %v5698 = vld [vmem:[%s7] sm:$0xff]
      %v5699 = vld [vmem:[%s7 + $0x8] sm:$0xff]
      %v5700 = vld [vmem:[%s7 + $0x10] sm:$0xff]
      %v5701 = vld [vmem:[%s7 + $0x18] sm:$0xff]
      %v5702 = vld [vmem:[%s7 + $0x20] sm:$0xff]
      %v5703 = vld [vmem:[%s7 + $0x28] sm:$0xff]
      %v5704 = vld [vmem:[%s7 + $0x30] sm:$0xff]
      %v5705 = vld [vmem:[%s7 + $0x38] sm:$0xff]
      %v5706 = vld [vmem:[%s7 + $0x40] sm:$0xff]
      %v5707 = vld [vmem:[%s7 + $0x48] sm:$0xff]
      %v5708 = vld [vmem:[%s7 + $0x50] sm:$0xff]
      %v5709 = vld [vmem:[%s7 + $0x58] sm:$0xff]
      %v5710 = vld [vmem:[%s7 + $0x60] sm:$0xff]
      %v5711 = vld [vmem:[%s7 + $0x68] sm:$0xff]
      %v5712 = vld [vmem:[%s7 + $0x70] sm:$0xff]
      %v5713 = vld [vmem:[%s7 + $0x78] sm:$0xff]
      %v5714 = vld [vmem:[%s8] sm:$0x1]
      %v5716 = vlaneseq
      %v5717 = vshrl.u32 %v5716, 7
      %v5718 = vsub.s32 0, %v5717
      %v5719 = vrot.slane %v5714, %v5718
      %5721 = vmatprep.subr.mxu0 0.0
      %5722 = vmatpush1.msra.mxu0 %v5698
      %5723 = vmatprep.subr.mxu0 0.0
      %5724 = vmatpush1.msra.mxu0 %v5699
      %5725 = vmatprep.subr.mxu0 0.0
      %5726 = vmatpush1.msra.mxu0 %v5700
      %5727 = vmatprep.subr.mxu0 0.0
      %5728 = vmatpush1.msra.mxu0 %v5701
      %5729 = vmatprep.subr.mxu0 0.0
      %5730 = vmatpush1.msra.mxu0 %v5702
      %5731 = vmatprep.subr.mxu0 0.0
      %5732 = vmatpush1.msra.mxu0 %v5703
      %5733 = vmatprep.subr.mxu0 0.0
      %5734 = vmatpush1.msra.mxu0 %v5704
      %5735 = vmatprep.subr.mxu0 0.0
      %5736 = vmatpush1.msra.mxu0 %v5705
      %5737 = vmatprep.subr.mxu0 0.0
      %5738 = vmatpush1.msra.mxu0 %v5706
      %5739 = vmatprep.subr.mxu0 0.0
      %5740 = vmatpush1.msra.mxu0 %v5707
      %5741 = vmatprep.subr.mxu0 0.0
      %5742 = vmatpush1.msra.mxu0 %v5708
      %5743 = vmatprep.subr.mxu0 0.0
      %5744 = vmatpush1.msra.mxu0 %v5709
      %5745 = vmatprep.subr.mxu0 0.0
      %5746 = vmatpush1.msra.mxu0 %v5710
      %5747 = vmatprep.subr.mxu0 0.0
      %5748 = vmatpush1.msra.mxu0 %v5711
      %5749 = vmatprep.subr.mxu0 0.0
      %5750 = vmatpush1.msra.mxu0 %v5712
      %5751 = vmatprep.subr.mxu0 0.0
      %5752 = vmatpush1.msra.mxu0 %v5713
      %5753 = vmatprep.subr.mxu0 0.0
      %5754 = vmatpush1.msra.mxu0 0.0
      %5755 = vmatprep.subr.mxu0 0.0
      %5756 = vmatpush1.msra.mxu0 0.0
      %5757 = vmatprep.subr.mxu0 0.0
      %5758 = vmatpush1.msra.mxu0 0.0
      %5759 = vmatprep.subr.mxu0 0.0
      %5760 = vmatpush1.msra.mxu0 0.0
      %5761 = vmatprep.subr.mxu0 0.0
      %5762 = vmatpush1.msra.mxu0 0.0
      %5763 = vmatprep.subr.mxu0 0.0
      %5764 = vmatpush1.msra.mxu0 0.0
      %5765 = vmatprep.subr.mxu0 0.0
      %5766 = vmatpush1.msra.mxu0 0.0
      %5767 = vmatprep.subr.mxu0 0.0
      %5768 = vmatpush1.msra.mxu0 0.0
      %5769 = vmatprep.subr.mxu0 0.0
      %5770 = vmatpush1.msra.mxu0 0.0
      %5771 = vmatprep.subr.mxu0 0.0
      %5772 = vmatpush1.msra.mxu0 0.0
      %5773 = vmatprep.subr.mxu0 0.0
      %5774 = vmatpush1.msra.mxu0 0.0
      %5775 = vmatprep.subr.mxu0 0.0
      %5776 = vmatpush1.msra.mxu0 0.0
      %5777 = vmatprep.subr.mxu0 0.0
      %5778 = vmatpush1.msra.mxu0 0.0
      %5779 = vmatprep.subr.mxu0 0.0
      %5780 = vmatpush1.msra.mxu0 0.0
      %5781 = vmatprep.subr.mxu0 0.0
      %5782 = vmatpush1.msra.mxu0 0.0
      %5783 = vmatprep.subr.mxu0 0.0
      %5784 = vmatpush1.msra.mxu0 0.0
      %5785 = vmatprep.mubr.f32.mxu0 0.0
      %5786 = vmatmul.mubr.f32.gmra.mrb[0].mxu0 %v5691
      %v5787 = vpop.f32.mrb[0].mxu0
      %v5788 = vadd.f32 %v5719, %v5787
      %v5789 = vpop.f32.mrb[0].mxu0
      %5790 = vdwg.mxu0
      %v5791 = vmax.f32 %v5788, 0.0
      %v5792 = vld [vmem:[%s9] sm:$0xff]
      %v5793 = vld [vmem:[%s9 + $0x8] sm:$0xff]
      %v5794 = vld [vmem:[%s9 + $0x10] sm:$0xff]
      %v5795 = vld [vmem:[%s9 + $0x18] sm:$0xff]
      %v5796 = vld [vmem:[%s10] sm:$0x1]
      %v5798 = vlaneseq
      %v5799 = vshrl.u32 %v5798, 7
      %v5800 = vsub.s32 0, %v5799
      %v5801 = vrot.slane %v5796, %v5800
      %vm5803 = vcmask 261120
      %v5805 = vsel %vm5803, %v5791, 0
      %5807 = vmatprep.subr.mxu0 0.0
      %5808 = vmatpush1.msra.mxu0 %v5792
      %5809 = vmatprep.subr.mxu0 0.0
      %5810 = vmatpush1.msra.mxu0 %v5793
      %5811 = vmatprep.subr.mxu0 0.0
      %5812 = vmatpush1.msra.mxu0 %v5794
      %5813 = vmatprep.subr.mxu0 0.0
      %5814 = vmatpush1.msra.mxu0 %v5795
      %5815 = vmatprep.subr.mxu0 0.0
      %5816 = vmatpush1.msra.mxu0 0.0
      %5817 = vmatprep.subr.mxu0 0.0
      %5818 = vmatpush1.msra.mxu0 0.0
      %5819 = vmatprep.subr.mxu0 0.0
      %5820 = vmatpush1.msra.mxu0 0.0
      %5821 = vmatprep.subr.mxu0 0.0
      %5822 = vmatpush1.msra.mxu0 0.0
      %5823 = vmatprep.subr.mxu0 0.0
      %5824 = vmatpush1.msra.mxu0 0.0
      %5825 = vmatprep.subr.mxu0 0.0
      %5826 = vmatpush1.msra.mxu0 0.0
      %5827 = vmatprep.subr.mxu0 0.0
      %5828 = vmatpush1.msra.mxu0 0.0
      %5829 = vmatprep.subr.mxu0 0.0
      %5830 = vmatpush1.msra.mxu0 0.0
      %5831 = vmatprep.subr.mxu0 0.0
      %5832 = vmatpush1.msra.mxu0 0.0
      %5833 = vmatprep.subr.mxu0 0.0
      %5834 = vmatpush1.msra.mxu0 0.0
      %5835 = vmatprep.subr.mxu0 0.0
      %5836 = vmatpush1.msra.mxu0 0.0
      %5837 = vmatprep.subr.mxu0 0.0
      %5838 = vmatpush1.msra.mxu0 0.0
      %5839 = vmatprep.subr.mxu0 0.0
      %5840 = vmatpush1.msra.mxu0 0.0
      %5841 = vmatprep.subr.mxu0 0.0
      %5842 = vmatpush1.msra.mxu0 0.0
      %5843 = vmatprep.subr.mxu0 0.0
      %5844 = vmatpush1.msra.mxu0 0.0
      %5845 = vmatprep.subr.mxu0 0.0
      %5846 = vmatpush1.msra.mxu0 0.0
      %5847 = vmatprep.subr.mxu0 0.0
      %5848 = vmatpush1.msra.mxu0 0.0
      %5849 = vmatprep.subr.mxu0 0.0
      %5850 = vmatpush1.msra.mxu0 0.0
      %5851 = vmatprep.subr.mxu0 0.0
      %5852 = vmatpush1.msra.mxu0 0.0
      %5853 = vmatprep.subr.mxu0 0.0
      %5854 = vmatpush1.msra.mxu0 0.0
      %5855 = vmatprep.subr.mxu0 0.0
      %5856 = vmatpush1.msra.mxu0 0.0
      %5857 = vmatprep.subr.mxu0 0.0
      %5858 = vmatpush1.msra.mxu0 0.0
      %5859 = vmatprep.subr.mxu0 0.0
      %5860 = vmatpush1.msra.mxu0 0.0
      %5861 = vmatprep.subr.mxu0 0.0
      %5862 = vmatpush1.msra.mxu0 0.0
      %5863 = vmatprep.subr.mxu0 0.0
      %5864 = vmatpush1.msra.mxu0 0.0
      %5865 = vmatprep.subr.mxu0 0.0
      %5866 = vmatpush1.msra.mxu0 0.0
      %5867 = vmatprep.subr.mxu0 0.0
      %5868 = vmatpush1.msra.mxu0 0.0
      %5869 = vmatprep.subr.mxu0 0.0
      %5870 = vmatpush1.msra.mxu0 0.0
      %5871 = vmatprep.mubr.f32.mxu0 0.0
      %5872 = vmatmul.mubr.f32.gmra.mrb[0].mxu0 %v5805
      %v5873 = vpop.f32.mrb[0].mxu0
      %v5874 = vadd.f32 %v5801, %v5873
      %v5875 = vpop.f32.mrb[0].mxu0
      %5876 = vdwg.mxu0
      %v5877 = vmax.f32 %v5874, 0.0
      %v5878 = vld [vmem:[%s11] sm:$0xff]
      %v5879 = vld [vmem:[%s11 + $0x8] sm:$0xff]
      %v5880 = vld [vmem:[#allocation5] sm:$0x1]
      %v5882 = vlaneseq
      %v5883 = vshrl.u32 %v5882, 7
      %v5884 = vsub.s32 0, %v5883
      %v5885 = vrot.slane %v5880, %v5884
      %vm5887 = vcmask 130048
      %v5889 = vsel %vm5887, %v5877, 0
      %5891 = vmatprep.subr.mxu0 0.0
      %5892 = vmatpush1.msra.mxu0 %v5878
      %5893 = vmatprep.subr.mxu0 0.0
      %5894 = vmatpush1.msra.mxu0 %v5879
      %5895 = vmatprep.subr.mxu0 0.0
      %5896 = vmatpush1.msra.mxu0 0.0
      %5897 = vmatprep.subr.mxu0 0.0
      %5898 = vmatpush1.msra.mxu0 0.0
      %5899 = vmatprep.subr.mxu0 0.0
      %5900 = vmatpush1.msra.mxu0 0.0
      %5901 = vmatprep.subr.mxu0 0.0
      %5902 = vmatpush1.msra.mxu0 0.0
      %5903 = vmatprep.subr.mxu0 0.0
      %5904 = vmatpush1.msra.mxu0 0.0
      %5905 = vmatprep.subr.mxu0 0.0
      %5906 = vmatpush1.msra.mxu0 0.0
      %5907 = vmatprep.subr.mxu0 0.0
      %5908 = vmatpush1.msra.mxu0 0.0
      %5909 = vmatprep.subr.mxu0 0.0
      %5910 = vmatpush1.msra.mxu0 0.0
      %5911 = vmatprep.subr.mxu0 0.0
      %5912 = vmatpush1.msra.mxu0 0.0
      %5913 = vmatprep.subr.mxu0 0.0
      %5914 = vmatpush1.msra.mxu0 0.0
      %5915 = vmatprep.subr.mxu0 0.0
      %5916 = vmatpush1.msra.mxu0 0.0
      %5917 = vmatprep.subr.mxu0 0.0
      %5918 = vmatpush1.msra.mxu0 0.0
      %5919 = vmatprep.subr.mxu0 0.0
      %5920 = vmatpush1.msra.mxu0 0.0
      %5921 = vmatprep.subr.mxu0 0.0
      %5922 = vmatpush1.msra.mxu0 0.0
      %5923 = vmatprep.subr.mxu0 0.0
      %5924 = vmatpush1.msra.mxu0 0.0
      %5925 = vmatprep.subr.mxu0 0.0
      %5926 = vmatpush1.msra.mxu0 0.0
      %5927 = vmatprep.subr.mxu0 0.0
      %5928 = vmatpush1.msra.mxu0 0.0
      %5929 = vmatprep.subr.mxu0 0.0
      %5930 = vmatpush1.msra.mxu0 0.0
      %5931 = vmatprep.subr.mxu0 0.0
      %5932 = vmatpush1.msra.mxu0 0.0
      %5933 = vmatprep.subr.mxu0 0.0
      %5934 = vmatpush1.msra.mxu0 0.0
      %5935 = vmatprep.subr.mxu0 0.0
      %5936 = vmatpush1.msra.mxu0 0.0
      %5937 = vmatprep.subr.mxu0 0.0
      %5938 = vmatpush1.msra.mxu0 0.0
      %5939 = vmatprep.subr.mxu0 0.0
      %5940 = vmatpush1.msra.mxu0 0.0
      %5941 = vmatprep.subr.mxu0 0.0
      %5942 = vmatpush1.msra.mxu0 0.0
      %5943 = vmatprep.subr.mxu0 0.0
      %5944 = vmatpush1.msra.mxu0 0.0
      %5945 = vmatprep.subr.mxu0 0.0
      %5946 = vmatpush1.msra.mxu0 0.0
      %5947 = vmatprep.subr.mxu0 0.0
      %5948 = vmatpush1.msra.mxu0 0.0
      %5949 = vmatprep.subr.mxu0 0.0
      %5950 = vmatpush1.msra.mxu0 0.0
      %5951 = vmatprep.subr.mxu0 0.0
      %5952 = vmatpush1.msra.mxu0 0.0
      %5953 = vmatprep.subr.mxu0 0.0
      %5954 = vmatpush1.msra.mxu0 0.0
      %5955 = vmatprep.mubr.f32.mxu0 0.0
      %5956 = vmatmul.mubr.f32.gmra.mrb[0].mxu0 %v5889
      %v5957 = vpop.f32.mrb[0].mxu0
      %v5958 = vadd.f32 %v5885, %v5957
      %v5959 = vpop.f32.mrb[0].mxu0
      %5960 = vdwg.mxu0
      %v5961 = vxor.u32 %v5958, 2147483648
      %v5962 = vmul.f32 %v5961, 1.442695
      %v5963 = vpow.pop %v5962
      %v5964 = vadd.f32 %v5963, 1.0
      %v5965 = vrcp.pop %v5964
      %v5966 = vmul.f32 1.0, %v5965
      %vm5967 = vcmask 1024
      %5968 = vst.msk [vmem:[%s13] sm:$0x3] %vm5967, %v5966
    $region69: #{discriminator_forward.1} parent=1 // pred_fallthru
      _
    // Predicated region
    $region70: #{discriminator_forward.1} parent=1 // pred_check
      _
    $region71: #{discriminator_forward.1} parent=1 // pred_check_branch
      %5970 = sbr.rel (0) target = $region73
    $region72: #{discriminator_forward.1} parent=1 // pred_region
      _
    $region73: #{discriminator_forward.1} parent=1 // pred_fallthru
      _
    // Predicated region
    $region74: #{discriminator_forward.1} parent=1 // pred_check
      _
    $region75: #{discriminator_forward.1} parent=1 // pred_check_branch
      %5972 = sbr.rel (0) target = $region77
    $region76: #{discriminator_forward.1} parent=1 // pred_region
      _
    $region77: #{discriminator_forward.1} parent=1 // pred_fallthru
      _
    %5973 = vsyncpa [#allocation7], 1
    %5974 = vsyncpa [#allocation9], 1

</llo_original>
